<compile_context>
chip_gen: v7x
topology: tpu7x:2x2x1
jax: 0.10.0
libtpu: 0.0.40
codegen_flags: <defaults>
</compile_context>

<pallas_src>
import functools
import math

import jax
import jax.numpy as jnp
from jax.experimental import pallas as pl
from jax.experimental.pallas import tpu as pltpu

EPS = 1e-5                       # torch.nn.BatchNorm2d default
_VMEM_LIMIT = 32 * 1024 * 1024   # well above the ~3 MiB/step tile footprint,
                                 # below physical VMEM on v5e/v6e (128 MiB) and v7x (64 MiB)

# ConvTranspose2d(k=4, s=2, p=1): output pixel p = 2*m + a gets contributions
# from padded-input rows m + a + di (di in {0,1}) through kernel tap
# _KH[(a, di)] (same decomposition for columns).
_KH = {(0, 0): 3, (0, 1): 1, (1, 0): 2, (1, 1): 0}


def _round_up(x, m):
    return (x + m - 1) // m * m


def _convt_stats_kernel(params_ref, x_ref, w_ref, y_ref, stats_ref):
    """Pass 1: transposed-conv matmuls + per-channel sum / sumsq accumulation.

    params_ref : (8, Op)  f32, row 0 = conv bias
    x_ref      : (1, 1, Ht+2, W+2, Cp)   padded NHWC input tile (h halo included)
    w_ref      : (2, 2, 2, 2, Cp, Op)    weight taps, indexed [a, b, di, dj]
    y_ref      : (2, 2, 1, 1, Ht*W, Op)  f32 conv output, subpixel-planar
    stats_ref  : (8, Op) f32, rows 0/1 accumulate sum / sum-of-squares
    """
    ht = x_ref.shape[2] - 2
    wd = x_ref.shape[3] - 2
    op = y_ref.shape[-1]

    @pl.when((pl.program_id(0) == 0) & (pl.program_id(1) == 0))
    def _():
        stats_ref[...] = jnp.zeros_like(stats_ref)

    bias = params_ref[0:1, :]                       # (1, Op) f32

    psum = jnp.zeros((1, op), jnp.float32)
    psumsq = jnp.zeros((1, op), jnp.float32)
    for a in range(2):                              # output-row subpixel
        for b in range(2):                          # output-col subpixel
            acc = jnp.zeros((ht * wd, op), jnp.float32)
            for di in range(2):                     # 4 accumulating taps per subpixel
                for dj in range(2):
                    tap = x_ref[0, 0, a + di:a + di + ht, b + dj:b + dj + wd, :]
                    tap = tap.reshape(ht * wd, tap.shape[-1])
                    acc = acc + jnp.dot(tap, w_ref[a, b, di, dj],
                                        preferred_element_type=jnp.float32)
            part = acc + bias                       # true ConvTranspose2d output (f32)
            y_ref[a, b, 0, 0] = part                # direct slab write (no concat copy)
            # fold the BN reductions in while `part` is hot in vregs
            psum = psum + jnp.sum(part, axis=0, keepdims=True)
            psumsq = psumsq + jnp.sum(part * part, axis=0, keepdims=True)
    stats_ref[0:1, :] += psum
    stats_ref[1:2, :] += psumsq


def _bn_relu_kernel(ss_ref, y_ref, o_ref):
    """Pass 2: fused y * scale + shift followed by ReLU (single FMA sweep)."""
    scale = ss_ref[0:1, :]
    shift = ss_ref[1:2, :]
    for a in range(2):
        for b in range(2):
            yb = y_ref[a, b, 0, 0]
            o_ref[a, b, 0, 0] = jnp.maximum(yb * scale + shift, 0.0)


def unet_up_forward(x, w, b, gamma, beta, *, h_tile=None, mxu_dtype=jnp.float32):
    """x: (N, C, H, W) f32; w: (C, O, 4, 4); b/gamma/beta: (O,).

    Returns (N, O, 2H, 2W) f32 = ReLU(BatchNorm2d_train(ConvTranspose2d(x))).
    mxu_dtype=jnp.bfloat16 feeds the MXU bf16 (v6e/v7x path); accumulation and
    all BatchNorm math stay f32.
    """
    N, C, H, W = x.shape
    O = w.shape[1]

    if h_tile is None:
        h_tile = 8 if H % 8 == 0 else H
    assert H % h_tile == 0, (H, h_tile)
    HT = H // h_tile
    rows = h_tile * W                    # matmul rows per subpixel per grid step
    M = N * H * W                        # input spatial positions
    cnt = 4 * M                          # BN population per channel (= N*2H*2W)

    Cp = _round_up(C, 8)                 # sublane-align the contraction dim
                                         # (real UNet channel counts should pad to 128)
    Op = _round_up(O, 128)               # lane-dense outputs (>=128 lanes per store)
    itemsize = jnp.finfo(mxu_dtype).bits // 8

    # ---- wrapper-side restructuring: read the input once (~(Ht+2)/Ht dup) ----
    xhwc = jnp.transpose(x, (0, 2, 3, 1))                         # NHWC
    xpad = jnp.pad(xhwc, ((0, 0), (1, 1), (1, 1), (0, Cp - C)))   # (N, H+2, W+2, Cp)
    ridx = jnp.arange(HT)[:, None] * h_tile + jnp.arange(h_tile + 2)[None, :]
    xt = xpad[:, ridx].astype(mxu_dtype)                          # (N, HT, Ht+2, W+2, Cp)

    wp = jnp.pad(w, ((0, Cp - C), (0, Op - O), (0, 0), (0, 0)))   # (Cp, Op, 4, 4)
    wk = jnp.stack([
        jnp.stack([
            jnp.stack([
                jnp.stack([wp[:, :, _KH[(a, di)], _KH[(b_, dj)]] for dj in (0, 1)], 0)
                for di in (0, 1)], 0)
            for b_ in (0, 1)], 0)
        for a in (0, 1)], 0).astype(mxu_dtype)                    # (2, 2, 2, 2, Cp, Op)

    # packed per-channel params (single (8, Op) ref instead of 3 tiny DMAs)
    bias_p = jnp.pad(b, (0, Op - O)).reshape(1, Op).astype(jnp.float32)
    params = jnp.concatenate([bias_p, jnp.zeros((7, Op), jnp.float32)], axis=0)

    # ---- pass 1: conv-transpose matmuls + per-channel sum / sumsq ------------
    x_bytes = N * HT * (h_tile + 2) * (W + 2) * Cp * itemsize
    w_bytes = 16 * Cp * Op * itemsize
    y_bytes = 4 * M * Op * 4
    cost1 = pl.CostEstimate(flops=2 * 4 * 4 * M * Cp * Op,
                            transcendentals=0,
                            bytes_accessed=x_bytes + w_bytes + y_bytes + 16 * Op * 4)

    y_planar, stats = pl.pallas_call(
        _convt_stats_kernel,
        grid=(N, HT),
        in_specs=[
            pl.BlockSpec((8, Op), lambda n, t: (0, 0)),
            pl.BlockSpec((1, 1, h_tile + 2, W + 2, Cp), lambda n, t: (n, t, 0, 0, 0)),
            pl.BlockSpec((2, 2, 2, 2, Cp, Op), lambda n, t: (0, 0, 0, 0, 0, 0)),
        ],
        out_specs=(
            pl.BlockSpec((2, 2, 1, 1, rows, Op), lambda n, t: (0, 0, n, t, 0, 0)),
            pl.BlockSpec((8, Op), lambda n, t: (0, 0)),
        ),
        out_shape=(
            jax.ShapeDtypeStruct((2, 2, N, HT, rows, Op), jnp.float32),
            jax.ShapeDtypeStruct((8, Op), jnp.float32),
        ),
        compiler_params=pltpu.CompilerParams(
            # stats block is accumulated across the whole grid -> sequential axes.
            # TODO(synk): v7x megacore would want per-core partial stats plus a
            # tiny cross-core combine so these axes could be 'parallel'.
            dimension_semantics=("arbitrary", "arbitrary"),
            vmem_limit_bytes=_VMEM_LIMIT),
        cost_estimate=cost1,
    )(params, xt, wk)

    # ---- fold BatchNorm into a single scale/shift (tiny (1, Op) math) --------
    mean = stats[0:1, :] / cnt
    var = jnp.maximum(stats[1:2, :] / cnt - mean * mean, 0.0)  # one-pass E[y^2]-E[y]^2
    gamma_p = jnp.pad(gamma, (0, Op - O)).reshape(1, Op).astype(jnp.float32)
    beta_p = jnp.pad(beta, (0, Op - O)).reshape(1, Op).astype(jnp.float32)
    scale = gamma_p * jax.lax.rsqrt(var + EPS)
    shift = beta_p - mean * scale
    scaleshift = jnp.concatenate([scale, shift, jnp.zeros((6, Op), jnp.float32)], 0)

    # ---- pass 2: fused normalize + ReLU, in place (aliased output) -----------
    cost2 = pl.CostEstimate(flops=3 * 4 * M * Op, transcendentals=0,
                            bytes_accessed=2 * y_bytes + 8 * Op * 4)
    out_planar = pl.pallas_call(
        _bn_relu_kernel,
        grid=(N, HT),
        in_specs=[
            pl.BlockSpec((8, Op), lambda n, t: (0, 0)),
            pl.BlockSpec((2, 2, 1, 1, rows, Op), lambda n, t: (0, 0, n, t, 0, 0)),
        ],
        out_specs=pl.BlockSpec((2, 2, 1, 1, rows, Op), lambda n, t: (0, 0, n, t, 0, 0)),
        out_shape=jax.ShapeDtypeStruct((2, 2, N, HT, rows, Op), jnp.float32),
        input_output_aliases={1: 0},
        compiler_params=pltpu.CompilerParams(
            dimension_semantics=("parallel", "parallel"),
            vmem_limit_bytes=_VMEM_LIMIT),
        cost_estimate=cost2,
    )(scaleshift, y_planar)

    # ---- PyTorch-parity relayout: planar (a, b, n, h, w, o) -> NCHW ----------
    # (an NHWC pipeline would consume the kernel's layout directly and skip this)
    yf = out_planar.reshape(2, 2, N, H, W, Op)[..., :O]
    y = jnp.transpose(yf, (2, 5, 3, 0, 4, 1)).reshape(N, O, 2 * H, 2 * W)
    return y
    # TODO(synk): BatchNorm running_mean/running_var buffer updates (stateful
    # training side effect) are not represented in the returned value.


def unet_up_reference(x, w, b, gamma, beta):
    """Pure-JAX reference: ConvTranspose2d(4,2,1) + BatchNorm2d(train) + ReLU."""
    wc = jnp.flip(jnp.transpose(w, (1, 0, 2, 3)), axis=(2, 3))  # (O, C, 4, 4)
    y = jax.lax.conv_general_dilated(
        x, wc, window_strides=(1, 1), padding=((2, 2), (2, 2)),
        lhs_dilation=(2, 2), dimension_numbers=("NCHW", "OIHW", "NCHW"))
    y = y + b[None, :, None, None]
    mean = jnp.mean(y, axis=(0, 2, 3), keepdims=True)
    var = jnp.mean((y - mean) ** 2, axis=(0, 2, 3), keepdims=True)
    yn = (y - mean) * jax.lax.rsqrt(var + EPS)
    yn = yn * gamma[None, :, None, None] + beta[None, :, None, None]
    return jnp.maximum(yn, 0.0)


if __name__ == "__main__":
    key = jax.random.PRNGKey(0)
    kx, kw, kb, kg, kbt = jax.random.split(key, 5)

    N, in_c, out_c, H, W = 2, 4, 8, 16, 16
    x = jax.random.normal(kx, (N, in_c, H, W), jnp.float32)
    w = jax.random.normal(kw, (in_c, out_c, 4, 4), jnp.float32) * 0.1   # ConvTranspose2d weight
    b = jax.random.normal(kb, (out_c,), jnp.float32) * 0.1              # ConvTranspose2d bias
    gamma = jax.random.normal(kg, (out_c,), jnp.float32) * 0.5 + 1.0    # BN weight
    beta = jax.random.normal(kbt, (out_c,), jnp.float32) * 0.1          # BN bias

    # f32-MXU path: tight check against the reference.
    y = jax.jit(unet_up_forward)(x, w, b, gamma, beta)
    jax.block_until_ready(y)
    y_ref = unet_up_reference(x, w, b, gamma, beta)
    assert y.shape == (N, out_c, 2 * H, 2 * W), y.shape
    max_err = float(jnp.max(jnp.abs(y - y_ref)))
    assert jnp.allclose(y, y_ref, atol=1e-3, rtol=1e-3), max_err

    # bf16-MXU path (v6e/v7x feedback): same kernels, looser tolerance.
    fwd_bf16 = jax.jit(functools.partial(unet_up_forward, mxu_dtype=jnp.bfloat16))
    y16 = fwd_bf16(x, w, b, gamma, beta)
    jax.block_until_ready(y16)
    err16 = float(jnp.max(jnp.abs(y16 - y_ref)))
    assert math.isfinite(err16) and err16 < 0.25, err16

    print("KERNEL_OK")
</pallas_src>

<mosaic_0001>
module attributes {stable_mosaic.version = 11 : i64} {
  func.func @_convt_stats_kernel(%arg0: i32, %arg1: i32, %arg2: memref<8x128xf32, #tpu.memory_space<vmem>>, %arg3: memref<1x1x10x18x8xf32, #tpu.memory_space<vmem>>, %arg4: memref<2x2x2x2x8x128xf32, #tpu.memory_space<vmem>>, %arg5: memref<2x2x1x1x128x128xf32, #tpu.memory_space<vmem>>, %arg6: memref<8x128xf32, #tpu.memory_space<vmem>>) attributes {dimension_semantics = [#tpu.dimension_semantics<arbitrary>, #tpu.dimension_semantics<arbitrary>], iteration_bounds = array<i64: 2, 2>, scalar_prefetch = 0 : i64, scratch_operands = 0 : i64, tpu.core_type = #tpu.core_type<tc>, window_params = [{pipeline_mode = #tpu.pipeline_mode<synchronous>, transform_indices = @transform_0, window_bounds = array<i64: 8, 128>}, {transform_indices = @transform_1, window_bounds = array<i64: 1, 1, 10, 18, 8>}, {pipeline_mode = #tpu.pipeline_mode<synchronous>, transform_indices = @transform_2, window_bounds = array<i64: 2, 2, 2, 2, 8, 128>}, {transform_indices = @transform_3, window_bounds = array<i64: 2, 2, 1, 1, 128, 128>}, {pipeline_mode = #tpu.pipeline_mode<synchronous>, transform_indices = @transform_4, window_bounds = array<i64: 8, 128>}]} {
    %c0_i32 = arith.constant 0 : i32
    %0 = arith.cmpi eq, %arg0, %c0_i32 : i32
    %c0_i32_0 = arith.constant 0 : i32
    %1 = arith.cmpi eq, %arg1, %c0_i32_0 : i32
    %2 = arith.andi %0, %1 : i1
    %3 = arith.extui %2 : i1 to i32
    %c0_i32_1 = arith.constant 0 : i32
    %4 = arith.cmpi ne, %3, %c0_i32_1 : i32
    scf.if %4 {
      %cst_238 = arith.constant 0.000000e+00 : f32
      %178 = vector.broadcast %cst_238 : f32 to vector<8x128xf32>
      %c0_239 = arith.constant 0 : index
      %c0_240 = arith.constant 0 : index
      %179 = vector.load %arg6[%c0_239, %c0_240] : memref<8x128xf32, #tpu.memory_space<vmem>>, vector<8x128xf32>
      tpu.vector_store %arg6[%c0_239, %c0_240], %178 {strides = array<i32>} : memref<8x128xf32, #tpu.memory_space<vmem>>, vector<8x128xf32>,
    } else {
    }
    %c0 = arith.constant 0 : index
    %c0_2 = arith.constant 0 : index
    %5 = vector.load %arg2[%c0, %c0_2] : memref<8x128xf32, #tpu.memory_space<vmem>>, vector<1x128xf32>
    %cst = arith.constant 0.000000e+00 : f32
    %6 = vector.broadcast %cst : f32 to vector<1x128xf32>
    %cst_3 = arith.constant 0.000000e+00 : f32
    %7 = vector.broadcast %cst_3 : f32 to vector<1x128xf32>
    %cst_4 = arith.constant 0.000000e+00 : f32
    %8 = vector.broadcast %cst_4 : f32 to vector<128x128xf32>
    %c0_5 = arith.constant 0 : index
    %c0_6 = arith.constant 0 : index
    %c0_7 = arith.constant 0 : index
    %c0_8 = arith.constant 0 : index
    %c0_9 = arith.constant 0 : index
    %9 = vector.load %arg3[%c0_5, %c0_6, %c0_7, %c0_8, %c0_9] : memref<1x1x10x18x8xf32, #tpu.memory_space<vmem>>, vector<1x1x8x16x8xf32>
    %10 = vector.shape_cast %9 : vector<1x1x8x16x8xf32> to vector<8x16x8xf32>
    %11 = vector.shape_cast %10 : vector<8x16x8xf32> to vector<128x8xf32>
    %c0_10 = arith.constant 0 : index
    %c0_11 = arith.constant 0 : index
    %c0_12 = arith.constant 0 : index
    %c0_13 = arith.constant 0 : index
    %c0_14 = arith.constant 0 : index
    %c0_15 = arith.constant 0 : index
    %12 = vector.load %arg4[%c0_10, %c0_11, %c0_12, %c0_13, %c0_14, %c0_15] : memref<2x2x2x2x8x128xf32, #tpu.memory_space<vmem>>, vector<1x1x1x1x8x128xf32>
    %13 = vector.shape_cast %12 : vector<1x1x1x1x8x128xf32> to vector<8x128xf32>
    %cst_16 = arith.constant dense<0.000000e+00> : vector<128x128xf32>
    %14 = tpu.matmul %11, %13, %cst_16 {dimension_numbers = #tpu.dot_dimension_numbers<[1], [0], [0], [1], [0, 0, 1, 1], [], []>} : vector<128x8xf32>, vector<8x128xf32>, vector<128x128xf32> -> vector<128x128xf32>
    %15 = arith.addf %8, %14 : vector<128x128xf32>
    %c0_17 = arith.constant 0 : index
    %c0_18 = arith.constant 0 : index
    %c0_19 = arith.constant 0 : index
    %c1 = arith.constant 1 : index
    %c0_20 = arith.constant 0 : index
    %16 = vector.load %arg3[%c0_17, %c0_18, %c0_19, %c1, %c0_20] : memref<1x1x10x18x8xf32, #tpu.memory_space<vmem>>, vector<1x1x8x16x8xf32>
    %17 = vector.shape_cast %16 : vector<1x1x8x16x8xf32> to vector<8x16x8xf32>
    %18 = vector.shape_cast %17 : vector<8x16x8xf32> to vector<128x8xf32>
    %c0_21 = arith.constant 0 : index
    %c0_22 = arith.constant 0 : index
    %c0_23 = arith.constant 0 : index
    %c1_24 = arith.constant 1 : index
    %c0_25 = arith.constant 0 : index
    %c0_26 = arith.constant 0 : index
    %19 = vector.load %arg4[%c0_21, %c0_22, %c0_23, %c1_24, %c0_25, %c0_26] : memref<2x2x2x2x8x128xf32, #tpu.memory_space<vmem>>, vector<1x1x1x1x8x128xf32>
    %20 = vector.shape_cast %19 : vector<1x1x1x1x8x128xf32> to vector<8x128xf32>
    %cst_27 = arith.constant dense<0.000000e+00> : vector<128x128xf32>
    %21 = tpu.matmul %18, %20, %cst_27 {dimension_numbers = #tpu.dot_dimension_numbers<[1], [0], [0], [1], [0, 0, 1, 1], [], []>} : vector<128x8xf32>, vector<8x128xf32>, vector<128x128xf32> -> vector<128x128xf32>
    %22 = arith.addf %15, %21 : vector<128x128xf32>
    %c0_28 = arith.constant 0 : index
    %c0_29 = arith.constant 0 : index
    %c1_30 = arith.constant 1 : index
    %c0_31 = arith.constant 0 : index
    %c0_32 = arith.constant 0 : index
    %23 = vector.load %arg3[%c0_28, %c0_29, %c1_30, %c0_31, %c0_32] : memref<1x1x10x18x8xf32, #tpu.memory_space<vmem>>, vector<1x1x8x16x8xf32>
    %24 = vector.shape_cast %23 : vector<1x1x8x16x8xf32> to vector<8x16x8xf32>
    %25 = vector.shape_cast %24 : vector<8x16x8xf32> to vector<128x8xf32>
    %c0_33 = arith.constant 0 : index
    %c0_34 = arith.constant 0 : index
    %c1_35 = arith.constant 1 : index
    %c0_36 = arith.constant 0 : index
    %c0_37 = arith.constant 0 : index
    %c0_38 = arith.constant 0 : index
    %26 = vector.load %arg4[%c0_33, %c0_34, %c1_35, %c0_36, %c0_37, %c0_38] : memref<2x2x2x2x8x128xf32, #tpu.memory_space<vmem>>, vector<1x1x1x1x8x128xf32>
    %27 = vector.shape_cast %26 : vector<1x1x1x1x8x128xf32> to vector<8x128xf32>
    %cst_39 = arith.constant dense<0.000000e+00> : vector<128x128xf32>
    %28 = tpu.matmul %25, %27, %cst_39 {dimension_numbers = #tpu.dot_dimension_numbers<[1], [0], [0], [1], [0, 0, 1, 1], [], []>} : vector<128x8xf32>, vector<8x128xf32>, vector<128x128xf32> -> vector<128x128xf32>
    %29 = arith.addf %22, %28 : vector<128x128xf32>
    %c0_40 = arith.constant 0 : index
    %c0_41 = arith.constant 0 : index
    %c1_42 = arith.constant 1 : index
    %c1_43 = arith.constant 1 : index
    %c0_44 = arith.constant 0 : index
    %30 = vector.load %arg3[%c0_40, %c0_41, %c1_42, %c1_43, %c0_44] : memref<1x1x10x18x8xf32, #tpu.memory_space<vmem>>, vector<1x1x8x16x8xf32>
    %31 = vector.shape_cast %30 : vector<1x1x8x16x8xf32> to vector<8x16x8xf32>
    %32 = vector.shape_cast %31 : vector<8x16x8xf32> to vector<128x8xf32>
    %c0_45 = arith.constant 0 : index
    %c0_46 = arith.constant 0 : index
    %c1_47 = arith.constant 1 : index
    %c1_48 = arith.constant 1 : index
    %c0_49 = arith.constant 0 : index
    %c0_50 = arith.constant 0 : index
    %33 = vector.load %arg4[%c0_45, %c0_46, %c1_47, %c1_48, %c0_49, %c0_50] : memref<2x2x2x2x8x128xf32, #tpu.memory_space<vmem>>, vector<1x1x1x1x8x128xf32>
    %34 = vector.shape_cast %33 : vector<1x1x1x1x8x128xf32> to vector<8x128xf32>
    %cst_51 = arith.constant dense<0.000000e+00> : vector<128x128xf32>
    %35 = tpu.matmul %32, %34, %cst_51 {dimension_numbers = #tpu.dot_dimension_numbers<[1], [0], [0], [1], [0, 0, 1, 1], [], []>} : vector<128x8xf32>, vector<8x128xf32>, vector<128x128xf32> -> vector<128x128xf32>
    %36 = arith.addf %29, %35 : vector<128x128xf32>
    %37 = vector.broadcast %5 : vector<1x128xf32> to vector<128x128xf32>
    %38 = arith.addf %36, %37 : vector<128x128xf32>
    %c0_52 = arith.constant 0 : index
    %c0_53 = arith.constant 0 : index
    %c0_54 = arith.constant 0 : index
    %c0_55 = arith.constant 0 : index
    %c0_56 = arith.constant 0 : index
    %c0_57 = arith.constant 0 : index
    %39 = vector.load %arg5[%c0_52, %c0_53, %c0_54, %c0_55, %c0_56, %c0_57] : memref<2x2x1x1x128x128xf32, #tpu.memory_space<vmem>>, vector<1x1x1x1x128x128xf32>
    %40 = vector.shape_cast %39 : vector<1x1x1x1x128x128xf32> to vector<128x128xf32>
    %41 = vector.shape_cast %38 : vector<128x128xf32> to vector<1x1x1x1x128x128xf32>
    tpu.vector_store %arg5[%c0_52, %c0_53, %c0_54, %c0_55, %c0_56, %c0_57], %41 {strides = array<i32>} : memref<2x2x1x1x128x128xf32, #tpu.memory_space<vmem>>, vector<1x1x1x1x128x128xf32>,
    %cst_58 = arith.constant dense<0.000000e+00> : vector<128xf32>
    %42 = vector.multi_reduction <add>, %38, %cst_58 [0] : vector<128x128xf32> to vector<128xf32>
    %43 = vector.shape_cast %42 : vector<128xf32> to vector<1x128xf32>
    %44 = arith.addf %6, %43 : vector<1x128xf32>
    %45 = arith.mulf %38, %38 : vector<128x128xf32>
    %cst_59 = arith.constant dense<0.000000e+00> : vector<128xf32>
    %46 = vector.multi_reduction <add>, %45, %cst_59 [0] : vector<128x128xf32> to vector<128xf32>
    %47 = vector.shape_cast %46 : vector<128xf32> to vector<1x128xf32>
    %48 = arith.addf %7, %47 : vector<1x128xf32>
    %cst_60 = arith.constant 0.000000e+00 : f32
    %49 = vector.broadcast %cst_60 : f32 to vector<128x128xf32>
    %c0_61 = arith.constant 0 : index
    %c0_62 = arith.constant 0 : index
    %c0_63 = arith.constant 0 : index
    %c1_64 = arith.constant 1 : index
    %c0_65 = arith.constant 0 : index
    %50 = vector.load %arg3[%c0_61, %c0_62, %c0_63, %c1_64, %c0_65] : memref<1x1x10x18x8xf32, #tpu.memory_space<vmem>>, vector<1x1x8x16x8xf32>
    %51 = vector.shape_cast %50 : vector<1x1x8x16x8xf32> to vector<8x16x8xf32>
    %52 = vector.shape_cast %51 : vector<8x16x8xf32> to vector<128x8xf32>
    %c0_66 = arith.constant 0 : index
    %c1_67 = arith.constant 1 : index
    %c0_68 = arith.constant 0 : index
    %c0_69 = arith.constant 0 : index
    %c0_70 = arith.constant 0 : index
    %c0_71 = arith.constant 0 : index
    %53 = vector.load %arg4[%c0_66, %c1_67, %c0_68, %c0_69, %c0_70, %c0_71] : memref<2x2x2x2x8x128xf32, #tpu.memory_space<vmem>>, vector<1x1x1x1x8x128xf32>
    %54 = vector.shape_cast %53 : vector<1x1x1x1x8x128xf32> to vector<8x128xf32>
    %cst_72 = arith.constant dense<0.000000e+00> : vector<128x128xf32>
    %55 = tpu.matmul %52, %54, %cst_72 {dimension_numbers = #tpu.dot_dimension_numbers<[1], [0], [0], [1], [0, 0, 1, 1], [], []>} : vector<128x8xf32>, vector<8x128xf32>, vector<128x128xf32> -> vector<128x128xf32>
    %56 = arith.addf %49, %55 : vector<128x128xf32>
    %c0_73 = arith.constant 0 : index
    %c0_74 = arith.constant 0 : index
    %c0_75 = arith.constant 0 : index
    %c2 = arith.constant 2 : index
    %c0_76 = arith.constant 0 : index
    %57 = vector.load %arg3[%c0_73, %c0_74, %c0_75, %c2, %c0_76] : memref<1x1x10x18x8xf32, #tpu.memory_space<vmem>>, vector<1x1x8x16x8xf32>
    %58 = vector.shape_cast %57 : vector<1x1x8x16x8xf32> to vector<8x16x8xf32>
    %59 = vector.shape_cast %58 : vector<8x16x8xf32> to vector<128x8xf32>
    %c0_77 = arith.constant 0 : index
    %c1_78 = arith.constant 1 : index
    %c0_79 = arith.constant 0 : index
    %c1_80 = arith.constant 1 : index
    %c0_81 = arith.constant 0 : index
    %c0_82 = arith.constant 0 : index
    %60 = vector.load %arg4[%c0_77, %c1_78, %c0_79, %c1_80, %c0_81, %c0_82] : memref<2x2x2x2x8x128xf32, #tpu.memory_space<vmem>>, vector<1x1x1x1x8x128xf32>
    %61 = vector.shape_cast %60 : vector<1x1x1x1x8x128xf32> to vector<8x128xf32>
    %cst_83 = arith.constant dense<0.000000e+00> : vector<128x128xf32>
    %62 = tpu.matmul %59, %61, %cst_83 {dimension_numbers = #tpu.dot_dimension_numbers<[1], [0], [0], [1], [0, 0, 1, 1], [], []>} : vector<128x8xf32>, vector<8x128xf32>, vector<128x128xf32> -> vector<128x128xf32>
    %63 = arith.addf %56, %62 : vector<128x128xf32>
    %c0_84 = arith.constant 0 : index
    %c0_85 = arith.constant 0 : index
    %c1_86 = arith.constant 1 : index
    %c1_87 = arith.constant 1 : index
    %c0_88 = arith.constant 0 : index
    %64 = vector.load %arg3[%c0_84, %c0_85, %c1_86, %c1_87, %c0_88] : memref<1x1x10x18x8xf32, #tpu.memory_space<vmem>>, vector<1x1x8x16x8xf32>
    %65 = vector.shape_cast %64 : vector<1x1x8x16x8xf32> to vector<8x16x8xf32>
    %66 = vector.shape_cast %65 : vector<8x16x8xf32> to vector<128x8xf32>
    %c0_89 = arith.constant 0 : index
    %c1_90 = arith.constant 1 : index
    %c1_91 = arith.constant 1 : index
    %c0_92 = arith.constant 0 : index
    %c0_93 = arith.constant 0 : index
    %c0_94 = arith.constant 0 : index
    %67 = vector.load %arg4[%c0_89, %c1_90, %c1_91, %c0_92, %c0_93, %c0_94] : memref<2x2x2x2x8x128xf32, #tpu.memory_space<vmem>>, vector<1x1x1x1x8x128xf32>
    %68 = vector.shape_cast %67 : vector<1x1x1x1x8x128xf32> to vector<8x128xf32>
    %cst_95 = arith.constant dense<0.000000e+00> : vector<128x128xf32>
    %69 = tpu.matmul %66, %68, %cst_95 {dimension_numbers = #tpu.dot_dimension_numbers<[1], [0], [0], [1], [0, 0, 1, 1], [], []>} : vector<128x8xf32>, vector<8x128xf32>, vector<128x128xf32> -> vector<128x128xf32>
    %70 = arith.addf %63, %69 : vector<128x128xf32>
    %c0_96 = arith.constant 0 : index
    %c0_97 = arith.constant 0 : index
    %c1_98 = arith.constant 1 : index
    %c2_99 = arith.constant 2 : index
    %c0_100 = arith.constant 0 : index
    %71 = vector.load %arg3[%c0_96, %c0_97, %c1_98, %c2_99, %c0_100] : memref<1x1x10x18x8xf32, #tpu.memory_space<vmem>>, vector<1x1x8x16x8xf32>
    %72 = vector.shape_cast %71 : vector<1x1x8x16x8xf32> to vector<8x16x8xf32>
    %73 = vector.shape_cast %72 : vector<8x16x8xf32> to vector<128x8xf32>
    %c0_101 = arith.constant 0 : index
    %c1_102 = arith.constant 1 : index
    %c1_103 = arith.constant 1 : index
    %c1_104 = arith.constant 1 : index
    %c0_105 = arith.constant 0 : index
    %c0_106 = arith.constant 0 : index
    %74 = vector.load %arg4[%c0_101, %c1_102, %c1_103, %c1_104, %c0_105, %c0_106] : memref<2x2x2x2x8x128xf32, #tpu.memory_space<vmem>>, vector<1x1x1x1x8x128xf32>
    %75 = vector.shape_cast %74 : vector<1x1x1x1x8x128xf32> to vector<8x128xf32>
    %cst_107 = arith.constant dense<0.000000e+00> : vector<128x128xf32>
    %76 = tpu.matmul %73, %75, %cst_107 {dimension_numbers = #tpu.dot_dimension_numbers<[1], [0], [0], [1], [0, 0, 1, 1], [], []>} : vector<128x8xf32>, vector<8x128xf32>, vector<128x128xf32> -> vector<128x128xf32>
    %77 = arith.addf %70, %76 : vector<128x128xf32>
    %78 = vector.broadcast %5 : vector<1x128xf32> to vector<128x128xf32>
    %79 = arith.addf %77, %78 : vector<128x128xf32>
    %c0_108 = arith.constant 0 : index
    %c1_109 = arith.constant 1 : index
    %c0_110 = arith.constant 0 : index
    %c0_111 = arith.constant 0 : index
    %c0_112 = arith.constant 0 : index
    %c0_113 = arith.constant 0 : index
    %80 = vector.load %arg5[%c0_108, %c1_109, %c0_110, %c0_111, %c0_112, %c0_113] : memref<2x2x1x1x128x128xf32, #tpu.memory_space<vmem>>, vector<1x1x1x1x128x128xf32>
    %81 = vector.shape_cast %80 : vector<1x1x1x1x128x128xf32> to vector<128x128xf32>
    %82 = vector.shape_cast %79 : vector<128x128xf32> to vector<1x1x1x1x128x128xf32>
    tpu.vector_store %arg5[%c0_108, %c1_109, %c0_110, %c0_111, %c0_112, %c0_113], %82 {strides = array<i32>} : memref<2x2x1x1x128x128xf32, #tpu.memory_space<vmem>>, vector<1x1x1x1x128x128xf32>,
    %cst_114 = arith.constant dense<0.000000e+00> : vector<128xf32>
    %83 = vector.multi_reduction <add>, %79, %cst_114 [0] : vector<128x128xf32> to vector<128xf32>
    %84 = vector.shape_cast %83 : vector<128xf32> to vector<1x128xf32>
    %85 = arith.addf %44, %84 : vector<1x128xf32>
    %86 = arith.mulf %79, %79 : vector<128x128xf32>
    %cst_115 = arith.constant dense<0.000000e+00> : vector<128xf32>
    %87 = vector.multi_reduction <add>, %86, %cst_115 [0] : vector<128x128xf32> to vector<128xf32>
    %88 = vector.shape_cast %87 : vector<128xf32> to vector<1x128xf32>
    %89 = arith.addf %48, %88 : vector<1x128xf32>
    %cst_116 = arith.constant 0.000000e+00 : f32
    %90 = vector.broadcast %cst_116 : f32 to vector<128x128xf32>
    %c0_117 = arith.constant 0 : index
    %c0_118 = arith.constant 0 : index
    %c1_119 = arith.constant 1 : index
    %c0_120 = arith.constant 0 : index
    %c0_121 = arith.constant 0 : index
    %91 = vector.load %arg3[%c0_117, %c0_118, %c1_119, %c0_120, %c0_121] : memref<1x1x10x18x8xf32, #tpu.memory_space<vmem>>, vector<1x1x8x16x8xf32>
    %92 = vector.shape_cast %91 : vector<1x1x8x16x8xf32> to vector<8x16x8xf32>
    %93 = vector.shape_cast %92 : vector<8x16x8xf32> to vector<128x8xf32>
    %c1_122 = arith.constant 1 : index
    %c0_123 = arith.constant 0 : index
    %c0_124 = arith.constant 0 : index
    %c0_125 = arith.constant 0 : index
    %c0_126 = arith.constant 0 : index
    %c0_127 = arith.constant 0 : index
    %94 = vector.load %arg4[%c1_122, %c0_123, %c0_124, %c0_125, %c0_126, %c0_127] : memref<2x2x2x2x8x128xf32, #tpu.memory_space<vmem>>, vector<1x1x1x1x8x128xf32>
    %95 = vector.shape_cast %94 : vector<1x1x1x1x8x128xf32> to vector<8x128xf32>
    %cst_128 = arith.constant dense<0.000000e+00> : vector<128x128xf32>
    %96 = tpu.matmul %93, %95, %cst_128 {dimension_numbers = #tpu.dot_dimension_numbers<[1], [0], [0], [1], [0, 0, 1, 1], [], []>} : vector<128x8xf32>, vector<8x128xf32>, vector<128x128xf32> -> vector<128x128xf32>
    %97 = arith.addf %90, %96 : vector<128x128xf32>
    %c0_129 = arith.constant 0 : index
    %c0_130 = arith.constant 0 : index
    %c1_131 = arith.constant 1 : index
    %c1_132 = arith.constant 1 : index
    %c0_133 = arith.constant 0 : index
    %98 = vector.load %arg3[%c0_129, %c0_130, %c1_131, %c1_132, %c0_133] : memref<1x1x10x18x8xf32, #tpu.memory_space<vmem>>, vector<1x1x8x16x8xf32>
    %99 = vector.shape_cast %98 : vector<1x1x8x16x8xf32> to vector<8x16x8xf32>
    %100 = vector.shape_cast %99 : vector<8x16x8xf32> to vector<128x8xf32>
    %c1_134 = arith.constant 1 : index
    %c0_135 = arith.constant 0 : index
    %c0_136 = arith.constant 0 : index
    %c1_137 = arith.constant 1 : index
    %c0_138 = arith.constant 0 : index
    %c0_139 = arith.constant 0 : index
    %101 = vector.load %arg4[%c1_134, %c0_135, %c0_136, %c1_137, %c0_138, %c0_139] : memref<2x2x2x2x8x128xf32, #tpu.memory_space<vmem>>, vector<1x1x1x1x8x128xf32>
    %102 = vector.shape_cast %101 : vector<1x1x1x1x8x128xf32> to vector<8x128xf32>
    %cst_140 = arith.constant dense<0.000000e+00> : vector<128x128xf32>
    %103 = tpu.matmul %100, %102, %cst_140 {dimension_numbers = #tpu.dot_dimension_numbers<[1], [0], [0], [1], [0, 0, 1, 1], [], []>} : vector<128x8xf32>, vector<8x128xf32>, vector<128x128xf32> -> vector<128x128xf32>
    %104 = arith.addf %97, %103 : vector<128x128xf32>
    %c0_141 = arith.constant 0 : index
    %c0_142 = arith.constant 0 : index
    %c2_143 = arith.constant 2 : index
    %c0_144 = arith.constant 0 : index
    %c0_145 = arith.constant 0 : index
    %105 = vector.load %arg3[%c0_141, %c0_142, %c2_143, %c0_144, %c0_145] : memref<1x1x10x18x8xf32, #tpu.memory_space<vmem>>, vector<1x1x8x16x8xf32>
    %106 = vector.shape_cast %105 : vector<1x1x8x16x8xf32> to vector<8x16x8xf32>
    %107 = vector.shape_cast %106 : vector<8x16x8xf32> to vector<128x8xf32>
    %c1_146 = arith.constant 1 : index
    %c0_147 = arith.constant 0 : index
    %c1_148 = arith.constant 1 : index
    %c0_149 = arith.constant 0 : index
    %c0_150 = arith.constant 0 : index
    %c0_151 = arith.constant 0 : index
    %108 = vector.load %arg4[%c1_146, %c0_147, %c1_148, %c0_149, %c0_150, %c0_151] : memref<2x2x2x2x8x128xf32, #tpu.memory_space<vmem>>, vector<1x1x1x1x8x128xf32>
    %109 = vector.shape_cast %108 : vector<1x1x1x1x8x128xf32> to vector<8x128xf32>
    %cst_152 = arith.constant dense<0.000000e+00> : vector<128x128xf32>
    %110 = tpu.matmul %107, %109, %cst_152 {dimension_numbers = #tpu.dot_dimension_numbers<[1], [0], [0], [1], [0, 0, 1, 1], [], []>} : vector<128x8xf32>, vector<8x128xf32>, vector<128x128xf32> -> vector<128x128xf32>
    %111 = arith.addf %104, %110 : vector<128x128xf32>
    %c0_153 = arith.constant 0 : index
    %c0_154 = arith.constant 0 : index
    %c2_155 = arith.constant 2 : index
    %c1_156 = arith.constant 1 : index
    %c0_157 = arith.constant 0 : index
    %112 = vector.load %arg3[%c0_153, %c0_154, %c2_155, %c1_156, %c0_157] : memref<1x1x10x18x8xf32, #tpu.memory_space<vmem>>, vector<1x1x8x16x8xf32>
    %113 = vector.shape_cast %112 : vector<1x1x8x16x8xf32> to vector<8x16x8xf32>
    %114 = vector.shape_cast %113 : vector<8x16x8xf32> to vector<128x8xf32>
    %c1_158 = arith.constant 1 : index
    %c0_159 = arith.constant 0 : index
    %c1_160 = arith.constant 1 : index
    %c1_161 = arith.constant 1 : index
    %c0_162 = arith.constant 0 : index
    %c0_163 = arith.constant 0 : index
    %115 = vector.load %arg4[%c1_158, %c0_159, %c1_160, %c1_161, %c0_162, %c0_163] : memref<2x2x2x2x8x128xf32, #tpu.memory_space<vmem>>, vector<1x1x1x1x8x128xf32>
    %116 = vector.shape_cast %115 : vector<1x1x1x1x8x128xf32> to vector<8x128xf32>
    %cst_164 = arith.constant dense<0.000000e+00> : vector<128x128xf32>
    %117 = tpu.matmul %114, %116, %cst_164 {dimension_numbers = #tpu.dot_dimension_numbers<[1], [0], [0], [1], [0, 0, 1, 1], [], []>} : vector<128x8xf32>, vector<8x128xf32>, vector<128x128xf32> -> vector<128x128xf32>
    %118 = arith.addf %111, %117 : vector<128x128xf32>
    %119 = vector.broadcast %5 : vector<1x128xf32> to vector<128x128xf32>
    %120 = arith.addf %118, %119 : vector<128x128xf32>
    %c1_165 = arith.constant 1 : index
    %c0_166 = arith.constant 0 : index
    %c0_167 = arith.constant 0 : index
    %c0_168 = arith.constant 0 : index
    %c0_169 = arith.constant 0 : index
    %c0_170 = arith.constant 0 : index
    %121 = vector.load %arg5[%c1_165, %c0_166, %c0_167, %c0_168, %c0_169, %c0_170] : memref<2x2x1x1x128x128xf32, #tpu.memory_space<vmem>>, vector<1x1x1x1x128x128xf32>
    %122 = vector.shape_cast %121 : vector<1x1x1x1x128x128xf32> to vector<128x128xf32>
    %123 = vector.shape_cast %120 : vector<128x128xf32> to vector<1x1x1x1x128x128xf32>
    tpu.vector_store %arg5[%c1_165, %c0_166, %c0_167, %c0_168, %c0_169, %c0_170], %123 {strides = array<i32>} : memref<2x2x1x1x128x128xf32, #tpu.memory_space<vmem>>, vector<1x1x1x1x128x128xf32>,
    %cst_171 = arith.constant dense<0.000000e+00> : vector<128xf32>
    %124 = vector.multi_reduction <add>, %120, %cst_171 [0] : vector<128x128xf32> to vector<128xf32>
    %125 = vector.shape_cast %124 : vector<128xf32> to vector<1x128xf32>
    %126 = arith.addf %85, %125 : vector<1x128xf32>
    %127 = arith.mulf %120, %120 : vector<128x128xf32>
    %cst_172 = arith.constant dense<0.000000e+00> : vector<128xf32>
    %128 = vector.multi_reduction <add>, %127, %cst_172 [0] : vector<128x128xf32> to vector<128xf32>
    %129 = vector.shape_cast %128 : vector<128xf32> to vector<1x128xf32>
    %130 = arith.addf %89, %129 : vector<1x128xf32>
    %cst_173 = arith.constant 0.000000e+00 : f32
    %131 = vector.broadcast %cst_173 : f32 to vector<128x128xf32>
    %c0_174 = arith.constant 0 : index
    %c0_175 = arith.constant 0 : index
    %c1_176 = arith.constant 1 : index
    %c1_177 = arith.constant 1 : index
    %c0_178 = arith.constant 0 : index
    %132 = vector.load %arg3[%c0_174, %c0_175, %c1_176, %c1_177, %c0_178] : memref<1x1x10x18x8xf32, #tpu.memory_space<vmem>>, vector<1x1x8x16x8xf32>
    %133 = vector.shape_cast %132 : vector<1x1x8x16x8xf32> to vector<8x16x8xf32>
    %134 = vector.shape_cast %133 : vector<8x16x8xf32> to vector<128x8xf32>
    %c1_179 = arith.constant 1 : index
    %c1_180 = arith.constant 1 : index
    %c0_181 = arith.constant 0 : index
    %c0_182 = arith.constant 0 : index
    %c0_183 = arith.constant 0 : index
    %c0_184 = arith.constant 0 : index
    %135 = vector.load %arg4[%c1_179, %c1_180, %c0_181, %c0_182, %c0_183, %c0_184] : memref<2x2x2x2x8x128xf32, #tpu.memory_space<vmem>>, vector<1x1x1x1x8x128xf32>
    %136 = vector.shape_cast %135 : vector<1x1x1x1x8x128xf32> to vector<8x128xf32>
    %cst_185 = arith.constant dense<0.000000e+00> : vector<128x128xf32>
    %137 = tpu.matmul %134, %136, %cst_185 {dimension_numbers = #tpu.dot_dimension_numbers<[1], [0], [0], [1], [0, 0, 1, 1], [], []>} : vector<128x8xf32>, vector<8x128xf32>, vector<128x128xf32> -> vector<128x128xf32>
    %138 = arith.addf %131, %137 : vector<128x128xf32>
    %c0_186 = arith.constant 0 : index
    %c0_187 = arith.constant 0 : index
    %c1_188 = arith.constant 1 : index
    %c2_189 = arith.constant 2 : index
    %c0_190 = arith.constant 0 : index
    %139 = vector.load %arg3[%c0_186, %c0_187, %c1_188, %c2_189, %c0_190] : memref<1x1x10x18x8xf32, #tpu.memory_space<vmem>>, vector<1x1x8x16x8xf32>
    %140 = vector.shape_cast %139 : vector<1x1x8x16x8xf32> to vector<8x16x8xf32>
    %141 = vector.shape_cast %140 : vector<8x16x8xf32> to vector<128x8xf32>
    %c1_191 = arith.constant 1 : index
    %c1_192 = arith.constant 1 : index
    %c0_193 = arith.constant 0 : index
    %c1_194 = arith.constant 1 : index
    %c0_195 = arith.constant 0 : index
    %c0_196 = arith.constant 0 : index
    %142 = vector.load %arg4[%c1_191, %c1_192, %c0_193, %c1_194, %c0_195, %c0_196] : memref<2x2x2x2x8x128xf32, #tpu.memory_space<vmem>>, vector<1x1x1x1x8x128xf32>
    %143 = vector.shape_cast %142 : vector<1x1x1x1x8x128xf32> to vector<8x128xf32>
    %cst_197 = arith.constant dense<0.000000e+00> : vector<128x128xf32>
    %144 = tpu.matmul %141, %143, %cst_197 {dimension_numbers = #tpu.dot_dimension_numbers<[1], [0], [0], [1], [0, 0, 1, 1], [], []>} : vector<128x8xf32>, vector<8x128xf32>, vector<128x128xf32> -> vector<128x128xf32>
    %145 = arith.addf %138, %144 : vector<128x128xf32>
    %c0_198 = arith.constant 0 : index
    %c0_199 = arith.constant 0 : index
    %c2_200 = arith.constant 2 : index
    %c1_201 = arith.constant 1 : index
    %c0_202 = arith.constant 0 : index
    %146 = vector.load %arg3[%c0_198, %c0_199, %c2_200, %c1_201, %c0_202] : memref<1x1x10x18x8xf32, #tpu.memory_space<vmem>>, vector<1x1x8x16x8xf32>
    %147 = vector.shape_cast %146 : vector<1x1x8x16x8xf32> to vector<8x16x8xf32>
    %148 = vector.shape_cast %147 : vector<8x16x8xf32> to vector<128x8xf32>
    %c1_203 = arith.constant 1 : index
    %c1_204 = arith.constant 1 : index
    %c1_205 = arith.constant 1 : index
    %c0_206 = arith.constant 0 : index
    %c0_207 = arith.constant 0 : index
    %c0_208 = arith.constant 0 : index
    %149 = vector.load %arg4[%c1_203, %c1_204, %c1_205, %c0_206, %c0_207, %c0_208] : memref<2x2x2x2x8x128xf32, #tpu.memory_space<vmem>>, vector<1x1x1x1x8x128xf32>
    %150 = vector.shape_cast %149 : vector<1x1x1x1x8x128xf32> to vector<8x128xf32>
    %cst_209 = arith.constant dense<0.000000e+00> : vector<128x128xf32>
    %151 = tpu.matmul %148, %150, %cst_209 {dimension_numbers = #tpu.dot_dimension_numbers<[1], [0], [0], [1], [0, 0, 1, 1], [], []>} : vector<128x8xf32>, vector<8x128xf32>, vector<128x128xf32> -> vector<128x128xf32>
    %152 = arith.addf %145, %151 : vector<128x128xf32>
    %c0_210 = arith.constant 0 : index
    %c0_211 = arith.constant 0 : index
    %c2_212 = arith.constant 2 : index
    %c2_213 = arith.constant 2 : index
    %c0_214 = arith.constant 0 : index
    %153 = vector.load %arg3[%c0_210, %c0_211, %c2_212, %c2_213, %c0_214] : memref<1x1x10x18x8xf32, #tpu.memory_space<vmem>>, vector<1x1x8x16x8xf32>
    %154 = vector.shape_cast %153 : vector<1x1x8x16x8xf32> to vector<8x16x8xf32>
    %155 = vector.shape_cast %154 : vector<8x16x8xf32> to vector<128x8xf32>
    %c1_215 = arith.constant 1 : index
    %c1_216 = arith.constant 1 : index
    %c1_217 = arith.constant 1 : index
    %c1_218 = arith.constant 1 : index
    %c0_219 = arith.constant 0 : index
    %c0_220 = arith.constant 0 : index
    %156 = vector.load %arg4[%c1_215, %c1_216, %c1_217, %c1_218, %c0_219, %c0_220] : memref<2x2x2x2x8x128xf32, #tpu.memory_space<vmem>>, vector<1x1x1x1x8x128xf32>
    %157 = vector.shape_cast %156 : vector<1x1x1x1x8x128xf32> to vector<8x128xf32>
    %cst_221 = arith.constant dense<0.000000e+00> : vector<128x128xf32>
    %158 = tpu.matmul %155, %157, %cst_221 {dimension_numbers = #tpu.dot_dimension_numbers<[1], [0], [0], [1], [0, 0, 1, 1], [], []>} : vector<128x8xf32>, vector<8x128xf32>, vector<128x128xf32> -> vector<128x128xf32>
    %159 = arith.addf %152, %158 : vector<128x128xf32>
    %160 = vector.broadcast %5 : vector<1x128xf32> to vector<128x128xf32>
    %161 = arith.addf %159, %160 : vector<128x128xf32>
    %c1_222 = arith.constant 1 : index
    %c1_223 = arith.constant 1 : index
    %c0_224 = arith.constant 0 : index
    %c0_225 = arith.constant 0 : index
    %c0_226 = arith.constant 0 : index
    %c0_227 = arith.constant 0 : index
    %162 = vector.load %arg5[%c1_222, %c1_223, %c0_224, %c0_225, %c0_226, %c0_227] : memref<2x2x1x1x128x128xf32, #tpu.memory_space<vmem>>, vector<1x1x1x1x128x128xf32>
    %163 = vector.shape_cast %162 : vector<1x1x1x1x128x128xf32> to vector<128x128xf32>
    %164 = vector.shape_cast %161 : vector<128x128xf32> to vector<1x1x1x1x128x128xf32>
    tpu.vector_store %arg5[%c1_222, %c1_223, %c0_224, %c0_225, %c0_226, %c0_227], %164 {strides = array<i32>} : memref<2x2x1x1x128x128xf32, #tpu.memory_space<vmem>>, vector<1x1x1x1x128x128xf32>,
    %cst_228 = arith.constant dense<0.000000e+00> : vector<128xf32>
    %165 = vector.multi_reduction <add>, %161, %cst_228 [0] : vector<128x128xf32> to vector<128xf32>
    %166 = vector.shape_cast %165 : vector<128xf32> to vector<1x128xf32>
    %167 = arith.addf %126, %166 : vector<1x128xf32>
    %168 = arith.mulf %161, %161 : vector<128x128xf32>
    %cst_229 = arith.constant dense<0.000000e+00> : vector<128xf32>
    %169 = vector.multi_reduction <add>, %168, %cst_229 [0] : vector<128x128xf32> to vector<128xf32>
    %170 = vector.shape_cast %169 : vector<128xf32> to vector<1x128xf32>
    %171 = arith.addf %130, %170 : vector<1x128xf32>
    %c0_230 = arith.constant 0 : index
    %c0_231 = arith.constant 0 : index
    %172 = vector.load %arg6[%c0_230, %c0_231] : memref<8x128xf32, #tpu.memory_space<vmem>>, vector<1x128xf32>
    %173 = arith.addf %172, %167 : vector<1x128xf32>
    %c0_232 = arith.constant 0 : index
    %c0_233 = arith.constant 0 : index
    %174 = vector.load %arg6[%c0_232, %c0_233] : memref<8x128xf32, #tpu.memory_space<vmem>>, vector<1x128xf32>
    tpu.vector_store %arg6[%c0_232, %c0_233], %173 {strides = array<i32>} : memref<8x128xf32, #tpu.memory_space<vmem>>, vector<1x128xf32>,
    %c1_234 = arith.constant 1 : index
    %c0_235 = arith.constant 0 : index
    %175 = vector.load %arg6[%c1_234, %c0_235] : memref<8x128xf32, #tpu.memory_space<vmem>>, vector<1x128xf32>
    %176 = arith.addf %175, %171 : vector<1x128xf32>
    %c1_236 = arith.constant 1 : index
    %c0_237 = arith.constant 0 : index
    %177 = vector.load %arg6[%c1_236, %c0_237] : memref<8x128xf32, #tpu.memory_space<vmem>>, vector<1x128xf32>
    tpu.vector_store %arg6[%c1_236, %c0_237], %176 {strides = array<i32>} : memref<8x128xf32, #tpu.memory_space<vmem>>, vector<1x128xf32>,
    return
  }
  func.func @transform_0(%arg0: i32, %arg1: i32) -> (i32, i32) {
    %c0_i32 = arith.constant 0 : i32
    %c0_i32_0 = arith.constant 0 : i32
    %c0_i32_1 = arith.constant 0 : i32
    return %c0_i32, %c0_i32_0 : i32, i32
  }
  func.func @transform_1(%arg0: i32, %arg1: i32) -> (i32, i32, i32, i32, i32) {
    %c0_i32 = arith.constant 0 : i32
    %c0_i32_0 = arith.constant 0 : i32
    %c0_i32_1 = arith.constant 0 : i32
    %c0_i32_2 = arith.constant 0 : i32
    return %arg0, %arg1, %c0_i32, %c0_i32_0, %c0_i32_1 : i32, i32, i32, i32, i32
  }
  func.func @transform_2(%arg0: i32, %arg1: i32) -> (i32, i32, i32, i32, i32, i32) {
    %c0_i32 = arith.constant 0 : i32
    %c0_i32_0 = arith.constant 0 : i32
    %c0_i32_1 = arith.constant 0 : i32
    %c0_i32_2 = arith.constant 0 : i32
    %c0_i32_3 = arith.constant 0 : i32
    %c0_i32_4 = arith.constant 0 : i32
    %c0_i32_5 = arith.constant 0 : i32
    return %c0_i32, %c0_i32_0, %c0_i32_1, %c0_i32_2, %c0_i32_3, %c0_i32_4 : i32, i32, i32, i32, i32, i32
  }
  func.func @transform_3(%arg0: i32, %arg1: i32) -> (i32, i32, i32, i32, i32, i32) {
    %c0_i32 = arith.constant 0 : i32
    %c0_i32_0 = arith.constant 0 : i32
    %c0_i32_1 = arith.constant 0 : i32
    %c0_i32_2 = arith.constant 0 : i32
    %c0_i32_3 = arith.constant 0 : i32
    return %c0_i32, %c0_i32_0, %arg0, %arg1, %c0_i32_1, %c0_i32_2 : i32, i32, i32, i32, i32, i32
  }
  func.func @transform_4(%arg0: i32, %arg1: i32) -> (i32, i32) {
    %c0_i32 = arith.constant 0 : i32
    %c0_i32_0 = arith.constant 0 : i32
    %c0_i32_1 = arith.constant 0 : i32
    return %c0_i32, %c0_i32_0 : i32, i32
  }
}

module attributes {stable_mosaic.version = 11 : i64} {
  func.func @_bn_relu_kernel(%arg0: i32, %arg1: i32, %arg2: memref<8x128xf32, #tpu.memory_space<vmem>>, %arg3: memref<2x2x1x1x128x128xf32, #tpu.memory_space<vmem>>, %arg4: memref<2x2x1x1x128x128xf32, #tpu.memory_space<vmem>>) attributes {dimension_semantics = [#tpu.dimension_semantics<parallel>, #tpu.dimension_semantics<parallel>], iteration_bounds = array<i64: 2, 2>, scalar_prefetch = 0 : i64, scratch_operands = 0 : i64, tpu.core_type = #tpu.core_type<tc>, window_params = [{pipeline_mode = #tpu.pipeline_mode<synchronous>, transform_indices = @transform_0, window_bounds = array<i64: 8, 128>}, {transform_indices = @transform_1, window_bounds = array<i64: 2, 2, 1, 1, 128, 128>}, {transform_indices = @transform_2, window_bounds = array<i64: 2, 2, 1, 1, 128, 128>}]} {
    %c0 = arith.constant 0 : index
    %c0_0 = arith.constant 0 : index
    %0 = vector.load %arg2[%c0, %c0_0] : memref<8x128xf32, #tpu.memory_space<vmem>>, vector<1x128xf32>
    %c1 = arith.constant 1 : index
    %c0_1 = arith.constant 0 : index
    %1 = vector.load %arg2[%c1, %c0_1] : memref<8x128xf32, #tpu.memory_space<vmem>>, vector<1x128xf32>
    %c0_2 = arith.constant 0 : index
    %c0_3 = arith.constant 0 : index
    %c0_4 = arith.constant 0 : index
    %c0_5 = arith.constant 0 : index
    %c0_6 = arith.constant 0 : index
    %c0_7 = arith.constant 0 : index
    %2 = vector.load %arg3[%c0_2, %c0_3, %c0_4, %c0_5, %c0_6, %c0_7] : memref<2x2x1x1x128x128xf32, #tpu.memory_space<vmem>>, vector<1x1x1x1x128x128xf32>
    %3 = vector.shape_cast %2 : vector<1x1x1x1x128x128xf32> to vector<128x128xf32>
    %4 = vector.broadcast %0 : vector<1x128xf32> to vector<128x128xf32>
    %5 = arith.mulf %3, %4 : vector<128x128xf32>
    %6 = vector.broadcast %1 : vector<1x128xf32> to vector<128x128xf32>
    %7 = arith.addf %5, %6 : vector<128x128xf32>
    %cst = arith.constant 0.000000e+00 : f32
    %8 = vector.broadcast %cst : f32 to vector<128x128xf32>
    %9 = arith.maximumf %7, %8 : vector<128x128xf32>
    %c0_8 = arith.constant 0 : index
    %c0_9 = arith.constant 0 : index
    %c0_10 = arith.constant 0 : index
    %c0_11 = arith.constant 0 : index
    %c0_12 = arith.constant 0 : index
    %c0_13 = arith.constant 0 : index
    %10 = vector.load %arg4[%c0_8, %c0_9, %c0_10, %c0_11, %c0_12, %c0_13] : memref<2x2x1x1x128x128xf32, #tpu.memory_space<vmem>>, vector<1x1x1x1x128x128xf32>
    %11 = vector.shape_cast %10 : vector<1x1x1x1x128x128xf32> to vector<128x128xf32>
    %12 = vector.shape_cast %9 : vector<128x128xf32> to vector<1x1x1x1x128x128xf32>
    tpu.vector_store %arg4[%c0_8, %c0_9, %c0_10, %c0_11, %c0_12, %c0_13], %12 {strides = array<i32>} : memref<2x2x1x1x128x128xf32, #tpu.memory_space<vmem>>, vector<1x1x1x1x128x128xf32>,
    %c0_14 = arith.constant 0 : index
    %c1_15 = arith.constant 1 : index
    %c0_16 = arith.constant 0 : index
    %c0_17 = arith.constant 0 : index
    %c0_18 = arith.constant 0 : index
    %c0_19 = arith.constant 0 : index
    %13 = vector.load %arg3[%c0_14, %c1_15, %c0_16, %c0_17, %c0_18, %c0_19] : memref<2x2x1x1x128x128xf32, #tpu.memory_space<vmem>>, vector<1x1x1x1x128x128xf32>
    %14 = vector.shape_cast %13 : vector<1x1x1x1x128x128xf32> to vector<128x128xf32>
    %15 = vector.broadcast %0 : vector<1x128xf32> to vector<128x128xf32>
    %16 = arith.mulf %14, %15 : vector<128x128xf32>
    %17 = vector.broadcast %1 : vector<1x128xf32> to vector<128x128xf32>
    %18 = arith.addf %16, %17 : vector<128x128xf32>
    %cst_20 = arith.constant 0.000000e+00 : f32
    %19 = vector.broadcast %cst_20 : f32 to vector<128x128xf32>
    %20 = arith.maximumf %18, %19 : vector<128x128xf32>
    %c0_21 = arith.constant 0 : index
    %c1_22 = arith.constant 1 : index
    %c0_23 = arith.constant 0 : index
    %c0_24 = arith.constant 0 : index
    %c0_25 = arith.constant 0 : index
    %c0_26 = arith.constant 0 : index
    %21 = vector.load %arg4[%c0_21, %c1_22, %c0_23, %c0_24, %c0_25, %c0_26] : memref<2x2x1x1x128x128xf32, #tpu.memory_space<vmem>>, vector<1x1x1x1x128x128xf32>
    %22 = vector.shape_cast %21 : vector<1x1x1x1x128x128xf32> to vector<128x128xf32>
    %23 = vector.shape_cast %20 : vector<128x128xf32> to vector<1x1x1x1x128x128xf32>
    tpu.vector_store %arg4[%c0_21, %c1_22, %c0_23, %c0_24, %c0_25, %c0_26], %23 {strides = array<i32>} : memref<2x2x1x1x128x128xf32, #tpu.memory_space<vmem>>, vector<1x1x1x1x128x128xf32>,
    %c1_27 = arith.constant 1 : index
    %c0_28 = arith.constant 0 : index
    %c0_29 = arith.constant 0 : index
    %c0_30 = arith.constant 0 : index
    %c0_31 = arith.constant 0 : index
    %c0_32 = arith.constant 0 : index
    %24 = vector.load %arg3[%c1_27, %c0_28, %c0_29, %c0_30, %c0_31, %c0_32] : memref<2x2x1x1x128x128xf32, #tpu.memory_space<vmem>>, vector<1x1x1x1x128x128xf32>
    %25 = vector.shape_cast %24 : vector<1x1x1x1x128x128xf32> to vector<128x128xf32>
    %26 = vector.broadcast %0 : vector<1x128xf32> to vector<128x128xf32>
    %27 = arith.mulf %25, %26 : vector<128x128xf32>
    %28 = vector.broadcast %1 : vector<1x128xf32> to vector<128x128xf32>
    %29 = arith.addf %27, %28 : vector<128x128xf32>
    %cst_33 = arith.constant 0.000000e+00 : f32
    %30 = vector.broadcast %cst_33 : f32 to vector<128x128xf32>
    %31 = arith.maximumf %29, %30 : vector<128x128xf32>
    %c1_34 = arith.constant 1 : index
    %c0_35 = arith.constant 0 : index
    %c0_36 = arith.constant 0 : index
    %c0_37 = arith.constant 0 : index
    %c0_38 = arith.constant 0 : index
    %c0_39 = arith.constant 0 : index
    %32 = vector.load %arg4[%c1_34, %c0_35, %c0_36, %c0_37, %c0_38, %c0_39] : memref<2x2x1x1x128x128xf32, #tpu.memory_space<vmem>>, vector<1x1x1x1x128x128xf32>
    %33 = vector.shape_cast %32 : vector<1x1x1x1x128x128xf32> to vector<128x128xf32>
    %34 = vector.shape_cast %31 : vector<128x128xf32> to vector<1x1x1x1x128x128xf32>
    tpu.vector_store %arg4[%c1_34, %c0_35, %c0_36, %c0_37, %c0_38, %c0_39], %34 {strides = array<i32>} : memref<2x2x1x1x128x128xf32, #tpu.memory_space<vmem>>, vector<1x1x1x1x128x128xf32>,
    %c1_40 = arith.constant 1 : index
    %c1_41 = arith.constant 1 : index
    %c0_42 = arith.constant 0 : index
    %c0_43 = arith.constant 0 : index
    %c0_44 = arith.constant 0 : index
    %c0_45 = arith.constant 0 : index
    %35 = vector.load %arg3[%c1_40, %c1_41, %c0_42, %c0_43, %c0_44, %c0_45] : memref<2x2x1x1x128x128xf32, #tpu.memory_space<vmem>>, vector<1x1x1x1x128x128xf32>
    %36 = vector.shape_cast %35 : vector<1x1x1x1x128x128xf32> to vector<128x128xf32>
    %37 = vector.broadcast %0 : vector<1x128xf32> to vector<128x128xf32>
    %38 = arith.mulf %36, %37 : vector<128x128xf32>
    %39 = vector.broadcast %1 : vector<1x128xf32> to vector<128x128xf32>
    %40 = arith.addf %38, %39 : vector<128x128xf32>
    %cst_46 = arith.constant 0.000000e+00 : f32
    %41 = vector.broadcast %cst_46 : f32 to vector<128x128xf32>
    %42 = arith.maximumf %40, %41 : vector<128x128xf32>
    %c1_47 = arith.constant 1 : index
    %c1_48 = arith.constant 1 : index
    %c0_49 = arith.constant 0 : index
    %c0_50 = arith.constant 0 : index
    %c0_51 = arith.constant 0 : index
    %c0_52 = arith.constant 0 : index
    %43 = vector.load %arg4[%c1_47, %c1_48, %c0_49, %c0_50, %c0_51, %c0_52] : memref<2x2x1x1x128x128xf32, #tpu.memory_space<vmem>>, vector<1x1x1x1x128x128xf32>
    %44 = vector.shape_cast %43 : vector<1x1x1x1x128x128xf32> to vector<128x128xf32>
    %45 = vector.shape_cast %42 : vector<128x128xf32> to vector<1x1x1x1x128x128xf32>
    tpu.vector_store %arg4[%c1_47, %c1_48, %c0_49, %c0_50, %c0_51, %c0_52], %45 {strides = array<i32>} : memref<2x2x1x1x128x128xf32, #tpu.memory_space<vmem>>, vector<1x1x1x1x128x128xf32>,
    return
  }
  func.func @transform_0(%arg0: i32, %arg1: i32) -> (i32, i32) {
    %c0_i32 = arith.constant 0 : i32
    %c0_i32_0 = arith.constant 0 : i32
    %c0_i32_1 = arith.constant 0 : i32
    return %c0_i32, %c0_i32_0 : i32, i32
  }
  func.func @transform_1(%arg0: i32, %arg1: i32) -> (i32, i32, i32, i32, i32, i32) {
    %c0_i32 = arith.constant 0 : i32
    %c0_i32_0 = arith.constant 0 : i32
    %c0_i32_1 = arith.constant 0 : i32
    %c0_i32_2 = arith.constant 0 : i32
    %c0_i32_3 = arith.constant 0 : i32
    return %c0_i32, %c0_i32_0, %arg0, %arg1, %c0_i32_1, %c0_i32_2 : i32, i32, i32, i32, i32, i32
  }
  func.func @transform_2(%arg0: i32, %arg1: i32) -> (i32, i32, i32, i32, i32, i32) {
    %c0_i32 = arith.constant 0 : i32
    %c0_i32_0 = arith.constant 0 : i32
    %c0_i32_1 = arith.constant 0 : i32
    %c0_i32_2 = arith.constant 0 : i32
    %c0_i32_3 = arith.constant 0 : i32
    return %c0_i32, %c0_i32_0, %arg0, %arg1, %c0_i32_1, %c0_i32_2 : i32, i32, i32, i32, i32, i32
  }
}

</mosaic_0001>

<llo_original>
// kernel: unet_up_forward.3
$region0: #{unet_up_forward.3}
  #allocation0 [shape = 'u32[]', space=smem, size = 0x4, offset = 0x4, fixed_abs, tag = 'smem constant byte address 0x4 - core index']
  #allocation1 [shape = 'u32[144,128]{1,0:T(1,128)}', space=vmem, size = 0x12000, scoped, tag = 'internal scratch']
  %s0 = inlined_call_operand.vmem [shape: f32[8,128], index: 0, kind: input, shape index: {}]
  %s1 = inlined_call_operand.vmem [shape: f32[2,2,2,2,128,128], index: 1, kind: input, shape index: {}, may-alias: {1,2}]
  %s2 = inlined_call_operand.vmem [shape: f32[2,2,2,2,128,128], index: 2, kind: output, shape index: {}, may-alias: {1,2}]
  %s3 = sld [smem:[#allocation0]]
  $region113: #{unet_up_forward.3} parent=0
    _
  %s5 = ssub.s32 1, %s3
  %s6 = scalar_select 0, %s5, %s3
  $region1: #{unet_up_forward.3} parent=0
    #allocation2 [shape = 'u8[524288]{0}', space=vmem, size = 0x80000, scoped, tag = 'input window, operand 1']
    #allocation3 [shape = 'u8[524288]{0}', space=vmem, size = 0x80000, scoped, tag = 'output window, operand 0']
    loop: start=0, step=1, limit=6
    $region2: #{unet_up_forward.3} parent=1 // loop_pre_header
      _
    $region3: #{unet_up_forward.3} parent=1 // loop_header
      %s8 = sphi 0, %s12
      %p9 = scmp.ge.s32.totalorder %s8, 6
      %s15 = sphi 0, %s27
      %s16 = sphi 0, %s23
      %s17 = sphi 0, %s15
      %s18 = sphi 0, %s16
      %s19 = sphi 0, %s17
      %s20 = sphi 0, %s18
      %s28 = sphi 0, %s28
      %s30 = sphi 0, %s28
      %s31 = sphi 0, %s30
      %s45 = sphi 0, %s31
      %s53 = sphi 0, %s55
      %s56 = sphi 0, %s53
      %s57 = sphi 0, %s56
      %s73 = sphi 0, %s57
      %s81 = sphi 0, %s83
      %s84 = sphi 0, %s81
      %s85 = sphi 0, %s84
      %s101 = sphi 0, %s85
    $region4: #{unet_up_forward.3} parent=1 // loop_header_branch
      %11 = sbr.rel (%p9) target = $region8
    $region5: #{unet_up_forward.3} parent=1 // loop_body
      %s13 = ssub.s32 %s8, 1
      %s14 = ssub.s32 %s8, 2
      %s21 = sadd.s32 1, %s16
      %p22 = scmp.ge.s32.totalorder %s21, 2
      %s23 = scalar_select %p22, 0, %s21
      %s24 = sadd.s32 1, %s15
      %s25 = scalar_select %p22, %s24, %s15
      %p26 = scmp.ge.s32.totalorder %s25, 2
      %s27 = scalar_select %p26, 0, %s25
      %s29 = sadd.s32 %s28, 1
      %p32 = scmp.eq.s32.totalorder %s8, 3
      %p33 = scmp.ne.s32.totalorder %s28, %s30
      %p34 = scmp.eq.s32.totalorder %s8, 0
      %p35 = por %p33, %p34
      %p36 = scmp.ne.s32.totalorder %s28, %s30
      %p37 = scmp.eq.s32.totalorder %s13, 3
      %p38 = por %p36, %p37
      %p39 = scmp.ne.s32.totalorder %s30, %s31
      %p40 = scmp.eq.s32.totalorder %s13, 0
      %p41 = por %p39, %p40
      %p42 = scmp.ne.s32.totalorder %s30, %s31
      %p43 = scmp.eq.s32.totalorder %s14, 3
      %p44 = por %p42, %p43
      %p46 = scmp.ne.s32.totalorder %s31, %s45
      %p47 = scmp.eq.s32.totalorder %s14, 0
      %p48 = por %p46, %p47
      %s49 = ssub.s32 %s15, %s27
      %s50 = ssub.s32 %s16, %s23
      %s51 = sor.u32 %s49, %s50
      %p52 = scmp.eq.s32.totalorder %s51, 0
      %s54 = sadd.s32 %s53, 1
      %s55 = scalar_select %p52, %s53, %s54
      %p58 = pneg %p52
      %p59 = scmp.eq.s32.totalorder %s8, 3
      %p60 = por %p58, %p59
      %p61 = scmp.ne.s32.totalorder %s53, %s56
      %p62 = scmp.eq.s32.totalorder %s8, 0
      %p63 = por %p61, %p62
      %p64 = scmp.ne.s32.totalorder %s53, %s56
      %p65 = scmp.eq.s32.totalorder %s13, 3
      %p66 = por %p64, %p65
      %p67 = scmp.ne.s32.totalorder %s56, %s57
      %p68 = scmp.eq.s32.totalorder %s13, 0
      %p69 = por %p67, %p68
      %p70 = scmp.ne.s32.totalorder %s56, %s57
      %p71 = scmp.eq.s32.totalorder %s14, 3
      %p72 = por %p70, %p71
      %p74 = scmp.ne.s32.totalorder %s57, %s73
      %p75 = scmp.eq.s32.totalorder %s14, 0
      %p76 = por %p74, %p75
      %s77 = ssub.s32 %s15, %s27
      %s78 = ssub.s32 %s16, %s23
      %s79 = sor.u32 %s77, %s78
      %p80 = scmp.eq.s32.totalorder %s79, 0
      %s82 = sadd.s32 %s81, 1
      %s83 = scalar_select %p80, %s81, %s82
      %p86 = pneg %p80
      %p87 = scmp.eq.s32.totalorder %s8, 3
      %p88 = por %p86, %p87
      %p89 = scmp.ne.s32.totalorder %s81, %s84
      %p90 = scmp.eq.s32.totalorder %s8, 0
      %p91 = por %p89, %p90
      %p92 = scmp.ne.s32.totalorder %s81, %s84
      %p93 = scmp.eq.s32.totalorder %s13, 3
      %p94 = por %p92, %p93
      %p95 = scmp.ne.s32.totalorder %s84, %s85
      %p96 = scmp.eq.s32.totalorder %s13, 0
      %p97 = por %p95, %p96
      %p98 = scmp.ne.s32.totalorder %s84, %s85
      %p99 = scmp.eq.s32.totalorder %s14, 3
      %p100 = por %p98, %p99
      %p102 = scmp.ne.s32.totalorder %s85, %s101
      %p103 = scmp.eq.s32.totalorder %s14, 0
      %p104 = por %p102, %p103
      %p105 = scmp.le.s32.totalorder 1, %s8
      %p106 = scmp.lt.s32.totalorder %s8, 5
      %p107 = pnand %p105, %p106
      %p108 = pneg %p107
      // Predicated region
      $region9: #{unet_up_forward.3} parent=5 // pred_check
        _
      $region10: #{unet_up_forward.3} parent=5 // pred_check_branch
        %110 = sbr.rel (%p107) target = $region12
      $region11: #{unet_up_forward.3} parent=5 // pred_region
        %s111 = ssub.s32 %s8, 1
        // Predicated region
        $region13: #{unet_up_forward.3} parent=11 // pred_check
          %p112 = pneg %p41
        $region14: #{unet_up_forward.3} parent=11 // pred_check_branch
          %114 = sbr.rel (%p112) target = $region16
        $region15: #{unet_up_forward.3} parent=11 // pred_region
          _
        $region16: #{unet_up_forward.3} parent=11 // pred_fallthru
          _
      $region12: #{unet_up_forward.3} parent=5 // pred_fallthru
        _
      %p115 = scmp.lt.s32.totalorder %s8, 4
      // Predicated region
      $region17: #{unet_up_forward.3} parent=5 // pred_check
        %p116 = pneg %p115
      $region18: #{unet_up_forward.3} parent=5 // pred_check_branch
        %118 = sbr.rel (%p116) target = $region20
      $region19: #{unet_up_forward.3} parent=5 // pred_region
        // Predicated region
        $region21: #{unet_up_forward.3} parent=19 // pred_check
          %p119 = pneg %p63
        $region22: #{unet_up_forward.3} parent=19 // pred_check_branch
          %121 = sbr.rel (%p119) target = $region24
        $region23: #{unet_up_forward.3} parent=19 // pred_region
          %s122 = sand.u32 %s53, 1
          %s123 = sand.u32 %s53, 1
          %s124 = smul.addr %s123, 512
          %s125 = scalar_lea.vmem [#allocation2], %s124
          %s126 = smul.addr %s16, 16
          %s127 = smul.addr %s15, 32
          %s128 = sadd.s32 %s126, %s127
          %s129 = smul.addr %s128, 8
          %s130 = scalar_lea.vmem %s1, %s129
          // Predicated region
          $region25: #{unet_up_forward.3} parent=23 // pred_check
            _
          $region26: #{unet_up_forward.3} parent=23 // pred_check_branch
            %132 = sbr.rel (0) target = $region28
          $region27: #{unet_up_forward.3} parent=23 // pred_region
            // Predicated region
            $region29: #{unet_up_forward.3} parent=27 // pred_check
              _
            $region30: #{unet_up_forward.3} parent=27 // pred_check_branch
              %134 = sbr.rel (0) target = $region32
            $region31: #{unet_up_forward.3} parent=27 // pred_region
              // Predicated region
              $region44: #{unet_up_forward.3} parent=31 // pred_check
                _
              $region45: #{unet_up_forward.3} parent=31 // pred_check_branch
                %275 = sbr.rel (0) target = $region47
              $region46: #{unet_up_forward.3} parent=31 // pred_region
                loop: start=0, step=1, limit=1
                $region48: #{unet_up_forward.3} parent=46 // loop_pre_header
                  _
                $region49: #{unet_up_forward.3} parent=46 // loop_header
                  %s277 = sphi 0, %s281
                  %p278 = scmp.ge.s32.totalorder %s277, 1
                  %s282 = sphi %s130, %s130
                  %s283 = sphi %s125, %s125
                $region50: #{unet_up_forward.3} parent=46 // loop_header_branch
                  %280 = sbr.rel (%p278) target = $region54
                $region51: #{unet_up_forward.3} parent=46 // loop_body
                  %v284 = vld [vmem:[%s282] sm:$0xff]
                  %285 = vst [vmem:[%s283] sm:$0xff] %v284
                  %v286 = vld [vmem:[%s282 + $0x8] sm:$0xff]
                  %287 = vst [vmem:[%s283 + $0x8] sm:$0xff] %v286
                  %v288 = vld [vmem:[%s282 + $0x10] sm:$0xff]
                  %289 = vst [vmem:[%s283 + $0x10] sm:$0xff] %v288
                  %v290 = vld [vmem:[%s282 + $0x18] sm:$0xff]
                  %291 = vst [vmem:[%s283 + $0x18] sm:$0xff] %v290
                  %v292 = vld [vmem:[%s282 + $0x20] sm:$0xff]
                  %293 = vst [vmem:[%s283 + $0x20] sm:$0xff] %v292
                  %v294 = vld [vmem:[%s282 + $0x28] sm:$0xff]
                  %295 = vst [vmem:[%s283 + $0x28] sm:$0xff] %v294
                  %v296 = vld [vmem:[%s282 + $0x30] sm:$0xff]
                  %297 = vst [vmem:[%s283 + $0x30] sm:$0xff] %v296
                  %v298 = vld [vmem:[%s282 + $0x38] sm:$0xff]
                  %299 = vst [vmem:[%s283 + $0x38] sm:$0xff] %v298
                  %v300 = vld [vmem:[%s282 + $0x40] sm:$0xff]
                  %301 = vst [vmem:[%s283 + $0x40] sm:$0xff] %v300
                  %v302 = vld [vmem:[%s282 + $0x48] sm:$0xff]
                  %303 = vst [vmem:[%s283 + $0x48] sm:$0xff] %v302
                  %v304 = vld [vmem:[%s282 + $0x50] sm:$0xff]
                  %305 = vst [vmem:[%s283 + $0x50] sm:$0xff] %v304
                  %v306 = vld [vmem:[%s282 + $0x58] sm:$0xff]
                  %307 = vst [vmem:[%s283 + $0x58] sm:$0xff] %v306
                  %v308 = vld [vmem:[%s282 + $0x60] sm:$0xff]
                  %309 = vst [vmem:[%s283 + $0x60] sm:$0xff] %v308
                  %v310 = vld [vmem:[%s282 + $0x68] sm:$0xff]
                  %311 = vst [vmem:[%s283 + $0x68] sm:$0xff] %v310
                  %v312 = vld [vmem:[%s282 + $0x70] sm:$0xff]
                  %313 = vst [vmem:[%s283 + $0x70] sm:$0xff] %v312
                  %v314 = vld [vmem:[%s282 + $0x78] sm:$0xff]
                  %315 = vst [vmem:[%s283 + $0x78] sm:$0xff] %v314
                  %v316 = vld [vmem:[%s282 + $0x200] sm:$0xff]
                  %317 = vst [vmem:[%s283 + $0x80] sm:$0xff] %v316
                  %v318 = vld [vmem:[%s282 + $0x208] sm:$0xff]
                  %319 = vst [vmem:[%s283 + $0x88] sm:$0xff] %v318
                  %v320 = vld [vmem:[%s282 + $0x210] sm:$0xff]
                  %321 = vst [vmem:[%s283 + $0x90] sm:$0xff] %v320
                  %v322 = vld [vmem:[%s282 + $0x218] sm:$0xff]
                  %323 = vst [vmem:[%s283 + $0x98] sm:$0xff] %v322
                  %v324 = vld [vmem:[%s282 + $0x220] sm:$0xff]
                  %325 = vst [vmem:[%s283 + $0xa0] sm:$0xff] %v324
                  %v326 = vld [vmem:[%s282 + $0x228] sm:$0xff]
                  %327 = vst [vmem:[%s283 + $0xa8] sm:$0xff] %v326
                  %v328 = vld [vmem:[%s282 + $0x230] sm:$0xff]
                  %329 = vst [vmem:[%s283 + $0xb0] sm:$0xff] %v328
                  %v330 = vld [vmem:[%s282 + $0x238] sm:$0xff]
                  %331 = vst [vmem:[%s283 + $0xb8] sm:$0xff] %v330
                  %v332 = vld [vmem:[%s282 + $0x240] sm:$0xff]
                  %333 = vst [vmem:[%s283 + $0xc0] sm:$0xff] %v332
                  %v334 = vld [vmem:[%s282 + $0x248] sm:$0xff]
                  %335 = vst [vmem:[%s283 + $0xc8] sm:$0xff] %v334
                  %v336 = vld [vmem:[%s282 + $0x250] sm:$0xff]
                  %337 = vst [vmem:[%s283 + $0xd0] sm:$0xff] %v336
                  %v338 = vld [vmem:[%s282 + $0x258] sm:$0xff]
                  %339 = vst [vmem:[%s283 + $0xd8] sm:$0xff] %v338
                  %v340 = vld [vmem:[%s282 + $0x260] sm:$0xff]
                  %341 = vst [vmem:[%s283 + $0xe0] sm:$0xff] %v340
                  %v342 = vld [vmem:[%s282 + $0x268] sm:$0xff]
                  %343 = vst [vmem:[%s283 + $0xe8] sm:$0xff] %v342
                  %v344 = vld [vmem:[%s282 + $0x270] sm:$0xff]
                  %345 = vst [vmem:[%s283 + $0xf0] sm:$0xff] %v344
                  %v346 = vld [vmem:[%s282 + $0x278] sm:$0xff]
                  %347 = vst [vmem:[%s283 + $0xf8] sm:$0xff] %v346
                  %v348 = vld [vmem:[%s282 + $0x400] sm:$0xff]
                  %349 = vst [vmem:[%s283 + $0x100] sm:$0xff] %v348
                  %v350 = vld [vmem:[%s282 + $0x408] sm:$0xff]
                  %351 = vst [vmem:[%s283 + $0x108] sm:$0xff] %v350
                  %v352 = vld [vmem:[%s282 + $0x410] sm:$0xff]
                  %353 = vst [vmem:[%s283 + $0x110] sm:$0xff] %v352
                  %v354 = vld [vmem:[%s282 + $0x418] sm:$0xff]
                  %355 = vst [vmem:[%s283 + $0x118] sm:$0xff] %v354
                  %v356 = vld [vmem:[%s282 + $0x420] sm:$0xff]
                  %357 = vst [vmem:[%s283 + $0x120] sm:$0xff] %v356
                  %v358 = vld [vmem:[%s282 + $0x428] sm:$0xff]
                  %359 = vst [vmem:[%s283 + $0x128] sm:$0xff] %v358
                  %v360 = vld [vmem:[%s282 + $0x430] sm:$0xff]
                  %361 = vst [vmem:[%s283 + $0x130] sm:$0xff] %v360
                  %v362 = vld [vmem:[%s282 + $0x438] sm:$0xff]
                  %363 = vst [vmem:[%s283 + $0x138] sm:$0xff] %v362
                  %v364 = vld [vmem:[%s282 + $0x440] sm:$0xff]
                  %365 = vst [vmem:[%s283 + $0x140] sm:$0xff] %v364
                  %v366 = vld [vmem:[%s282 + $0x448] sm:$0xff]
                  %367 = vst [vmem:[%s283 + $0x148] sm:$0xff] %v366
                  %v368 = vld [vmem:[%s282 + $0x450] sm:$0xff]
                  %369 = vst [vmem:[%s283 + $0x150] sm:$0xff] %v368
                  %v370 = vld [vmem:[%s282 + $0x458] sm:$0xff]
                  %371 = vst [vmem:[%s283 + $0x158] sm:$0xff] %v370
                  %v372 = vld [vmem:[%s282 + $0x460] sm:$0xff]
                  %373 = vst [vmem:[%s283 + $0x160] sm:$0xff] %v372
                  %v374 = vld [vmem:[%s282 + $0x468] sm:$0xff]
                  %375 = vst [vmem:[%s283 + $0x168] sm:$0xff] %v374
                  %v376 = vld [vmem:[%s282 + $0x470] sm:$0xff]
                  %377 = vst [vmem:[%s283 + $0x170] sm:$0xff] %v376
                  %v378 = vld [vmem:[%s282 + $0x478] sm:$0xff]
                  %379 = vst [vmem:[%s283 + $0x178] sm:$0xff] %v378
                  %v380 = vld [vmem:[%s282 + $0x600] sm:$0xff]
                  %381 = vst [vmem:[%s283 + $0x180] sm:$0xff] %v380
                  %v382 = vld [vmem:[%s282 + $0x608] sm:$0xff]
                  %383 = vst [vmem:[%s283 + $0x188] sm:$0xff] %v382
                  %v384 = vld [vmem:[%s282 + $0x610] sm:$0xff]
                  %385 = vst [vmem:[%s283 + $0x190] sm:$0xff] %v384
                  %v386 = vld [vmem:[%s282 + $0x618] sm:$0xff]
                  %387 = vst [vmem:[%s283 + $0x198] sm:$0xff] %v386
                  %v388 = vld [vmem:[%s282 + $0x620] sm:$0xff]
                  %389 = vst [vmem:[%s283 + $0x1a0] sm:$0xff] %v388
                  %v390 = vld [vmem:[%s282 + $0x628] sm:$0xff]
                  %391 = vst [vmem:[%s283 + $0x1a8] sm:$0xff] %v390
                  %v392 = vld [vmem:[%s282 + $0x630] sm:$0xff]
                  %393 = vst [vmem:[%s283 + $0x1b0] sm:$0xff] %v392
                  %v394 = vld [vmem:[%s282 + $0x638] sm:$0xff]
                  %395 = vst [vmem:[%s283 + $0x1b8] sm:$0xff] %v394
                  %v396 = vld [vmem:[%s282 + $0x640] sm:$0xff]
                  %397 = vst [vmem:[%s283 + $0x1c0] sm:$0xff] %v396
                  %v398 = vld [vmem:[%s282 + $0x648] sm:$0xff]
                  %399 = vst [vmem:[%s283 + $0x1c8] sm:$0xff] %v398
                  %v400 = vld [vmem:[%s282 + $0x650] sm:$0xff]
                  %401 = vst [vmem:[%s283 + $0x1d0] sm:$0xff] %v400
                  %v402 = vld [vmem:[%s282 + $0x658] sm:$0xff]
                  %403 = vst [vmem:[%s283 + $0x1d8] sm:$0xff] %v402
                  %v404 = vld [vmem:[%s282 + $0x660] sm:$0xff]
                  %405 = vst [vmem:[%s283 + $0x1e0] sm:$0xff] %v404
                  %v406 = vld [vmem:[%s282 + $0x668] sm:$0xff]
                  %407 = vst [vmem:[%s283 + $0x1e8] sm:$0xff] %v406
                  %v408 = vld [vmem:[%s282 + $0x670] sm:$0xff]
                  %409 = vst [vmem:[%s283 + $0x1f0] sm:$0xff] %v408
                  %v410 = vld [vmem:[%s282 + $0x678] sm:$0xff]
                  %411 = vst [vmem:[%s283 + $0x1f8] sm:$0xff] %v410
                $region52: #{unet_up_forward.3} parent=46 // loop_footer
                  %s281 = sadd.s32 1, %s277
                $region53: #{unet_up_forward.3} parent=46 // loop_footer_branch
                  %276 = sbr.rel target = $region49
                $region54: #{unet_up_forward.3} parent=46 // loop_exit
                  _
              $region47: #{unet_up_forward.3} parent=31 // pred_fallthru
                _
              // Predicated region
              $region55: #{unet_up_forward.3} parent=31 // pred_check
                _
              $region56: #{unet_up_forward.3} parent=31 // pred_check_branch
                %413 = sbr.rel target = $region58
              $region57: #{unet_up_forward.3} parent=31 // pred_region
                _
              $region58: #{unet_up_forward.3} parent=31 // pred_fallthru
                _
            $region32: #{unet_up_forward.3} parent=27 // pred_fallthru
              _
            // Predicated region
            $region33: #{unet_up_forward.3} parent=27 // pred_check
              _
            $region34: #{unet_up_forward.3} parent=27 // pred_check_branch
              %136 = sbr.rel target = $region36
            $region35: #{unet_up_forward.3} parent=27 // pred_region
              loop: start=0, step=1, limit=1
              $region37: #{unet_up_forward.3} parent=35 // loop_pre_header
                _
              $region38: #{unet_up_forward.3} parent=35 // loop_header
                %s139 = sphi 0, %s143
                %p140 = scmp.ge.s32.totalorder %s139, 1
                %s144 = sphi %s130, %s130
                %s145 = sphi %s125, %s125
              $region39: #{unet_up_forward.3} parent=35 // loop_header_branch
                %142 = sbr.rel (%p140) target = $region43
              $region40: #{unet_up_forward.3} parent=35 // loop_body
                %v146 = vld [vmem:[%s144] sm:$0xff]
                %147 = vst [vmem:[%s145] sm:$0xff] %v146
                %v148 = vld [vmem:[%s144 + $0x8] sm:$0xff]
                %149 = vst [vmem:[%s145 + $0x8] sm:$0xff] %v148
                %v150 = vld [vmem:[%s144 + $0x10] sm:$0xff]
                %151 = vst [vmem:[%s145 + $0x10] sm:$0xff] %v150
                %v152 = vld [vmem:[%s144 + $0x18] sm:$0xff]
                %153 = vst [vmem:[%s145 + $0x18] sm:$0xff] %v152
                %v154 = vld [vmem:[%s144 + $0x20] sm:$0xff]
                %155 = vst [vmem:[%s145 + $0x20] sm:$0xff] %v154
                %v156 = vld [vmem:[%s144 + $0x28] sm:$0xff]
                %157 = vst [vmem:[%s145 + $0x28] sm:$0xff] %v156
                %v158 = vld [vmem:[%s144 + $0x30] sm:$0xff]
                %159 = vst [vmem:[%s145 + $0x30] sm:$0xff] %v158
                %v160 = vld [vmem:[%s144 + $0x38] sm:$0xff]
                %161 = vst [vmem:[%s145 + $0x38] sm:$0xff] %v160
                %v162 = vld [vmem:[%s144 + $0x40] sm:$0xff]
                %163 = vst [vmem:[%s145 + $0x40] sm:$0xff] %v162
                %v164 = vld [vmem:[%s144 + $0x48] sm:$0xff]
                %165 = vst [vmem:[%s145 + $0x48] sm:$0xff] %v164
                %v166 = vld [vmem:[%s144 + $0x50] sm:$0xff]
                %167 = vst [vmem:[%s145 + $0x50] sm:$0xff] %v166
                %v168 = vld [vmem:[%s144 + $0x58] sm:$0xff]
                %169 = vst [vmem:[%s145 + $0x58] sm:$0xff] %v168
                %v170 = vld [vmem:[%s144 + $0x60] sm:$0xff]
                %171 = vst [vmem:[%s145 + $0x60] sm:$0xff] %v170
                %v172 = vld [vmem:[%s144 + $0x68] sm:$0xff]
                %173 = vst [vmem:[%s145 + $0x68] sm:$0xff] %v172
                %v174 = vld [vmem:[%s144 + $0x70] sm:$0xff]
                %175 = vst [vmem:[%s145 + $0x70] sm:$0xff] %v174
                %v176 = vld [vmem:[%s144 + $0x78] sm:$0xff]
                %177 = vst [vmem:[%s145 + $0x78] sm:$0xff] %v176
                %v178 = vld [vmem:[%s144 + $0x200] sm:$0xff]
                %179 = vst [vmem:[%s145 + $0x80] sm:$0xff] %v178
                %v180 = vld [vmem:[%s144 + $0x208] sm:$0xff]
                %181 = vst [vmem:[%s145 + $0x88] sm:$0xff] %v180
                %v182 = vld [vmem:[%s144 + $0x210] sm:$0xff]
                %183 = vst [vmem:[%s145 + $0x90] sm:$0xff] %v182
                %v184 = vld [vmem:[%s144 + $0x218] sm:$0xff]
                %185 = vst [vmem:[%s145 + $0x98] sm:$0xff] %v184
                %v186 = vld [vmem:[%s144 + $0x220] sm:$0xff]
                %187 = vst [vmem:[%s145 + $0xa0] sm:$0xff] %v186
                %v188 = vld [vmem:[%s144 + $0x228] sm:$0xff]
                %189 = vst [vmem:[%s145 + $0xa8] sm:$0xff] %v188
                %v190 = vld [vmem:[%s144 + $0x230] sm:$0xff]
                %191 = vst [vmem:[%s145 + $0xb0] sm:$0xff] %v190
                %v192 = vld [vmem:[%s144 + $0x238] sm:$0xff]
                %193 = vst [vmem:[%s145 + $0xb8] sm:$0xff] %v192
                %v194 = vld [vmem:[%s144 + $0x240] sm:$0xff]
                %195 = vst [vmem:[%s145 + $0xc0] sm:$0xff] %v194
                %v196 = vld [vmem:[%s144 + $0x248] sm:$0xff]
                %197 = vst [vmem:[%s145 + $0xc8] sm:$0xff] %v196
                %v198 = vld [vmem:[%s144 + $0x250] sm:$0xff]
                %199 = vst [vmem:[%s145 + $0xd0] sm:$0xff] %v198
                %v200 = vld [vmem:[%s144 + $0x258] sm:$0xff]
                %201 = vst [vmem:[%s145 + $0xd8] sm:$0xff] %v200
                %v202 = vld [vmem:[%s144 + $0x260] sm:$0xff]
                %203 = vst [vmem:[%s145 + $0xe0] sm:$0xff] %v202
                %v204 = vld [vmem:[%s144 + $0x268] sm:$0xff]
                %205 = vst [vmem:[%s145 + $0xe8] sm:$0xff] %v204
                %v206 = vld [vmem:[%s144 + $0x270] sm:$0xff]
                %207 = vst [vmem:[%s145 + $0xf0] sm:$0xff] %v206
                %v208 = vld [vmem:[%s144 + $0x278] sm:$0xff]
                %209 = vst [vmem:[%s145 + $0xf8] sm:$0xff] %v208
                %v210 = vld [vmem:[%s144 + $0x400] sm:$0xff]
                %211 = vst [vmem:[%s145 + $0x100] sm:$0xff] %v210
                %v212 = vld [vmem:[%s144 + $0x408] sm:$0xff]
                %213 = vst [vmem:[%s145 + $0x108] sm:$0xff] %v212
                %v214 = vld [vmem:[%s144 + $0x410] sm:$0xff]
                %215 = vst [vmem:[%s145 + $0x110] sm:$0xff] %v214
                %v216 = vld [vmem:[%s144 + $0x418] sm:$0xff]
                %217 = vst [vmem:[%s145 + $0x118] sm:$0xff] %v216
                %v218 = vld [vmem:[%s144 + $0x420] sm:$0xff]
                %219 = vst [vmem:[%s145 + $0x120] sm:$0xff] %v218
                %v220 = vld [vmem:[%s144 + $0x428] sm:$0xff]
                %221 = vst [vmem:[%s145 + $0x128] sm:$0xff] %v220
                %v222 = vld [vmem:[%s144 + $0x430] sm:$0xff]
                %223 = vst [vmem:[%s145 + $0x130] sm:$0xff] %v222
                %v224 = vld [vmem:[%s144 + $0x438] sm:$0xff]
                %225 = vst [vmem:[%s145 + $0x138] sm:$0xff] %v224
                %v226 = vld [vmem:[%s144 + $0x440] sm:$0xff]
                %227 = vst [vmem:[%s145 + $0x140] sm:$0xff] %v226
                %v228 = vld [vmem:[%s144 + $0x448] sm:$0xff]
                %229 = vst [vmem:[%s145 + $0x148] sm:$0xff] %v228
                %v230 = vld [vmem:[%s144 + $0x450] sm:$0xff]
                %231 = vst [vmem:[%s145 + $0x150] sm:$0xff] %v230
                %v232 = vld [vmem:[%s144 + $0x458] sm:$0xff]
                %233 = vst [vmem:[%s145 + $0x158] sm:$0xff] %v232
                %v234 = vld [vmem:[%s144 + $0x460] sm:$0xff]
                %235 = vst [vmem:[%s145 + $0x160] sm:$0xff] %v234
                %v236 = vld [vmem:[%s144 + $0x468] sm:$0xff]
                %237 = vst [vmem:[%s145 + $0x168] sm:$0xff] %v236
                %v238 = vld [vmem:[%s144 + $0x470] sm:$0xff]
                %239 = vst [vmem:[%s145 + $0x170] sm:$0xff] %v238
                %v240 = vld [vmem:[%s144 + $0x478] sm:$0xff]
                %241 = vst [vmem:[%s145 + $0x178] sm:$0xff] %v240
                %v242 = vld [vmem:[%s144 + $0x600] sm:$0xff]
                %243 = vst [vmem:[%s145 + $0x180] sm:$0xff] %v242
                %v244 = vld [vmem:[%s144 + $0x608] sm:$0xff]
                %245 = vst [vmem:[%s145 + $0x188] sm:$0xff] %v244
                %v246 = vld [vmem:[%s144 + $0x610] sm:$0xff]
                %247 = vst [vmem:[%s145 + $0x190] sm:$0xff] %v246
                %v248 = vld [vmem:[%s144 + $0x618] sm:$0xff]
                %249 = vst [vmem:[%s145 + $0x198] sm:$0xff] %v248
                %v250 = vld [vmem:[%s144 + $0x620] sm:$0xff]
                %251 = vst [vmem:[%s145 + $0x1a0] sm:$0xff] %v250
                %v252 = vld [vmem:[%s144 + $0x628] sm:$0xff]
                %253 = vst [vmem:[%s145 + $0x1a8] sm:$0xff] %v252
                %v254 = vld [vmem:[%s144 + $0x630] sm:$0xff]
                %255 = vst [vmem:[%s145 + $0x1b0] sm:$0xff] %v254
                %v256 = vld [vmem:[%s144 + $0x638] sm:$0xff]
                %257 = vst [vmem:[%s145 + $0x1b8] sm:$0xff] %v256
                %v258 = vld [vmem:[%s144 + $0x640] sm:$0xff]
                %259 = vst [vmem:[%s145 + $0x1c0] sm:$0xff] %v258
                %v260 = vld [vmem:[%s144 + $0x648] sm:$0xff]
                %261 = vst [vmem:[%s145 + $0x1c8] sm:$0xff] %v260
                %v262 = vld [vmem:[%s144 + $0x650] sm:$0xff]
                %263 = vst [vmem:[%s145 + $0x1d0] sm:$0xff] %v262
                %v264 = vld [vmem:[%s144 + $0x658] sm:$0xff]
                %265 = vst [vmem:[%s145 + $0x1d8] sm:$0xff] %v264
                %v266 = vld [vmem:[%s144 + $0x660] sm:$0xff]
                %267 = vst [vmem:[%s145 + $0x1e0] sm:$0xff] %v266
                %v268 = vld [vmem:[%s144 + $0x668] sm:$0xff]
                %269 = vst [vmem:[%s145 + $0x1e8] sm:$0xff] %v268
                %v270 = vld [vmem:[%s144 + $0x670] sm:$0xff]
                %271 = vst [vmem:[%s145 + $0x1f0] sm:$0xff] %v270
                %v272 = vld [vmem:[%s144 + $0x678] sm:$0xff]
                %273 = vst [vmem:[%s145 + $0x1f8] sm:$0xff] %v272
              $region41: #{unet_up_forward.3} parent=35 // loop_footer
                %s143 = sadd.s32 1, %s139
              $region42: #{unet_up_forward.3} parent=35 // loop_footer_branch
                %138 = sbr.rel target = $region38
              $region43: #{unet_up_forward.3} parent=35 // loop_exit
                _
            $region36: #{unet_up_forward.3} parent=27 // pred_fallthru
              _
          $region28: #{unet_up_forward.3} parent=23 // pred_fallthru
            _
          %414 = vnop
        $region24: #{unet_up_forward.3} parent=19 // pred_fallthru
          _
      $region20: #{unet_up_forward.3} parent=5 // pred_fallthru
        _
      %p415 = scmp.le.s32.totalorder 1, %s8
      %p416 = scmp.lt.s32.totalorder %s8, 5
      %p417 = pnand %p415, %p416
      %p418 = pneg %p417
      // Predicated region
      $region59: #{unet_up_forward.3} parent=5 // pred_check
        _
      $region60: #{unet_up_forward.3} parent=5 // pred_check_branch
        %420 = sbr.rel (%p417) target = $region62
      $region61: #{unet_up_forward.3} parent=5 // pred_region
        %s421 = ssub.s32 %s8, 1
        %s422 = sand.u32 %s56, 1
        %s423 = sand.u32 %s56, 1
        %s424 = smul.addr %s423, 512
        %s425 = scalar_lea.vmem [#allocation2], %s424
        // Predicated region
        $region63: #{unet_up_forward.3} parent=61 // pred_check
          %p426 = pneg %p69
        $region64: #{unet_up_forward.3} parent=61 // pred_check_branch
          %428 = sbr.rel (%p426) target = $region66
        $region65: #{unet_up_forward.3} parent=61 // pred_region
          _
        $region66: #{unet_up_forward.3} parent=61 // pred_fallthru
          _
        %p429 = pneg %p41
        %p430 = pneg %p38
        %s431 = sand.u32 %s56, 1
        %s432 = sand.u32 %s56, 1
        %s433 = smul.addr %s432, 512
        %s434 = scalar_lea.vmem [#allocation2], %s433
        %p435 = pneg %p69
        %p436 = pneg %p66
        %p437 = pneg %p97
        %p438 = pneg %p94
        %s439 = sand.u32 %s84, 1
        %s440 = sand.u32 %s84, 1
        %s441 = smul.addr %s440, 512
        %s442 = scalar_lea.vmem [#allocation3], %s441
        %v443 = vld [vmem:[%s0] sm:$0x1]
        %v444 = vld [vmem:[%s0 + $0x1] sm:$0x1]
        %v445 = vld [vmem:[%s425] sm:$0xff]
        %v446 = vld [vmem:[%s425 + $0x8] sm:$0xff]
        %v447 = vld [vmem:[%s425 + $0x10] sm:$0xff]
        %v448 = vld [vmem:[%s425 + $0x18] sm:$0xff]
        %v449 = vld [vmem:[%s425 + $0x20] sm:$0xff]
        %v450 = vld [vmem:[%s425 + $0x28] sm:$0xff]
        %v451 = vld [vmem:[%s425 + $0x30] sm:$0xff]
        %v452 = vld [vmem:[%s425 + $0x38] sm:$0xff]
        %v453 = vld [vmem:[%s425 + $0x40] sm:$0xff]
        %v454 = vld [vmem:[%s425 + $0x48] sm:$0xff]
        %v455 = vld [vmem:[%s425 + $0x50] sm:$0xff]
        %v456 = vld [vmem:[%s425 + $0x58] sm:$0xff]
        %v457 = vld [vmem:[%s425 + $0x60] sm:$0xff]
        %v458 = vld [vmem:[%s425 + $0x68] sm:$0xff]
        %v459 = vld [vmem:[%s425 + $0x70] sm:$0xff]
        %v460 = vld [vmem:[%s425 + $0x78] sm:$0xff]
        %v461 = vlaneseq
        %v462 = vshrl.u32 %v461, 7
        %v463 = vsub.s32 0, %v462
        %v464 = vrot.slane %v443, %v463
        %v465 = vmul.f32 %v445, %v464
        %v466 = vmul.f32 %v446, %v464
        %v467 = vmul.f32 %v447, %v464
        %v468 = vmul.f32 %v448, %v464
        %v469 = vmul.f32 %v449, %v464
        %v470 = vmul.f32 %v450, %v464
        %v471 = vmul.f32 %v451, %v464
        %v472 = vmul.f32 %v452, %v464
        %v473 = vmul.f32 %v453, %v464
        %v474 = vmul.f32 %v454, %v464
        %v475 = vmul.f32 %v455, %v464
        %v476 = vmul.f32 %v456, %v464
        %v477 = vmul.f32 %v457, %v464
        %v478 = vmul.f32 %v458, %v464
        %v479 = vmul.f32 %v459, %v464
        %v480 = vmul.f32 %v460, %v464
        %v481 = vlaneseq
        %v482 = vshrl.u32 %v481, 7
        %v483 = vsub.s32 0, %v482
        %v484 = vrot.slane %v444, %v483
        %v485 = vadd.f32 %v465, %v484
        %v486 = vadd.f32 %v466, %v484
        %v487 = vadd.f32 %v467, %v484
        %v488 = vadd.f32 %v468, %v484
        %v489 = vadd.f32 %v469, %v484
        %v490 = vadd.f32 %v470, %v484
        %v491 = vadd.f32 %v471, %v484
        %v492 = vadd.f32 %v472, %v484
        %v493 = vadd.f32 %v473, %v484
        %v494 = vadd.f32 %v474, %v484
        %v495 = vadd.f32 %v475, %v484
        %v496 = vadd.f32 %v476, %v484
        %v497 = vadd.f32 %v477, %v484
        %v498 = vadd.f32 %v478, %v484
        %v499 = vadd.f32 %v479, %v484
        %v500 = vadd.f32 %v480, %v484
        %v501 = vmax.f32 %v485, 0.0
        %v502 = vmax.f32 %v486, 0.0
        %v503 = vmax.f32 %v487, 0.0
        %v504 = vmax.f32 %v488, 0.0
        %v505 = vmax.f32 %v489, 0.0
        %v506 = vmax.f32 %v490, 0.0
        %v507 = vmax.f32 %v491, 0.0
        %v508 = vmax.f32 %v492, 0.0
        %v509 = vmax.f32 %v493, 0.0
        %v510 = vmax.f32 %v494, 0.0
        %v511 = vmax.f32 %v495, 0.0
        %v512 = vmax.f32 %v496, 0.0
        %v513 = vmax.f32 %v497, 0.0
        %v514 = vmax.f32 %v498, 0.0
        %v515 = vmax.f32 %v499, 0.0
        %v516 = vmax.f32 %v500, 0.0
        %517 = vst [vmem:[%s442] sm:$0xff] %v501
        %518 = vst [vmem:[%s442 + $0x8] sm:$0xff] %v502
        %519 = vst [vmem:[%s442 + $0x10] sm:$0xff] %v503
        %520 = vst [vmem:[%s442 + $0x18] sm:$0xff] %v504
        %521 = vst [vmem:[%s442 + $0x20] sm:$0xff] %v505
        %522 = vst [vmem:[%s442 + $0x28] sm:$0xff] %v506
        %523 = vst [vmem:[%s442 + $0x30] sm:$0xff] %v507
        %524 = vst [vmem:[%s442 + $0x38] sm:$0xff] %v508
        %525 = vst [vmem:[%s442 + $0x40] sm:$0xff] %v509
        %526 = vst [vmem:[%s442 + $0x48] sm:$0xff] %v510
        %527 = vst [vmem:[%s442 + $0x50] sm:$0xff] %v511
        %528 = vst [vmem:[%s442 + $0x58] sm:$0xff] %v512
        %529 = vst [vmem:[%s442 + $0x60] sm:$0xff] %v513
        %530 = vst [vmem:[%s442 + $0x68] sm:$0xff] %v514
        %531 = vst [vmem:[%s442 + $0x70] sm:$0xff] %v515
        %532 = vst [vmem:[%s442 + $0x78] sm:$0xff] %v516
        %s533 = scalar_lea.vmem %s425, 128 [#allocation2]
        %v534 = vld [vmem:[%s533] sm:$0xff]
        %v535 = vld [vmem:[%s533 + $0x8] sm:$0xff]
        %v536 = vld [vmem:[%s533 + $0x10] sm:$0xff]
        %v537 = vld [vmem:[%s533 + $0x18] sm:$0xff]
        %v538 = vld [vmem:[%s533 + $0x20] sm:$0xff]
        %v539 = vld [vmem:[%s533 + $0x28] sm:$0xff]
        %v540 = vld [vmem:[%s533 + $0x30] sm:$0xff]
        %v541 = vld [vmem:[%s533 + $0x38] sm:$0xff]
        %v542 = vld [vmem:[%s533 + $0x40] sm:$0xff]
        %v543 = vld [vmem:[%s533 + $0x48] sm:$0xff]
        %v544 = vld [vmem:[%s533 + $0x50] sm:$0xff]
        %v545 = vld [vmem:[%s533 + $0x58] sm:$0xff]
        %v546 = vld [vmem:[%s533 + $0x60] sm:$0xff]
        %v547 = vld [vmem:[%s533 + $0x68] sm:$0xff]
        %v548 = vld [vmem:[%s533 + $0x70] sm:$0xff]
        %v549 = vld [vmem:[%s533 + $0x78] sm:$0xff]
        %v550 = vmul.f32 %v534, %v464
        %v551 = vmul.f32 %v535, %v464
        %v552 = vmul.f32 %v536, %v464
        %v553 = vmul.f32 %v537, %v464
        %v554 = vmul.f32 %v538, %v464
        %v555 = vmul.f32 %v539, %v464
        %v556 = vmul.f32 %v540, %v464
        %v557 = vmul.f32 %v541, %v464
        %v558 = vmul.f32 %v542, %v464
        %v559 = vmul.f32 %v543, %v464
        %v560 = vmul.f32 %v544, %v464
        %v561 = vmul.f32 %v545, %v464
        %v562 = vmul.f32 %v546, %v464
        %v563 = vmul.f32 %v547, %v464
        %v564 = vmul.f32 %v548, %v464
        %v565 = vmul.f32 %v549, %v464
        %v566 = vadd.f32 %v550, %v484
        %v567 = vadd.f32 %v551, %v484
        %v568 = vadd.f32 %v552, %v484
        %v569 = vadd.f32 %v553, %v484
        %v570 = vadd.f32 %v554, %v484
        %v571 = vadd.f32 %v555, %v484
        %v572 = vadd.f32 %v556, %v484
        %v573 = vadd.f32 %v557, %v484
        %v574 = vadd.f32 %v558, %v484
        %v575 = vadd.f32 %v559, %v484
        %v576 = vadd.f32 %v560, %v484
        %v577 = vadd.f32 %v561, %v484
        %v578 = vadd.f32 %v562, %v484
        %v579 = vadd.f32 %v563, %v484
        %v580 = vadd.f32 %v564, %v484
        %v581 = vadd.f32 %v565, %v484
        %v582 = vmax.f32 %v566, 0.0
        %v583 = vmax.f32 %v567, 0.0
        %v584 = vmax.f32 %v568, 0.0
        %v585 = vmax.f32 %v569, 0.0
        %v586 = vmax.f32 %v570, 0.0
        %v587 = vmax.f32 %v571, 0.0
        %v588 = vmax.f32 %v572, 0.0
        %v589 = vmax.f32 %v573, 0.0
        %v590 = vmax.f32 %v574, 0.0
        %v591 = vmax.f32 %v575, 0.0
        %v592 = vmax.f32 %v576, 0.0
        %v593 = vmax.f32 %v577, 0.0
        %v594 = vmax.f32 %v578, 0.0
        %v595 = vmax.f32 %v579, 0.0
        %v596 = vmax.f32 %v580, 0.0
        %v597 = vmax.f32 %v581, 0.0
        %s598 = scalar_lea.vmem %s442, 128 [#allocation3]
        %599 = vst [vmem:[%s598] sm:$0xff] %v582
        %600 = vst [vmem:[%s598 + $0x8] sm:$0xff] %v583
        %601 = vst [vmem:[%s598 + $0x10] sm:$0xff] %v584
        %602 = vst [vmem:[%s598 + $0x18] sm:$0xff] %v585
        %603 = vst [vmem:[%s598 + $0x20] sm:$0xff] %v586
        %604 = vst [vmem:[%s598 + $0x28] sm:$0xff] %v587
        %605 = vst [vmem:[%s598 + $0x30] sm:$0xff] %v588
        %606 = vst [vmem:[%s598 + $0x38] sm:$0xff] %v589
        %607 = vst [vmem:[%s598 + $0x40] sm:$0xff] %v590
        %608 = vst [vmem:[%s598 + $0x48] sm:$0xff] %v591
        %609 = vst [vmem:[%s598 + $0x50] sm:$0xff] %v592
        %610 = vst [vmem:[%s598 + $0x58] sm:$0xff] %v593
        %611 = vst [vmem:[%s598 + $0x60] sm:$0xff] %v594
        %612 = vst [vmem:[%s598 + $0x68] sm:$0xff] %v595
        %613 = vst [vmem:[%s598 + $0x70] sm:$0xff] %v596
        %614 = vst [vmem:[%s598 + $0x78] sm:$0xff] %v597
        %s615 = scalar_lea.vmem %s425, 256 [#allocation2]
        %v616 = vld [vmem:[%s615] sm:$0xff]
        %v617 = vld [vmem:[%s615 + $0x8] sm:$0xff]
        %v618 = vld [vmem:[%s615 + $0x10] sm:$0xff]
        %v619 = vld [vmem:[%s615 + $0x18] sm:$0xff]
        %v620 = vld [vmem:[%s615 + $0x20] sm:$0xff]
        %v621 = vld [vmem:[%s615 + $0x28] sm:$0xff]
        %v622 = vld [vmem:[%s615 + $0x30] sm:$0xff]
        %v623 = vld [vmem:[%s615 + $0x38] sm:$0xff]
        %v624 = vld [vmem:[%s615 + $0x40] sm:$0xff]
        %v625 = vld [vmem:[%s615 + $0x48] sm:$0xff]
        %v626 = vld [vmem:[%s615 + $0x50] sm:$0xff]
        %v627 = vld [vmem:[%s615 + $0x58] sm:$0xff]
        %v628 = vld [vmem:[%s615 + $0x60] sm:$0xff]
        %v629 = vld [vmem:[%s615 + $0x68] sm:$0xff]
        %v630 = vld [vmem:[%s615 + $0x70] sm:$0xff]
        %v631 = vld [vmem:[%s615 + $0x78] sm:$0xff]
        %v632 = vmul.f32 %v616, %v464
        %v633 = vmul.f32 %v617, %v464
        %v634 = vmul.f32 %v618, %v464
        %v635 = vmul.f32 %v619, %v464
        %v636 = vmul.f32 %v620, %v464
        %v637 = vmul.f32 %v621, %v464
        %v638 = vmul.f32 %v622, %v464
        %v639 = vmul.f32 %v623, %v464
        %v640 = vmul.f32 %v624, %v464
        %v641 = vmul.f32 %v625, %v464
        %v642 = vmul.f32 %v626, %v464
        %v643 = vmul.f32 %v627, %v464
        %v644 = vmul.f32 %v628, %v464
        %v645 = vmul.f32 %v629, %v464
        %v646 = vmul.f32 %v630, %v464
        %v647 = vmul.f32 %v631, %v464
        %v648 = vadd.f32 %v632, %v484
        %v649 = vadd.f32 %v633, %v484
        %v650 = vadd.f32 %v634, %v484
        %v651 = vadd.f32 %v635, %v484
        %v652 = vadd.f32 %v636, %v484
        %v653 = vadd.f32 %v637, %v484
        %v654 = vadd.f32 %v638, %v484
        %v655 = vadd.f32 %v639, %v484
        %v656 = vadd.f32 %v640, %v484
        %v657 = vadd.f32 %v641, %v484
        %v658 = vadd.f32 %v642, %v484
        %v659 = vadd.f32 %v643, %v484
        %v660 = vadd.f32 %v644, %v484
        %v661 = vadd.f32 %v645, %v484
        %v662 = vadd.f32 %v646, %v484
        %v663 = vadd.f32 %v647, %v484
        %v664 = vmax.f32 %v648, 0.0
        %v665 = vmax.f32 %v649, 0.0
        %v666 = vmax.f32 %v650, 0.0
        %v667 = vmax.f32 %v651, 0.0
        %v668 = vmax.f32 %v652, 0.0
        %v669 = vmax.f32 %v653, 0.0
        %v670 = vmax.f32 %v654, 0.0
        %v671 = vmax.f32 %v655, 0.0
        %v672 = vmax.f32 %v656, 0.0
        %v673 = vmax.f32 %v657, 0.0
        %v674 = vmax.f32 %v658, 0.0
        %v675 = vmax.f32 %v659, 0.0
        %v676 = vmax.f32 %v660, 0.0
        %v677 = vmax.f32 %v661, 0.0
        %v678 = vmax.f32 %v662, 0.0
        %v679 = vmax.f32 %v663, 0.0
        %s680 = scalar_lea.vmem %s442, 256 [#allocation3]
        %681 = vst [vmem:[%s680] sm:$0xff] %v664
        %682 = vst [vmem:[%s680 + $0x8] sm:$0xff] %v665
        %683 = vst [vmem:[%s680 + $0x10] sm:$0xff] %v666
        %684 = vst [vmem:[%s680 + $0x18] sm:$0xff] %v667
        %685 = vst [vmem:[%s680 + $0x20] sm:$0xff] %v668
        %686 = vst [vmem:[%s680 + $0x28] sm:$0xff] %v669
        %687 = vst [vmem:[%s680 + $0x30] sm:$0xff] %v670
        %688 = vst [vmem:[%s680 + $0x38] sm:$0xff] %v671
        %689 = vst [vmem:[%s680 + $0x40] sm:$0xff] %v672
        %690 = vst [vmem:[%s680 + $0x48] sm:$0xff] %v673
        %691 = vst [vmem:[%s680 + $0x50] sm:$0xff] %v674
        %692 = vst [vmem:[%s680 + $0x58] sm:$0xff] %v675
        %693 = vst [vmem:[%s680 + $0x60] sm:$0xff] %v676
        %694 = vst [vmem:[%s680 + $0x68] sm:$0xff] %v677
        %695 = vst [vmem:[%s680 + $0x70] sm:$0xff] %v678
        %696 = vst [vmem:[%s680 + $0x78] sm:$0xff] %v679
        %s697 = scalar_lea.vmem %s425, 384 [#allocation2]
        %v698 = vld [vmem:[%s697] sm:$0xff]
        %v699 = vld [vmem:[%s697 + $0x8] sm:$0xff]
        %v700 = vld [vmem:[%s697 + $0x10] sm:$0xff]
        %v701 = vld [vmem:[%s697 + $0x18] sm:$0xff]
        %v702 = vld [vmem:[%s697 + $0x20] sm:$0xff]
        %v703 = vld [vmem:[%s697 + $0x28] sm:$0xff]
        %v704 = vld [vmem:[%s697 + $0x30] sm:$0xff]
        %v705 = vld [vmem:[%s697 + $0x38] sm:$0xff]
        %v706 = vld [vmem:[%s697 + $0x40] sm:$0xff]
        %v707 = vld [vmem:[%s697 + $0x48] sm:$0xff]
        %v708 = vld [vmem:[%s697 + $0x50] sm:$0xff]
        %v709 = vld [vmem:[%s697 + $0x58] sm:$0xff]
        %v710 = vld [vmem:[%s697 + $0x60] sm:$0xff]
        %v711 = vld [vmem:[%s697 + $0x68] sm:$0xff]
        %v712 = vld [vmem:[%s697 + $0x70] sm:$0xff]
        %v713 = vld [vmem:[%s697 + $0x78] sm:$0xff]
        %v714 = vmul.f32 %v698, %v464
        %v715 = vmul.f32 %v699, %v464
        %v716 = vmul.f32 %v700, %v464
        %v717 = vmul.f32 %v701, %v464
        %v718 = vmul.f32 %v702, %v464
        %v719 = vmul.f32 %v703, %v464
        %v720 = vmul.f32 %v704, %v464
        %v721 = vmul.f32 %v705, %v464
        %v722 = vmul.f32 %v706, %v464
        %v723 = vmul.f32 %v707, %v464
        %v724 = vmul.f32 %v708, %v464
        %v725 = vmul.f32 %v709, %v464
        %v726 = vmul.f32 %v710, %v464
        %v727 = vmul.f32 %v711, %v464
        %v728 = vmul.f32 %v712, %v464
        %v729 = vmul.f32 %v713, %v464
        %v730 = vadd.f32 %v714, %v484
        %v731 = vadd.f32 %v715, %v484
        %v732 = vadd.f32 %v716, %v484
        %v733 = vadd.f32 %v717, %v484
        %v734 = vadd.f32 %v718, %v484
        %v735 = vadd.f32 %v719, %v484
        %v736 = vadd.f32 %v720, %v484
        %v737 = vadd.f32 %v721, %v484
        %v738 = vadd.f32 %v722, %v484
        %v739 = vadd.f32 %v723, %v484
        %v740 = vadd.f32 %v724, %v484
        %v741 = vadd.f32 %v725, %v484
        %v742 = vadd.f32 %v726, %v484
        %v743 = vadd.f32 %v727, %v484
        %v744 = vadd.f32 %v728, %v484
        %v745 = vadd.f32 %v729, %v484
        %v746 = vmax.f32 %v730, 0.0
        %v747 = vmax.f32 %v731, 0.0
        %v748 = vmax.f32 %v732, 0.0
        %v749 = vmax.f32 %v733, 0.0
        %v750 = vmax.f32 %v734, 0.0
        %v751 = vmax.f32 %v735, 0.0
        %v752 = vmax.f32 %v736, 0.0
        %v753 = vmax.f32 %v737, 0.0
        %v754 = vmax.f32 %v738, 0.0
        %v755 = vmax.f32 %v739, 0.0
        %v756 = vmax.f32 %v740, 0.0
        %v757 = vmax.f32 %v741, 0.0
        %v758 = vmax.f32 %v742, 0.0
        %v759 = vmax.f32 %v743, 0.0
        %v760 = vmax.f32 %v744, 0.0
        %v761 = vmax.f32 %v745, 0.0
        %s762 = scalar_lea.vmem %s442, 384 [#allocation3]
        %763 = vst [vmem:[%s762] sm:$0xff] %v746
        %764 = vst [vmem:[%s762 + $0x8] sm:$0xff] %v747
        %765 = vst [vmem:[%s762 + $0x10] sm:$0xff] %v748
        %766 = vst [vmem:[%s762 + $0x18] sm:$0xff] %v749
        %767 = vst [vmem:[%s762 + $0x20] sm:$0xff] %v750
        %768 = vst [vmem:[%s762 + $0x28] sm:$0xff] %v751
        %769 = vst [vmem:[%s762 + $0x30] sm:$0xff] %v752
        %770 = vst [vmem:[%s762 + $0x38] sm:$0xff] %v753
        %771 = vst [vmem:[%s762 + $0x40] sm:$0xff] %v754
        %772 = vst [vmem:[%s762 + $0x48] sm:$0xff] %v755
        %773 = vst [vmem:[%s762 + $0x50] sm:$0xff] %v756
        %774 = vst [vmem:[%s762 + $0x58] sm:$0xff] %v757
        %775 = vst [vmem:[%s762 + $0x60] sm:$0xff] %v758
        %776 = vst [vmem:[%s762 + $0x68] sm:$0xff] %v759
        %777 = vst [vmem:[%s762 + $0x70] sm:$0xff] %v760
        %778 = vst [vmem:[%s762 + $0x78] sm:$0xff] %v761
        %s779 = sand.u32 %s84, 1
        %s780 = sand.u32 %s84, 1
        %s781 = smul.addr %s780, 512
        %s782 = scalar_lea.vmem [#allocation3], %s781
        // Predicated region
        $region67: #{unet_up_forward.3} parent=61 // pred_check
          %p783 = pneg %p94
        $region68: #{unet_up_forward.3} parent=61 // pred_check_branch
          %785 = sbr.rel (%p783) target = $region70
        $region69: #{unet_up_forward.3} parent=61 // pred_region
          %s786 = smul.addr %s18, 16
          %s787 = smul.addr %s17, 32
          %s788 = sadd.s32 %s786, %s787
          %s789 = smul.addr %s788, 8
          %s790 = scalar_lea.vmem %s2, %s789
          // Predicated region
          $region71: #{unet_up_forward.3} parent=69 // pred_check
            _
          $region72: #{unet_up_forward.3} parent=69 // pred_check_branch
            %792 = sbr.rel (0) target = $region74
          $region73: #{unet_up_forward.3} parent=69 // pred_region
            // Predicated region
            $region75: #{unet_up_forward.3} parent=73 // pred_check
              _
            $region76: #{unet_up_forward.3} parent=73 // pred_check_branch
              %794 = sbr.rel (0) target = $region78
            $region77: #{unet_up_forward.3} parent=73 // pred_region
              // Predicated region
              $region90: #{unet_up_forward.3} parent=77 // pred_check
                _
              $region91: #{unet_up_forward.3} parent=77 // pred_check_branch
                %935 = sbr.rel (0) target = $region93
              $region92: #{unet_up_forward.3} parent=77 // pred_region
                loop: start=0, step=1, limit=1
                $region94: #{unet_up_forward.3} parent=92 // loop_pre_header
                  _
                $region95: #{unet_up_forward.3} parent=92 // loop_header
                  %s937 = sphi 0, %s941
                  %p938 = scmp.ge.s32.totalorder %s937, 1
                  %s942 = sphi %s782, %s782
                  %s943 = sphi %s790, %s790
                $region96: #{unet_up_forward.3} parent=92 // loop_header_branch
                  %940 = sbr.rel (%p938) target = $region100
                $region97: #{unet_up_forward.3} parent=92 // loop_body
                  %v944 = vld [vmem:[%s942] sm:$0xff]
                  %945 = vst [vmem:[%s943] sm:$0xff] %v944
                  %v946 = vld [vmem:[%s942 + $0x8] sm:$0xff]
                  %947 = vst [vmem:[%s943 + $0x8] sm:$0xff] %v946
                  %v948 = vld [vmem:[%s942 + $0x10] sm:$0xff]
                  %949 = vst [vmem:[%s943 + $0x10] sm:$0xff] %v948
                  %v950 = vld [vmem:[%s942 + $0x18] sm:$0xff]
                  %951 = vst [vmem:[%s943 + $0x18] sm:$0xff] %v950
                  %v952 = vld [vmem:[%s942 + $0x20] sm:$0xff]
                  %953 = vst [vmem:[%s943 + $0x20] sm:$0xff] %v952
                  %v954 = vld [vmem:[%s942 + $0x28] sm:$0xff]
                  %955 = vst [vmem:[%s943 + $0x28] sm:$0xff] %v954
                  %v956 = vld [vmem:[%s942 + $0x30] sm:$0xff]
                  %957 = vst [vmem:[%s943 + $0x30] sm:$0xff] %v956
                  %v958 = vld [vmem:[%s942 + $0x38] sm:$0xff]
                  %959 = vst [vmem:[%s943 + $0x38] sm:$0xff] %v958
                  %v960 = vld [vmem:[%s942 + $0x40] sm:$0xff]
                  %961 = vst [vmem:[%s943 + $0x40] sm:$0xff] %v960
                  %v962 = vld [vmem:[%s942 + $0x48] sm:$0xff]
                  %963 = vst [vmem:[%s943 + $0x48] sm:$0xff] %v962
                  %v964 = vld [vmem:[%s942 + $0x50] sm:$0xff]
                  %965 = vst [vmem:[%s943 + $0x50] sm:$0xff] %v964
                  %v966 = vld [vmem:[%s942 + $0x58] sm:$0xff]
                  %967 = vst [vmem:[%s943 + $0x58] sm:$0xff] %v966
                  %v968 = vld [vmem:[%s942 + $0x60] sm:$0xff]
                  %969 = vst [vmem:[%s943 + $0x60] sm:$0xff] %v968
                  %v970 = vld [vmem:[%s942 + $0x68] sm:$0xff]
                  %971 = vst [vmem:[%s943 + $0x68] sm:$0xff] %v970
                  %v972 = vld [vmem:[%s942 + $0x70] sm:$0xff]
                  %973 = vst [vmem:[%s943 + $0x70] sm:$0xff] %v972
                  %v974 = vld [vmem:[%s942 + $0x78] sm:$0xff]
                  %975 = vst [vmem:[%s943 + $0x78] sm:$0xff] %v974
                  %v976 = vld [vmem:[%s942 + $0x80] sm:$0xff]
                  %977 = vst [vmem:[%s943 + $0x200] sm:$0xff] %v976
                  %v978 = vld [vmem:[%s942 + $0x88] sm:$0xff]
                  %979 = vst [vmem:[%s943 + $0x208] sm:$0xff] %v978
                  %v980 = vld [vmem:[%s942 + $0x90] sm:$0xff]
                  %981 = vst [vmem:[%s943 + $0x210] sm:$0xff] %v980
                  %v982 = vld [vmem:[%s942 + $0x98] sm:$0xff]
                  %983 = vst [vmem:[%s943 + $0x218] sm:$0xff] %v982
                  %v984 = vld [vmem:[%s942 + $0xa0] sm:$0xff]
                  %985 = vst [vmem:[%s943 + $0x220] sm:$0xff] %v984
                  %v986 = vld [vmem:[%s942 + $0xa8] sm:$0xff]
                  %987 = vst [vmem:[%s943 + $0x228] sm:$0xff] %v986
                  %v988 = vld [vmem:[%s942 + $0xb0] sm:$0xff]
                  %989 = vst [vmem:[%s943 + $0x230] sm:$0xff] %v988
                  %v990 = vld [vmem:[%s942 + $0xb8] sm:$0xff]
                  %991 = vst [vmem:[%s943 + $0x238] sm:$0xff] %v990
                  %v992 = vld [vmem:[%s942 + $0xc0] sm:$0xff]
                  %993 = vst [vmem:[%s943 + $0x240] sm:$0xff] %v992
                  %v994 = vld [vmem:[%s942 + $0xc8] sm:$0xff]
                  %995 = vst [vmem:[%s943 + $0x248] sm:$0xff] %v994
                  %v996 = vld [vmem:[%s942 + $0xd0] sm:$0xff]
                  %997 = vst [vmem:[%s943 + $0x250] sm:$0xff] %v996
                  %v998 = vld [vmem:[%s942 + $0xd8] sm:$0xff]
                  %999 = vst [vmem:[%s943 + $0x258] sm:$0xff] %v998
                  %v1000 = vld [vmem:[%s942 + $0xe0] sm:$0xff]
                  %1001 = vst [vmem:[%s943 + $0x260] sm:$0xff] %v1000
                  %v1002 = vld [vmem:[%s942 + $0xe8] sm:$0xff]
                  %1003 = vst [vmem:[%s943 + $0x268] sm:$0xff] %v1002
                  %v1004 = vld [vmem:[%s942 + $0xf0] sm:$0xff]
                  %1005 = vst [vmem:[%s943 + $0x270] sm:$0xff] %v1004
                  %v1006 = vld [vmem:[%s942 + $0xf8] sm:$0xff]
                  %1007 = vst [vmem:[%s943 + $0x278] sm:$0xff] %v1006
                  %v1008 = vld [vmem:[%s942 + $0x100] sm:$0xff]
                  %1009 = vst [vmem:[%s943 + $0x400] sm:$0xff] %v1008
                  %v1010 = vld [vmem:[%s942 + $0x108] sm:$0xff]
                  %1011 = vst [vmem:[%s943 + $0x408] sm:$0xff] %v1010
                  %v1012 = vld [vmem:[%s942 + $0x110] sm:$0xff]
                  %1013 = vst [vmem:[%s943 + $0x410] sm:$0xff] %v1012
                  %v1014 = vld [vmem:[%s942 + $0x118] sm:$0xff]
                  %1015 = vst [vmem:[%s943 + $0x418] sm:$0xff] %v1014
                  %v1016 = vld [vmem:[%s942 + $0x120] sm:$0xff]
                  %1017 = vst [vmem:[%s943 + $0x420] sm:$0xff] %v1016
                  %v1018 = vld [vmem:[%s942 + $0x128] sm:$0xff]
                  %1019 = vst [vmem:[%s943 + $0x428] sm:$0xff] %v1018
                  %v1020 = vld [vmem:[%s942 + $0x130] sm:$0xff]
                  %1021 = vst [vmem:[%s943 + $0x430] sm:$0xff] %v1020
                  %v1022 = vld [vmem:[%s942 + $0x138] sm:$0xff]
                  %1023 = vst [vmem:[%s943 + $0x438] sm:$0xff] %v1022
                  %v1024 = vld [vmem:[%s942 + $0x140] sm:$0xff]
                  %1025 = vst [vmem:[%s943 + $0x440] sm:$0xff] %v1024
                  %v1026 = vld [vmem:[%s942 + $0x148] sm:$0xff]
                  %1027 = vst [vmem:[%s943 + $0x448] sm:$0xff] %v1026
                  %v1028 = vld [vmem:[%s942 + $0x150] sm:$0xff]
                  %1029 = vst [vmem:[%s943 + $0x450] sm:$0xff] %v1028
                  %v1030 = vld [vmem:[%s942 + $0x158] sm:$0xff]
                  %1031 = vst [vmem:[%s943 + $0x458] sm:$0xff] %v1030
                  %v1032 = vld [vmem:[%s942 + $0x160] sm:$0xff]
                  %1033 = vst [vmem:[%s943 + $0x460] sm:$0xff] %v1032
                  %v1034 = vld [vmem:[%s942 + $0x168] sm:$0xff]
                  %1035 = vst [vmem:[%s943 + $0x468] sm:$0xff] %v1034
                  %v1036 = vld [vmem:[%s942 + $0x170] sm:$0xff]
                  %1037 = vst [vmem:[%s943 + $0x470] sm:$0xff] %v1036
                  %v1038 = vld [vmem:[%s942 + $0x178] sm:$0xff]
                  %1039 = vst [vmem:[%s943 + $0x478] sm:$0xff] %v1038
                  %v1040 = vld [vmem:[%s942 + $0x180] sm:$0xff]
                  %1041 = vst [vmem:[%s943 + $0x600] sm:$0xff] %v1040
                  %v1042 = vld [vmem:[%s942 + $0x188] sm:$0xff]
                  %1043 = vst [vmem:[%s943 + $0x608] sm:$0xff] %v1042
                  %v1044 = vld [vmem:[%s942 + $0x190] sm:$0xff]
                  %1045 = vst [vmem:[%s943 + $0x610] sm:$0xff] %v1044
                  %v1046 = vld [vmem:[%s942 + $0x198] sm:$0xff]
                  %1047 = vst [vmem:[%s943 + $0x618] sm:$0xff] %v1046
                  %v1048 = vld [vmem:[%s942 + $0x1a0] sm:$0xff]
                  %1049 = vst [vmem:[%s943 + $0x620] sm:$0xff] %v1048
                  %v1050 = vld [vmem:[%s942 + $0x1a8] sm:$0xff]
                  %1051 = vst [vmem:[%s943 + $0x628] sm:$0xff] %v1050
                  %v1052 = vld [vmem:[%s942 + $0x1b0] sm:$0xff]
                  %1053 = vst [vmem:[%s943 + $0x630] sm:$0xff] %v1052
                  %v1054 = vld [vmem:[%s942 + $0x1b8] sm:$0xff]
                  %1055 = vst [vmem:[%s943 + $0x638] sm:$0xff] %v1054
                  %v1056 = vld [vmem:[%s942 + $0x1c0] sm:$0xff]
                  %1057 = vst [vmem:[%s943 + $0x640] sm:$0xff] %v1056
                  %v1058 = vld [vmem:[%s942 + $0x1c8] sm:$0xff]
                  %1059 = vst [vmem:[%s943 + $0x648] sm:$0xff] %v1058
                  %v1060 = vld [vmem:[%s942 + $0x1d0] sm:$0xff]
                  %1061 = vst [vmem:[%s943 + $0x650] sm:$0xff] %v1060
                  %v1062 = vld [vmem:[%s942 + $0x1d8] sm:$0xff]
                  %1063 = vst [vmem:[%s943 + $0x658] sm:$0xff] %v1062
                  %v1064 = vld [vmem:[%s942 + $0x1e0] sm:$0xff]
                  %1065 = vst [vmem:[%s943 + $0x660] sm:$0xff] %v1064
                  %v1066 = vld [vmem:[%s942 + $0x1e8] sm:$0xff]
                  %1067 = vst [vmem:[%s943 + $0x668] sm:$0xff] %v1066
                  %v1068 = vld [vmem:[%s942 + $0x1f0] sm:$0xff]
                  %1069 = vst [vmem:[%s943 + $0x670] sm:$0xff] %v1068
                  %v1070 = vld [vmem:[%s942 + $0x1f8] sm:$0xff]
                  %1071 = vst [vmem:[%s943 + $0x678] sm:$0xff] %v1070
                $region98: #{unet_up_forward.3} parent=92 // loop_footer
                  %s941 = sadd.s32 1, %s937
                $region99: #{unet_up_forward.3} parent=92 // loop_footer_branch
                  %936 = sbr.rel target = $region95
                $region100: #{unet_up_forward.3} parent=92 // loop_exit
                  _
              $region93: #{unet_up_forward.3} parent=77 // pred_fallthru
                _
              // Predicated region
              $region101: #{unet_up_forward.3} parent=77 // pred_check
                _
              $region102: #{unet_up_forward.3} parent=77 // pred_check_branch
                %1073 = sbr.rel target = $region104
              $region103: #{unet_up_forward.3} parent=77 // pred_region
                _
              $region104: #{unet_up_forward.3} parent=77 // pred_fallthru
                _
            $region78: #{unet_up_forward.3} parent=73 // pred_fallthru
              _
            // Predicated region
            $region79: #{unet_up_forward.3} parent=73 // pred_check
              _
            $region80: #{unet_up_forward.3} parent=73 // pred_check_branch
              %796 = sbr.rel target = $region82
            $region81: #{unet_up_forward.3} parent=73 // pred_region
              loop: start=0, step=1, limit=1
              $region83: #{unet_up_forward.3} parent=81 // loop_pre_header
                _
              $region84: #{unet_up_forward.3} parent=81 // loop_header
                %s799 = sphi 0, %s803
                %p800 = scmp.ge.s32.totalorder %s799, 1
                %s804 = sphi %s782, %s782
                %s805 = sphi %s790, %s790
              $region85: #{unet_up_forward.3} parent=81 // loop_header_branch
                %802 = sbr.rel (%p800) target = $region89
              $region86: #{unet_up_forward.3} parent=81 // loop_body
                %v806 = vld [vmem:[%s804] sm:$0xff]
                %807 = vst [vmem:[%s805] sm:$0xff] %v806
                %v808 = vld [vmem:[%s804 + $0x8] sm:$0xff]
                %809 = vst [vmem:[%s805 + $0x8] sm:$0xff] %v808
                %v810 = vld [vmem:[%s804 + $0x10] sm:$0xff]
                %811 = vst [vmem:[%s805 + $0x10] sm:$0xff] %v810
                %v812 = vld [vmem:[%s804 + $0x18] sm:$0xff]
                %813 = vst [vmem:[%s805 + $0x18] sm:$0xff] %v812
                %v814 = vld [vmem:[%s804 + $0x20] sm:$0xff]
                %815 = vst [vmem:[%s805 + $0x20] sm:$0xff] %v814
                %v816 = vld [vmem:[%s804 + $0x28] sm:$0xff]
                %817 = vst [vmem:[%s805 + $0x28] sm:$0xff] %v816
                %v818 = vld [vmem:[%s804 + $0x30] sm:$0xff]
                %819 = vst [vmem:[%s805 + $0x30] sm:$0xff] %v818
                %v820 = vld [vmem:[%s804 + $0x38] sm:$0xff]
                %821 = vst [vmem:[%s805 + $0x38] sm:$0xff] %v820
                %v822 = vld [vmem:[%s804 + $0x40] sm:$0xff]
                %823 = vst [vmem:[%s805 + $0x40] sm:$0xff] %v822
                %v824 = vld [vmem:[%s804 + $0x48] sm:$0xff]
                %825 = vst [vmem:[%s805 + $0x48] sm:$0xff] %v824
                %v826 = vld [vmem:[%s804 + $0x50] sm:$0xff]
                %827 = vst [vmem:[%s805 + $0x50] sm:$0xff] %v826
                %v828 = vld [vmem:[%s804 + $0x58] sm:$0xff]
                %829 = vst [vmem:[%s805 + $0x58] sm:$0xff] %v828
                %v830 = vld [vmem:[%s804 + $0x60] sm:$0xff]
                %831 = vst [vmem:[%s805 + $0x60] sm:$0xff] %v830
                %v832 = vld [vmem:[%s804 + $0x68] sm:$0xff]
                %833 = vst [vmem:[%s805 + $0x68] sm:$0xff] %v832
                %v834 = vld [vmem:[%s804 + $0x70] sm:$0xff]
                %835 = vst [vmem:[%s805 + $0x70] sm:$0xff] %v834
                %v836 = vld [vmem:[%s804 + $0x78] sm:$0xff]
                %837 = vst [vmem:[%s805 + $0x78] sm:$0xff] %v836
                %v838 = vld [vmem:[%s804 + $0x80] sm:$0xff]
                %839 = vst [vmem:[%s805 + $0x200] sm:$0xff] %v838
                %v840 = vld [vmem:[%s804 + $0x88] sm:$0xff]
                %841 = vst [vmem:[%s805 + $0x208] sm:$0xff] %v840
                %v842 = vld [vmem:[%s804 + $0x90] sm:$0xff]
                %843 = vst [vmem:[%s805 + $0x210] sm:$0xff] %v842
                %v844 = vld [vmem:[%s804 + $0x98] sm:$0xff]
                %845 = vst [vmem:[%s805 + $0x218] sm:$0xff] %v844
                %v846 = vld [vmem:[%s804 + $0xa0] sm:$0xff]
                %847 = vst [vmem:[%s805 + $0x220] sm:$0xff] %v846
                %v848 = vld [vmem:[%s804 + $0xa8] sm:$0xff]
                %849 = vst [vmem:[%s805 + $0x228] sm:$0xff] %v848
                %v850 = vld [vmem:[%s804 + $0xb0] sm:$0xff]
                %851 = vst [vmem:[%s805 + $0x230] sm:$0xff] %v850
                %v852 = vld [vmem:[%s804 + $0xb8] sm:$0xff]
                %853 = vst [vmem:[%s805 + $0x238] sm:$0xff] %v852
                %v854 = vld [vmem:[%s804 + $0xc0] sm:$0xff]
                %855 = vst [vmem:[%s805 + $0x240] sm:$0xff] %v854
                %v856 = vld [vmem:[%s804 + $0xc8] sm:$0xff]
                %857 = vst [vmem:[%s805 + $0x248] sm:$0xff] %v856
                %v858 = vld [vmem:[%s804 + $0xd0] sm:$0xff]
                %859 = vst [vmem:[%s805 + $0x250] sm:$0xff] %v858
                %v860 = vld [vmem:[%s804 + $0xd8] sm:$0xff]
                %861 = vst [vmem:[%s805 + $0x258] sm:$0xff] %v860
                %v862 = vld [vmem:[%s804 + $0xe0] sm:$0xff]
                %863 = vst [vmem:[%s805 + $0x260] sm:$0xff] %v862
                %v864 = vld [vmem:[%s804 + $0xe8] sm:$0xff]
                %865 = vst [vmem:[%s805 + $0x268] sm:$0xff] %v864
                %v866 = vld [vmem:[%s804 + $0xf0] sm:$0xff]
                %867 = vst [vmem:[%s805 + $0x270] sm:$0xff] %v866
                %v868 = vld [vmem:[%s804 + $0xf8] sm:$0xff]
                %869 = vst [vmem:[%s805 + $0x278] sm:$0xff] %v868
                %v870 = vld [vmem:[%s804 + $0x100] sm:$0xff]
                %871 = vst [vmem:[%s805 + $0x400] sm:$0xff] %v870
                %v872 = vld [vmem:[%s804 + $0x108] sm:$0xff]
                %873 = vst [vmem:[%s805 + $0x408] sm:$0xff] %v872
                %v874 = vld [vmem:[%s804 + $0x110] sm:$0xff]
                %875 = vst [vmem:[%s805 + $0x410] sm:$0xff] %v874
                %v876 = vld [vmem:[%s804 + $0x118] sm:$0xff]
                %877 = vst [vmem:[%s805 + $0x418] sm:$0xff] %v876
                %v878 = vld [vmem:[%s804 + $0x120] sm:$0xff]
                %879 = vst [vmem:[%s805 + $0x420] sm:$0xff] %v878
                %v880 = vld [vmem:[%s804 + $0x128] sm:$0xff]
                %881 = vst [vmem:[%s805 + $0x428] sm:$0xff] %v880
                %v882 = vld [vmem:[%s804 + $0x130] sm:$0xff]
                %883 = vst [vmem:[%s805 + $0x430] sm:$0xff] %v882
                %v884 = vld [vmem:[%s804 + $0x138] sm:$0xff]
                %885 = vst [vmem:[%s805 + $0x438] sm:$0xff] %v884
                %v886 = vld [vmem:[%s804 + $0x140] sm:$0xff]
                %887 = vst [vmem:[%s805 + $0x440] sm:$0xff] %v886
                %v888 = vld [vmem:[%s804 + $0x148] sm:$0xff]
                %889 = vst [vmem:[%s805 + $0x448] sm:$0xff] %v888
                %v890 = vld [vmem:[%s804 + $0x150] sm:$0xff]
                %891 = vst [vmem:[%s805 + $0x450] sm:$0xff] %v890
                %v892 = vld [vmem:[%s804 + $0x158] sm:$0xff]
                %893 = vst [vmem:[%s805 + $0x458] sm:$0xff] %v892
                %v894 = vld [vmem:[%s804 + $0x160] sm:$0xff]
                %895 = vst [vmem:[%s805 + $0x460] sm:$0xff] %v894
                %v896 = vld [vmem:[%s804 + $0x168] sm:$0xff]
                %897 = vst [vmem:[%s805 + $0x468] sm:$0xff] %v896
                %v898 = vld [vmem:[%s804 + $0x170] sm:$0xff]
                %899 = vst [vmem:[%s805 + $0x470] sm:$0xff] %v898
                %v900 = vld [vmem:[%s804 + $0x178] sm:$0xff]
                %901 = vst [vmem:[%s805 + $0x478] sm:$0xff] %v900
                %v902 = vld [vmem:[%s804 + $0x180] sm:$0xff]
                %903 = vst [vmem:[%s805 + $0x600] sm:$0xff] %v902
                %v904 = vld [vmem:[%s804 + $0x188] sm:$0xff]
                %905 = vst [vmem:[%s805 + $0x608] sm:$0xff] %v904
                %v906 = vld [vmem:[%s804 + $0x190] sm:$0xff]
                %907 = vst [vmem:[%s805 + $0x610] sm:$0xff] %v906
                %v908 = vld [vmem:[%s804 + $0x198] sm:$0xff]
                %909 = vst [vmem:[%s805 + $0x618] sm:$0xff] %v908
                %v910 = vld [vmem:[%s804 + $0x1a0] sm:$0xff]
                %911 = vst [vmem:[%s805 + $0x620] sm:$0xff] %v910
                %v912 = vld [vmem:[%s804 + $0x1a8] sm:$0xff]
                %913 = vst [vmem:[%s805 + $0x628] sm:$0xff] %v912
                %v914 = vld [vmem:[%s804 + $0x1b0] sm:$0xff]
                %915 = vst [vmem:[%s805 + $0x630] sm:$0xff] %v914
                %v916 = vld [vmem:[%s804 + $0x1b8] sm:$0xff]
                %917 = vst [vmem:[%s805 + $0x638] sm:$0xff] %v916
                %v918 = vld [vmem:[%s804 + $0x1c0] sm:$0xff]
                %919 = vst [vmem:[%s805 + $0x640] sm:$0xff] %v918
                %v920 = vld [vmem:[%s804 + $0x1c8] sm:$0xff]
                %921 = vst [vmem:[%s805 + $0x648] sm:$0xff] %v920
                %v922 = vld [vmem:[%s804 + $0x1d0] sm:$0xff]
                %923 = vst [vmem:[%s805 + $0x650] sm:$0xff] %v922
                %v924 = vld [vmem:[%s804 + $0x1d8] sm:$0xff]
                %925 = vst [vmem:[%s805 + $0x658] sm:$0xff] %v924
                %v926 = vld [vmem:[%s804 + $0x1e0] sm:$0xff]
                %927 = vst [vmem:[%s805 + $0x660] sm:$0xff] %v926
                %v928 = vld [vmem:[%s804 + $0x1e8] sm:$0xff]
                %929 = vst [vmem:[%s805 + $0x668] sm:$0xff] %v928
                %v930 = vld [vmem:[%s804 + $0x1f0] sm:$0xff]
                %931 = vst [vmem:[%s805 + $0x670] sm:$0xff] %v930
                %v932 = vld [vmem:[%s804 + $0x1f8] sm:$0xff]
                %933 = vst [vmem:[%s805 + $0x678] sm:$0xff] %v932
              $region87: #{unet_up_forward.3} parent=81 // loop_footer
                %s803 = sadd.s32 1, %s799
              $region88: #{unet_up_forward.3} parent=81 // loop_footer_branch
                %798 = sbr.rel target = $region84
              $region89: #{unet_up_forward.3} parent=81 // loop_exit
                _
            $region82: #{unet_up_forward.3} parent=73 // pred_fallthru
              _
          $region74: #{unet_up_forward.3} parent=69 // pred_fallthru
            _
          %1074 = vnop
        $region70: #{unet_up_forward.3} parent=61 // pred_fallthru
          _
      $region62: #{unet_up_forward.3} parent=5 // pred_fallthru
        _
      %p1075 = scmp.le.s32.totalorder 2, %s8
      // Predicated region
      $region105: #{unet_up_forward.3} parent=5 // pred_check
        %p1076 = pneg %p1075
      $region106: #{unet_up_forward.3} parent=5 // pred_check_branch
        %1078 = sbr.rel (%p1076) target = $region108
      $region107: #{unet_up_forward.3} parent=5 // pred_region
        %s1079 = ssub.s32 %s8, 2
        // Predicated region
        $region109: #{unet_up_forward.3} parent=107 // pred_check
          %p1080 = pneg %p100
        $region110: #{unet_up_forward.3} parent=107 // pred_check_branch
          %1082 = sbr.rel (%p1080) target = $region112
        $region111: #{unet_up_forward.3} parent=107 // pred_region
          %s1083 = sand.u32 %s85, 1
          %s1084 = sand.u32 %s85, 1
          %s1085 = smul.addr %s1084, 512
          %s1086 = scalar_lea.vmem [#allocation3], %s1085
        $region112: #{unet_up_forward.3} parent=107 // pred_fallthru
          _
      $region108: #{unet_up_forward.3} parent=5 // pred_fallthru
        _
    $region6: #{unet_up_forward.3} parent=1 // loop_footer
      %s12 = sadd.s32 1, %s8
    $region7: #{unet_up_forward.3} parent=1 // loop_footer_branch
      %7 = sbr.rel target = $region3
    $region8: #{unet_up_forward.3} parent=1 // loop_exit
      _

// kernel: unet_up_forward.2
$region0: #{unet_up_forward.2}
  #allocation0 [shape = 'u32[]', space=smem, size = 0x4, offset = 0x4, fixed_abs, tag = 'smem constant byte address 0x4 - core index']
  #allocation1 [shape = 'u32[144,128]{1,0:T(1,128)}', space=vmem, size = 0x12000, scoped, tag = 'internal scratch']
  %s0 = inlined_call_operand.vmem [shape: f32[8,128], index: 0, kind: input, shape index: {}]
  %s1 = inlined_call_operand.vmem [shape: f32[2,2,10,18,8], index: 1, kind: input, shape index: {}]
  %s2 = inlined_call_operand.vmem [shape: f32[2,2,2,2,8,128], index: 2, kind: input, shape index: {}]
  %s3 = inlined_call_operand.vmem [shape: f32[2,2,2,2,128,128], index: 3, kind: output, shape index: {0}]
  %s4 = inlined_call_operand.vmem [shape: f32[8,128], index: 4, kind: output, shape index: {1}]
  %5 = xla_tuple %s3, %s4
  %s6 = sld [smem:[#allocation0]]
  $region91: #{unet_up_forward.2} parent=0
    _
  %s8 = ssub.s32 1, %s6
  %s9 = scalar_select 0, %s8, %s6
  $region1: #{unet_up_forward.2} parent=0
    #allocation2 [shape = 'u8[524288]{0}', space=vmem, size = 0x80000, scoped, tag = 'output window, operand 0']
    loop: start=0, step=1, limit=6
    $region2: #{unet_up_forward.2} parent=1 // loop_pre_header
      _
    $region3: #{unet_up_forward.2} parent=1 // loop_header
      %s11 = sphi 0, %s15
      %p12 = scmp.ge.s32.totalorder %s11, 6
      %s18 = sphi 0, %s30
      %s19 = sphi 0, %s26
      %s20 = sphi 0, %s18
      %s21 = sphi 0, %s19
      %s22 = sphi 0, %s20
      %s23 = sphi 0, %s21
      %s31 = sphi 0, %s31
      %s33 = sphi 0, %s31
      %s34 = sphi 0, %s33
      %s48 = sphi 0, %s34
      %s56 = sphi 0, %s58
      %s59 = sphi 0, %s56
      %s60 = sphi 0, %s59
      %s76 = sphi 0, %s60
      %s80 = sphi 0, %s80
      %s82 = sphi 0, %s80
      %s83 = sphi 0, %s82
      %s97 = sphi 0, %s83
      %s105 = sphi 0, %s107
      %s108 = sphi 0, %s105
      %s109 = sphi 0, %s108
      %s125 = sphi 0, %s109
      %s129 = sphi 0, %s129
      %s131 = sphi 0, %s129
      %s132 = sphi 0, %s131
      %s146 = sphi 0, %s132
    $region4: #{unet_up_forward.2} parent=1 // loop_header_branch
      %14 = sbr.rel (%p12) target = $region8
    $region5: #{unet_up_forward.2} parent=1 // loop_body
      %s16 = ssub.s32 %s11, 1
      %s17 = ssub.s32 %s11, 2
      %s24 = sadd.s32 1, %s19
      %p25 = scmp.ge.s32.totalorder %s24, 2
      %s26 = scalar_select %p25, 0, %s24
      %s27 = sadd.s32 1, %s18
      %s28 = scalar_select %p25, %s27, %s18
      %p29 = scmp.ge.s32.totalorder %s28, 2
      %s30 = scalar_select %p29, 0, %s28
      %s32 = sadd.s32 %s31, 1
      %p35 = scmp.eq.s32.totalorder %s11, 3
      %p36 = scmp.ne.s32.totalorder %s31, %s33
      %p37 = scmp.eq.s32.totalorder %s11, 0
      %p38 = por %p36, %p37
      %p39 = scmp.ne.s32.totalorder %s31, %s33
      %p40 = scmp.eq.s32.totalorder %s16, 3
      %p41 = por %p39, %p40
      %p42 = scmp.ne.s32.totalorder %s33, %s34
      %p43 = scmp.eq.s32.totalorder %s16, 0
      %p44 = por %p42, %p43
      %p45 = scmp.ne.s32.totalorder %s33, %s34
      %p46 = scmp.eq.s32.totalorder %s17, 3
      %p47 = por %p45, %p46
      %p49 = scmp.ne.s32.totalorder %s34, %s48
      %p50 = scmp.eq.s32.totalorder %s17, 0
      %p51 = por %p49, %p50
      %s52 = ssub.s32 %s18, %s30
      %s53 = ssub.s32 %s19, %s26
      %s54 = sor.u32 %s52, %s53
      %p55 = scmp.eq.s32.totalorder %s54, 0
      %s57 = sadd.s32 %s56, 1
      %s58 = scalar_select %p55, %s56, %s57
      %p61 = pneg %p55
      %p62 = scmp.eq.s32.totalorder %s11, 3
      %p63 = por %p61, %p62
      %p64 = scmp.ne.s32.totalorder %s56, %s59
      %p65 = scmp.eq.s32.totalorder %s11, 0
      %p66 = por %p64, %p65
      %p67 = scmp.ne.s32.totalorder %s56, %s59
      %p68 = scmp.eq.s32.totalorder %s16, 3
      %p69 = por %p67, %p68
      %p70 = scmp.ne.s32.totalorder %s59, %s60
      %p71 = scmp.eq.s32.totalorder %s16, 0
      %p72 = por %p70, %p71
      %p73 = scmp.ne.s32.totalorder %s59, %s60
      %p74 = scmp.eq.s32.totalorder %s17, 3
      %p75 = por %p73, %p74
      %p77 = scmp.ne.s32.totalorder %s60, %s76
      %p78 = scmp.eq.s32.totalorder %s17, 0
      %p79 = por %p77, %p78
      %s81 = sadd.s32 %s80, 1
      %p84 = scmp.eq.s32.totalorder %s11, 3
      %p85 = scmp.ne.s32.totalorder %s80, %s82
      %p86 = scmp.eq.s32.totalorder %s11, 0
      %p87 = por %p85, %p86
      %p88 = scmp.ne.s32.totalorder %s80, %s82
      %p89 = scmp.eq.s32.totalorder %s16, 3
      %p90 = por %p88, %p89
      %p91 = scmp.ne.s32.totalorder %s82, %s83
      %p92 = scmp.eq.s32.totalorder %s16, 0
      %p93 = por %p91, %p92
      %p94 = scmp.ne.s32.totalorder %s82, %s83
      %p95 = scmp.eq.s32.totalorder %s17, 3
      %p96 = por %p94, %p95
      %p98 = scmp.ne.s32.totalorder %s83, %s97
      %p99 = scmp.eq.s32.totalorder %s17, 0
      %p100 = por %p98, %p99
      %s101 = ssub.s32 %s18, %s30
      %s102 = ssub.s32 %s19, %s26
      %s103 = sor.u32 %s101, %s102
      %p104 = scmp.eq.s32.totalorder %s103, 0
      %s106 = sadd.s32 %s105, 1
      %s107 = scalar_select %p104, %s105, %s106
      %p110 = pneg %p104
      %p111 = scmp.eq.s32.totalorder %s11, 3
      %p112 = por %p110, %p111
      %p113 = scmp.ne.s32.totalorder %s105, %s108
      %p114 = scmp.eq.s32.totalorder %s11, 0
      %p115 = por %p113, %p114
      %p116 = scmp.ne.s32.totalorder %s105, %s108
      %p117 = scmp.eq.s32.totalorder %s16, 3
      %p118 = por %p116, %p117
      %p119 = scmp.ne.s32.totalorder %s108, %s109
      %p120 = scmp.eq.s32.totalorder %s16, 0
      %p121 = por %p119, %p120
      %p122 = scmp.ne.s32.totalorder %s108, %s109
      %p123 = scmp.eq.s32.totalorder %s17, 3
      %p124 = por %p122, %p123
      %p126 = scmp.ne.s32.totalorder %s109, %s125
      %p127 = scmp.eq.s32.totalorder %s17, 0
      %p128 = por %p126, %p127
      %s130 = sadd.s32 %s129, 1
      %p133 = scmp.eq.s32.totalorder %s11, 3
      %p134 = scmp.ne.s32.totalorder %s129, %s131
      %p135 = scmp.eq.s32.totalorder %s11, 0
      %p136 = por %p134, %p135
      %p137 = scmp.ne.s32.totalorder %s129, %s131
      %p138 = scmp.eq.s32.totalorder %s16, 3
      %p139 = por %p137, %p138
      %p140 = scmp.ne.s32.totalorder %s131, %s132
      %p141 = scmp.eq.s32.totalorder %s16, 0
      %p142 = por %p140, %p141
      %p143 = scmp.ne.s32.totalorder %s131, %s132
      %p144 = scmp.eq.s32.totalorder %s17, 3
      %p145 = por %p143, %p144
      %p147 = scmp.ne.s32.totalorder %s132, %s146
      %p148 = scmp.eq.s32.totalorder %s17, 0
      %p149 = por %p147, %p148
      %p150 = scmp.le.s32.totalorder 1, %s11
      %p151 = scmp.lt.s32.totalorder %s11, 5
      %p152 = pnand %p150, %p151
      %p153 = pneg %p152
      // Predicated region
      $region9: #{unet_up_forward.2} parent=5 // pred_check
        _
      $region10: #{unet_up_forward.2} parent=5 // pred_check_branch
        %155 = sbr.rel (%p152) target = $region12
      $region11: #{unet_up_forward.2} parent=5 // pred_region
        %s156 = ssub.s32 %s11, 1
        // Predicated region
        $region13: #{unet_up_forward.2} parent=11 // pred_check
          %p157 = pneg %p44
        $region14: #{unet_up_forward.2} parent=11 // pred_check_branch
          %159 = sbr.rel (%p157) target = $region16
        $region15: #{unet_up_forward.2} parent=11 // pred_region
          _
        $region16: #{unet_up_forward.2} parent=11 // pred_fallthru
          _
        // Predicated region
        $region17: #{unet_up_forward.2} parent=11 // pred_check
          %p160 = pneg %p93
        $region18: #{unet_up_forward.2} parent=11 // pred_check_branch
          %162 = sbr.rel (%p160) target = $region20
        $region19: #{unet_up_forward.2} parent=11 // pred_region
          _
        $region20: #{unet_up_forward.2} parent=11 // pred_fallthru
          _
      $region12: #{unet_up_forward.2} parent=5 // pred_fallthru
        _
      %p163 = scmp.lt.s32.totalorder %s11, 4
      // Predicated region
      $region21: #{unet_up_forward.2} parent=5 // pred_check
        %p164 = pneg %p163
      $region22: #{unet_up_forward.2} parent=5 // pred_check_branch
        %166 = sbr.rel (%p164) target = $region24
      $region23: #{unet_up_forward.2} parent=5 // pred_region
        // Predicated region
        $region25: #{unet_up_forward.2} parent=23 // pred_check
          %p167 = pneg %p66
        $region26: #{unet_up_forward.2} parent=23 // pred_check_branch
          %169 = sbr.rel (%p167) target = $region28
        $region27: #{unet_up_forward.2} parent=23 // pred_region
          %p170 = scmp.lt.s32.totalorder %s18, 1
          %s171 = scalar_select %p170, %s18, 1
          %p172 = scmp.lt.s32.totalorder %s19, 1
          %s173 = scalar_select %p172, %s19, 1
          %s174 = smul.addr %s173, 30
          %s175 = smul.addr %s171, 60
          %s176 = sadd.s32 %s174, %s175
          %s177 = smul.addr %s176, 8
          %s178 = scalar_lea.vmem %s1, %s177
        $region28: #{unet_up_forward.2} parent=23 // pred_fallthru
          _
      $region24: #{unet_up_forward.2} parent=5 // pred_fallthru
        _
      %p179 = scmp.le.s32.totalorder 1, %s11
      %p180 = scmp.lt.s32.totalorder %s11, 5
      %p181 = pnand %p179, %p180
      %p182 = pneg %p181
      // Predicated region
      $region29: #{unet_up_forward.2} parent=5 // pred_check
        _
      $region30: #{unet_up_forward.2} parent=5 // pred_check_branch
        %184 = sbr.rel (%p181) target = $region32
      $region31: #{unet_up_forward.2} parent=5 // pred_region
        %s185 = ssub.s32 %s11, 1
        %p186 = pneg %p44
        %p187 = pneg %p41
        %p188 = scmp.lt.s32.totalorder %s20, 1
        %s189 = scalar_select %p188, %s20, 1
        %p190 = scmp.lt.s32.totalorder %s21, 1
        %s191 = scalar_select %p190, %s21, 1
        %s192 = smul.addr %s191, 30
        %s193 = smul.addr %s189, 60
        %s194 = sadd.s32 %s192, %s193
        %s195 = smul.addr %s194, 8
        %s196 = scalar_lea.vmem %s1, %s195
        %p197 = pneg %p72
        %p198 = pneg %p69
        %p199 = pneg %p93
        %p200 = pneg %p90
        %p201 = pneg %p121
        %p202 = pneg %p118
        %s203 = sand.u32 %s108, 1
        %s204 = sand.u32 %s108, 1
        %s205 = smul.addr %s204, 512
        %s206 = scalar_lea.vmem [#allocation2], %s205
        %p207 = pneg %p142
        %p208 = pneg %p139
        %p209 = scmp.lt.s32.totalorder %s20, 1
        %s210 = scalar_select %p209, %s20, 1
        %p211 = scmp.lt.s32.totalorder %s21, 1
        %s212 = scalar_select %p211, %s21, 1
        %s213 = smul.addr %s212, 30
        %s214 = smul.addr %s210, 60
        %s215 = sadd.s32 %s213, %s214
        %s216 = smul.addr %s215, 8
        %s217 = scalar_lea.vmem %s1, %s216
        %p218 = scmp.eq.s32.totalorder %s20, 0
        %p219 = scmp.eq.s32.totalorder %s21, 0
        %p220 = pnand %p218, %p219
        %p221 = pneg %p220
        // Predicated region
        $region33: #{unet_up_forward.2} parent=31 // pred_check
          _
        $region34: #{unet_up_forward.2} parent=31 // pred_check_branch
          %223 = sbr.rel (%p220) target = $region36
        $region35: #{unet_up_forward.2} parent=31 // pred_region
          %224 = vst [vmem:[%s4] sm:$0xff] 0.0
        $region36: #{unet_up_forward.2} parent=31 // pred_fallthru
          _
        %v225 = vld [vmem:[%s0] sm:$0x1]
        %v226 = vld [vmem:[%s217] sm:$0xff]
        %v227 = vld [vmem:[%s217 + $0x8] sm:$0xff]
        %v228 = vld [vmem:[%s217 + $0x18] sm:$0xff]
        %v229 = vld [vmem:[%s217 + $0x20] sm:$0xff]
        %v230 = vld [vmem:[%s217 + $0x30] sm:$0xff]
        %v231 = vld [vmem:[%s217 + $0x38] sm:$0xff]
        %v232 = vld [vmem:[%s217 + $0x48] sm:$0xff]
        %v233 = vld [vmem:[%s217 + $0x50] sm:$0xff]
        %v234 = vld [vmem:[%s217 + $0x60] sm:$0xff]
        %v235 = vld [vmem:[%s217 + $0x68] sm:$0xff]
        %v236 = vld [vmem:[%s217 + $0x78] sm:$0xff]
        %v237 = vld [vmem:[%s217 + $0x80] sm:$0xff]
        %v238 = vld [vmem:[%s217 + $0x90] sm:$0xff]
        %v239 = vld [vmem:[%s217 + $0x98] sm:$0xff]
        %v240 = vld [vmem:[%s217 + $0xa8] sm:$0xff]
        %v241 = vld [vmem:[%s217 + $0xb0] sm:$0xff]
        %v242 = vld [vmem:[%s2] sm:$0xff]
        %v243 = vld [vmem:[%s217 + $0x1] sm:$0xff]
        %v244 = vld [vmem:[%s217 + $0x9] sm:$0xff]
        %v245 = vld [vmem:[%s217 + $0x19] sm:$0xff]
        %v246 = vld [vmem:[%s217 + $0x21] sm:$0xff]
        %v247 = vld [vmem:[%s217 + $0x31] sm:$0xff]
        %v248 = vld [vmem:[%s217 + $0x39] sm:$0xff]
        %v249 = vld [vmem:[%s217 + $0x49] sm:$0xff]
        %v250 = vld [vmem:[%s217 + $0x51] sm:$0xff]
        %v251 = vld [vmem:[%s217 + $0x61] sm:$0xff]
        %v252 = vld [vmem:[%s217 + $0x69] sm:$0xff]
        %v253 = vld [vmem:[%s217 + $0x79] sm:$0xff]
        %v254 = vld [vmem:[%s217 + $0x81] sm:$0xff]
        %v255 = vld [vmem:[%s217 + $0x91] sm:$0xff]
        %v256 = vld [vmem:[%s217 + $0x99] sm:$0xff]
        %v257 = vld [vmem:[%s217 + $0xa9] sm:$0xff]
        %v258 = vld [vmem:[%s217 + $0xb1] sm:$0xff]
        %s259 = scalar_lea.vmem %s2, 8
        %v260 = vld [vmem:[%s259] sm:$0xff]
        %vm261 = vcmask 64512
        %v263 = vsel %vm261, %v243, 0
        %v266 = vsel %vm261, %v244, 0
        %v269 = vsel %vm261, %v245, 0
        %v272 = vsel %vm261, %v246, 0
        %v275 = vsel %vm261, %v247, 0
        %v278 = vsel %vm261, %v248, 0
        %v281 = vsel %vm261, %v249, 0
        %v284 = vsel %vm261, %v250, 0
        %v287 = vsel %vm261, %v251, 0
        %v290 = vsel %vm261, %v252, 0
        %v293 = vsel %vm261, %v253, 0
        %v296 = vsel %vm261, %v254, 0
        %v299 = vsel %vm261, %v255, 0
        %v302 = vsel %vm261, %v256, 0
        %v305 = vsel %vm261, %v257, 0
        %v308 = vsel %vm261, %v258, 0
        %310 = vmatprep.subr.mxu0 0.0
        %311 = vmatpush1.msra.mxu0 %v260
        %312 = vmatprep.subr.mxu0 0.0
        %313 = vmatpush1.msra.mxu0 0.0
        %314 = vmatprep.subr.mxu0 0.0
        %315 = vmatpush1.msra.mxu0 0.0
        %316 = vmatprep.subr.mxu0 0.0
        %317 = vmatpush1.msra.mxu0 0.0
        %318 = vmatprep.subr.mxu0 0.0
        %319 = vmatpush1.msra.mxu0 0.0
        %320 = vmatprep.subr.mxu0 0.0
        %321 = vmatpush1.msra.mxu0 0.0
        %322 = vmatprep.subr.mxu0 0.0
        %323 = vmatpush1.msra.mxu0 0.0
        %324 = vmatprep.subr.mxu0 0.0
        %325 = vmatpush1.msra.mxu0 0.0
        %326 = vmatprep.subr.mxu0 0.0
        %327 = vmatpush1.msra.mxu0 0.0
        %328 = vmatprep.subr.mxu0 0.0
        %329 = vmatpush1.msra.mxu0 0.0
        %330 = vmatprep.subr.mxu0 0.0
        %331 = vmatpush1.msra.mxu0 0.0
        %332 = vmatprep.subr.mxu0 0.0
        %333 = vmatpush1.msra.mxu0 0.0
        %334 = vmatprep.subr.mxu0 0.0
        %335 = vmatpush1.msra.mxu0 0.0
        %336 = vmatprep.subr.mxu0 0.0
        %337 = vmatpush1.msra.mxu0 0.0
        %338 = vmatprep.subr.mxu0 0.0
        %339 = vmatpush1.msra.mxu0 0.0
        %340 = vmatprep.subr.mxu0 0.0
        %341 = vmatpush1.msra.mxu0 0.0
        %342 = vmatprep.subr.mxu0 0.0
        %343 = vmatpush1.msra.mxu0 0.0
        %344 = vmatprep.subr.mxu0 0.0
        %345 = vmatpush1.msra.mxu0 0.0
        %346 = vmatprep.subr.mxu0 0.0
        %347 = vmatpush1.msra.mxu0 0.0
        %348 = vmatprep.subr.mxu0 0.0
        %349 = vmatpush1.msra.mxu0 0.0
        %350 = vmatprep.subr.mxu0 0.0
        %351 = vmatpush1.msra.mxu0 0.0
        %352 = vmatprep.subr.mxu0 0.0
        %353 = vmatpush1.msra.mxu0 0.0
        %354 = vmatprep.subr.mxu0 0.0
        %355 = vmatpush1.msra.mxu0 0.0
        %356 = vmatprep.subr.mxu0 0.0
        %357 = vmatpush1.msra.mxu0 0.0
        %358 = vmatprep.subr.mxu0 0.0
        %359 = vmatpush1.msra.mxu0 0.0
        %360 = vmatprep.subr.mxu0 0.0
        %361 = vmatpush1.msra.mxu0 0.0
        %362 = vmatprep.subr.mxu0 0.0
        %363 = vmatpush1.msra.mxu0 0.0
        %364 = vmatprep.subr.mxu0 0.0
        %365 = vmatpush1.msra.mxu0 0.0
        %366 = vmatprep.subr.mxu0 0.0
        %367 = vmatpush1.msra.mxu0 0.0
        %368 = vmatprep.subr.mxu0 0.0
        %369 = vmatpush1.msra.mxu0 0.0
        %370 = vmatprep.subr.mxu0 0.0
        %371 = vmatpush1.msra.mxu0 0.0
        %372 = vmatprep.subr.mxu0 0.0
        %373 = vmatpush1.msra.mxu0 0.0
        %374 = vmatprep.mubr.f32.mxu0 0.0
        %375 = vmatmul.mubr.f32.gmra.mrb[0].mxu0 %v263
        %v376 = vpop.f32.mrb[0].mxu0
        %v377 = vadd.f32 0.0, %v376
        %v378 = vpop.f32.mrb[0].mxu0
        %379 = vmatprep.mubr.f32.mxu0 0.0
        %380 = vmatmul.mubr.f32.gmra.mrb[0].mxu0 %v266
        %v381 = vpop.f32.mrb[0].mxu0
        %v382 = vadd.f32 0.0, %v381
        %v383 = vpop.f32.mrb[0].mxu0
        %384 = vmatprep.mubr.f32.mxu0 0.0
        %385 = vmatmul.mubr.f32.gmra.mrb[0].mxu0 %v269
        %v386 = vpop.f32.mrb[0].mxu0
        %v387 = vadd.f32 0.0, %v386
        %v388 = vpop.f32.mrb[0].mxu0
        %389 = vmatprep.mubr.f32.mxu0 0.0
        %390 = vmatmul.mubr.f32.gmra.mrb[0].mxu0 %v272
        %v391 = vpop.f32.mrb[0].mxu0
        %v392 = vadd.f32 0.0, %v391
        %v393 = vpop.f32.mrb[0].mxu0
        %394 = vmatprep.mubr.f32.mxu0 0.0
        %395 = vmatmul.mubr.f32.gmra.mrb[0].mxu0 %v275
        %v396 = vpop.f32.mrb[0].mxu0
        %v397 = vadd.f32 0.0, %v396
        %v398 = vpop.f32.mrb[0].mxu0
        %399 = vmatprep.mubr.f32.mxu0 0.0
        %400 = vmatmul.mubr.f32.gmra.mrb[0].mxu0 %v278
        %v401 = vpop.f32.mrb[0].mxu0
        %v402 = vadd.f32 0.0, %v401
        %v403 = vpop.f32.mrb[0].mxu0
        %404 = vmatprep.mubr.f32.mxu0 0.0
        %405 = vmatmul.mubr.f32.gmra.mrb[0].mxu0 %v281
        %v406 = vpop.f32.mrb[0].mxu0
        %v407 = vadd.f32 0.0, %v406
        %v408 = vpop.f32.mrb[0].mxu0
        %409 = vmatprep.mubr.f32.mxu0 0.0
        %410 = vmatmul.mubr.f32.gmra.mrb[0].mxu0 %v284
        %v411 = vpop.f32.mrb[0].mxu0
        %v412 = vadd.f32 0.0, %v411
        %v413 = vpop.f32.mrb[0].mxu0
        %414 = vmatprep.mubr.f32.mxu0 0.0
        %415 = vmatmul.mubr.f32.gmra.mrb[0].mxu0 %v287
        %v416 = vpop.f32.mrb[0].mxu0
        %v417 = vadd.f32 0.0, %v416
        %v418 = vpop.f32.mrb[0].mxu0
        %419 = vmatprep.mubr.f32.mxu0 0.0
        %420 = vmatmul.mubr.f32.gmra.mrb[0].mxu0 %v290
        %v421 = vpop.f32.mrb[0].mxu0
        %v422 = vadd.f32 0.0, %v421
        %v423 = vpop.f32.mrb[0].mxu0
        %424 = vmatprep.mubr.f32.mxu0 0.0
        %425 = vmatmul.mubr.f32.gmra.mrb[0].mxu0 %v293
        %v426 = vpop.f32.mrb[0].mxu0
        %v427 = vadd.f32 0.0, %v426
        %v428 = vpop.f32.mrb[0].mxu0
        %429 = vmatprep.mubr.f32.mxu0 0.0
        %430 = vmatmul.mubr.f32.gmra.mrb[0].mxu0 %v296
        %v431 = vpop.f32.mrb[0].mxu0
        %v432 = vadd.f32 0.0, %v431
        %v433 = vpop.f32.mrb[0].mxu0
        %434 = vmatprep.mubr.f32.mxu0 0.0
        %435 = vmatmul.mubr.f32.gmra.mrb[0].mxu0 %v299
        %v436 = vpop.f32.mrb[0].mxu0
        %v437 = vadd.f32 0.0, %v436
        %v438 = vpop.f32.mrb[0].mxu0
        %439 = vmatprep.mubr.f32.mxu0 0.0
        %440 = vmatmul.mubr.f32.gmra.mrb[0].mxu0 %v302
        %v441 = vpop.f32.mrb[0].mxu0
        %v442 = vadd.f32 0.0, %v441
        %v443 = vpop.f32.mrb[0].mxu0
        %444 = vmatprep.mubr.f32.mxu0 0.0
        %445 = vmatmul.mubr.f32.gmra.mrb[0].mxu0 %v305
        %v446 = vpop.f32.mrb[0].mxu0
        %v447 = vadd.f32 0.0, %v446
        %v448 = vpop.f32.mrb[0].mxu0
        %449 = vmatprep.mubr.f32.mxu0 0.0
        %450 = vmatmul.mubr.f32.gmra.mrb[0].mxu0 %v308
        %v451 = vpop.f32.mrb[0].mxu0
        %v452 = vadd.f32 0.0, %v451
        %v453 = vpop.f32.mrb[0].mxu0
        %454 = vdwg.mxu0
        %v456 = vsel %vm261, %v226, 0
        %v459 = vsel %vm261, %v227, 0
        %v462 = vsel %vm261, %v228, 0
        %v465 = vsel %vm261, %v229, 0
        %v468 = vsel %vm261, %v230, 0
        %v471 = vsel %vm261, %v231, 0
        %v474 = vsel %vm261, %v232, 0
        %v477 = vsel %vm261, %v233, 0
        %v480 = vsel %vm261, %v234, 0
        %v483 = vsel %vm261, %v235, 0
        %v486 = vsel %vm261, %v236, 0
        %v489 = vsel %vm261, %v237, 0
        %v492 = vsel %vm261, %v238, 0
        %v495 = vsel %vm261, %v239, 0
        %v498 = vsel %vm261, %v240, 0
        %v501 = vsel %vm261, %v241, 0
        %503 = vmatprep.subr.mxu0 0.0
        %504 = vmatpush1.msra.mxu0 %v242
        %505 = vmatprep.subr.mxu0 0.0
        %506 = vmatpush1.msra.mxu0 0.0
        %507 = vmatprep.subr.mxu0 0.0
        %508 = vmatpush1.msra.mxu0 0.0
        %509 = vmatprep.subr.mxu0 0.0
        %510 = vmatpush1.msra.mxu0 0.0
        %511 = vmatprep.subr.mxu0 0.0
        %512 = vmatpush1.msra.mxu0 0.0
        %513 = vmatprep.subr.mxu0 0.0
        %514 = vmatpush1.msra.mxu0 0.0
        %515 = vmatprep.subr.mxu0 0.0
        %516 = vmatpush1.msra.mxu0 0.0
        %517 = vmatprep.subr.mxu0 0.0
        %518 = vmatpush1.msra.mxu0 0.0
        %519 = vmatprep.subr.mxu0 0.0
        %520 = vmatpush1.msra.mxu0 0.0
        %521 = vmatprep.subr.mxu0 0.0
        %522 = vmatpush1.msra.mxu0 0.0
        %523 = vmatprep.subr.mxu0 0.0
        %524 = vmatpush1.msra.mxu0 0.0
        %525 = vmatprep.subr.mxu0 0.0
        %526 = vmatpush1.msra.mxu0 0.0
        %527 = vmatprep.subr.mxu0 0.0
        %528 = vmatpush1.msra.mxu0 0.0
        %529 = vmatprep.subr.mxu0 0.0
        %530 = vmatpush1.msra.mxu0 0.0
        %531 = vmatprep.subr.mxu0 0.0
        %532 = vmatpush1.msra.mxu0 0.0
        %533 = vmatprep.subr.mxu0 0.0
        %534 = vmatpush1.msra.mxu0 0.0
        %535 = vmatprep.subr.mxu0 0.0
        %536 = vmatpush1.msra.mxu0 0.0
        %537 = vmatprep.subr.mxu0 0.0
        %538 = vmatpush1.msra.mxu0 0.0
        %539 = vmatprep.subr.mxu0 0.0
        %540 = vmatpush1.msra.mxu0 0.0
        %541 = vmatprep.subr.mxu0 0.0
        %542 = vmatpush1.msra.mxu0 0.0
        %543 = vmatprep.subr.mxu0 0.0
        %544 = vmatpush1.msra.mxu0 0.0
        %545 = vmatprep.subr.mxu0 0.0
        %546 = vmatpush1.msra.mxu0 0.0
        %547 = vmatprep.subr.mxu0 0.0
        %548 = vmatpush1.msra.mxu0 0.0
        %549 = vmatprep.subr.mxu0 0.0
        %550 = vmatpush1.msra.mxu0 0.0
        %551 = vmatprep.subr.mxu0 0.0
        %552 = vmatpush1.msra.mxu0 0.0
        %553 = vmatprep.subr.mxu0 0.0
        %554 = vmatpush1.msra.mxu0 0.0
        %555 = vmatprep.subr.mxu0 0.0
        %556 = vmatpush1.msra.mxu0 0.0
        %557 = vmatprep.subr.mxu0 0.0
        %558 = vmatpush1.msra.mxu0 0.0
        %559 = vmatprep.subr.mxu0 0.0
        %560 = vmatpush1.msra.mxu0 0.0
        %561 = vmatprep.subr.mxu0 0.0
        %562 = vmatpush1.msra.mxu0 0.0
        %563 = vmatprep.subr.mxu0 0.0
        %564 = vmatpush1.msra.mxu0 0.0
        %565 = vmatprep.subr.mxu0 0.0
        %566 = vmatpush1.msra.mxu0 0.0
        %567 = vmatprep.mubr.f32.mxu0 0.0
        %568 = vmatmul.mubr.f32.gmra.mrb[0].mxu0 %v456
        %v569 = vpop.f32.mrb[0].mxu0
        %v570 = vadd.f32 %v377, %v569
        %v571 = vpop.f32.mrb[0].mxu0
        %572 = vmatprep.mubr.f32.mxu0 0.0
        %573 = vmatmul.mubr.f32.gmra.mrb[0].mxu0 %v459
        %v574 = vpop.f32.mrb[0].mxu0
        %v575 = vadd.f32 %v382, %v574
        %v576 = vpop.f32.mrb[0].mxu0
        %577 = vmatprep.mubr.f32.mxu0 0.0
        %578 = vmatmul.mubr.f32.gmra.mrb[0].mxu0 %v462
        %v579 = vpop.f32.mrb[0].mxu0
        %v580 = vadd.f32 %v387, %v579
        %v581 = vpop.f32.mrb[0].mxu0
        %582 = vmatprep.mubr.f32.mxu0 0.0
        %583 = vmatmul.mubr.f32.gmra.mrb[0].mxu0 %v465
        %v584 = vpop.f32.mrb[0].mxu0
        %v585 = vadd.f32 %v392, %v584
        %v586 = vpop.f32.mrb[0].mxu0
        %587 = vmatprep.mubr.f32.mxu0 0.0
        %588 = vmatmul.mubr.f32.gmra.mrb[0].mxu0 %v468
        %v589 = vpop.f32.mrb[0].mxu0
        %v590 = vadd.f32 %v397, %v589
        %v591 = vpop.f32.mrb[0].mxu0
        %592 = vmatprep.mubr.f32.mxu0 0.0
        %593 = vmatmul.mubr.f32.gmra.mrb[0].mxu0 %v471
        %v594 = vpop.f32.mrb[0].mxu0
        %v595 = vadd.f32 %v402, %v594
        %v596 = vpop.f32.mrb[0].mxu0
        %597 = vmatprep.mubr.f32.mxu0 0.0
        %598 = vmatmul.mubr.f32.gmra.mrb[0].mxu0 %v474
        %v599 = vpop.f32.mrb[0].mxu0
        %v600 = vadd.f32 %v407, %v599
        %v601 = vpop.f32.mrb[0].mxu0
        %602 = vmatprep.mubr.f32.mxu0 0.0
        %603 = vmatmul.mubr.f32.gmra.mrb[0].mxu0 %v477
        %v604 = vpop.f32.mrb[0].mxu0
        %v605 = vadd.f32 %v412, %v604
        %v606 = vpop.f32.mrb[0].mxu0
        %607 = vmatprep.mubr.f32.mxu0 0.0
        %608 = vmatmul.mubr.f32.gmra.mrb[0].mxu0 %v480
        %v609 = vpop.f32.mrb[0].mxu0
        %v610 = vadd.f32 %v417, %v609
        %v611 = vpop.f32.mrb[0].mxu0
        %612 = vmatprep.mubr.f32.mxu0 0.0
        %613 = vmatmul.mubr.f32.gmra.mrb[0].mxu0 %v483
        %v614 = vpop.f32.mrb[0].mxu0
        %v615 = vadd.f32 %v422, %v614
        %v616 = vpop.f32.mrb[0].mxu0
        %617 = vmatprep.mubr.f32.mxu0 0.0
        %618 = vmatmul.mubr.f32.gmra.mrb[0].mxu0 %v486
        %v619 = vpop.f32.mrb[0].mxu0
        %v620 = vadd.f32 %v427, %v619
        %v621 = vpop.f32.mrb[0].mxu0
        %622 = vmatprep.mubr.f32.mxu0 0.0
        %623 = vmatmul.mubr.f32.gmra.mrb[0].mxu0 %v489
        %v624 = vpop.f32.mrb[0].mxu0
        %v625 = vadd.f32 %v432, %v624
        %v626 = vpop.f32.mrb[0].mxu0
        %627 = vmatprep.mubr.f32.mxu0 0.0
        %628 = vmatmul.mubr.f32.gmra.mrb[0].mxu0 %v492
        %v629 = vpop.f32.mrb[0].mxu0
        %v630 = vadd.f32 %v437, %v629
        %v631 = vpop.f32.mrb[0].mxu0
        %632 = vmatprep.mubr.f32.mxu0 0.0
        %633 = vmatmul.mubr.f32.gmra.mrb[0].mxu0 %v495
        %v634 = vpop.f32.mrb[0].mxu0
        %v635 = vadd.f32 %v442, %v634
        %v636 = vpop.f32.mrb[0].mxu0
        %637 = vmatprep.mubr.f32.mxu0 0.0
        %638 = vmatmul.mubr.f32.gmra.mrb[0].mxu0 %v498
        %v639 = vpop.f32.mrb[0].mxu0
        %v640 = vadd.f32 %v447, %v639
        %v641 = vpop.f32.mrb[0].mxu0
        %642 = vmatprep.mubr.f32.mxu0 0.0
        %643 = vmatmul.mubr.f32.gmra.mrb[0].mxu0 %v501
        %v644 = vpop.f32.mrb[0].mxu0
        %v645 = vadd.f32 %v452, %v644
        %v646 = vpop.f32.mrb[0].mxu0
        %647 = vdwg.mxu0
        %s648 = scalar_lea.vmem %s217, 24
        %v649 = vld [vmem:[%s648] sm:$0xff]
        %v650 = vld [vmem:[%s648 + $0x8] sm:$0xff]
        %v651 = vld [vmem:[%s648 + $0x18] sm:$0xff]
        %v652 = vld [vmem:[%s648 + $0x20] sm:$0xff]
        %v653 = vld [vmem:[%s648 + $0x30] sm:$0xff]
        %v654 = vld [vmem:[%s648 + $0x38] sm:$0xff]
        %v655 = vld [vmem:[%s648 + $0x48] sm:$0xff]
        %v656 = vld [vmem:[%s648 + $0x50] sm:$0xff]
        %v657 = vld [vmem:[%s648 + $0x60] sm:$0xff]
        %v658 = vld [vmem:[%s648 + $0x68] sm:$0xff]
        %v659 = vld [vmem:[%s648 + $0x78] sm:$0xff]
        %v660 = vld [vmem:[%s648 + $0x80] sm:$0xff]
        %v661 = vld [vmem:[%s648 + $0x90] sm:$0xff]
        %v662 = vld [vmem:[%s648 + $0x98] sm:$0xff]
        %v663 = vld [vmem:[%s648 + $0xa8] sm:$0xff]
        %v664 = vld [vmem:[%s648 + $0xb0] sm:$0xff]
        %s665 = scalar_lea.vmem %s2, 16
        %v666 = vld [vmem:[%s665] sm:$0xff]
        %v668 = vsel %vm261, %v649, 0
        %v671 = vsel %vm261, %v650, 0
        %v674 = vsel %vm261, %v651, 0
        %v677 = vsel %vm261, %v652, 0
        %v680 = vsel %vm261, %v653, 0
        %v683 = vsel %vm261, %v654, 0
        %v686 = vsel %vm261, %v655, 0
        %v689 = vsel %vm261, %v656, 0
        %v692 = vsel %vm261, %v657, 0
        %v695 = vsel %vm261, %v658, 0
        %v698 = vsel %vm261, %v659, 0
        %v701 = vsel %vm261, %v660, 0
        %v704 = vsel %vm261, %v661, 0
        %v707 = vsel %vm261, %v662, 0
        %v710 = vsel %vm261, %v663, 0
        %v713 = vsel %vm261, %v664, 0
        %715 = vmatprep.subr.mxu0 0.0
        %716 = vmatpush1.msra.mxu0 %v666
        %717 = vmatprep.subr.mxu0 0.0
        %718 = vmatpush1.msra.mxu0 0.0
        %719 = vmatprep.subr.mxu0 0.0
        %720 = vmatpush1.msra.mxu0 0.0
        %721 = vmatprep.subr.mxu0 0.0
        %722 = vmatpush1.msra.mxu0 0.0
        %723 = vmatprep.subr.mxu0 0.0
        %724 = vmatpush1.msra.mxu0 0.0
        %725 = vmatprep.subr.mxu0 0.0
        %726 = vmatpush1.msra.mxu0 0.0
        %727 = vmatprep.subr.mxu0 0.0
        %728 = vmatpush1.msra.mxu0 0.0
        %729 = vmatprep.subr.mxu0 0.0
        %730 = vmatpush1.msra.mxu0 0.0
        %731 = vmatprep.subr.mxu0 0.0
        %732 = vmatpush1.msra.mxu0 0.0
        %733 = vmatprep.subr.mxu0 0.0
        %734 = vmatpush1.msra.mxu0 0.0
        %735 = vmatprep.subr.mxu0 0.0
        %736 = vmatpush1.msra.mxu0 0.0
        %737 = vmatprep.subr.mxu0 0.0
        %738 = vmatpush1.msra.mxu0 0.0
        %739 = vmatprep.subr.mxu0 0.0
        %740 = vmatpush1.msra.mxu0 0.0
        %741 = vmatprep.subr.mxu0 0.0
        %742 = vmatpush1.msra.mxu0 0.0
        %743 = vmatprep.subr.mxu0 0.0
        %744 = vmatpush1.msra.mxu0 0.0
        %745 = vmatprep.subr.mxu0 0.0
        %746 = vmatpush1.msra.mxu0 0.0
        %747 = vmatprep.subr.mxu0 0.0
        %748 = vmatpush1.msra.mxu0 0.0
        %749 = vmatprep.subr.mxu0 0.0
        %750 = vmatpush1.msra.mxu0 0.0
        %751 = vmatprep.subr.mxu0 0.0
        %752 = vmatpush1.msra.mxu0 0.0
        %753 = vmatprep.subr.mxu0 0.0
        %754 = vmatpush1.msra.mxu0 0.0
        %755 = vmatprep.subr.mxu0 0.0
        %756 = vmatpush1.msra.mxu0 0.0
        %757 = vmatprep.subr.mxu0 0.0
        %758 = vmatpush1.msra.mxu0 0.0
        %759 = vmatprep.subr.mxu0 0.0
        %760 = vmatpush1.msra.mxu0 0.0
        %761 = vmatprep.subr.mxu0 0.0
        %762 = vmatpush1.msra.mxu0 0.0
        %763 = vmatprep.subr.mxu0 0.0
        %764 = vmatpush1.msra.mxu0 0.0
        %765 = vmatprep.subr.mxu0 0.0
        %766 = vmatpush1.msra.mxu0 0.0
        %767 = vmatprep.subr.mxu0 0.0
        %768 = vmatpush1.msra.mxu0 0.0
        %769 = vmatprep.subr.mxu0 0.0
        %770 = vmatpush1.msra.mxu0 0.0
        %771 = vmatprep.subr.mxu0 0.0
        %772 = vmatpush1.msra.mxu0 0.0
        %773 = vmatprep.subr.mxu0 0.0
        %774 = vmatpush1.msra.mxu0 0.0
        %775 = vmatprep.subr.mxu0 0.0
        %776 = vmatpush1.msra.mxu0 0.0
        %777 = vmatprep.subr.mxu0 0.0
        %778 = vmatpush1.msra.mxu0 0.0
        %779 = vmatprep.mubr.f32.mxu0 0.0
        %780 = vmatmul.mubr.f32.gmra.mrb[0].mxu0 %v668
        %v781 = vpop.f32.mrb[0].mxu0
        %v782 = vadd.f32 0.0, %v781
        %v783 = vpop.f32.mrb[0].mxu0
        %784 = vmatprep.mubr.f32.mxu0 0.0
        %785 = vmatmul.mubr.f32.gmra.mrb[0].mxu0 %v671
        %v786 = vpop.f32.mrb[0].mxu0
        %v787 = vadd.f32 0.0, %v786
        %v788 = vpop.f32.mrb[0].mxu0
        %789 = vmatprep.mubr.f32.mxu0 0.0
        %790 = vmatmul.mubr.f32.gmra.mrb[0].mxu0 %v674
        %v791 = vpop.f32.mrb[0].mxu0
        %v792 = vadd.f32 0.0, %v791
        %v793 = vpop.f32.mrb[0].mxu0
        %794 = vmatprep.mubr.f32.mxu0 0.0
        %795 = vmatmul.mubr.f32.gmra.mrb[0].mxu0 %v677
        %v796 = vpop.f32.mrb[0].mxu0
        %v797 = vadd.f32 0.0, %v796
        %v798 = vpop.f32.mrb[0].mxu0
        %799 = vmatprep.mubr.f32.mxu0 0.0
        %800 = vmatmul.mubr.f32.gmra.mrb[0].mxu0 %v680
        %v801 = vpop.f32.mrb[0].mxu0
        %v802 = vadd.f32 0.0, %v801
        %v803 = vpop.f32.mrb[0].mxu0
        %804 = vmatprep.mubr.f32.mxu0 0.0
        %805 = vmatmul.mubr.f32.gmra.mrb[0].mxu0 %v683
        %v806 = vpop.f32.mrb[0].mxu0
        %v807 = vadd.f32 0.0, %v806
        %v808 = vpop.f32.mrb[0].mxu0
        %809 = vmatprep.mubr.f32.mxu0 0.0
        %810 = vmatmul.mubr.f32.gmra.mrb[0].mxu0 %v686
        %v811 = vpop.f32.mrb[0].mxu0
        %v812 = vadd.f32 0.0, %v811
        %v813 = vpop.f32.mrb[0].mxu0
        %814 = vmatprep.mubr.f32.mxu0 0.0
        %815 = vmatmul.mubr.f32.gmra.mrb[0].mxu0 %v689
        %v816 = vpop.f32.mrb[0].mxu0
        %v817 = vadd.f32 0.0, %v816
        %v818 = vpop.f32.mrb[0].mxu0
        %819 = vmatprep.mubr.f32.mxu0 0.0
        %820 = vmatmul.mubr.f32.gmra.mrb[0].mxu0 %v692
        %v821 = vpop.f32.mrb[0].mxu0
        %v822 = vadd.f32 0.0, %v821
        %v823 = vpop.f32.mrb[0].mxu0
        %824 = vmatprep.mubr.f32.mxu0 0.0
        %825 = vmatmul.mubr.f32.gmra.mrb[0].mxu0 %v695
        %v826 = vpop.f32.mrb[0].mxu0
        %v827 = vadd.f32 0.0, %v826
        %v828 = vpop.f32.mrb[0].mxu0
        %829 = vmatprep.mubr.f32.mxu0 0.0
        %830 = vmatmul.mubr.f32.gmra.mrb[0].mxu0 %v698
        %v831 = vpop.f32.mrb[0].mxu0
        %v832 = vadd.f32 0.0, %v831
        %v833 = vpop.f32.mrb[0].mxu0
        %834 = vmatprep.mubr.f32.mxu0 0.0
        %835 = vmatmul.mubr.f32.gmra.mrb[0].mxu0 %v701
        %v836 = vpop.f32.mrb[0].mxu0
        %v837 = vadd.f32 0.0, %v836
        %v838 = vpop.f32.mrb[0].mxu0
        %839 = vmatprep.mubr.f32.mxu0 0.0
        %840 = vmatmul.mubr.f32.gmra.mrb[0].mxu0 %v704
        %v841 = vpop.f32.mrb[0].mxu0
        %v842 = vadd.f32 0.0, %v841
        %v843 = vpop.f32.mrb[0].mxu0
        %844 = vmatprep.mubr.f32.mxu0 0.0
        %845 = vmatmul.mubr.f32.gmra.mrb[0].mxu0 %v707
        %v846 = vpop.f32.mrb[0].mxu0
        %v847 = vadd.f32 0.0, %v846
        %v848 = vpop.f32.mrb[0].mxu0
        %849 = vmatprep.mubr.f32.mxu0 0.0
        %850 = vmatmul.mubr.f32.gmra.mrb[0].mxu0 %v710
        %v851 = vpop.f32.mrb[0].mxu0
        %v852 = vadd.f32 0.0, %v851
        %v853 = vpop.f32.mrb[0].mxu0
        %854 = vmatprep.mubr.f32.mxu0 0.0
        %855 = vmatmul.mubr.f32.gmra.mrb[0].mxu0 %v713
        %v856 = vpop.f32.mrb[0].mxu0
        %v857 = vadd.f32 0.0, %v856
        %v858 = vpop.f32.mrb[0].mxu0
        %859 = vdwg.mxu0
        %v860 = vadd.f32 %v570, %v782
        %v861 = vadd.f32 %v575, %v787
        %v862 = vadd.f32 %v580, %v792
        %v863 = vadd.f32 %v585, %v797
        %v864 = vadd.f32 %v590, %v802
        %v865 = vadd.f32 %v595, %v807
        %v866 = vadd.f32 %v600, %v812
        %v867 = vadd.f32 %v605, %v817
        %v868 = vadd.f32 %v610, %v822
        %v869 = vadd.f32 %v615, %v827
        %v870 = vadd.f32 %v620, %v832
        %v871 = vadd.f32 %v625, %v837
        %v872 = vadd.f32 %v630, %v842
        %v873 = vadd.f32 %v635, %v847
        %v874 = vadd.f32 %v640, %v852
        %v875 = vadd.f32 %v645, %v857
        %v876 = vld [vmem:[%s648 + $0x1] sm:$0xff]
        %v877 = vld [vmem:[%s648 + $0x9] sm:$0xff]
        %v878 = vld [vmem:[%s648 + $0x19] sm:$0xff]
        %v879 = vld [vmem:[%s648 + $0x21] sm:$0xff]
        %v880 = vld [vmem:[%s648 + $0x31] sm:$0xff]
        %v881 = vld [vmem:[%s648 + $0x39] sm:$0xff]
        %v882 = vld [vmem:[%s648 + $0x49] sm:$0xff]
        %v883 = vld [vmem:[%s648 + $0x51] sm:$0xff]
        %v884 = vld [vmem:[%s648 + $0x61] sm:$0xff]
        %v885 = vld [vmem:[%s648 + $0x69] sm:$0xff]
        %v886 = vld [vmem:[%s648 + $0x79] sm:$0xff]
        %v887 = vld [vmem:[%s648 + $0x81] sm:$0xff]
        %v888 = vld [vmem:[%s648 + $0x91] sm:$0xff]
        %v889 = vld [vmem:[%s648 + $0x99] sm:$0xff]
        %v890 = vld [vmem:[%s648 + $0xa9] sm:$0xff]
        %v891 = vld [vmem:[%s648 + $0xb1] sm:$0xff]
        %s892 = scalar_lea.vmem %s2, 24
        %v893 = vld [vmem:[%s892] sm:$0xff]
        %v895 = vsel %vm261, %v876, 0
        %v898 = vsel %vm261, %v877, 0
        %v901 = vsel %vm261, %v878, 0
        %v904 = vsel %vm261, %v879, 0
        %v907 = vsel %vm261, %v880, 0
        %v910 = vsel %vm261, %v881, 0
        %v913 = vsel %vm261, %v882, 0
        %v916 = vsel %vm261, %v883, 0
        %v919 = vsel %vm261, %v884, 0
        %v922 = vsel %vm261, %v885, 0
        %v925 = vsel %vm261, %v886, 0
        %v928 = vsel %vm261, %v887, 0
        %v931 = vsel %vm261, %v888, 0
        %v934 = vsel %vm261, %v889, 0
        %v937 = vsel %vm261, %v890, 0
        %v940 = vsel %vm261, %v891, 0
        %942 = vmatprep.subr.mxu0 0.0
        %943 = vmatpush1.msra.mxu0 %v893
        %944 = vmatprep.subr.mxu0 0.0
        %945 = vmatpush1.msra.mxu0 0.0
        %946 = vmatprep.subr.mxu0 0.0
        %947 = vmatpush1.msra.mxu0 0.0
        %948 = vmatprep.subr.mxu0 0.0
        %949 = vmatpush1.msra.mxu0 0.0
        %950 = vmatprep.subr.mxu0 0.0
        %951 = vmatpush1.msra.mxu0 0.0
        %952 = vmatprep.subr.mxu0 0.0
        %953 = vmatpush1.msra.mxu0 0.0
        %954 = vmatprep.subr.mxu0 0.0
        %955 = vmatpush1.msra.mxu0 0.0
        %956 = vmatprep.subr.mxu0 0.0
        %957 = vmatpush1.msra.mxu0 0.0
        %958 = vmatprep.subr.mxu0 0.0
        %959 = vmatpush1.msra.mxu0 0.0
        %960 = vmatprep.subr.mxu0 0.0
        %961 = vmatpush1.msra.mxu0 0.0
        %962 = vmatprep.subr.mxu0 0.0
        %963 = vmatpush1.msra.mxu0 0.0
        %964 = vmatprep.subr.mxu0 0.0
        %965 = vmatpush1.msra.mxu0 0.0
        %966 = vmatprep.subr.mxu0 0.0
        %967 = vmatpush1.msra.mxu0 0.0
        %968 = vmatprep.subr.mxu0 0.0
        %969 = vmatpush1.msra.mxu0 0.0
        %970 = vmatprep.subr.mxu0 0.0
        %971 = vmatpush1.msra.mxu0 0.0
        %972 = vmatprep.subr.mxu0 0.0
        %973 = vmatpush1.msra.mxu0 0.0
        %974 = vmatprep.subr.mxu0 0.0
        %975 = vmatpush1.msra.mxu0 0.0
        %976 = vmatprep.subr.mxu0 0.0
        %977 = vmatpush1.msra.mxu0 0.0
        %978 = vmatprep.subr.mxu0 0.0
        %979 = vmatpush1.msra.mxu0 0.0
        %980 = vmatprep.subr.mxu0 0.0
        %981 = vmatpush1.msra.mxu0 0.0
        %982 = vmatprep.subr.mxu0 0.0
        %983 = vmatpush1.msra.mxu0 0.0
        %984 = vmatprep.subr.mxu0 0.0
        %985 = vmatpush1.msra.mxu0 0.0
        %986 = vmatprep.subr.mxu0 0.0
        %987 = vmatpush1.msra.mxu0 0.0
        %988 = vmatprep.subr.mxu0 0.0
        %989 = vmatpush1.msra.mxu0 0.0
        %990 = vmatprep.subr.mxu0 0.0
        %991 = vmatpush1.msra.mxu0 0.0
        %992 = vmatprep.subr.mxu0 0.0
        %993 = vmatpush1.msra.mxu0 0.0
        %994 = vmatprep.subr.mxu0 0.0
        %995 = vmatpush1.msra.mxu0 0.0
        %996 = vmatprep.subr.mxu0 0.0
        %997 = vmatpush1.msra.mxu0 0.0
        %998 = vmatprep.subr.mxu0 0.0
        %999 = vmatpush1.msra.mxu0 0.0
        %1000 = vmatprep.subr.mxu0 0.0
        %1001 = vmatpush1.msra.mxu0 0.0
        %1002 = vmatprep.subr.mxu0 0.0
        %1003 = vmatpush1.msra.mxu0 0.0
        %1004 = vmatprep.subr.mxu0 0.0
        %1005 = vmatpush1.msra.mxu0 0.0
        %1006 = vmatprep.mubr.f32.mxu0 0.0
        %1007 = vmatmul.mubr.f32.gmra.mrb[0].mxu0 %v895
        %v1008 = vpop.f32.mrb[0].mxu0
        %v1009 = vadd.f32 0.0, %v1008
        %v1010 = vpop.f32.mrb[0].mxu0
        %1011 = vmatprep.mubr.f32.mxu0 0.0
        %1012 = vmatmul.mubr.f32.gmra.mrb[0].mxu0 %v898
        %v1013 = vpop.f32.mrb[0].mxu0
        %v1014 = vadd.f32 0.0, %v1013
        %v1015 = vpop.f32.mrb[0].mxu0
        %1016 = vmatprep.mubr.f32.mxu0 0.0
        %1017 = vmatmul.mubr.f32.gmra.mrb[0].mxu0 %v901
        %v1018 = vpop.f32.mrb[0].mxu0
        %v1019 = vadd.f32 0.0, %v1018
        %v1020 = vpop.f32.mrb[0].mxu0
        %1021 = vmatprep.mubr.f32.mxu0 0.0
        %1022 = vmatmul.mubr.f32.gmra.mrb[0].mxu0 %v904
        %v1023 = vpop.f32.mrb[0].mxu0
        %v1024 = vadd.f32 0.0, %v1023
        %v1025 = vpop.f32.mrb[0].mxu0
        %1026 = vmatprep.mubr.f32.mxu0 0.0
        %1027 = vmatmul.mubr.f32.gmra.mrb[0].mxu0 %v907
        %v1028 = vpop.f32.mrb[0].mxu0
        %v1029 = vadd.f32 0.0, %v1028
        %v1030 = vpop.f32.mrb[0].mxu0
        %1031 = vmatprep.mubr.f32.mxu0 0.0
        %1032 = vmatmul.mubr.f32.gmra.mrb[0].mxu0 %v910
        %v1033 = vpop.f32.mrb[0].mxu0
        %v1034 = vadd.f32 0.0, %v1033
        %v1035 = vpop.f32.mrb[0].mxu0
        %1036 = vmatprep.mubr.f32.mxu0 0.0
        %1037 = vmatmul.mubr.f32.gmra.mrb[0].mxu0 %v913
        %v1038 = vpop.f32.mrb[0].mxu0
        %v1039 = vadd.f32 0.0, %v1038
        %v1040 = vpop.f32.mrb[0].mxu0
        %1041 = vmatprep.mubr.f32.mxu0 0.0
        %1042 = vmatmul.mubr.f32.gmra.mrb[0].mxu0 %v916
        %v1043 = vpop.f32.mrb[0].mxu0
        %v1044 = vadd.f32 0.0, %v1043
        %v1045 = vpop.f32.mrb[0].mxu0
        %1046 = vmatprep.mubr.f32.mxu0 0.0
        %1047 = vmatmul.mubr.f32.gmra.mrb[0].mxu0 %v919
        %v1048 = vpop.f32.mrb[0].mxu0
        %v1049 = vadd.f32 0.0, %v1048
        %v1050 = vpop.f32.mrb[0].mxu0
        %1051 = vmatprep.mubr.f32.mxu0 0.0
        %1052 = vmatmul.mubr.f32.gmra.mrb[0].mxu0 %v922
        %v1053 = vpop.f32.mrb[0].mxu0
        %v1054 = vadd.f32 0.0, %v1053
        %v1055 = vpop.f32.mrb[0].mxu0
        %1056 = vmatprep.mubr.f32.mxu0 0.0
        %1057 = vmatmul.mubr.f32.gmra.mrb[0].mxu0 %v925
        %v1058 = vpop.f32.mrb[0].mxu0
        %v1059 = vadd.f32 0.0, %v1058
        %v1060 = vpop.f32.mrb[0].mxu0
        %1061 = vmatprep.mubr.f32.mxu0 0.0
        %1062 = vmatmul.mubr.f32.gmra.mrb[0].mxu0 %v928
        %v1063 = vpop.f32.mrb[0].mxu0
        %v1064 = vadd.f32 0.0, %v1063
        %v1065 = vpop.f32.mrb[0].mxu0
        %1066 = vmatprep.mubr.f32.mxu0 0.0
        %1067 = vmatmul.mubr.f32.gmra.mrb[0].mxu0 %v931
        %v1068 = vpop.f32.mrb[0].mxu0
        %v1069 = vadd.f32 0.0, %v1068
        %v1070 = vpop.f32.mrb[0].mxu0
        %1071 = vmatprep.mubr.f32.mxu0 0.0
        %1072 = vmatmul.mubr.f32.gmra.mrb[0].mxu0 %v934
        %v1073 = vpop.f32.mrb[0].mxu0
        %v1074 = vadd.f32 0.0, %v1073
        %v1075 = vpop.f32.mrb[0].mxu0
        %1076 = vmatprep.mubr.f32.mxu0 0.0
        %1077 = vmatmul.mubr.f32.gmra.mrb[0].mxu0 %v937
        %v1078 = vpop.f32.mrb[0].mxu0
        %v1079 = vadd.f32 0.0, %v1078
        %v1080 = vpop.f32.mrb[0].mxu0
        %1081 = vmatprep.mubr.f32.mxu0 0.0
        %1082 = vmatmul.mubr.f32.gmra.mrb[0].mxu0 %v940
        %v1083 = vpop.f32.mrb[0].mxu0
        %v1084 = vadd.f32 0.0, %v1083
        %v1085 = vpop.f32.mrb[0].mxu0
        %1086 = vdwg.mxu0
        %v1087 = vadd.f32 %v860, %v1009
        %v1088 = vadd.f32 %v861, %v1014
        %v1089 = vadd.f32 %v862, %v1019
        %v1090 = vadd.f32 %v863, %v1024
        %v1091 = vadd.f32 %v864, %v1029
        %v1092 = vadd.f32 %v865, %v1034
        %v1093 = vadd.f32 %v866, %v1039
        %v1094 = vadd.f32 %v867, %v1044
        %v1095 = vadd.f32 %v868, %v1049
        %v1096 = vadd.f32 %v869, %v1054
        %v1097 = vadd.f32 %v870, %v1059
        %v1098 = vadd.f32 %v871, %v1064
        %v1099 = vadd.f32 %v872, %v1069
        %v1100 = vadd.f32 %v873, %v1074
        %v1101 = vadd.f32 %v874, %v1079
        %v1102 = vadd.f32 %v875, %v1084
        %v1103 = vlaneseq
        %v1104 = vshrl.u32 %v1103, 7
        %v1105 = vsub.s32 0, %v1104
        %v1106 = vrot.slane %v225, %v1105
        %v1107 = vadd.f32 %v1087, %v1106
        %v1108 = vadd.f32 %v1088, %v1106
        %v1109 = vadd.f32 %v1089, %v1106
        %v1110 = vadd.f32 %v1090, %v1106
        %v1111 = vadd.f32 %v1091, %v1106
        %v1112 = vadd.f32 %v1092, %v1106
        %v1113 = vadd.f32 %v1093, %v1106
        %v1114 = vadd.f32 %v1094, %v1106
        %v1115 = vadd.f32 %v1095, %v1106
        %v1116 = vadd.f32 %v1096, %v1106
        %v1117 = vadd.f32 %v1097, %v1106
        %v1118 = vadd.f32 %v1098, %v1106
        %v1119 = vadd.f32 %v1099, %v1106
        %v1120 = vadd.f32 %v1100, %v1106
        %v1121 = vadd.f32 %v1101, %v1106
        %v1122 = vadd.f32 %v1102, %v1106
        %1123 = vst [vmem:[%s206] sm:$0xff] %v1107
        %1124 = vst [vmem:[%s206 + $0x8] sm:$0xff] %v1108
        %1125 = vst [vmem:[%s206 + $0x10] sm:$0xff] %v1109
        %1126 = vst [vmem:[%s206 + $0x18] sm:$0xff] %v1110
        %1127 = vst [vmem:[%s206 + $0x20] sm:$0xff] %v1111
        %1128 = vst [vmem:[%s206 + $0x28] sm:$0xff] %v1112
        %1129 = vst [vmem:[%s206 + $0x30] sm:$0xff] %v1113
        %1130 = vst [vmem:[%s206 + $0x38] sm:$0xff] %v1114
        %1131 = vst [vmem:[%s206 + $0x40] sm:$0xff] %v1115
        %1132 = vst [vmem:[%s206 + $0x48] sm:$0xff] %v1116
        %1133 = vst [vmem:[%s206 + $0x50] sm:$0xff] %v1117
        %1134 = vst [vmem:[%s206 + $0x58] sm:$0xff] %v1118
        %1135 = vst [vmem:[%s206 + $0x60] sm:$0xff] %v1119
        %1136 = vst [vmem:[%s206 + $0x68] sm:$0xff] %v1120
        %1137 = vst [vmem:[%s206 + $0x70] sm:$0xff] %v1121
        %1138 = vst [vmem:[%s206 + $0x78] sm:$0xff] %v1122
        %v1139 = vadd.f32 %v1107, %v1108
        %v1140 = vadd.f32 %v1139, %v1109
        %v1141 = vadd.f32 %v1140, %v1110
        %v1142 = vadd.f32 %v1141, %v1111
        %v1143 = vadd.f32 %v1142, %v1112
        %v1144 = vadd.f32 %v1143, %v1113
        %v1145 = vadd.f32 %v1144, %v1114
        %v1146 = vadd.f32 %v1145, %v1115
        %v1147 = vadd.f32 %v1146, %v1116
        %v1148 = vadd.f32 %v1147, %v1117
        %v1149 = vadd.f32 %v1148, %v1118
        %v1150 = vadd.f32 %v1149, %v1119
        %v1151 = vadd.f32 %v1150, %v1120
        %v1152 = vadd.f32 %v1151, %v1121
        %v1153 = vadd.f32 %v1152, %v1122
        %v1154 = vrot.slane %v1153, 4
        %v1155 = vadd.f32 %v1153, %v1154
        %v1156 = vrot.slane %v1155, 2
        %v1157 = vadd.f32 %v1155, %v1156
        %v1158 = vrot.slane %v1157, 1
        %v1159 = vadd.f32 %v1157, %v1158
        %v1160 = vadd.f32 %v1159, 0.0
        %v1161 = vmul.f32 %v1107, %v1107
        %v1162 = vmul.f32 %v1108, %v1108
        %v1163 = vmul.f32 %v1109, %v1109
        %v1164 = vmul.f32 %v1110, %v1110
        %v1165 = vmul.f32 %v1111, %v1111
        %v1166 = vmul.f32 %v1112, %v1112
        %v1167 = vmul.f32 %v1113, %v1113
        %v1168 = vmul.f32 %v1114, %v1114
        %v1169 = vmul.f32 %v1115, %v1115
        %v1170 = vmul.f32 %v1116, %v1116
        %v1171 = vmul.f32 %v1117, %v1117
        %v1172 = vmul.f32 %v1118, %v1118
        %v1173 = vmul.f32 %v1119, %v1119
        %v1174 = vmul.f32 %v1120, %v1120
        %v1175 = vmul.f32 %v1121, %v1121
        %v1176 = vmul.f32 %v1122, %v1122
        %v1177 = vadd.f32 %v1161, %v1162
        %v1178 = vadd.f32 %v1177, %v1163
        %v1179 = vadd.f32 %v1178, %v1164
        %v1180 = vadd.f32 %v1179, %v1165
        %v1181 = vadd.f32 %v1180, %v1166
        %v1182 = vadd.f32 %v1181, %v1167
        %v1183 = vadd.f32 %v1182, %v1168
        %v1184 = vadd.f32 %v1183, %v1169
        %v1185 = vadd.f32 %v1184, %v1170
        %v1186 = vadd.f32 %v1185, %v1171
        %v1187 = vadd.f32 %v1186, %v1172
        %v1188 = vadd.f32 %v1187, %v1173
        %v1189 = vadd.f32 %v1188, %v1174
        %v1190 = vadd.f32 %v1189, %v1175
        %v1191 = vadd.f32 %v1190, %v1176
        %v1192 = vrot.slane %v1191, 4
        %v1193 = vadd.f32 %v1191, %v1192
        %v1194 = vrot.slane %v1193, 2
        %v1195 = vadd.f32 %v1193, %v1194
        %v1196 = vrot.slane %v1195, 1
        %v1197 = vadd.f32 %v1195, %v1196
        %v1198 = vadd.f32 %v1197, 0.0
        %v1199 = vld [vmem:[%s217 + $0x1] sm:$0xff]
        %v1200 = vld [vmem:[%s217 + $0x9] sm:$0xff]
        %v1201 = vld [vmem:[%s217 + $0x19] sm:$0xff]
        %v1202 = vld [vmem:[%s217 + $0x21] sm:$0xff]
        %v1203 = vld [vmem:[%s217 + $0x31] sm:$0xff]
        %v1204 = vld [vmem:[%s217 + $0x39] sm:$0xff]
        %v1205 = vld [vmem:[%s217 + $0x49] sm:$0xff]
        %v1206 = vld [vmem:[%s217 + $0x51] sm:$0xff]
        %v1207 = vld [vmem:[%s217 + $0x61] sm:$0xff]
        %v1208 = vld [vmem:[%s217 + $0x69] sm:$0xff]
        %v1209 = vld [vmem:[%s217 + $0x79] sm:$0xff]
        %v1210 = vld [vmem:[%s217 + $0x81] sm:$0xff]
        %v1211 = vld [vmem:[%s217 + $0x91] sm:$0xff]
        %v1212 = vld [vmem:[%s217 + $0x99] sm:$0xff]
        %v1213 = vld [vmem:[%s217 + $0xa9] sm:$0xff]
        %v1214 = vld [vmem:[%s217 + $0xb1] sm:$0xff]
        %s1215 = scalar_lea.vmem %s2, 32
        %v1216 = vld [vmem:[%s1215] sm:$0xff]
        %v1217 = vld [vmem:[%s217 + $0x2] sm:$0xff]
        %v1218 = vld [vmem:[%s217 + $0xa] sm:$0xff]
        %v1219 = vld [vmem:[%s217 + $0x1a] sm:$0xff]
        %v1220 = vld [vmem:[%s217 + $0x22] sm:$0xff]
        %v1221 = vld [vmem:[%s217 + $0x32] sm:$0xff]
        %v1222 = vld [vmem:[%s217 + $0x3a] sm:$0xff]
        %v1223 = vld [vmem:[%s217 + $0x4a] sm:$0xff]
        %v1224 = vld [vmem:[%s217 + $0x52] sm:$0xff]
        %v1225 = vld [vmem:[%s217 + $0x62] sm:$0xff]
        %v1226 = vld [vmem:[%s217 + $0x6a] sm:$0xff]
        %v1227 = vld [vmem:[%s217 + $0x7a] sm:$0xff]
        %v1228 = vld [vmem:[%s217 + $0x82] sm:$0xff]
        %v1229 = vld [vmem:[%s217 + $0x92] sm:$0xff]
        %v1230 = vld [vmem:[%s217 + $0x9a] sm:$0xff]
        %v1231 = vld [vmem:[%s217 + $0xaa] sm:$0xff]
        %v1232 = vld [vmem:[%s217 + $0xb2] sm:$0xff]
        %s1233 = scalar_lea.vmem %s2, 40
        %v1234 = vld [vmem:[%s1233] sm:$0xff]
        %v1236 = vsel %vm261, %v1217, 0
        %v1239 = vsel %vm261, %v1218, 0
        %v1242 = vsel %vm261, %v1219, 0
        %v1245 = vsel %vm261, %v1220, 0
        %v1248 = vsel %vm261, %v1221, 0
        %v1251 = vsel %vm261, %v1222, 0
        %v1254 = vsel %vm261, %v1223, 0
        %v1257 = vsel %vm261, %v1224, 0
        %v1260 = vsel %vm261, %v1225, 0
        %v1263 = vsel %vm261, %v1226, 0
        %v1266 = vsel %vm261, %v1227, 0
        %v1269 = vsel %vm261, %v1228, 0
        %v1272 = vsel %vm261, %v1229, 0
        %v1275 = vsel %vm261, %v1230, 0
        %v1278 = vsel %vm261, %v1231, 0
        %v1281 = vsel %vm261, %v1232, 0
        %1283 = vmatprep.subr.mxu0 0.0
        %1284 = vmatpush1.msra.mxu0 %v1234
        %1285 = vmatprep.subr.mxu0 0.0
        %1286 = vmatpush1.msra.mxu0 0.0
        %1287 = vmatprep.subr.mxu0 0.0
        %1288 = vmatpush1.msra.mxu0 0.0
        %1289 = vmatprep.subr.mxu0 0.0
        %1290 = vmatpush1.msra.mxu0 0.0
        %1291 = vmatprep.subr.mxu0 0.0
        %1292 = vmatpush1.msra.mxu0 0.0
        %1293 = vmatprep.subr.mxu0 0.0
        %1294 = vmatpush1.msra.mxu0 0.0
        %1295 = vmatprep.subr.mxu0 0.0
        %1296 = vmatpush1.msra.mxu0 0.0
        %1297 = vmatprep.subr.mxu0 0.0
        %1298 = vmatpush1.msra.mxu0 0.0
        %1299 = vmatprep.subr.mxu0 0.0
        %1300 = vmatpush1.msra.mxu0 0.0
        %1301 = vmatprep.subr.mxu0 0.0
        %1302 = vmatpush1.msra.mxu0 0.0
        %1303 = vmatprep.subr.mxu0 0.0
        %1304 = vmatpush1.msra.mxu0 0.0
        %1305 = vmatprep.subr.mxu0 0.0
        %1306 = vmatpush1.msra.mxu0 0.0
        %1307 = vmatprep.subr.mxu0 0.0
        %1308 = vmatpush1.msra.mxu0 0.0
        %1309 = vmatprep.subr.mxu0 0.0
        %1310 = vmatpush1.msra.mxu0 0.0
        %1311 = vmatprep.subr.mxu0 0.0
        %1312 = vmatpush1.msra.mxu0 0.0
        %1313 = vmatprep.subr.mxu0 0.0
        %1314 = vmatpush1.msra.mxu0 0.0
        %1315 = vmatprep.subr.mxu0 0.0
        %1316 = vmatpush1.msra.mxu0 0.0
        %1317 = vmatprep.subr.mxu0 0.0
        %1318 = vmatpush1.msra.mxu0 0.0
        %1319 = vmatprep.subr.mxu0 0.0
        %1320 = vmatpush1.msra.mxu0 0.0
        %1321 = vmatprep.subr.mxu0 0.0
        %1322 = vmatpush1.msra.mxu0 0.0
        %1323 = vmatprep.subr.mxu0 0.0
        %1324 = vmatpush1.msra.mxu0 0.0
        %1325 = vmatprep.subr.mxu0 0.0
        %1326 = vmatpush1.msra.mxu0 0.0
        %1327 = vmatprep.subr.mxu0 0.0
        %1328 = vmatpush1.msra.mxu0 0.0
        %1329 = vmatprep.subr.mxu0 0.0
        %1330 = vmatpush1.msra.mxu0 0.0
        %1331 = vmatprep.subr.mxu0 0.0
        %1332 = vmatpush1.msra.mxu0 0.0
        %1333 = vmatprep.subr.mxu0 0.0
        %1334 = vmatpush1.msra.mxu0 0.0
        %1335 = vmatprep.subr.mxu0 0.0
        %1336 = vmatpush1.msra.mxu0 0.0
        %1337 = vmatprep.subr.mxu0 0.0
        %1338 = vmatpush1.msra.mxu0 0.0
        %1339 = vmatprep.subr.mxu0 0.0
        %1340 = vmatpush1.msra.mxu0 0.0
        %1341 = vmatprep.subr.mxu0 0.0
        %1342 = vmatpush1.msra.mxu0 0.0
        %1343 = vmatprep.subr.mxu0 0.0
        %1344 = vmatpush1.msra.mxu0 0.0
        %1345 = vmatprep.subr.mxu0 0.0
        %1346 = vmatpush1.msra.mxu0 0.0
        %1347 = vmatprep.mubr.f32.mxu0 0.0
        %1348 = vmatmul.mubr.f32.gmra.mrb[0].mxu0 %v1236
        %v1349 = vpop.f32.mrb[0].mxu0
        %v1350 = vadd.f32 0.0, %v1349
        %v1351 = vpop.f32.mrb[0].mxu0
        %1352 = vmatprep.mubr.f32.mxu0 0.0
        %1353 = vmatmul.mubr.f32.gmra.mrb[0].mxu0 %v1239
        %v1354 = vpop.f32.mrb[0].mxu0
        %v1355 = vadd.f32 0.0, %v1354
        %v1356 = vpop.f32.mrb[0].mxu0
        %1357 = vmatprep.mubr.f32.mxu0 0.0
        %1358 = vmatmul.mubr.f32.gmra.mrb[0].mxu0 %v1242
        %v1359 = vpop.f32.mrb[0].mxu0
        %v1360 = vadd.f32 0.0, %v1359
        %v1361 = vpop.f32.mrb[0].mxu0
        %1362 = vmatprep.mubr.f32.mxu0 0.0
        %1363 = vmatmul.mubr.f32.gmra.mrb[0].mxu0 %v1245
        %v1364 = vpop.f32.mrb[0].mxu0
        %v1365 = vadd.f32 0.0, %v1364
        %v1366 = vpop.f32.mrb[0].mxu0
        %1367 = vmatprep.mubr.f32.mxu0 0.0
        %1368 = vmatmul.mubr.f32.gmra.mrb[0].mxu0 %v1248
        %v1369 = vpop.f32.mrb[0].mxu0
        %v1370 = vadd.f32 0.0, %v1369
        %v1371 = vpop.f32.mrb[0].mxu0
        %1372 = vmatprep.mubr.f32.mxu0 0.0
        %1373 = vmatmul.mubr.f32.gmra.mrb[0].mxu0 %v1251
        %v1374 = vpop.f32.mrb[0].mxu0
        %v1375 = vadd.f32 0.0, %v1374
        %v1376 = vpop.f32.mrb[0].mxu0
        %1377 = vmatprep.mubr.f32.mxu0 0.0
        %1378 = vmatmul.mubr.f32.gmra.mrb[0].mxu0 %v1254
        %v1379 = vpop.f32.mrb[0].mxu0
        %v1380 = vadd.f32 0.0, %v1379
        %v1381 = vpop.f32.mrb[0].mxu0
        %1382 = vmatprep.mubr.f32.mxu0 0.0
        %1383 = vmatmul.mubr.f32.gmra.mrb[0].mxu0 %v1257
        %v1384 = vpop.f32.mrb[0].mxu0
        %v1385 = vadd.f32 0.0, %v1384
        %v1386 = vpop.f32.mrb[0].mxu0
        %1387 = vmatprep.mubr.f32.mxu0 0.0
        %1388 = vmatmul.mubr.f32.gmra.mrb[0].mxu0 %v1260
        %v1389 = vpop.f32.mrb[0].mxu0
        %v1390 = vadd.f32 0.0, %v1389
        %v1391 = vpop.f32.mrb[0].mxu0
        %1392 = vmatprep.mubr.f32.mxu0 0.0
        %1393 = vmatmul.mubr.f32.gmra.mrb[0].mxu0 %v1263
        %v1394 = vpop.f32.mrb[0].mxu0
        %v1395 = vadd.f32 0.0, %v1394
        %v1396 = vpop.f32.mrb[0].mxu0
        %1397 = vmatprep.mubr.f32.mxu0 0.0
        %1398 = vmatmul.mubr.f32.gmra.mrb[0].mxu0 %v1266
        %v1399 = vpop.f32.mrb[0].mxu0
        %v1400 = vadd.f32 0.0, %v1399
        %v1401 = vpop.f32.mrb[0].mxu0
        %1402 = vmatprep.mubr.f32.mxu0 0.0
        %1403 = vmatmul.mubr.f32.gmra.mrb[0].mxu0 %v1269
        %v1404 = vpop.f32.mrb[0].mxu0
        %v1405 = vadd.f32 0.0, %v1404
        %v1406 = vpop.f32.mrb[0].mxu0
        %1407 = vmatprep.mubr.f32.mxu0 0.0
        %1408 = vmatmul.mubr.f32.gmra.mrb[0].mxu0 %v1272
        %v1409 = vpop.f32.mrb[0].mxu0
        %v1410 = vadd.f32 0.0, %v1409
        %v1411 = vpop.f32.mrb[0].mxu0
        %1412 = vmatprep.mubr.f32.mxu0 0.0
        %1413 = vmatmul.mubr.f32.gmra.mrb[0].mxu0 %v1275
        %v1414 = vpop.f32.mrb[0].mxu0
        %v1415 = vadd.f32 0.0, %v1414
        %v1416 = vpop.f32.mrb[0].mxu0
        %1417 = vmatprep.mubr.f32.mxu0 0.0
        %1418 = vmatmul.mubr.f32.gmra.mrb[0].mxu0 %v1278
        %v1419 = vpop.f32.mrb[0].mxu0
        %v1420 = vadd.f32 0.0, %v1419
        %v1421 = vpop.f32.mrb[0].mxu0
        %1422 = vmatprep.mubr.f32.mxu0 0.0
        %1423 = vmatmul.mubr.f32.gmra.mrb[0].mxu0 %v1281
        %v1424 = vpop.f32.mrb[0].mxu0
        %v1425 = vadd.f32 0.0, %v1424
        %v1426 = vpop.f32.mrb[0].mxu0
        %1427 = vdwg.mxu0
        %v1429 = vsel %vm261, %v1199, 0
        %v1432 = vsel %vm261, %v1200, 0
        %v1435 = vsel %vm261, %v1201, 0
        %v1438 = vsel %vm261, %v1202, 0
        %v1441 = vsel %vm261, %v1203, 0
        %v1444 = vsel %vm261, %v1204, 0
        %v1447 = vsel %vm261, %v1205, 0
        %v1450 = vsel %vm261, %v1206, 0
        %v1453 = vsel %vm261, %v1207, 0
        %v1456 = vsel %vm261, %v1208, 0
        %v1459 = vsel %vm261, %v1209, 0
        %v1462 = vsel %vm261, %v1210, 0
        %v1465 = vsel %vm261, %v1211, 0
        %v1468 = vsel %vm261, %v1212, 0
        %v1471 = vsel %vm261, %v1213, 0
        %v1474 = vsel %vm261, %v1214, 0
        %1476 = vmatprep.subr.mxu0 0.0
        %1477 = vmatpush1.msra.mxu0 %v1216
        %1478 = vmatprep.subr.mxu0 0.0
        %1479 = vmatpush1.msra.mxu0 0.0
        %1480 = vmatprep.subr.mxu0 0.0
        %1481 = vmatpush1.msra.mxu0 0.0
        %1482 = vmatprep.subr.mxu0 0.0
        %1483 = vmatpush1.msra.mxu0 0.0
        %1484 = vmatprep.subr.mxu0 0.0
        %1485 = vmatpush1.msra.mxu0 0.0
        %1486 = vmatprep.subr.mxu0 0.0
        %1487 = vmatpush1.msra.mxu0 0.0
        %1488 = vmatprep.subr.mxu0 0.0
        %1489 = vmatpush1.msra.mxu0 0.0
        %1490 = vmatprep.subr.mxu0 0.0
        %1491 = vmatpush1.msra.mxu0 0.0
        %1492 = vmatprep.subr.mxu0 0.0
        %1493 = vmatpush1.msra.mxu0 0.0
        %1494 = vmatprep.subr.mxu0 0.0
        %1495 = vmatpush1.msra.mxu0 0.0
        %1496 = vmatprep.subr.mxu0 0.0
        %1497 = vmatpush1.msra.mxu0 0.0
        %1498 = vmatprep.subr.mxu0 0.0
        %1499 = vmatpush1.msra.mxu0 0.0
        %1500 = vmatprep.subr.mxu0 0.0
        %1501 = vmatpush1.msra.mxu0 0.0
        %1502 = vmatprep.subr.mxu0 0.0
        %1503 = vmatpush1.msra.mxu0 0.0
        %1504 = vmatprep.subr.mxu0 0.0
        %1505 = vmatpush1.msra.mxu0 0.0
        %1506 = vmatprep.subr.mxu0 0.0
        %1507 = vmatpush1.msra.mxu0 0.0
        %1508 = vmatprep.subr.mxu0 0.0
        %1509 = vmatpush1.msra.mxu0 0.0
        %1510 = vmatprep.subr.mxu0 0.0
        %1511 = vmatpush1.msra.mxu0 0.0
        %1512 = vmatprep.subr.mxu0 0.0
        %1513 = vmatpush1.msra.mxu0 0.0
        %1514 = vmatprep.subr.mxu0 0.0
        %1515 = vmatpush1.msra.mxu0 0.0
        %1516 = vmatprep.subr.mxu0 0.0
        %1517 = vmatpush1.msra.mxu0 0.0
        %1518 = vmatprep.subr.mxu0 0.0
        %1519 = vmatpush1.msra.mxu0 0.0
        %1520 = vmatprep.subr.mxu0 0.0
        %1521 = vmatpush1.msra.mxu0 0.0
        %1522 = vmatprep.subr.mxu0 0.0
        %1523 = vmatpush1.msra.mxu0 0.0
        %1524 = vmatprep.subr.mxu0 0.0
        %1525 = vmatpush1.msra.mxu0 0.0
        %1526 = vmatprep.subr.mxu0 0.0
        %1527 = vmatpush1.msra.mxu0 0.0
        %1528 = vmatprep.subr.mxu0 0.0
        %1529 = vmatpush1.msra.mxu0 0.0
        %1530 = vmatprep.subr.mxu0 0.0
        %1531 = vmatpush1.msra.mxu0 0.0
        %1532 = vmatprep.subr.mxu0 0.0
        %1533 = vmatpush1.msra.mxu0 0.0
        %1534 = vmatprep.subr.mxu0 0.0
        %1535 = vmatpush1.msra.mxu0 0.0
        %1536 = vmatprep.subr.mxu0 0.0
        %1537 = vmatpush1.msra.mxu0 0.0
        %1538 = vmatprep.subr.mxu0 0.0
        %1539 = vmatpush1.msra.mxu0 0.0
        %1540 = vmatprep.mubr.f32.mxu0 0.0
        %1541 = vmatmul.mubr.f32.gmra.mrb[0].mxu0 %v1429
        %v1542 = vpop.f32.mrb[0].mxu0
        %v1543 = vadd.f32 %v1350, %v1542
        %v1544 = vpop.f32.mrb[0].mxu0
        %1545 = vmatprep.mubr.f32.mxu0 0.0
        %1546 = vmatmul.mubr.f32.gmra.mrb[0].mxu0 %v1432
        %v1547 = vpop.f32.mrb[0].mxu0
        %v1548 = vadd.f32 %v1355, %v1547
        %v1549 = vpop.f32.mrb[0].mxu0
        %1550 = vmatprep.mubr.f32.mxu0 0.0
        %1551 = vmatmul.mubr.f32.gmra.mrb[0].mxu0 %v1435
        %v1552 = vpop.f32.mrb[0].mxu0
        %v1553 = vadd.f32 %v1360, %v1552
        %v1554 = vpop.f32.mrb[0].mxu0
        %1555 = vmatprep.mubr.f32.mxu0 0.0
        %1556 = vmatmul.mubr.f32.gmra.mrb[0].mxu0 %v1438
        %v1557 = vpop.f32.mrb[0].mxu0
        %v1558 = vadd.f32 %v1365, %v1557
        %v1559 = vpop.f32.mrb[0].mxu0
        %1560 = vmatprep.mubr.f32.mxu0 0.0
        %1561 = vmatmul.mubr.f32.gmra.mrb[0].mxu0 %v1441
        %v1562 = vpop.f32.mrb[0].mxu0
        %v1563 = vadd.f32 %v1370, %v1562
        %v1564 = vpop.f32.mrb[0].mxu0
        %1565 = vmatprep.mubr.f32.mxu0 0.0
        %1566 = vmatmul.mubr.f32.gmra.mrb[0].mxu0 %v1444
        %v1567 = vpop.f32.mrb[0].mxu0
        %v1568 = vadd.f32 %v1375, %v1567
        %v1569 = vpop.f32.mrb[0].mxu0
        %1570 = vmatprep.mubr.f32.mxu0 0.0
        %1571 = vmatmul.mubr.f32.gmra.mrb[0].mxu0 %v1447
        %v1572 = vpop.f32.mrb[0].mxu0
        %v1573 = vadd.f32 %v1380, %v1572
        %v1574 = vpop.f32.mrb[0].mxu0
        %1575 = vmatprep.mubr.f32.mxu0 0.0
        %1576 = vmatmul.mubr.f32.gmra.mrb[0].mxu0 %v1450
        %v1577 = vpop.f32.mrb[0].mxu0
        %v1578 = vadd.f32 %v1385, %v1577
        %v1579 = vpop.f32.mrb[0].mxu0
        %1580 = vmatprep.mubr.f32.mxu0 0.0
        %1581 = vmatmul.mubr.f32.gmra.mrb[0].mxu0 %v1453
        %v1582 = vpop.f32.mrb[0].mxu0
        %v1583 = vadd.f32 %v1390, %v1582
        %v1584 = vpop.f32.mrb[0].mxu0
        %1585 = vmatprep.mubr.f32.mxu0 0.0
        %1586 = vmatmul.mubr.f32.gmra.mrb[0].mxu0 %v1456
        %v1587 = vpop.f32.mrb[0].mxu0
        %v1588 = vadd.f32 %v1395, %v1587
        %v1589 = vpop.f32.mrb[0].mxu0
        %1590 = vmatprep.mubr.f32.mxu0 0.0
        %1591 = vmatmul.mubr.f32.gmra.mrb[0].mxu0 %v1459
        %v1592 = vpop.f32.mrb[0].mxu0
        %v1593 = vadd.f32 %v1400, %v1592
        %v1594 = vpop.f32.mrb[0].mxu0
        %1595 = vmatprep.mubr.f32.mxu0 0.0
        %1596 = vmatmul.mubr.f32.gmra.mrb[0].mxu0 %v1462
        %v1597 = vpop.f32.mrb[0].mxu0
        %v1598 = vadd.f32 %v1405, %v1597
        %v1599 = vpop.f32.mrb[0].mxu0
        %1600 = vmatprep.mubr.f32.mxu0 0.0
        %1601 = vmatmul.mubr.f32.gmra.mrb[0].mxu0 %v1465
        %v1602 = vpop.f32.mrb[0].mxu0
        %v1603 = vadd.f32 %v1410, %v1602
        %v1604 = vpop.f32.mrb[0].mxu0
        %1605 = vmatprep.mubr.f32.mxu0 0.0
        %1606 = vmatmul.mubr.f32.gmra.mrb[0].mxu0 %v1468
        %v1607 = vpop.f32.mrb[0].mxu0
        %v1608 = vadd.f32 %v1415, %v1607
        %v1609 = vpop.f32.mrb[0].mxu0
        %1610 = vmatprep.mubr.f32.mxu0 0.0
        %1611 = vmatmul.mubr.f32.gmra.mrb[0].mxu0 %v1471
        %v1612 = vpop.f32.mrb[0].mxu0
        %v1613 = vadd.f32 %v1420, %v1612
        %v1614 = vpop.f32.mrb[0].mxu0
        %1615 = vmatprep.mubr.f32.mxu0 0.0
        %1616 = vmatmul.mubr.f32.gmra.mrb[0].mxu0 %v1474
        %v1617 = vpop.f32.mrb[0].mxu0
        %v1618 = vadd.f32 %v1425, %v1617
        %v1619 = vpop.f32.mrb[0].mxu0
        %1620 = vdwg.mxu0
        %v1621 = vld [vmem:[%s648 + $0x1] sm:$0xff]
        %v1622 = vld [vmem:[%s648 + $0x9] sm:$0xff]
        %v1623 = vld [vmem:[%s648 + $0x19] sm:$0xff]
        %v1624 = vld [vmem:[%s648 + $0x21] sm:$0xff]
        %v1625 = vld [vmem:[%s648 + $0x31] sm:$0xff]
        %v1626 = vld [vmem:[%s648 + $0x39] sm:$0xff]
        %v1627 = vld [vmem:[%s648 + $0x49] sm:$0xff]
        %v1628 = vld [vmem:[%s648 + $0x51] sm:$0xff]
        %v1629 = vld [vmem:[%s648 + $0x61] sm:$0xff]
        %v1630 = vld [vmem:[%s648 + $0x69] sm:$0xff]
        %v1631 = vld [vmem:[%s648 + $0x79] sm:$0xff]
        %v1632 = vld [vmem:[%s648 + $0x81] sm:$0xff]
        %v1633 = vld [vmem:[%s648 + $0x91] sm:$0xff]
        %v1634 = vld [vmem:[%s648 + $0x99] sm:$0xff]
        %v1635 = vld [vmem:[%s648 + $0xa9] sm:$0xff]
        %v1636 = vld [vmem:[%s648 + $0xb1] sm:$0xff]
        %s1637 = scalar_lea.vmem %s2, 48
        %v1638 = vld [vmem:[%s1637] sm:$0xff]
        %v1640 = vsel %vm261, %v1621, 0
        %v1643 = vsel %vm261, %v1622, 0
        %v1646 = vsel %vm261, %v1623, 0
        %v1649 = vsel %vm261, %v1624, 0
        %v1652 = vsel %vm261, %v1625, 0
        %v1655 = vsel %vm261, %v1626, 0
        %v1658 = vsel %vm261, %v1627, 0
        %v1661 = vsel %vm261, %v1628, 0
        %v1664 = vsel %vm261, %v1629, 0
        %v1667 = vsel %vm261, %v1630, 0
        %v1670 = vsel %vm261, %v1631, 0
        %v1673 = vsel %vm261, %v1632, 0
        %v1676 = vsel %vm261, %v1633, 0
        %v1679 = vsel %vm261, %v1634, 0
        %v1682 = vsel %vm261, %v1635, 0
        %v1685 = vsel %vm261, %v1636, 0
        %1687 = vmatprep.subr.mxu0 0.0
        %1688 = vmatpush1.msra.mxu0 %v1638
        %1689 = vmatprep.subr.mxu0 0.0
        %1690 = vmatpush1.msra.mxu0 0.0
        %1691 = vmatprep.subr.mxu0 0.0
        %1692 = vmatpush1.msra.mxu0 0.0
        %1693 = vmatprep.subr.mxu0 0.0
        %1694 = vmatpush1.msra.mxu0 0.0
        %1695 = vmatprep.subr.mxu0 0.0
        %1696 = vmatpush1.msra.mxu0 0.0
        %1697 = vmatprep.subr.mxu0 0.0
        %1698 = vmatpush1.msra.mxu0 0.0
        %1699 = vmatprep.subr.mxu0 0.0
        %1700 = vmatpush1.msra.mxu0 0.0
        %1701 = vmatprep.subr.mxu0 0.0
        %1702 = vmatpush1.msra.mxu0 0.0
        %1703 = vmatprep.subr.mxu0 0.0
        %1704 = vmatpush1.msra.mxu0 0.0
        %1705 = vmatprep.subr.mxu0 0.0
        %1706 = vmatpush1.msra.mxu0 0.0
        %1707 = vmatprep.subr.mxu0 0.0
        %1708 = vmatpush1.msra.mxu0 0.0
        %1709 = vmatprep.subr.mxu0 0.0
        %1710 = vmatpush1.msra.mxu0 0.0
        %1711 = vmatprep.subr.mxu0 0.0
        %1712 = vmatpush1.msra.mxu0 0.0
        %1713 = vmatprep.subr.mxu0 0.0
        %1714 = vmatpush1.msra.mxu0 0.0
        %1715 = vmatprep.subr.mxu0 0.0
        %1716 = vmatpush1.msra.mxu0 0.0
        %1717 = vmatprep.subr.mxu0 0.0
        %1718 = vmatpush1.msra.mxu0 0.0
        %1719 = vmatprep.subr.mxu0 0.0
        %1720 = vmatpush1.msra.mxu0 0.0
        %1721 = vmatprep.subr.mxu0 0.0
        %1722 = vmatpush1.msra.mxu0 0.0
        %1723 = vmatprep.subr.mxu0 0.0
        %1724 = vmatpush1.msra.mxu0 0.0
        %1725 = vmatprep.subr.mxu0 0.0
        %1726 = vmatpush1.msra.mxu0 0.0
        %1727 = vmatprep.subr.mxu0 0.0
        %1728 = vmatpush1.msra.mxu0 0.0
        %1729 = vmatprep.subr.mxu0 0.0
        %1730 = vmatpush1.msra.mxu0 0.0
        %1731 = vmatprep.subr.mxu0 0.0
        %1732 = vmatpush1.msra.mxu0 0.0
        %1733 = vmatprep.subr.mxu0 0.0
        %1734 = vmatpush1.msra.mxu0 0.0
        %1735 = vmatprep.subr.mxu0 0.0
        %1736 = vmatpush1.msra.mxu0 0.0
        %1737 = vmatprep.subr.mxu0 0.0
        %1738 = vmatpush1.msra.mxu0 0.0
        %1739 = vmatprep.subr.mxu0 0.0
        %1740 = vmatpush1.msra.mxu0 0.0
        %1741 = vmatprep.subr.mxu0 0.0
        %1742 = vmatpush1.msra.mxu0 0.0
        %1743 = vmatprep.subr.mxu0 0.0
        %1744 = vmatpush1.msra.mxu0 0.0
        %1745 = vmatprep.subr.mxu0 0.0
        %1746 = vmatpush1.msra.mxu0 0.0
        %1747 = vmatprep.subr.mxu0 0.0
        %1748 = vmatpush1.msra.mxu0 0.0
        %1749 = vmatprep.subr.mxu0 0.0
        %1750 = vmatpush1.msra.mxu0 0.0
        %1751 = vmatprep.mubr.f32.mxu0 0.0
        %1752 = vmatmul.mubr.f32.gmra.mrb[0].mxu0 %v1640
        %v1753 = vpop.f32.mrb[0].mxu0
        %v1754 = vadd.f32 0.0, %v1753
        %v1755 = vpop.f32.mrb[0].mxu0
        %1756 = vmatprep.mubr.f32.mxu0 0.0
        %1757 = vmatmul.mubr.f32.gmra.mrb[0].mxu0 %v1643
        %v1758 = vpop.f32.mrb[0].mxu0
        %v1759 = vadd.f32 0.0, %v1758
        %v1760 = vpop.f32.mrb[0].mxu0
        %1761 = vmatprep.mubr.f32.mxu0 0.0
        %1762 = vmatmul.mubr.f32.gmra.mrb[0].mxu0 %v1646
        %v1763 = vpop.f32.mrb[0].mxu0
        %v1764 = vadd.f32 0.0, %v1763
        %v1765 = vpop.f32.mrb[0].mxu0
        %1766 = vmatprep.mubr.f32.mxu0 0.0
        %1767 = vmatmul.mubr.f32.gmra.mrb[0].mxu0 %v1649
        %v1768 = vpop.f32.mrb[0].mxu0
        %v1769 = vadd.f32 0.0, %v1768
        %v1770 = vpop.f32.mrb[0].mxu0
        %1771 = vmatprep.mubr.f32.mxu0 0.0
        %1772 = vmatmul.mubr.f32.gmra.mrb[0].mxu0 %v1652
        %v1773 = vpop.f32.mrb[0].mxu0
        %v1774 = vadd.f32 0.0, %v1773
        %v1775 = vpop.f32.mrb[0].mxu0
        %1776 = vmatprep.mubr.f32.mxu0 0.0
        %1777 = vmatmul.mubr.f32.gmra.mrb[0].mxu0 %v1655
        %v1778 = vpop.f32.mrb[0].mxu0
        %v1779 = vadd.f32 0.0, %v1778
        %v1780 = vpop.f32.mrb[0].mxu0
        %1781 = vmatprep.mubr.f32.mxu0 0.0
        %1782 = vmatmul.mubr.f32.gmra.mrb[0].mxu0 %v1658
        %v1783 = vpop.f32.mrb[0].mxu0
        %v1784 = vadd.f32 0.0, %v1783
        %v1785 = vpop.f32.mrb[0].mxu0
        %1786 = vmatprep.mubr.f32.mxu0 0.0
        %1787 = vmatmul.mubr.f32.gmra.mrb[0].mxu0 %v1661
        %v1788 = vpop.f32.mrb[0].mxu0
        %v1789 = vadd.f32 0.0, %v1788
        %v1790 = vpop.f32.mrb[0].mxu0
        %1791 = vmatprep.mubr.f32.mxu0 0.0
        %1792 = vmatmul.mubr.f32.gmra.mrb[0].mxu0 %v1664
        %v1793 = vpop.f32.mrb[0].mxu0
        %v1794 = vadd.f32 0.0, %v1793
        %v1795 = vpop.f32.mrb[0].mxu0
        %1796 = vmatprep.mubr.f32.mxu0 0.0
        %1797 = vmatmul.mubr.f32.gmra.mrb[0].mxu0 %v1667
        %v1798 = vpop.f32.mrb[0].mxu0
        %v1799 = vadd.f32 0.0, %v1798
        %v1800 = vpop.f32.mrb[0].mxu0
        %1801 = vmatprep.mubr.f32.mxu0 0.0
        %1802 = vmatmul.mubr.f32.gmra.mrb[0].mxu0 %v1670
        %v1803 = vpop.f32.mrb[0].mxu0
        %v1804 = vadd.f32 0.0, %v1803
        %v1805 = vpop.f32.mrb[0].mxu0
        %1806 = vmatprep.mubr.f32.mxu0 0.0
        %1807 = vmatmul.mubr.f32.gmra.mrb[0].mxu0 %v1673
        %v1808 = vpop.f32.mrb[0].mxu0
        %v1809 = vadd.f32 0.0, %v1808
        %v1810 = vpop.f32.mrb[0].mxu0
        %1811 = vmatprep.mubr.f32.mxu0 0.0
        %1812 = vmatmul.mubr.f32.gmra.mrb[0].mxu0 %v1676
        %v1813 = vpop.f32.mrb[0].mxu0
        %v1814 = vadd.f32 0.0, %v1813
        %v1815 = vpop.f32.mrb[0].mxu0
        %1816 = vmatprep.mubr.f32.mxu0 0.0
        %1817 = vmatmul.mubr.f32.gmra.mrb[0].mxu0 %v1679
        %v1818 = vpop.f32.mrb[0].mxu0
        %v1819 = vadd.f32 0.0, %v1818
        %v1820 = vpop.f32.mrb[0].mxu0
        %1821 = vmatprep.mubr.f32.mxu0 0.0
        %1822 = vmatmul.mubr.f32.gmra.mrb[0].mxu0 %v1682
        %v1823 = vpop.f32.mrb[0].mxu0
        %v1824 = vadd.f32 0.0, %v1823
        %v1825 = vpop.f32.mrb[0].mxu0
        %1826 = vmatprep.mubr.f32.mxu0 0.0
        %1827 = vmatmul.mubr.f32.gmra.mrb[0].mxu0 %v1685
        %v1828 = vpop.f32.mrb[0].mxu0
        %v1829 = vadd.f32 0.0, %v1828
        %v1830 = vpop.f32.mrb[0].mxu0
        %1831 = vdwg.mxu0
        %v1832 = vadd.f32 %v1543, %v1754
        %v1833 = vadd.f32 %v1548, %v1759
        %v1834 = vadd.f32 %v1553, %v1764
        %v1835 = vadd.f32 %v1558, %v1769
        %v1836 = vadd.f32 %v1563, %v1774
        %v1837 = vadd.f32 %v1568, %v1779
        %v1838 = vadd.f32 %v1573, %v1784
        %v1839 = vadd.f32 %v1578, %v1789
        %v1840 = vadd.f32 %v1583, %v1794
        %v1841 = vadd.f32 %v1588, %v1799
        %v1842 = vadd.f32 %v1593, %v1804
        %v1843 = vadd.f32 %v1598, %v1809
        %v1844 = vadd.f32 %v1603, %v1814
        %v1845 = vadd.f32 %v1608, %v1819
        %v1846 = vadd.f32 %v1613, %v1824
        %v1847 = vadd.f32 %v1618, %v1829
        %v1848 = vld [vmem:[%s648 + $0x2] sm:$0xff]
        %v1849 = vld [vmem:[%s648 + $0xa] sm:$0xff]
        %v1850 = vld [vmem:[%s648 + $0x1a] sm:$0xff]
        %v1851 = vld [vmem:[%s648 + $0x22] sm:$0xff]
        %v1852 = vld [vmem:[%s648 + $0x32] sm:$0xff]
        %v1853 = vld [vmem:[%s648 + $0x3a] sm:$0xff]
        %v1854 = vld [vmem:[%s648 + $0x4a] sm:$0xff]
        %v1855 = vld [vmem:[%s648 + $0x52] sm:$0xff]
        %v1856 = vld [vmem:[%s648 + $0x62] sm:$0xff]
        %v1857 = vld [vmem:[%s648 + $0x6a] sm:$0xff]
        %v1858 = vld [vmem:[%s648 + $0x7a] sm:$0xff]
        %v1859 = vld [vmem:[%s648 + $0x82] sm:$0xff]
        %v1860 = vld [vmem:[%s648 + $0x92] sm:$0xff]
        %v1861 = vld [vmem:[%s648 + $0x9a] sm:$0xff]
        %v1862 = vld [vmem:[%s648 + $0xaa] sm:$0xff]
        %v1863 = vld [vmem:[%s648 + $0xb2] sm:$0xff]
        %s1864 = scalar_lea.vmem %s2, 56
        %v1865 = vld [vmem:[%s1864] sm:$0xff]
        %v1867 = vsel %vm261, %v1848, 0
        %v1870 = vsel %vm261, %v1849, 0
        %v1873 = vsel %vm261, %v1850, 0
        %v1876 = vsel %vm261, %v1851, 0
        %v1879 = vsel %vm261, %v1852, 0
        %v1882 = vsel %vm261, %v1853, 0
        %v1885 = vsel %vm261, %v1854, 0
        %v1888 = vsel %vm261, %v1855, 0
        %v1891 = vsel %vm261, %v1856, 0
        %v1894 = vsel %vm261, %v1857, 0
        %v1897 = vsel %vm261, %v1858, 0
        %v1900 = vsel %vm261, %v1859, 0
        %v1903 = vsel %vm261, %v1860, 0
        %v1906 = vsel %vm261, %v1861, 0
        %v1909 = vsel %vm261, %v1862, 0
        %v1912 = vsel %vm261, %v1863, 0
        %1914 = vmatprep.subr.mxu0 0.0
        %1915 = vmatpush1.msra.mxu0 %v1865
        %1916 = vmatprep.subr.mxu0 0.0
        %1917 = vmatpush1.msra.mxu0 0.0
        %1918 = vmatprep.subr.mxu0 0.0
        %1919 = vmatpush1.msra.mxu0 0.0
        %1920 = vmatprep.subr.mxu0 0.0
        %1921 = vmatpush1.msra.mxu0 0.0
        %1922 = vmatprep.subr.mxu0 0.0
        %1923 = vmatpush1.msra.mxu0 0.0
        %1924 = vmatprep.subr.mxu0 0.0
        %1925 = vmatpush1.msra.mxu0 0.0
        %1926 = vmatprep.subr.mxu0 0.0
        %1927 = vmatpush1.msra.mxu0 0.0
        %1928 = vmatprep.subr.mxu0 0.0
        %1929 = vmatpush1.msra.mxu0 0.0
        %1930 = vmatprep.subr.mxu0 0.0
        %1931 = vmatpush1.msra.mxu0 0.0
        %1932 = vmatprep.subr.mxu0 0.0
        %1933 = vmatpush1.msra.mxu0 0.0
        %1934 = vmatprep.subr.mxu0 0.0
        %1935 = vmatpush1.msra.mxu0 0.0
        %1936 = vmatprep.subr.mxu0 0.0
        %1937 = vmatpush1.msra.mxu0 0.0
        %1938 = vmatprep.subr.mxu0 0.0
        %1939 = vmatpush1.msra.mxu0 0.0
        %1940 = vmatprep.subr.mxu0 0.0
        %1941 = vmatpush1.msra.mxu0 0.0
        %1942 = vmatprep.subr.mxu0 0.0
        %1943 = vmatpush1.msra.mxu0 0.0
        %1944 = vmatprep.subr.mxu0 0.0
        %1945 = vmatpush1.msra.mxu0 0.0
        %1946 = vmatprep.subr.mxu0 0.0
        %1947 = vmatpush1.msra.mxu0 0.0
        %1948 = vmatprep.subr.mxu0 0.0
        %1949 = vmatpush1.msra.mxu0 0.0
        %1950 = vmatprep.subr.mxu0 0.0
        %1951 = vmatpush1.msra.mxu0 0.0
        %1952 = vmatprep.subr.mxu0 0.0
        %1953 = vmatpush1.msra.mxu0 0.0
        %1954 = vmatprep.subr.mxu0 0.0
        %1955 = vmatpush1.msra.mxu0 0.0
        %1956 = vmatprep.subr.mxu0 0.0
        %1957 = vmatpush1.msra.mxu0 0.0
        %1958 = vmatprep.subr.mxu0 0.0
        %1959 = vmatpush1.msra.mxu0 0.0
        %1960 = vmatprep.subr.mxu0 0.0
        %1961 = vmatpush1.msra.mxu0 0.0
        %1962 = vmatprep.subr.mxu0 0.0
        %1963 = vmatpush1.msra.mxu0 0.0
        %1964 = vmatprep.subr.mxu0 0.0
        %1965 = vmatpush1.msra.mxu0 0.0
        %1966 = vmatprep.subr.mxu0 0.0
        %1967 = vmatpush1.msra.mxu0 0.0
        %1968 = vmatprep.subr.mxu0 0.0
        %1969 = vmatpush1.msra.mxu0 0.0
        %1970 = vmatprep.subr.mxu0 0.0
        %1971 = vmatpush1.msra.mxu0 0.0
        %1972 = vmatprep.subr.mxu0 0.0
        %1973 = vmatpush1.msra.mxu0 0.0
        %1974 = vmatprep.subr.mxu0 0.0
        %1975 = vmatpush1.msra.mxu0 0.0
        %1976 = vmatprep.subr.mxu0 0.0
        %1977 = vmatpush1.msra.mxu0 0.0
        %1978 = vmatprep.mubr.f32.mxu0 0.0
        %1979 = vmatmul.mubr.f32.gmra.mrb[0].mxu0 %v1867
        %v1980 = vpop.f32.mrb[0].mxu0
        %v1981 = vadd.f32 0.0, %v1980
        %v1982 = vpop.f32.mrb[0].mxu0
        %1983 = vmatprep.mubr.f32.mxu0 0.0
        %1984 = vmatmul.mubr.f32.gmra.mrb[0].mxu0 %v1870
        %v1985 = vpop.f32.mrb[0].mxu0
        %v1986 = vadd.f32 0.0, %v1985
        %v1987 = vpop.f32.mrb[0].mxu0
        %1988 = vmatprep.mubr.f32.mxu0 0.0
        %1989 = vmatmul.mubr.f32.gmra.mrb[0].mxu0 %v1873
        %v1990 = vpop.f32.mrb[0].mxu0
        %v1991 = vadd.f32 0.0, %v1990
        %v1992 = vpop.f32.mrb[0].mxu0
        %1993 = vmatprep.mubr.f32.mxu0 0.0
        %1994 = vmatmul.mubr.f32.gmra.mrb[0].mxu0 %v1876
        %v1995 = vpop.f32.mrb[0].mxu0
        %v1996 = vadd.f32 0.0, %v1995
        %v1997 = vpop.f32.mrb[0].mxu0
        %1998 = vmatprep.mubr.f32.mxu0 0.0
        %1999 = vmatmul.mubr.f32.gmra.mrb[0].mxu0 %v1879
        %v2000 = vpop.f32.mrb[0].mxu0
        %v2001 = vadd.f32 0.0, %v2000
        %v2002 = vpop.f32.mrb[0].mxu0
        %2003 = vmatprep.mubr.f32.mxu0 0.0
        %2004 = vmatmul.mubr.f32.gmra.mrb[0].mxu0 %v1882
        %v2005 = vpop.f32.mrb[0].mxu0
        %v2006 = vadd.f32 0.0, %v2005
        %v2007 = vpop.f32.mrb[0].mxu0
        %2008 = vmatprep.mubr.f32.mxu0 0.0
        %2009 = vmatmul.mubr.f32.gmra.mrb[0].mxu0 %v1885
        %v2010 = vpop.f32.mrb[0].mxu0
        %v2011 = vadd.f32 0.0, %v2010
        %v2012 = vpop.f32.mrb[0].mxu0
        %2013 = vmatprep.mubr.f32.mxu0 0.0
        %2014 = vmatmul.mubr.f32.gmra.mrb[0].mxu0 %v1888
        %v2015 = vpop.f32.mrb[0].mxu0
        %v2016 = vadd.f32 0.0, %v2015
        %v2017 = vpop.f32.mrb[0].mxu0
        %2018 = vmatprep.mubr.f32.mxu0 0.0
        %2019 = vmatmul.mubr.f32.gmra.mrb[0].mxu0 %v1891
        %v2020 = vpop.f32.mrb[0].mxu0
        %v2021 = vadd.f32 0.0, %v2020
        %v2022 = vpop.f32.mrb[0].mxu0
        %2023 = vmatprep.mubr.f32.mxu0 0.0
        %2024 = vmatmul.mubr.f32.gmra.mrb[0].mxu0 %v1894
        %v2025 = vpop.f32.mrb[0].mxu0
        %v2026 = vadd.f32 0.0, %v2025
        %v2027 = vpop.f32.mrb[0].mxu0
        %2028 = vmatprep.mubr.f32.mxu0 0.0
        %2029 = vmatmul.mubr.f32.gmra.mrb[0].mxu0 %v1897
        %v2030 = vpop.f32.mrb[0].mxu0
        %v2031 = vadd.f32 0.0, %v2030
        %v2032 = vpop.f32.mrb[0].mxu0
        %2033 = vmatprep.mubr.f32.mxu0 0.0
        %2034 = vmatmul.mubr.f32.gmra.mrb[0].mxu0 %v1900
        %v2035 = vpop.f32.mrb[0].mxu0
        %v2036 = vadd.f32 0.0, %v2035
        %v2037 = vpop.f32.mrb[0].mxu0
        %2038 = vmatprep.mubr.f32.mxu0 0.0
        %2039 = vmatmul.mubr.f32.gmra.mrb[0].mxu0 %v1903
        %v2040 = vpop.f32.mrb[0].mxu0
        %v2041 = vadd.f32 0.0, %v2040
        %v2042 = vpop.f32.mrb[0].mxu0
        %2043 = vmatprep.mubr.f32.mxu0 0.0
        %2044 = vmatmul.mubr.f32.gmra.mrb[0].mxu0 %v1906
        %v2045 = vpop.f32.mrb[0].mxu0
        %v2046 = vadd.f32 0.0, %v2045
        %v2047 = vpop.f32.mrb[0].mxu0
        %2048 = vmatprep.mubr.f32.mxu0 0.0
        %2049 = vmatmul.mubr.f32.gmra.mrb[0].mxu0 %v1909
        %v2050 = vpop.f32.mrb[0].mxu0
        %v2051 = vadd.f32 0.0, %v2050
        %v2052 = vpop.f32.mrb[0].mxu0
        %2053 = vmatprep.mubr.f32.mxu0 0.0
        %2054 = vmatmul.mubr.f32.gmra.mrb[0].mxu0 %v1912
        %v2055 = vpop.f32.mrb[0].mxu0
        %v2056 = vadd.f32 0.0, %v2055
        %v2057 = vpop.f32.mrb[0].mxu0
        %2058 = vdwg.mxu0
        %v2059 = vadd.f32 %v1832, %v1981
        %v2060 = vadd.f32 %v1833, %v1986
        %v2061 = vadd.f32 %v1834, %v1991
        %v2062 = vadd.f32 %v1835, %v1996
        %v2063 = vadd.f32 %v1836, %v2001
        %v2064 = vadd.f32 %v1837, %v2006
        %v2065 = vadd.f32 %v1838, %v2011
        %v2066 = vadd.f32 %v1839, %v2016
        %v2067 = vadd.f32 %v1840, %v2021
        %v2068 = vadd.f32 %v1841, %v2026
        %v2069 = vadd.f32 %v1842, %v2031
        %v2070 = vadd.f32 %v1843, %v2036
        %v2071 = vadd.f32 %v1844, %v2041
        %v2072 = vadd.f32 %v1845, %v2046
        %v2073 = vadd.f32 %v1846, %v2051
        %v2074 = vadd.f32 %v1847, %v2056
        %v2075 = vadd.f32 %v2059, %v1106
        %v2076 = vadd.f32 %v2060, %v1106
        %v2077 = vadd.f32 %v2061, %v1106
        %v2078 = vadd.f32 %v2062, %v1106
        %v2079 = vadd.f32 %v2063, %v1106
        %v2080 = vadd.f32 %v2064, %v1106
        %v2081 = vadd.f32 %v2065, %v1106
        %v2082 = vadd.f32 %v2066, %v1106
        %v2083 = vadd.f32 %v2067, %v1106
        %v2084 = vadd.f32 %v2068, %v1106
        %v2085 = vadd.f32 %v2069, %v1106
        %v2086 = vadd.f32 %v2070, %v1106
        %v2087 = vadd.f32 %v2071, %v1106
        %v2088 = vadd.f32 %v2072, %v1106
        %v2089 = vadd.f32 %v2073, %v1106
        %v2090 = vadd.f32 %v2074, %v1106
        %s2091 = scalar_lea.vmem %s206, 128 [#allocation2]
        %2092 = vst [vmem:[%s2091] sm:$0xff] %v2075
        %2093 = vst [vmem:[%s2091 + $0x8] sm:$0xff] %v2076
        %2094 = vst [vmem:[%s2091 + $0x10] sm:$0xff] %v2077
        %2095 = vst [vmem:[%s2091 + $0x18] sm:$0xff] %v2078
        %2096 = vst [vmem:[%s2091 + $0x20] sm:$0xff] %v2079
        %2097 = vst [vmem:[%s2091 + $0x28] sm:$0xff] %v2080
        %2098 = vst [vmem:[%s2091 + $0x30] sm:$0xff] %v2081
        %2099 = vst [vmem:[%s2091 + $0x38] sm:$0xff] %v2082
        %2100 = vst [vmem:[%s2091 + $0x40] sm:$0xff] %v2083
        %2101 = vst [vmem:[%s2091 + $0x48] sm:$0xff] %v2084
        %2102 = vst [vmem:[%s2091 + $0x50] sm:$0xff] %v2085
        %2103 = vst [vmem:[%s2091 + $0x58] sm:$0xff] %v2086
        %2104 = vst [vmem:[%s2091 + $0x60] sm:$0xff] %v2087
        %2105 = vst [vmem:[%s2091 + $0x68] sm:$0xff] %v2088
        %2106 = vst [vmem:[%s2091 + $0x70] sm:$0xff] %v2089
        %2107 = vst [vmem:[%s2091 + $0x78] sm:$0xff] %v2090
        %v2108 = vadd.f32 %v2075, %v2076
        %v2109 = vadd.f32 %v2108, %v2077
        %v2110 = vadd.f32 %v2109, %v2078
        %v2111 = vadd.f32 %v2110, %v2079
        %v2112 = vadd.f32 %v2111, %v2080
        %v2113 = vadd.f32 %v2112, %v2081
        %v2114 = vadd.f32 %v2113, %v2082
        %v2115 = vadd.f32 %v2114, %v2083
        %v2116 = vadd.f32 %v2115, %v2084
        %v2117 = vadd.f32 %v2116, %v2085
        %v2118 = vadd.f32 %v2117, %v2086
        %v2119 = vadd.f32 %v2118, %v2087
        %v2120 = vadd.f32 %v2119, %v2088
        %v2121 = vadd.f32 %v2120, %v2089
        %v2122 = vadd.f32 %v2121, %v2090
        %v2123 = vrot.slane %v2122, 4
        %v2124 = vadd.f32 %v2122, %v2123
        %v2125 = vrot.slane %v2124, 2
        %v2126 = vadd.f32 %v2124, %v2125
        %v2127 = vrot.slane %v2126, 1
        %v2128 = vadd.f32 %v2126, %v2127
        %v2129 = vadd.f32 %v1160, %v2128
        %v2130 = vmul.f32 %v2075, %v2075
        %v2131 = vmul.f32 %v2076, %v2076
        %v2132 = vmul.f32 %v2077, %v2077
        %v2133 = vmul.f32 %v2078, %v2078
        %v2134 = vmul.f32 %v2079, %v2079
        %v2135 = vmul.f32 %v2080, %v2080
        %v2136 = vmul.f32 %v2081, %v2081
        %v2137 = vmul.f32 %v2082, %v2082
        %v2138 = vmul.f32 %v2083, %v2083
        %v2139 = vmul.f32 %v2084, %v2084
        %v2140 = vmul.f32 %v2085, %v2085
        %v2141 = vmul.f32 %v2086, %v2086
        %v2142 = vmul.f32 %v2087, %v2087
        %v2143 = vmul.f32 %v2088, %v2088
        %v2144 = vmul.f32 %v2089, %v2089
        %v2145 = vmul.f32 %v2090, %v2090
        %v2146 = vadd.f32 %v2130, %v2131
        %v2147 = vadd.f32 %v2146, %v2132
        %v2148 = vadd.f32 %v2147, %v2133
        %v2149 = vadd.f32 %v2148, %v2134
        %v2150 = vadd.f32 %v2149, %v2135
        %v2151 = vadd.f32 %v2150, %v2136
        %v2152 = vadd.f32 %v2151, %v2137
        %v2153 = vadd.f32 %v2152, %v2138
        %v2154 = vadd.f32 %v2153, %v2139
        %v2155 = vadd.f32 %v2154, %v2140
        %v2156 = vadd.f32 %v2155, %v2141
        %v2157 = vadd.f32 %v2156, %v2142
        %v2158 = vadd.f32 %v2157, %v2143
        %v2159 = vadd.f32 %v2158, %v2144
        %v2160 = vadd.f32 %v2159, %v2145
        %v2161 = vrot.slane %v2160, 4
        %v2162 = vadd.f32 %v2160, %v2161
        %v2163 = vrot.slane %v2162, 2
        %v2164 = vadd.f32 %v2162, %v2163
        %v2165 = vrot.slane %v2164, 1
        %v2166 = vadd.f32 %v2164, %v2165
        %v2167 = vadd.f32 %v1198, %v2166
        %v2168 = vld [vmem:[%s648] sm:$0xff]
        %v2169 = vld [vmem:[%s648 + $0x8] sm:$0xff]
        %v2170 = vld [vmem:[%s648 + $0x18] sm:$0xff]
        %v2171 = vld [vmem:[%s648 + $0x20] sm:$0xff]
        %v2172 = vld [vmem:[%s648 + $0x30] sm:$0xff]
        %v2173 = vld [vmem:[%s648 + $0x38] sm:$0xff]
        %v2174 = vld [vmem:[%s648 + $0x48] sm:$0xff]
        %v2175 = vld [vmem:[%s648 + $0x50] sm:$0xff]
        %v2176 = vld [vmem:[%s648 + $0x60] sm:$0xff]
        %v2177 = vld [vmem:[%s648 + $0x68] sm:$0xff]
        %v2178 = vld [vmem:[%s648 + $0x78] sm:$0xff]
        %v2179 = vld [vmem:[%s648 + $0x80] sm:$0xff]
        %v2180 = vld [vmem:[%s648 + $0x90] sm:$0xff]
        %v2181 = vld [vmem:[%s648 + $0x98] sm:$0xff]
        %v2182 = vld [vmem:[%s648 + $0xa8] sm:$0xff]
        %v2183 = vld [vmem:[%s648 + $0xb0] sm:$0xff]
        %s2184 = scalar_lea.vmem %s2, 64
        %v2185 = vld [vmem:[%s2184] sm:$0xff]
        %v2186 = vld [vmem:[%s648 + $0x1] sm:$0xff]
        %v2187 = vld [vmem:[%s648 + $0x9] sm:$0xff]
        %v2188 = vld [vmem:[%s648 + $0x19] sm:$0xff]
        %v2189 = vld [vmem:[%s648 + $0x21] sm:$0xff]
        %v2190 = vld [vmem:[%s648 + $0x31] sm:$0xff]
        %v2191 = vld [vmem:[%s648 + $0x39] sm:$0xff]
        %v2192 = vld [vmem:[%s648 + $0x49] sm:$0xff]
        %v2193 = vld [vmem:[%s648 + $0x51] sm:$0xff]
        %v2194 = vld [vmem:[%s648 + $0x61] sm:$0xff]
        %v2195 = vld [vmem:[%s648 + $0x69] sm:$0xff]
        %v2196 = vld [vmem:[%s648 + $0x79] sm:$0xff]
        %v2197 = vld [vmem:[%s648 + $0x81] sm:$0xff]
        %v2198 = vld [vmem:[%s648 + $0x91] sm:$0xff]
        %v2199 = vld [vmem:[%s648 + $0x99] sm:$0xff]
        %v2200 = vld [vmem:[%s648 + $0xa9] sm:$0xff]
        %v2201 = vld [vmem:[%s648 + $0xb1] sm:$0xff]
        %s2202 = scalar_lea.vmem %s2, 72
        %v2203 = vld [vmem:[%s2202] sm:$0xff]
        %v2205 = vsel %vm261, %v2186, 0
        %v2208 = vsel %vm261, %v2187, 0
        %v2211 = vsel %vm261, %v2188, 0
        %v2214 = vsel %vm261, %v2189, 0
        %v2217 = vsel %vm261, %v2190, 0
        %v2220 = vsel %vm261, %v2191, 0
        %v2223 = vsel %vm261, %v2192, 0
        %v2226 = vsel %vm261, %v2193, 0
        %v2229 = vsel %vm261, %v2194, 0
        %v2232 = vsel %vm261, %v2195, 0
        %v2235 = vsel %vm261, %v2196, 0
        %v2238 = vsel %vm261, %v2197, 0
        %v2241 = vsel %vm261, %v2198, 0
        %v2244 = vsel %vm261, %v2199, 0
        %v2247 = vsel %vm261, %v2200, 0
        %v2250 = vsel %vm261, %v2201, 0
        %2252 = vmatprep.subr.mxu0 0.0
        %2253 = vmatpush1.msra.mxu0 %v2203
        %2254 = vmatprep.subr.mxu0 0.0
        %2255 = vmatpush1.msra.mxu0 0.0
        %2256 = vmatprep.subr.mxu0 0.0
        %2257 = vmatpush1.msra.mxu0 0.0
        %2258 = vmatprep.subr.mxu0 0.0
        %2259 = vmatpush1.msra.mxu0 0.0
        %2260 = vmatprep.subr.mxu0 0.0
        %2261 = vmatpush1.msra.mxu0 0.0
        %2262 = vmatprep.subr.mxu0 0.0
        %2263 = vmatpush1.msra.mxu0 0.0
        %2264 = vmatprep.subr.mxu0 0.0
        %2265 = vmatpush1.msra.mxu0 0.0
        %2266 = vmatprep.subr.mxu0 0.0
        %2267 = vmatpush1.msra.mxu0 0.0
        %2268 = vmatprep.subr.mxu0 0.0
        %2269 = vmatpush1.msra.mxu0 0.0
        %2270 = vmatprep.subr.mxu0 0.0
        %2271 = vmatpush1.msra.mxu0 0.0
        %2272 = vmatprep.subr.mxu0 0.0
        %2273 = vmatpush1.msra.mxu0 0.0
        %2274 = vmatprep.subr.mxu0 0.0
        %2275 = vmatpush1.msra.mxu0 0.0
        %2276 = vmatprep.subr.mxu0 0.0
        %2277 = vmatpush1.msra.mxu0 0.0
        %2278 = vmatprep.subr.mxu0 0.0
        %2279 = vmatpush1.msra.mxu0 0.0
        %2280 = vmatprep.subr.mxu0 0.0
        %2281 = vmatpush1.msra.mxu0 0.0
        %2282 = vmatprep.subr.mxu0 0.0
        %2283 = vmatpush1.msra.mxu0 0.0
        %2284 = vmatprep.subr.mxu0 0.0
        %2285 = vmatpush1.msra.mxu0 0.0
        %2286 = vmatprep.subr.mxu0 0.0
        %2287 = vmatpush1.msra.mxu0 0.0
        %2288 = vmatprep.subr.mxu0 0.0
        %2289 = vmatpush1.msra.mxu0 0.0
        %2290 = vmatprep.subr.mxu0 0.0
        %2291 = vmatpush1.msra.mxu0 0.0
        %2292 = vmatprep.subr.mxu0 0.0
        %2293 = vmatpush1.msra.mxu0 0.0
        %2294 = vmatprep.subr.mxu0 0.0
        %2295 = vmatpush1.msra.mxu0 0.0
        %2296 = vmatprep.subr.mxu0 0.0
        %2297 = vmatpush1.msra.mxu0 0.0
        %2298 = vmatprep.subr.mxu0 0.0
        %2299 = vmatpush1.msra.mxu0 0.0
        %2300 = vmatprep.subr.mxu0 0.0
        %2301 = vmatpush1.msra.mxu0 0.0
        %2302 = vmatprep.subr.mxu0 0.0
        %2303 = vmatpush1.msra.mxu0 0.0
        %2304 = vmatprep.subr.mxu0 0.0
        %2305 = vmatpush1.msra.mxu0 0.0
        %2306 = vmatprep.subr.mxu0 0.0
        %2307 = vmatpush1.msra.mxu0 0.0
        %2308 = vmatprep.subr.mxu0 0.0
        %2309 = vmatpush1.msra.mxu0 0.0
        %2310 = vmatprep.subr.mxu0 0.0
        %2311 = vmatpush1.msra.mxu0 0.0
        %2312 = vmatprep.subr.mxu0 0.0
        %2313 = vmatpush1.msra.mxu0 0.0
        %2314 = vmatprep.subr.mxu0 0.0
        %2315 = vmatpush1.msra.mxu0 0.0
        %2316 = vmatprep.mubr.f32.mxu0 0.0
        %2317 = vmatmul.mubr.f32.gmra.mrb[0].mxu0 %v2205
        %v2318 = vpop.f32.mrb[0].mxu0
        %v2319 = vadd.f32 0.0, %v2318
        %v2320 = vpop.f32.mrb[0].mxu0
        %2321 = vmatprep.mubr.f32.mxu0 0.0
        %2322 = vmatmul.mubr.f32.gmra.mrb[0].mxu0 %v2208
        %v2323 = vpop.f32.mrb[0].mxu0
        %v2324 = vadd.f32 0.0, %v2323
        %v2325 = vpop.f32.mrb[0].mxu0
        %2326 = vmatprep.mubr.f32.mxu0 0.0
        %2327 = vmatmul.mubr.f32.gmra.mrb[0].mxu0 %v2211
        %v2328 = vpop.f32.mrb[0].mxu0
        %v2329 = vadd.f32 0.0, %v2328
        %v2330 = vpop.f32.mrb[0].mxu0
        %2331 = vmatprep.mubr.f32.mxu0 0.0
        %2332 = vmatmul.mubr.f32.gmra.mrb[0].mxu0 %v2214
        %v2333 = vpop.f32.mrb[0].mxu0
        %v2334 = vadd.f32 0.0, %v2333
        %v2335 = vpop.f32.mrb[0].mxu0
        %2336 = vmatprep.mubr.f32.mxu0 0.0
        %2337 = vmatmul.mubr.f32.gmra.mrb[0].mxu0 %v2217
        %v2338 = vpop.f32.mrb[0].mxu0
        %v2339 = vadd.f32 0.0, %v2338
        %v2340 = vpop.f32.mrb[0].mxu0
        %2341 = vmatprep.mubr.f32.mxu0 0.0
        %2342 = vmatmul.mubr.f32.gmra.mrb[0].mxu0 %v2220
        %v2343 = vpop.f32.mrb[0].mxu0
        %v2344 = vadd.f32 0.0, %v2343
        %v2345 = vpop.f32.mrb[0].mxu0
        %2346 = vmatprep.mubr.f32.mxu0 0.0
        %2347 = vmatmul.mubr.f32.gmra.mrb[0].mxu0 %v2223
        %v2348 = vpop.f32.mrb[0].mxu0
        %v2349 = vadd.f32 0.0, %v2348
        %v2350 = vpop.f32.mrb[0].mxu0
        %2351 = vmatprep.mubr.f32.mxu0 0.0
        %2352 = vmatmul.mubr.f32.gmra.mrb[0].mxu0 %v2226
        %v2353 = vpop.f32.mrb[0].mxu0
        %v2354 = vadd.f32 0.0, %v2353
        %v2355 = vpop.f32.mrb[0].mxu0
        %2356 = vmatprep.mubr.f32.mxu0 0.0
        %2357 = vmatmul.mubr.f32.gmra.mrb[0].mxu0 %v2229
        %v2358 = vpop.f32.mrb[0].mxu0
        %v2359 = vadd.f32 0.0, %v2358
        %v2360 = vpop.f32.mrb[0].mxu0
        %2361 = vmatprep.mubr.f32.mxu0 0.0
        %2362 = vmatmul.mubr.f32.gmra.mrb[0].mxu0 %v2232
        %v2363 = vpop.f32.mrb[0].mxu0
        %v2364 = vadd.f32 0.0, %v2363
        %v2365 = vpop.f32.mrb[0].mxu0
        %2366 = vmatprep.mubr.f32.mxu0 0.0
        %2367 = vmatmul.mubr.f32.gmra.mrb[0].mxu0 %v2235
        %v2368 = vpop.f32.mrb[0].mxu0
        %v2369 = vadd.f32 0.0, %v2368
        %v2370 = vpop.f32.mrb[0].mxu0
        %2371 = vmatprep.mubr.f32.mxu0 0.0
        %2372 = vmatmul.mubr.f32.gmra.mrb[0].mxu0 %v2238
        %v2373 = vpop.f32.mrb[0].mxu0
        %v2374 = vadd.f32 0.0, %v2373
        %v2375 = vpop.f32.mrb[0].mxu0
        %2376 = vmatprep.mubr.f32.mxu0 0.0
        %2377 = vmatmul.mubr.f32.gmra.mrb[0].mxu0 %v2241
        %v2378 = vpop.f32.mrb[0].mxu0
        %v2379 = vadd.f32 0.0, %v2378
        %v2380 = vpop.f32.mrb[0].mxu0
        %2381 = vmatprep.mubr.f32.mxu0 0.0
        %2382 = vmatmul.mubr.f32.gmra.mrb[0].mxu0 %v2244
        %v2383 = vpop.f32.mrb[0].mxu0
        %v2384 = vadd.f32 0.0, %v2383
        %v2385 = vpop.f32.mrb[0].mxu0
        %2386 = vmatprep.mubr.f32.mxu0 0.0
        %2387 = vmatmul.mubr.f32.gmra.mrb[0].mxu0 %v2247
        %v2388 = vpop.f32.mrb[0].mxu0
        %v2389 = vadd.f32 0.0, %v2388
        %v2390 = vpop.f32.mrb[0].mxu0
        %2391 = vmatprep.mubr.f32.mxu0 0.0
        %2392 = vmatmul.mubr.f32.gmra.mrb[0].mxu0 %v2250
        %v2393 = vpop.f32.mrb[0].mxu0
        %v2394 = vadd.f32 0.0, %v2393
        %v2395 = vpop.f32.mrb[0].mxu0
        %2396 = vdwg.mxu0
        %v2398 = vsel %vm261, %v2168, 0
        %v2401 = vsel %vm261, %v2169, 0
        %v2404 = vsel %vm261, %v2170, 0
        %v2407 = vsel %vm261, %v2171, 0
        %v2410 = vsel %vm261, %v2172, 0
        %v2413 = vsel %vm261, %v2173, 0
        %v2416 = vsel %vm261, %v2174, 0
        %v2419 = vsel %vm261, %v2175, 0
        %v2422 = vsel %vm261, %v2176, 0
        %v2425 = vsel %vm261, %v2177, 0
        %v2428 = vsel %vm261, %v2178, 0
        %v2431 = vsel %vm261, %v2179, 0
        %v2434 = vsel %vm261, %v2180, 0
        %v2437 = vsel %vm261, %v2181, 0
        %v2440 = vsel %vm261, %v2182, 0
        %v2443 = vsel %vm261, %v2183, 0
        %2445 = vmatprep.subr.mxu0 0.0
        %2446 = vmatpush1.msra.mxu0 %v2185
        %2447 = vmatprep.subr.mxu0 0.0
        %2448 = vmatpush1.msra.mxu0 0.0
        %2449 = vmatprep.subr.mxu0 0.0
        %2450 = vmatpush1.msra.mxu0 0.0
        %2451 = vmatprep.subr.mxu0 0.0
        %2452 = vmatpush1.msra.mxu0 0.0
        %2453 = vmatprep.subr.mxu0 0.0
        %2454 = vmatpush1.msra.mxu0 0.0
        %2455 = vmatprep.subr.mxu0 0.0
        %2456 = vmatpush1.msra.mxu0 0.0
        %2457 = vmatprep.subr.mxu0 0.0
        %2458 = vmatpush1.msra.mxu0 0.0
        %2459 = vmatprep.subr.mxu0 0.0
        %2460 = vmatpush1.msra.mxu0 0.0
        %2461 = vmatprep.subr.mxu0 0.0
        %2462 = vmatpush1.msra.mxu0 0.0
        %2463 = vmatprep.subr.mxu0 0.0
        %2464 = vmatpush1.msra.mxu0 0.0
        %2465 = vmatprep.subr.mxu0 0.0
        %2466 = vmatpush1.msra.mxu0 0.0
        %2467 = vmatprep.subr.mxu0 0.0
        %2468 = vmatpush1.msra.mxu0 0.0
        %2469 = vmatprep.subr.mxu0 0.0
        %2470 = vmatpush1.msra.mxu0 0.0
        %2471 = vmatprep.subr.mxu0 0.0
        %2472 = vmatpush1.msra.mxu0 0.0
        %2473 = vmatprep.subr.mxu0 0.0
        %2474 = vmatpush1.msra.mxu0 0.0
        %2475 = vmatprep.subr.mxu0 0.0
        %2476 = vmatpush1.msra.mxu0 0.0
        %2477 = vmatprep.subr.mxu0 0.0
        %2478 = vmatpush1.msra.mxu0 0.0
        %2479 = vmatprep.subr.mxu0 0.0
        %2480 = vmatpush1.msra.mxu0 0.0
        %2481 = vmatprep.subr.mxu0 0.0
        %2482 = vmatpush1.msra.mxu0 0.0
        %2483 = vmatprep.subr.mxu0 0.0
        %2484 = vmatpush1.msra.mxu0 0.0
        %2485 = vmatprep.subr.mxu0 0.0
        %2486 = vmatpush1.msra.mxu0 0.0
        %2487 = vmatprep.subr.mxu0 0.0
        %2488 = vmatpush1.msra.mxu0 0.0
        %2489 = vmatprep.subr.mxu0 0.0
        %2490 = vmatpush1.msra.mxu0 0.0
        %2491 = vmatprep.subr.mxu0 0.0
        %2492 = vmatpush1.msra.mxu0 0.0
        %2493 = vmatprep.subr.mxu0 0.0
        %2494 = vmatpush1.msra.mxu0 0.0
        %2495 = vmatprep.subr.mxu0 0.0
        %2496 = vmatpush1.msra.mxu0 0.0
        %2497 = vmatprep.subr.mxu0 0.0
        %2498 = vmatpush1.msra.mxu0 0.0
        %2499 = vmatprep.subr.mxu0 0.0
        %2500 = vmatpush1.msra.mxu0 0.0
        %2501 = vmatprep.subr.mxu0 0.0
        %2502 = vmatpush1.msra.mxu0 0.0
        %2503 = vmatprep.subr.mxu0 0.0
        %2504 = vmatpush1.msra.mxu0 0.0
        %2505 = vmatprep.subr.mxu0 0.0
        %2506 = vmatpush1.msra.mxu0 0.0
        %2507 = vmatprep.subr.mxu0 0.0
        %2508 = vmatpush1.msra.mxu0 0.0
        %2509 = vmatprep.mubr.f32.mxu0 0.0
        %2510 = vmatmul.mubr.f32.gmra.mrb[0].mxu0 %v2398
        %v2511 = vpop.f32.mrb[0].mxu0
        %v2512 = vadd.f32 %v2319, %v2511
        %v2513 = vpop.f32.mrb[0].mxu0
        %2514 = vmatprep.mubr.f32.mxu0 0.0
        %2515 = vmatmul.mubr.f32.gmra.mrb[0].mxu0 %v2401
        %v2516 = vpop.f32.mrb[0].mxu0
        %v2517 = vadd.f32 %v2324, %v2516
        %v2518 = vpop.f32.mrb[0].mxu0
        %2519 = vmatprep.mubr.f32.mxu0 0.0
        %2520 = vmatmul.mubr.f32.gmra.mrb[0].mxu0 %v2404
        %v2521 = vpop.f32.mrb[0].mxu0
        %v2522 = vadd.f32 %v2329, %v2521
        %v2523 = vpop.f32.mrb[0].mxu0
        %2524 = vmatprep.mubr.f32.mxu0 0.0
        %2525 = vmatmul.mubr.f32.gmra.mrb[0].mxu0 %v2407
        %v2526 = vpop.f32.mrb[0].mxu0
        %v2527 = vadd.f32 %v2334, %v2526
        %v2528 = vpop.f32.mrb[0].mxu0
        %2529 = vmatprep.mubr.f32.mxu0 0.0
        %2530 = vmatmul.mubr.f32.gmra.mrb[0].mxu0 %v2410
        %v2531 = vpop.f32.mrb[0].mxu0
        %v2532 = vadd.f32 %v2339, %v2531
        %v2533 = vpop.f32.mrb[0].mxu0
        %2534 = vmatprep.mubr.f32.mxu0 0.0
        %2535 = vmatmul.mubr.f32.gmra.mrb[0].mxu0 %v2413
        %v2536 = vpop.f32.mrb[0].mxu0
        %v2537 = vadd.f32 %v2344, %v2536
        %v2538 = vpop.f32.mrb[0].mxu0
        %2539 = vmatprep.mubr.f32.mxu0 0.0
        %2540 = vmatmul.mubr.f32.gmra.mrb[0].mxu0 %v2416
        %v2541 = vpop.f32.mrb[0].mxu0
        %v2542 = vadd.f32 %v2349, %v2541
        %v2543 = vpop.f32.mrb[0].mxu0
        %2544 = vmatprep.mubr.f32.mxu0 0.0
        %2545 = vmatmul.mubr.f32.gmra.mrb[0].mxu0 %v2419
        %v2546 = vpop.f32.mrb[0].mxu0
        %v2547 = vadd.f32 %v2354, %v2546
        %v2548 = vpop.f32.mrb[0].mxu0
        %2549 = vmatprep.mubr.f32.mxu0 0.0
        %2550 = vmatmul.mubr.f32.gmra.mrb[0].mxu0 %v2422
        %v2551 = vpop.f32.mrb[0].mxu0
        %v2552 = vadd.f32 %v2359, %v2551
        %v2553 = vpop.f32.mrb[0].mxu0
        %2554 = vmatprep.mubr.f32.mxu0 0.0
        %2555 = vmatmul.mubr.f32.gmra.mrb[0].mxu0 %v2425
        %v2556 = vpop.f32.mrb[0].mxu0
        %v2557 = vadd.f32 %v2364, %v2556
        %v2558 = vpop.f32.mrb[0].mxu0
        %2559 = vmatprep.mubr.f32.mxu0 0.0
        %2560 = vmatmul.mubr.f32.gmra.mrb[0].mxu0 %v2428
        %v2561 = vpop.f32.mrb[0].mxu0
        %v2562 = vadd.f32 %v2369, %v2561
        %v2563 = vpop.f32.mrb[0].mxu0
        %2564 = vmatprep.mubr.f32.mxu0 0.0
        %2565 = vmatmul.mubr.f32.gmra.mrb[0].mxu0 %v2431
        %v2566 = vpop.f32.mrb[0].mxu0
        %v2567 = vadd.f32 %v2374, %v2566
        %v2568 = vpop.f32.mrb[0].mxu0
        %2569 = vmatprep.mubr.f32.mxu0 0.0
        %2570 = vmatmul.mubr.f32.gmra.mrb[0].mxu0 %v2434
        %v2571 = vpop.f32.mrb[0].mxu0
        %v2572 = vadd.f32 %v2379, %v2571
        %v2573 = vpop.f32.mrb[0].mxu0
        %2574 = vmatprep.mubr.f32.mxu0 0.0
        %2575 = vmatmul.mubr.f32.gmra.mrb[0].mxu0 %v2437
        %v2576 = vpop.f32.mrb[0].mxu0
        %v2577 = vadd.f32 %v2384, %v2576
        %v2578 = vpop.f32.mrb[0].mxu0
        %2579 = vmatprep.mubr.f32.mxu0 0.0
        %2580 = vmatmul.mubr.f32.gmra.mrb[0].mxu0 %v2440
        %v2581 = vpop.f32.mrb[0].mxu0
        %v2582 = vadd.f32 %v2389, %v2581
        %v2583 = vpop.f32.mrb[0].mxu0
        %2584 = vmatprep.mubr.f32.mxu0 0.0
        %2585 = vmatmul.mubr.f32.gmra.mrb[0].mxu0 %v2443
        %v2586 = vpop.f32.mrb[0].mxu0
        %v2587 = vadd.f32 %v2394, %v2586
        %v2588 = vpop.f32.mrb[0].mxu0
        %2589 = vdwg.mxu0
        %s2590 = scalar_lea.vmem %s217, 48
        %v2591 = vld [vmem:[%s2590] sm:$0xff]
        %v2592 = vld [vmem:[%s2590 + $0x8] sm:$0xff]
        %v2593 = vld [vmem:[%s2590 + $0x18] sm:$0xff]
        %v2594 = vld [vmem:[%s2590 + $0x20] sm:$0xff]
        %v2595 = vld [vmem:[%s2590 + $0x30] sm:$0xff]
        %v2596 = vld [vmem:[%s2590 + $0x38] sm:$0xff]
        %v2597 = vld [vmem:[%s2590 + $0x48] sm:$0xff]
        %v2598 = vld [vmem:[%s2590 + $0x50] sm:$0xff]
        %v2599 = vld [vmem:[%s2590 + $0x60] sm:$0xff]
        %v2600 = vld [vmem:[%s2590 + $0x68] sm:$0xff]
        %v2601 = vld [vmem:[%s2590 + $0x78] sm:$0xff]
        %v2602 = vld [vmem:[%s2590 + $0x80] sm:$0xff]
        %v2603 = vld [vmem:[%s2590 + $0x90] sm:$0xff]
        %v2604 = vld [vmem:[%s2590 + $0x98] sm:$0xff]
        %v2605 = vld [vmem:[%s2590 + $0xa8] sm:$0xff]
        %v2606 = vld [vmem:[%s2590 + $0xb0] sm:$0xff]
        %s2607 = scalar_lea.vmem %s2, 80
        %v2608 = vld [vmem:[%s2607] sm:$0xff]
        %v2610 = vsel %vm261, %v2591, 0
        %v2613 = vsel %vm261, %v2592, 0
        %v2616 = vsel %vm261, %v2593, 0
        %v2619 = vsel %vm261, %v2594, 0
        %v2622 = vsel %vm261, %v2595, 0
        %v2625 = vsel %vm261, %v2596, 0
        %v2628 = vsel %vm261, %v2597, 0
        %v2631 = vsel %vm261, %v2598, 0
        %v2634 = vsel %vm261, %v2599, 0
        %v2637 = vsel %vm261, %v2600, 0
        %v2640 = vsel %vm261, %v2601, 0
        %v2643 = vsel %vm261, %v2602, 0
        %v2646 = vsel %vm261, %v2603, 0
        %v2649 = vsel %vm261, %v2604, 0
        %v2652 = vsel %vm261, %v2605, 0
        %v2655 = vsel %vm261, %v2606, 0
        %2657 = vmatprep.subr.mxu0 0.0
        %2658 = vmatpush1.msra.mxu0 %v2608
        %2659 = vmatprep.subr.mxu0 0.0
        %2660 = vmatpush1.msra.mxu0 0.0
        %2661 = vmatprep.subr.mxu0 0.0
        %2662 = vmatpush1.msra.mxu0 0.0
        %2663 = vmatprep.subr.mxu0 0.0
        %2664 = vmatpush1.msra.mxu0 0.0
        %2665 = vmatprep.subr.mxu0 0.0
        %2666 = vmatpush1.msra.mxu0 0.0
        %2667 = vmatprep.subr.mxu0 0.0
        %2668 = vmatpush1.msra.mxu0 0.0
        %2669 = vmatprep.subr.mxu0 0.0
        %2670 = vmatpush1.msra.mxu0 0.0
        %2671 = vmatprep.subr.mxu0 0.0
        %2672 = vmatpush1.msra.mxu0 0.0
        %2673 = vmatprep.subr.mxu0 0.0
        %2674 = vmatpush1.msra.mxu0 0.0
        %2675 = vmatprep.subr.mxu0 0.0
        %2676 = vmatpush1.msra.mxu0 0.0
        %2677 = vmatprep.subr.mxu0 0.0
        %2678 = vmatpush1.msra.mxu0 0.0
        %2679 = vmatprep.subr.mxu0 0.0
        %2680 = vmatpush1.msra.mxu0 0.0
        %2681 = vmatprep.subr.mxu0 0.0
        %2682 = vmatpush1.msra.mxu0 0.0
        %2683 = vmatprep.subr.mxu0 0.0
        %2684 = vmatpush1.msra.mxu0 0.0
        %2685 = vmatprep.subr.mxu0 0.0
        %2686 = vmatpush1.msra.mxu0 0.0
        %2687 = vmatprep.subr.mxu0 0.0
        %2688 = vmatpush1.msra.mxu0 0.0
        %2689 = vmatprep.subr.mxu0 0.0
        %2690 = vmatpush1.msra.mxu0 0.0
        %2691 = vmatprep.subr.mxu0 0.0
        %2692 = vmatpush1.msra.mxu0 0.0
        %2693 = vmatprep.subr.mxu0 0.0
        %2694 = vmatpush1.msra.mxu0 0.0
        %2695 = vmatprep.subr.mxu0 0.0
        %2696 = vmatpush1.msra.mxu0 0.0
        %2697 = vmatprep.subr.mxu0 0.0
        %2698 = vmatpush1.msra.mxu0 0.0
        %2699 = vmatprep.subr.mxu0 0.0
        %2700 = vmatpush1.msra.mxu0 0.0
        %2701 = vmatprep.subr.mxu0 0.0
        %2702 = vmatpush1.msra.mxu0 0.0
        %2703 = vmatprep.subr.mxu0 0.0
        %2704 = vmatpush1.msra.mxu0 0.0
        %2705 = vmatprep.subr.mxu0 0.0
        %2706 = vmatpush1.msra.mxu0 0.0
        %2707 = vmatprep.subr.mxu0 0.0
        %2708 = vmatpush1.msra.mxu0 0.0
        %2709 = vmatprep.subr.mxu0 0.0
        %2710 = vmatpush1.msra.mxu0 0.0
        %2711 = vmatprep.subr.mxu0 0.0
        %2712 = vmatpush1.msra.mxu0 0.0
        %2713 = vmatprep.subr.mxu0 0.0
        %2714 = vmatpush1.msra.mxu0 0.0
        %2715 = vmatprep.subr.mxu0 0.0
        %2716 = vmatpush1.msra.mxu0 0.0
        %2717 = vmatprep.subr.mxu0 0.0
        %2718 = vmatpush1.msra.mxu0 0.0
        %2719 = vmatprep.subr.mxu0 0.0
        %2720 = vmatpush1.msra.mxu0 0.0
        %2721 = vmatprep.mubr.f32.mxu0 0.0
        %2722 = vmatmul.mubr.f32.gmra.mrb[0].mxu0 %v2610
        %v2723 = vpop.f32.mrb[0].mxu0
        %v2724 = vadd.f32 0.0, %v2723
        %v2725 = vpop.f32.mrb[0].mxu0
        %2726 = vmatprep.mubr.f32.mxu0 0.0
        %2727 = vmatmul.mubr.f32.gmra.mrb[0].mxu0 %v2613
        %v2728 = vpop.f32.mrb[0].mxu0
        %v2729 = vadd.f32 0.0, %v2728
        %v2730 = vpop.f32.mrb[0].mxu0
        %2731 = vmatprep.mubr.f32.mxu0 0.0
        %2732 = vmatmul.mubr.f32.gmra.mrb[0].mxu0 %v2616
        %v2733 = vpop.f32.mrb[0].mxu0
        %v2734 = vadd.f32 0.0, %v2733
        %v2735 = vpop.f32.mrb[0].mxu0
        %2736 = vmatprep.mubr.f32.mxu0 0.0
        %2737 = vmatmul.mubr.f32.gmra.mrb[0].mxu0 %v2619
        %v2738 = vpop.f32.mrb[0].mxu0
        %v2739 = vadd.f32 0.0, %v2738
        %v2740 = vpop.f32.mrb[0].mxu0
        %2741 = vmatprep.mubr.f32.mxu0 0.0
        %2742 = vmatmul.mubr.f32.gmra.mrb[0].mxu0 %v2622
        %v2743 = vpop.f32.mrb[0].mxu0
        %v2744 = vadd.f32 0.0, %v2743
        %v2745 = vpop.f32.mrb[0].mxu0
        %2746 = vmatprep.mubr.f32.mxu0 0.0
        %2747 = vmatmul.mubr.f32.gmra.mrb[0].mxu0 %v2625
        %v2748 = vpop.f32.mrb[0].mxu0
        %v2749 = vadd.f32 0.0, %v2748
        %v2750 = vpop.f32.mrb[0].mxu0
        %2751 = vmatprep.mubr.f32.mxu0 0.0
        %2752 = vmatmul.mubr.f32.gmra.mrb[0].mxu0 %v2628
        %v2753 = vpop.f32.mrb[0].mxu0
        %v2754 = vadd.f32 0.0, %v2753
        %v2755 = vpop.f32.mrb[0].mxu0
        %2756 = vmatprep.mubr.f32.mxu0 0.0
        %2757 = vmatmul.mubr.f32.gmra.mrb[0].mxu0 %v2631
        %v2758 = vpop.f32.mrb[0].mxu0
        %v2759 = vadd.f32 0.0, %v2758
        %v2760 = vpop.f32.mrb[0].mxu0
        %2761 = vmatprep.mubr.f32.mxu0 0.0
        %2762 = vmatmul.mubr.f32.gmra.mrb[0].mxu0 %v2634
        %v2763 = vpop.f32.mrb[0].mxu0
        %v2764 = vadd.f32 0.0, %v2763
        %v2765 = vpop.f32.mrb[0].mxu0
        %2766 = vmatprep.mubr.f32.mxu0 0.0
        %2767 = vmatmul.mubr.f32.gmra.mrb[0].mxu0 %v2637
        %v2768 = vpop.f32.mrb[0].mxu0
        %v2769 = vadd.f32 0.0, %v2768
        %v2770 = vpop.f32.mrb[0].mxu0
        %2771 = vmatprep.mubr.f32.mxu0 0.0
        %2772 = vmatmul.mubr.f32.gmra.mrb[0].mxu0 %v2640
        %v2773 = vpop.f32.mrb[0].mxu0
        %v2774 = vadd.f32 0.0, %v2773
        %v2775 = vpop.f32.mrb[0].mxu0
        %2776 = vmatprep.mubr.f32.mxu0 0.0
        %2777 = vmatmul.mubr.f32.gmra.mrb[0].mxu0 %v2643
        %v2778 = vpop.f32.mrb[0].mxu0
        %v2779 = vadd.f32 0.0, %v2778
        %v2780 = vpop.f32.mrb[0].mxu0
        %2781 = vmatprep.mubr.f32.mxu0 0.0
        %2782 = vmatmul.mubr.f32.gmra.mrb[0].mxu0 %v2646
        %v2783 = vpop.f32.mrb[0].mxu0
        %v2784 = vadd.f32 0.0, %v2783
        %v2785 = vpop.f32.mrb[0].mxu0
        %2786 = vmatprep.mubr.f32.mxu0 0.0
        %2787 = vmatmul.mubr.f32.gmra.mrb[0].mxu0 %v2649
        %v2788 = vpop.f32.mrb[0].mxu0
        %v2789 = vadd.f32 0.0, %v2788
        %v2790 = vpop.f32.mrb[0].mxu0
        %2791 = vmatprep.mubr.f32.mxu0 0.0
        %2792 = vmatmul.mubr.f32.gmra.mrb[0].mxu0 %v2652
        %v2793 = vpop.f32.mrb[0].mxu0
        %v2794 = vadd.f32 0.0, %v2793
        %v2795 = vpop.f32.mrb[0].mxu0
        %2796 = vmatprep.mubr.f32.mxu0 0.0
        %2797 = vmatmul.mubr.f32.gmra.mrb[0].mxu0 %v2655
        %v2798 = vpop.f32.mrb[0].mxu0
        %v2799 = vadd.f32 0.0, %v2798
        %v2800 = vpop.f32.mrb[0].mxu0
        %2801 = vdwg.mxu0
        %v2802 = vadd.f32 %v2512, %v2724
        %v2803 = vadd.f32 %v2517, %v2729
        %v2804 = vadd.f32 %v2522, %v2734
        %v2805 = vadd.f32 %v2527, %v2739
        %v2806 = vadd.f32 %v2532, %v2744
        %v2807 = vadd.f32 %v2537, %v2749
        %v2808 = vadd.f32 %v2542, %v2754
        %v2809 = vadd.f32 %v2547, %v2759
        %v2810 = vadd.f32 %v2552, %v2764
        %v2811 = vadd.f32 %v2557, %v2769
        %v2812 = vadd.f32 %v2562, %v2774
        %v2813 = vadd.f32 %v2567, %v2779
        %v2814 = vadd.f32 %v2572, %v2784
        %v2815 = vadd.f32 %v2577, %v2789
        %v2816 = vadd.f32 %v2582, %v2794
        %v2817 = vadd.f32 %v2587, %v2799
        %v2818 = vld [vmem:[%s2590 + $0x1] sm:$0xff]
        %v2819 = vld [vmem:[%s2590 + $0x9] sm:$0xff]
        %v2820 = vld [vmem:[%s2590 + $0x19] sm:$0xff]
        %v2821 = vld [vmem:[%s2590 + $0x21] sm:$0xff]
        %v2822 = vld [vmem:[%s2590 + $0x31] sm:$0xff]
        %v2823 = vld [vmem:[%s2590 + $0x39] sm:$0xff]
        %v2824 = vld [vmem:[%s2590 + $0x49] sm:$0xff]
        %v2825 = vld [vmem:[%s2590 + $0x51] sm:$0xff]
        %v2826 = vld [vmem:[%s2590 + $0x61] sm:$0xff]
        %v2827 = vld [vmem:[%s2590 + $0x69] sm:$0xff]
        %v2828 = vld [vmem:[%s2590 + $0x79] sm:$0xff]
        %v2829 = vld [vmem:[%s2590 + $0x81] sm:$0xff]
        %v2830 = vld [vmem:[%s2590 + $0x91] sm:$0xff]
        %v2831 = vld [vmem:[%s2590 + $0x99] sm:$0xff]
        %v2832 = vld [vmem:[%s2590 + $0xa9] sm:$0xff]
        %v2833 = vld [vmem:[%s2590 + $0xb1] sm:$0xff]
        %s2834 = scalar_lea.vmem %s2, 88
        %v2835 = vld [vmem:[%s2834] sm:$0xff]
        %v2837 = vsel %vm261, %v2818, 0
        %v2840 = vsel %vm261, %v2819, 0
        %v2843 = vsel %vm261, %v2820, 0
        %v2846 = vsel %vm261, %v2821, 0
        %v2849 = vsel %vm261, %v2822, 0
        %v2852 = vsel %vm261, %v2823, 0
        %v2855 = vsel %vm261, %v2824, 0
        %v2858 = vsel %vm261, %v2825, 0
        %v2861 = vsel %vm261, %v2826, 0
        %v2864 = vsel %vm261, %v2827, 0
        %v2867 = vsel %vm261, %v2828, 0
        %v2870 = vsel %vm261, %v2829, 0
        %v2873 = vsel %vm261, %v2830, 0
        %v2876 = vsel %vm261, %v2831, 0
        %v2879 = vsel %vm261, %v2832, 0
        %v2882 = vsel %vm261, %v2833, 0
        %2884 = vmatprep.subr.mxu0 0.0
        %2885 = vmatpush1.msra.mxu0 %v2835
        %2886 = vmatprep.subr.mxu0 0.0
        %2887 = vmatpush1.msra.mxu0 0.0
        %2888 = vmatprep.subr.mxu0 0.0
        %2889 = vmatpush1.msra.mxu0 0.0
        %2890 = vmatprep.subr.mxu0 0.0
        %2891 = vmatpush1.msra.mxu0 0.0
        %2892 = vmatprep.subr.mxu0 0.0
        %2893 = vmatpush1.msra.mxu0 0.0
        %2894 = vmatprep.subr.mxu0 0.0
        %2895 = vmatpush1.msra.mxu0 0.0
        %2896 = vmatprep.subr.mxu0 0.0
        %2897 = vmatpush1.msra.mxu0 0.0
        %2898 = vmatprep.subr.mxu0 0.0
        %2899 = vmatpush1.msra.mxu0 0.0
        %2900 = vmatprep.subr.mxu0 0.0
        %2901 = vmatpush1.msra.mxu0 0.0
        %2902 = vmatprep.subr.mxu0 0.0
        %2903 = vmatpush1.msra.mxu0 0.0
        %2904 = vmatprep.subr.mxu0 0.0
        %2905 = vmatpush1.msra.mxu0 0.0
        %2906 = vmatprep.subr.mxu0 0.0
        %2907 = vmatpush1.msra.mxu0 0.0
        %2908 = vmatprep.subr.mxu0 0.0
        %2909 = vmatpush1.msra.mxu0 0.0
        %2910 = vmatprep.subr.mxu0 0.0
        %2911 = vmatpush1.msra.mxu0 0.0
        %2912 = vmatprep.subr.mxu0 0.0
        %2913 = vmatpush1.msra.mxu0 0.0
        %2914 = vmatprep.subr.mxu0 0.0
        %2915 = vmatpush1.msra.mxu0 0.0
        %2916 = vmatprep.subr.mxu0 0.0
        %2917 = vmatpush1.msra.mxu0 0.0
        %2918 = vmatprep.subr.mxu0 0.0
        %2919 = vmatpush1.msra.mxu0 0.0
        %2920 = vmatprep.subr.mxu0 0.0
        %2921 = vmatpush1.msra.mxu0 0.0
        %2922 = vmatprep.subr.mxu0 0.0
        %2923 = vmatpush1.msra.mxu0 0.0
        %2924 = vmatprep.subr.mxu0 0.0
        %2925 = vmatpush1.msra.mxu0 0.0
        %2926 = vmatprep.subr.mxu0 0.0
        %2927 = vmatpush1.msra.mxu0 0.0
        %2928 = vmatprep.subr.mxu0 0.0
        %2929 = vmatpush1.msra.mxu0 0.0
        %2930 = vmatprep.subr.mxu0 0.0
        %2931 = vmatpush1.msra.mxu0 0.0
        %2932 = vmatprep.subr.mxu0 0.0
        %2933 = vmatpush1.msra.mxu0 0.0
        %2934 = vmatprep.subr.mxu0 0.0
        %2935 = vmatpush1.msra.mxu0 0.0
        %2936 = vmatprep.subr.mxu0 0.0
        %2937 = vmatpush1.msra.mxu0 0.0
        %2938 = vmatprep.subr.mxu0 0.0
        %2939 = vmatpush1.msra.mxu0 0.0
        %2940 = vmatprep.subr.mxu0 0.0
        %2941 = vmatpush1.msra.mxu0 0.0
        %2942 = vmatprep.subr.mxu0 0.0
        %2943 = vmatpush1.msra.mxu0 0.0
        %2944 = vmatprep.subr.mxu0 0.0
        %2945 = vmatpush1.msra.mxu0 0.0
        %2946 = vmatprep.subr.mxu0 0.0
        %2947 = vmatpush1.msra.mxu0 0.0
        %2948 = vmatprep.mubr.f32.mxu0 0.0
        %2949 = vmatmul.mubr.f32.gmra.mrb[0].mxu0 %v2837
        %v2950 = vpop.f32.mrb[0].mxu0
        %v2951 = vadd.f32 0.0, %v2950
        %v2952 = vpop.f32.mrb[0].mxu0
        %2953 = vmatprep.mubr.f32.mxu0 0.0
        %2954 = vmatmul.mubr.f32.gmra.mrb[0].mxu0 %v2840
        %v2955 = vpop.f32.mrb[0].mxu0
        %v2956 = vadd.f32 0.0, %v2955
        %v2957 = vpop.f32.mrb[0].mxu0
        %2958 = vmatprep.mubr.f32.mxu0 0.0
        %2959 = vmatmul.mubr.f32.gmra.mrb[0].mxu0 %v2843
        %v2960 = vpop.f32.mrb[0].mxu0
        %v2961 = vadd.f32 0.0, %v2960
        %v2962 = vpop.f32.mrb[0].mxu0
        %2963 = vmatprep.mubr.f32.mxu0 0.0
        %2964 = vmatmul.mubr.f32.gmra.mrb[0].mxu0 %v2846
        %v2965 = vpop.f32.mrb[0].mxu0
        %v2966 = vadd.f32 0.0, %v2965
        %v2967 = vpop.f32.mrb[0].mxu0
        %2968 = vmatprep.mubr.f32.mxu0 0.0
        %2969 = vmatmul.mubr.f32.gmra.mrb[0].mxu0 %v2849
        %v2970 = vpop.f32.mrb[0].mxu0
        %v2971 = vadd.f32 0.0, %v2970
        %v2972 = vpop.f32.mrb[0].mxu0
        %2973 = vmatprep.mubr.f32.mxu0 0.0
        %2974 = vmatmul.mubr.f32.gmra.mrb[0].mxu0 %v2852
        %v2975 = vpop.f32.mrb[0].mxu0
        %v2976 = vadd.f32 0.0, %v2975
        %v2977 = vpop.f32.mrb[0].mxu0
        %2978 = vmatprep.mubr.f32.mxu0 0.0
        %2979 = vmatmul.mubr.f32.gmra.mrb[0].mxu0 %v2855
        %v2980 = vpop.f32.mrb[0].mxu0
        %v2981 = vadd.f32 0.0, %v2980
        %v2982 = vpop.f32.mrb[0].mxu0
        %2983 = vmatprep.mubr.f32.mxu0 0.0
        %2984 = vmatmul.mubr.f32.gmra.mrb[0].mxu0 %v2858
        %v2985 = vpop.f32.mrb[0].mxu0
        %v2986 = vadd.f32 0.0, %v2985
        %v2987 = vpop.f32.mrb[0].mxu0
        %2988 = vmatprep.mubr.f32.mxu0 0.0
        %2989 = vmatmul.mubr.f32.gmra.mrb[0].mxu0 %v2861
        %v2990 = vpop.f32.mrb[0].mxu0
        %v2991 = vadd.f32 0.0, %v2990
        %v2992 = vpop.f32.mrb[0].mxu0
        %2993 = vmatprep.mubr.f32.mxu0 0.0
        %2994 = vmatmul.mubr.f32.gmra.mrb[0].mxu0 %v2864
        %v2995 = vpop.f32.mrb[0].mxu0
        %v2996 = vadd.f32 0.0, %v2995
        %v2997 = vpop.f32.mrb[0].mxu0
        %2998 = vmatprep.mubr.f32.mxu0 0.0
        %2999 = vmatmul.mubr.f32.gmra.mrb[0].mxu0 %v2867
        %v3000 = vpop.f32.mrb[0].mxu0
        %v3001 = vadd.f32 0.0, %v3000
        %v3002 = vpop.f32.mrb[0].mxu0
        %3003 = vmatprep.mubr.f32.mxu0 0.0
        %3004 = vmatmul.mubr.f32.gmra.mrb[0].mxu0 %v2870
        %v3005 = vpop.f32.mrb[0].mxu0
        %v3006 = vadd.f32 0.0, %v3005
        %v3007 = vpop.f32.mrb[0].mxu0
        %3008 = vmatprep.mubr.f32.mxu0 0.0
        %3009 = vmatmul.mubr.f32.gmra.mrb[0].mxu0 %v2873
        %v3010 = vpop.f32.mrb[0].mxu0
        %v3011 = vadd.f32 0.0, %v3010
        %v3012 = vpop.f32.mrb[0].mxu0
        %3013 = vmatprep.mubr.f32.mxu0 0.0
        %3014 = vmatmul.mubr.f32.gmra.mrb[0].mxu0 %v2876
        %v3015 = vpop.f32.mrb[0].mxu0
        %v3016 = vadd.f32 0.0, %v3015
        %v3017 = vpop.f32.mrb[0].mxu0
        %3018 = vmatprep.mubr.f32.mxu0 0.0
        %3019 = vmatmul.mubr.f32.gmra.mrb[0].mxu0 %v2879
        %v3020 = vpop.f32.mrb[0].mxu0
        %v3021 = vadd.f32 0.0, %v3020
        %v3022 = vpop.f32.mrb[0].mxu0
        %3023 = vmatprep.mubr.f32.mxu0 0.0
        %3024 = vmatmul.mubr.f32.gmra.mrb[0].mxu0 %v2882
        %v3025 = vpop.f32.mrb[0].mxu0
        %v3026 = vadd.f32 0.0, %v3025
        %v3027 = vpop.f32.mrb[0].mxu0
        %3028 = vdwg.mxu0
        %v3029 = vadd.f32 %v2802, %v2951
        %v3030 = vadd.f32 %v2803, %v2956
        %v3031 = vadd.f32 %v2804, %v2961
        %v3032 = vadd.f32 %v2805, %v2966
        %v3033 = vadd.f32 %v2806, %v2971
        %v3034 = vadd.f32 %v2807, %v2976
        %v3035 = vadd.f32 %v2808, %v2981
        %v3036 = vadd.f32 %v2809, %v2986
        %v3037 = vadd.f32 %v2810, %v2991
        %v3038 = vadd.f32 %v2811, %v2996
        %v3039 = vadd.f32 %v2812, %v3001
        %v3040 = vadd.f32 %v2813, %v3006
        %v3041 = vadd.f32 %v2814, %v3011
        %v3042 = vadd.f32 %v2815, %v3016
        %v3043 = vadd.f32 %v2816, %v3021
        %v3044 = vadd.f32 %v2817, %v3026
        %v3045 = vadd.f32 %v3029, %v1106
        %v3046 = vadd.f32 %v3030, %v1106
        %v3047 = vadd.f32 %v3031, %v1106
        %v3048 = vadd.f32 %v3032, %v1106
        %v3049 = vadd.f32 %v3033, %v1106
        %v3050 = vadd.f32 %v3034, %v1106
        %v3051 = vadd.f32 %v3035, %v1106
        %v3052 = vadd.f32 %v3036, %v1106
        %v3053 = vadd.f32 %v3037, %v1106
        %v3054 = vadd.f32 %v3038, %v1106
        %v3055 = vadd.f32 %v3039, %v1106
        %v3056 = vadd.f32 %v3040, %v1106
        %v3057 = vadd.f32 %v3041, %v1106
        %v3058 = vadd.f32 %v3042, %v1106
        %v3059 = vadd.f32 %v3043, %v1106
        %v3060 = vadd.f32 %v3044, %v1106
        %s3061 = scalar_lea.vmem %s206, 256 [#allocation2]
        %3062 = vst [vmem:[%s3061] sm:$0xff] %v3045
        %3063 = vst [vmem:[%s3061 + $0x8] sm:$0xff] %v3046
        %3064 = vst [vmem:[%s3061 + $0x10] sm:$0xff] %v3047
        %3065 = vst [vmem:[%s3061 + $0x18] sm:$0xff] %v3048
        %3066 = vst [vmem:[%s3061 + $0x20] sm:$0xff] %v3049
        %3067 = vst [vmem:[%s3061 + $0x28] sm:$0xff] %v3050
        %3068 = vst [vmem:[%s3061 + $0x30] sm:$0xff] %v3051
        %3069 = vst [vmem:[%s3061 + $0x38] sm:$0xff] %v3052
        %3070 = vst [vmem:[%s3061 + $0x40] sm:$0xff] %v3053
        %3071 = vst [vmem:[%s3061 + $0x48] sm:$0xff] %v3054
        %3072 = vst [vmem:[%s3061 + $0x50] sm:$0xff] %v3055
        %3073 = vst [vmem:[%s3061 + $0x58] sm:$0xff] %v3056
        %3074 = vst [vmem:[%s3061 + $0x60] sm:$0xff] %v3057
        %3075 = vst [vmem:[%s3061 + $0x68] sm:$0xff] %v3058
        %3076 = vst [vmem:[%s3061 + $0x70] sm:$0xff] %v3059
        %3077 = vst [vmem:[%s3061 + $0x78] sm:$0xff] %v3060
        %v3078 = vadd.f32 %v3045, %v3046
        %v3079 = vadd.f32 %v3078, %v3047
        %v3080 = vadd.f32 %v3079, %v3048
        %v3081 = vadd.f32 %v3080, %v3049
        %v3082 = vadd.f32 %v3081, %v3050
        %v3083 = vadd.f32 %v3082, %v3051
        %v3084 = vadd.f32 %v3083, %v3052
        %v3085 = vadd.f32 %v3084, %v3053
        %v3086 = vadd.f32 %v3085, %v3054
        %v3087 = vadd.f32 %v3086, %v3055
        %v3088 = vadd.f32 %v3087, %v3056
        %v3089 = vadd.f32 %v3088, %v3057
        %v3090 = vadd.f32 %v3089, %v3058
        %v3091 = vadd.f32 %v3090, %v3059
        %v3092 = vadd.f32 %v3091, %v3060
        %v3093 = vrot.slane %v3092, 4
        %v3094 = vadd.f32 %v3092, %v3093
        %v3095 = vrot.slane %v3094, 2
        %v3096 = vadd.f32 %v3094, %v3095
        %v3097 = vrot.slane %v3096, 1
        %v3098 = vadd.f32 %v3096, %v3097
        %v3099 = vadd.f32 %v2129, %v3098
        %v3100 = vmul.f32 %v3045, %v3045
        %v3101 = vmul.f32 %v3046, %v3046
        %v3102 = vmul.f32 %v3047, %v3047
        %v3103 = vmul.f32 %v3048, %v3048
        %v3104 = vmul.f32 %v3049, %v3049
        %v3105 = vmul.f32 %v3050, %v3050
        %v3106 = vmul.f32 %v3051, %v3051
        %v3107 = vmul.f32 %v3052, %v3052
        %v3108 = vmul.f32 %v3053, %v3053
        %v3109 = vmul.f32 %v3054, %v3054
        %v3110 = vmul.f32 %v3055, %v3055
        %v3111 = vmul.f32 %v3056, %v3056
        %v3112 = vmul.f32 %v3057, %v3057
        %v3113 = vmul.f32 %v3058, %v3058
        %v3114 = vmul.f32 %v3059, %v3059
        %v3115 = vmul.f32 %v3060, %v3060
        %v3116 = vadd.f32 %v3100, %v3101
        %v3117 = vadd.f32 %v3116, %v3102
        %v3118 = vadd.f32 %v3117, %v3103
        %v3119 = vadd.f32 %v3118, %v3104
        %v3120 = vadd.f32 %v3119, %v3105
        %v3121 = vadd.f32 %v3120, %v3106
        %v3122 = vadd.f32 %v3121, %v3107
        %v3123 = vadd.f32 %v3122, %v3108
        %v3124 = vadd.f32 %v3123, %v3109
        %v3125 = vadd.f32 %v3124, %v3110
        %v3126 = vadd.f32 %v3125, %v3111
        %v3127 = vadd.f32 %v3126, %v3112
        %v3128 = vadd.f32 %v3127, %v3113
        %v3129 = vadd.f32 %v3128, %v3114
        %v3130 = vadd.f32 %v3129, %v3115
        %v3131 = vrot.slane %v3130, 4
        %v3132 = vadd.f32 %v3130, %v3131
        %v3133 = vrot.slane %v3132, 2
        %v3134 = vadd.f32 %v3132, %v3133
        %v3135 = vrot.slane %v3134, 1
        %v3136 = vadd.f32 %v3134, %v3135
        %v3137 = vadd.f32 %v2167, %v3136
        %v3138 = vld [vmem:[%s648 + $0x1] sm:$0xff]
        %v3139 = vld [vmem:[%s648 + $0x9] sm:$0xff]
        %v3140 = vld [vmem:[%s648 + $0x19] sm:$0xff]
        %v3141 = vld [vmem:[%s648 + $0x21] sm:$0xff]
        %v3142 = vld [vmem:[%s648 + $0x31] sm:$0xff]
        %v3143 = vld [vmem:[%s648 + $0x39] sm:$0xff]
        %v3144 = vld [vmem:[%s648 + $0x49] sm:$0xff]
        %v3145 = vld [vmem:[%s648 + $0x51] sm:$0xff]
        %v3146 = vld [vmem:[%s648 + $0x61] sm:$0xff]
        %v3147 = vld [vmem:[%s648 + $0x69] sm:$0xff]
        %v3148 = vld [vmem:[%s648 + $0x79] sm:$0xff]
        %v3149 = vld [vmem:[%s648 + $0x81] sm:$0xff]
        %v3150 = vld [vmem:[%s648 + $0x91] sm:$0xff]
        %v3151 = vld [vmem:[%s648 + $0x99] sm:$0xff]
        %v3152 = vld [vmem:[%s648 + $0xa9] sm:$0xff]
        %v3153 = vld [vmem:[%s648 + $0xb1] sm:$0xff]
        %s3154 = scalar_lea.vmem %s2, 96
        %v3155 = vld [vmem:[%s3154] sm:$0xff]
        %v3156 = vld [vmem:[%s648 + $0x2] sm:$0xff]
        %v3157 = vld [vmem:[%s648 + $0xa] sm:$0xff]
        %v3158 = vld [vmem:[%s648 + $0x1a] sm:$0xff]
        %v3159 = vld [vmem:[%s648 + $0x22] sm:$0xff]
        %v3160 = vld [vmem:[%s648 + $0x32] sm:$0xff]
        %v3161 = vld [vmem:[%s648 + $0x3a] sm:$0xff]
        %v3162 = vld [vmem:[%s648 + $0x4a] sm:$0xff]
        %v3163 = vld [vmem:[%s648 + $0x52] sm:$0xff]
        %v3164 = vld [vmem:[%s648 + $0x62] sm:$0xff]
        %v3165 = vld [vmem:[%s648 + $0x6a] sm:$0xff]
        %v3166 = vld [vmem:[%s648 + $0x7a] sm:$0xff]
        %v3167 = vld [vmem:[%s648 + $0x82] sm:$0xff]
        %v3168 = vld [vmem:[%s648 + $0x92] sm:$0xff]
        %v3169 = vld [vmem:[%s648 + $0x9a] sm:$0xff]
        %v3170 = vld [vmem:[%s648 + $0xaa] sm:$0xff]
        %v3171 = vld [vmem:[%s648 + $0xb2] sm:$0xff]
        %s3172 = scalar_lea.vmem %s2, 104
        %v3173 = vld [vmem:[%s3172] sm:$0xff]
        %v3175 = vsel %vm261, %v3156, 0
        %v3178 = vsel %vm261, %v3157, 0
        %v3181 = vsel %vm261, %v3158, 0
        %v3184 = vsel %vm261, %v3159, 0
        %v3187 = vsel %vm261, %v3160, 0
        %v3190 = vsel %vm261, %v3161, 0
        %v3193 = vsel %vm261, %v3162, 0
        %v3196 = vsel %vm261, %v3163, 0
        %v3199 = vsel %vm261, %v3164, 0
        %v3202 = vsel %vm261, %v3165, 0
        %v3205 = vsel %vm261, %v3166, 0
        %v3208 = vsel %vm261, %v3167, 0
        %v3211 = vsel %vm261, %v3168, 0
        %v3214 = vsel %vm261, %v3169, 0
        %v3217 = vsel %vm261, %v3170, 0
        %v3220 = vsel %vm261, %v3171, 0
        %3222 = vmatprep.subr.mxu0 0.0
        %3223 = vmatpush1.msra.mxu0 %v3173
        %3224 = vmatprep.subr.mxu0 0.0
        %3225 = vmatpush1.msra.mxu0 0.0
        %3226 = vmatprep.subr.mxu0 0.0
        %3227 = vmatpush1.msra.mxu0 0.0
        %3228 = vmatprep.subr.mxu0 0.0
        %3229 = vmatpush1.msra.mxu0 0.0
        %3230 = vmatprep.subr.mxu0 0.0
        %3231 = vmatpush1.msra.mxu0 0.0
        %3232 = vmatprep.subr.mxu0 0.0
        %3233 = vmatpush1.msra.mxu0 0.0
        %3234 = vmatprep.subr.mxu0 0.0
        %3235 = vmatpush1.msra.mxu0 0.0
        %3236 = vmatprep.subr.mxu0 0.0
        %3237 = vmatpush1.msra.mxu0 0.0
        %3238 = vmatprep.subr.mxu0 0.0
        %3239 = vmatpush1.msra.mxu0 0.0
        %3240 = vmatprep.subr.mxu0 0.0
        %3241 = vmatpush1.msra.mxu0 0.0
        %3242 = vmatprep.subr.mxu0 0.0
        %3243 = vmatpush1.msra.mxu0 0.0
        %3244 = vmatprep.subr.mxu0 0.0
        %3245 = vmatpush1.msra.mxu0 0.0
        %3246 = vmatprep.subr.mxu0 0.0
        %3247 = vmatpush1.msra.mxu0 0.0
        %3248 = vmatprep.subr.mxu0 0.0
        %3249 = vmatpush1.msra.mxu0 0.0
        %3250 = vmatprep.subr.mxu0 0.0
        %3251 = vmatpush1.msra.mxu0 0.0
        %3252 = vmatprep.subr.mxu0 0.0
        %3253 = vmatpush1.msra.mxu0 0.0
        %3254 = vmatprep.subr.mxu0 0.0
        %3255 = vmatpush1.msra.mxu0 0.0
        %3256 = vmatprep.subr.mxu0 0.0
        %3257 = vmatpush1.msra.mxu0 0.0
        %3258 = vmatprep.subr.mxu0 0.0
        %3259 = vmatpush1.msra.mxu0 0.0
        %3260 = vmatprep.subr.mxu0 0.0
        %3261 = vmatpush1.msra.mxu0 0.0
        %3262 = vmatprep.subr.mxu0 0.0
        %3263 = vmatpush1.msra.mxu0 0.0
        %3264 = vmatprep.subr.mxu0 0.0
        %3265 = vmatpush1.msra.mxu0 0.0
        %3266 = vmatprep.subr.mxu0 0.0
        %3267 = vmatpush1.msra.mxu0 0.0
        %3268 = vmatprep.subr.mxu0 0.0
        %3269 = vmatpush1.msra.mxu0 0.0
        %3270 = vmatprep.subr.mxu0 0.0
        %3271 = vmatpush1.msra.mxu0 0.0
        %3272 = vmatprep.subr.mxu0 0.0
        %3273 = vmatpush1.msra.mxu0 0.0
        %3274 = vmatprep.subr.mxu0 0.0
        %3275 = vmatpush1.msra.mxu0 0.0
        %3276 = vmatprep.subr.mxu0 0.0
        %3277 = vmatpush1.msra.mxu0 0.0
        %3278 = vmatprep.subr.mxu0 0.0
        %3279 = vmatpush1.msra.mxu0 0.0
        %3280 = vmatprep.subr.mxu0 0.0
        %3281 = vmatpush1.msra.mxu0 0.0
        %3282 = vmatprep.subr.mxu0 0.0
        %3283 = vmatpush1.msra.mxu0 0.0
        %3284 = vmatprep.subr.mxu0 0.0
        %3285 = vmatpush1.msra.mxu0 0.0
        %3286 = vmatprep.mubr.f32.mxu0 0.0
        %3287 = vmatmul.mubr.f32.gmra.mrb[0].mxu0 %v3175
        %v3288 = vpop.f32.mrb[0].mxu0
        %v3289 = vadd.f32 0.0, %v3288
        %v3290 = vpop.f32.mrb[0].mxu0
        %3291 = vmatprep.mubr.f32.mxu0 0.0
        %3292 = vmatmul.mubr.f32.gmra.mrb[0].mxu0 %v3178
        %v3293 = vpop.f32.mrb[0].mxu0
        %v3294 = vadd.f32 0.0, %v3293
        %v3295 = vpop.f32.mrb[0].mxu0
        %3296 = vmatprep.mubr.f32.mxu0 0.0
        %3297 = vmatmul.mubr.f32.gmra.mrb[0].mxu0 %v3181
        %v3298 = vpop.f32.mrb[0].mxu0
        %v3299 = vadd.f32 0.0, %v3298
        %v3300 = vpop.f32.mrb[0].mxu0
        %3301 = vmatprep.mubr.f32.mxu0 0.0
        %3302 = vmatmul.mubr.f32.gmra.mrb[0].mxu0 %v3184
        %v3303 = vpop.f32.mrb[0].mxu0
        %v3304 = vadd.f32 0.0, %v3303
        %v3305 = vpop.f32.mrb[0].mxu0
        %3306 = vmatprep.mubr.f32.mxu0 0.0
        %3307 = vmatmul.mubr.f32.gmra.mrb[0].mxu0 %v3187
        %v3308 = vpop.f32.mrb[0].mxu0
        %v3309 = vadd.f32 0.0, %v3308
        %v3310 = vpop.f32.mrb[0].mxu0
        %3311 = vmatprep.mubr.f32.mxu0 0.0
        %3312 = vmatmul.mubr.f32.gmra.mrb[0].mxu0 %v3190
        %v3313 = vpop.f32.mrb[0].mxu0
        %v3314 = vadd.f32 0.0, %v3313
        %v3315 = vpop.f32.mrb[0].mxu0
        %3316 = vmatprep.mubr.f32.mxu0 0.0
        %3317 = vmatmul.mubr.f32.gmra.mrb[0].mxu0 %v3193
        %v3318 = vpop.f32.mrb[0].mxu0
        %v3319 = vadd.f32 0.0, %v3318
        %v3320 = vpop.f32.mrb[0].mxu0
        %3321 = vmatprep.mubr.f32.mxu0 0.0
        %3322 = vmatmul.mubr.f32.gmra.mrb[0].mxu0 %v3196
        %v3323 = vpop.f32.mrb[0].mxu0
        %v3324 = vadd.f32 0.0, %v3323
        %v3325 = vpop.f32.mrb[0].mxu0
        %3326 = vmatprep.mubr.f32.mxu0 0.0
        %3327 = vmatmul.mubr.f32.gmra.mrb[0].mxu0 %v3199
        %v3328 = vpop.f32.mrb[0].mxu0
        %v3329 = vadd.f32 0.0, %v3328
        %v3330 = vpop.f32.mrb[0].mxu0
        %3331 = vmatprep.mubr.f32.mxu0 0.0
        %3332 = vmatmul.mubr.f32.gmra.mrb[0].mxu0 %v3202
        %v3333 = vpop.f32.mrb[0].mxu0
        %v3334 = vadd.f32 0.0, %v3333
        %v3335 = vpop.f32.mrb[0].mxu0
        %3336 = vmatprep.mubr.f32.mxu0 0.0
        %3337 = vmatmul.mubr.f32.gmra.mrb[0].mxu0 %v3205
        %v3338 = vpop.f32.mrb[0].mxu0
        %v3339 = vadd.f32 0.0, %v3338
        %v3340 = vpop.f32.mrb[0].mxu0
        %3341 = vmatprep.mubr.f32.mxu0 0.0
        %3342 = vmatmul.mubr.f32.gmra.mrb[0].mxu0 %v3208
        %v3343 = vpop.f32.mrb[0].mxu0
        %v3344 = vadd.f32 0.0, %v3343
        %v3345 = vpop.f32.mrb[0].mxu0
        %3346 = vmatprep.mubr.f32.mxu0 0.0
        %3347 = vmatmul.mubr.f32.gmra.mrb[0].mxu0 %v3211
        %v3348 = vpop.f32.mrb[0].mxu0
        %v3349 = vadd.f32 0.0, %v3348
        %v3350 = vpop.f32.mrb[0].mxu0
        %3351 = vmatprep.mubr.f32.mxu0 0.0
        %3352 = vmatmul.mubr.f32.gmra.mrb[0].mxu0 %v3214
        %v3353 = vpop.f32.mrb[0].mxu0
        %v3354 = vadd.f32 0.0, %v3353
        %v3355 = vpop.f32.mrb[0].mxu0
        %3356 = vmatprep.mubr.f32.mxu0 0.0
        %3357 = vmatmul.mubr.f32.gmra.mrb[0].mxu0 %v3217
        %v3358 = vpop.f32.mrb[0].mxu0
        %v3359 = vadd.f32 0.0, %v3358
        %v3360 = vpop.f32.mrb[0].mxu0
        %3361 = vmatprep.mubr.f32.mxu0 0.0
        %3362 = vmatmul.mubr.f32.gmra.mrb[0].mxu0 %v3220
        %v3363 = vpop.f32.mrb[0].mxu0
        %v3364 = vadd.f32 0.0, %v3363
        %v3365 = vpop.f32.mrb[0].mxu0
        %3366 = vdwg.mxu0
        %v3368 = vsel %vm261, %v3138, 0
        %v3371 = vsel %vm261, %v3139, 0
        %v3374 = vsel %vm261, %v3140, 0
        %v3377 = vsel %vm261, %v3141, 0
        %v3380 = vsel %vm261, %v3142, 0
        %v3383 = vsel %vm261, %v3143, 0
        %v3386 = vsel %vm261, %v3144, 0
        %v3389 = vsel %vm261, %v3145, 0
        %v3392 = vsel %vm261, %v3146, 0
        %v3395 = vsel %vm261, %v3147, 0
        %v3398 = vsel %vm261, %v3148, 0
        %v3401 = vsel %vm261, %v3149, 0
        %v3404 = vsel %vm261, %v3150, 0
        %v3407 = vsel %vm261, %v3151, 0
        %v3410 = vsel %vm261, %v3152, 0
        %v3413 = vsel %vm261, %v3153, 0
        %3415 = vmatprep.subr.mxu0 0.0
        %3416 = vmatpush1.msra.mxu0 %v3155
        %3417 = vmatprep.subr.mxu0 0.0
        %3418 = vmatpush1.msra.mxu0 0.0
        %3419 = vmatprep.subr.mxu0 0.0
        %3420 = vmatpush1.msra.mxu0 0.0
        %3421 = vmatprep.subr.mxu0 0.0
        %3422 = vmatpush1.msra.mxu0 0.0
        %3423 = vmatprep.subr.mxu0 0.0
        %3424 = vmatpush1.msra.mxu0 0.0
        %3425 = vmatprep.subr.mxu0 0.0
        %3426 = vmatpush1.msra.mxu0 0.0
        %3427 = vmatprep.subr.mxu0 0.0
        %3428 = vmatpush1.msra.mxu0 0.0
        %3429 = vmatprep.subr.mxu0 0.0
        %3430 = vmatpush1.msra.mxu0 0.0
        %3431 = vmatprep.subr.mxu0 0.0
        %3432 = vmatpush1.msra.mxu0 0.0
        %3433 = vmatprep.subr.mxu0 0.0
        %3434 = vmatpush1.msra.mxu0 0.0
        %3435 = vmatprep.subr.mxu0 0.0
        %3436 = vmatpush1.msra.mxu0 0.0
        %3437 = vmatprep.subr.mxu0 0.0
        %3438 = vmatpush1.msra.mxu0 0.0
        %3439 = vmatprep.subr.mxu0 0.0
        %3440 = vmatpush1.msra.mxu0 0.0
        %3441 = vmatprep.subr.mxu0 0.0
        %3442 = vmatpush1.msra.mxu0 0.0
        %3443 = vmatprep.subr.mxu0 0.0
        %3444 = vmatpush1.msra.mxu0 0.0
        %3445 = vmatprep.subr.mxu0 0.0
        %3446 = vmatpush1.msra.mxu0 0.0
        %3447 = vmatprep.subr.mxu0 0.0
        %3448 = vmatpush1.msra.mxu0 0.0
        %3449 = vmatprep.subr.mxu0 0.0
        %3450 = vmatpush1.msra.mxu0 0.0
        %3451 = vmatprep.subr.mxu0 0.0
        %3452 = vmatpush1.msra.mxu0 0.0
        %3453 = vmatprep.subr.mxu0 0.0
        %3454 = vmatpush1.msra.mxu0 0.0
        %3455 = vmatprep.subr.mxu0 0.0
        %3456 = vmatpush1.msra.mxu0 0.0
        %3457 = vmatprep.subr.mxu0 0.0
        %3458 = vmatpush1.msra.mxu0 0.0
        %3459 = vmatprep.subr.mxu0 0.0
        %3460 = vmatpush1.msra.mxu0 0.0
        %3461 = vmatprep.subr.mxu0 0.0
        %3462 = vmatpush1.msra.mxu0 0.0
        %3463 = vmatprep.subr.mxu0 0.0
        %3464 = vmatpush1.msra.mxu0 0.0
        %3465 = vmatprep.subr.mxu0 0.0
        %3466 = vmatpush1.msra.mxu0 0.0
        %3467 = vmatprep.subr.mxu0 0.0
        %3468 = vmatpush1.msra.mxu0 0.0
        %3469 = vmatprep.subr.mxu0 0.0
        %3470 = vmatpush1.msra.mxu0 0.0
        %3471 = vmatprep.subr.mxu0 0.0
        %3472 = vmatpush1.msra.mxu0 0.0
        %3473 = vmatprep.subr.mxu0 0.0
        %3474 = vmatpush1.msra.mxu0 0.0
        %3475 = vmatprep.subr.mxu0 0.0
        %3476 = vmatpush1.msra.mxu0 0.0
        %3477 = vmatprep.subr.mxu0 0.0
        %3478 = vmatpush1.msra.mxu0 0.0
        %3479 = vmatprep.mubr.f32.mxu0 0.0
        %3480 = vmatmul.mubr.f32.gmra.mrb[0].mxu0 %v3368
        %v3481 = vpop.f32.mrb[0].mxu0
        %v3482 = vadd.f32 %v3289, %v3481
        %v3483 = vpop.f32.mrb[0].mxu0
        %3484 = vmatprep.mubr.f32.mxu0 0.0
        %3485 = vmatmul.mubr.f32.gmra.mrb[0].mxu0 %v3371
        %v3486 = vpop.f32.mrb[0].mxu0
        %v3487 = vadd.f32 %v3294, %v3486
        %v3488 = vpop.f32.mrb[0].mxu0
        %3489 = vmatprep.mubr.f32.mxu0 0.0
        %3490 = vmatmul.mubr.f32.gmra.mrb[0].mxu0 %v3374
        %v3491 = vpop.f32.mrb[0].mxu0
        %v3492 = vadd.f32 %v3299, %v3491
        %v3493 = vpop.f32.mrb[0].mxu0
        %3494 = vmatprep.mubr.f32.mxu0 0.0
        %3495 = vmatmul.mubr.f32.gmra.mrb[0].mxu0 %v3377
        %v3496 = vpop.f32.mrb[0].mxu0
        %v3497 = vadd.f32 %v3304, %v3496
        %v3498 = vpop.f32.mrb[0].mxu0
        %3499 = vmatprep.mubr.f32.mxu0 0.0
        %3500 = vmatmul.mubr.f32.gmra.mrb[0].mxu0 %v3380
        %v3501 = vpop.f32.mrb[0].mxu0
        %v3502 = vadd.f32 %v3309, %v3501
        %v3503 = vpop.f32.mrb[0].mxu0
        %3504 = vmatprep.mubr.f32.mxu0 0.0
        %3505 = vmatmul.mubr.f32.gmra.mrb[0].mxu0 %v3383
        %v3506 = vpop.f32.mrb[0].mxu0
        %v3507 = vadd.f32 %v3314, %v3506
        %v3508 = vpop.f32.mrb[0].mxu0
        %3509 = vmatprep.mubr.f32.mxu0 0.0
        %3510 = vmatmul.mubr.f32.gmra.mrb[0].mxu0 %v3386
        %v3511 = vpop.f32.mrb[0].mxu0
        %v3512 = vadd.f32 %v3319, %v3511
        %v3513 = vpop.f32.mrb[0].mxu0
        %3514 = vmatprep.mubr.f32.mxu0 0.0
        %3515 = vmatmul.mubr.f32.gmra.mrb[0].mxu0 %v3389
        %v3516 = vpop.f32.mrb[0].mxu0
        %v3517 = vadd.f32 %v3324, %v3516
        %v3518 = vpop.f32.mrb[0].mxu0
        %3519 = vmatprep.mubr.f32.mxu0 0.0
        %3520 = vmatmul.mubr.f32.gmra.mrb[0].mxu0 %v3392
        %v3521 = vpop.f32.mrb[0].mxu0
        %v3522 = vadd.f32 %v3329, %v3521
        %v3523 = vpop.f32.mrb[0].mxu0
        %3524 = vmatprep.mubr.f32.mxu0 0.0
        %3525 = vmatmul.mubr.f32.gmra.mrb[0].mxu0 %v3395
        %v3526 = vpop.f32.mrb[0].mxu0
        %v3527 = vadd.f32 %v3334, %v3526
        %v3528 = vpop.f32.mrb[0].mxu0
        %3529 = vmatprep.mubr.f32.mxu0 0.0
        %3530 = vmatmul.mubr.f32.gmra.mrb[0].mxu0 %v3398
        %v3531 = vpop.f32.mrb[0].mxu0
        %v3532 = vadd.f32 %v3339, %v3531
        %v3533 = vpop.f32.mrb[0].mxu0
        %3534 = vmatprep.mubr.f32.mxu0 0.0
        %3535 = vmatmul.mubr.f32.gmra.mrb[0].mxu0 %v3401
        %v3536 = vpop.f32.mrb[0].mxu0
        %v3537 = vadd.f32 %v3344, %v3536
        %v3538 = vpop.f32.mrb[0].mxu0
        %3539 = vmatprep.mubr.f32.mxu0 0.0
        %3540 = vmatmul.mubr.f32.gmra.mrb[0].mxu0 %v3404
        %v3541 = vpop.f32.mrb[0].mxu0
        %v3542 = vadd.f32 %v3349, %v3541
        %v3543 = vpop.f32.mrb[0].mxu0
        %3544 = vmatprep.mubr.f32.mxu0 0.0
        %3545 = vmatmul.mubr.f32.gmra.mrb[0].mxu0 %v3407
        %v3546 = vpop.f32.mrb[0].mxu0
        %v3547 = vadd.f32 %v3354, %v3546
        %v3548 = vpop.f32.mrb[0].mxu0
        %3549 = vmatprep.mubr.f32.mxu0 0.0
        %3550 = vmatmul.mubr.f32.gmra.mrb[0].mxu0 %v3410
        %v3551 = vpop.f32.mrb[0].mxu0
        %v3552 = vadd.f32 %v3359, %v3551
        %v3553 = vpop.f32.mrb[0].mxu0
        %3554 = vmatprep.mubr.f32.mxu0 0.0
        %3555 = vmatmul.mubr.f32.gmra.mrb[0].mxu0 %v3413
        %v3556 = vpop.f32.mrb[0].mxu0
        %v3557 = vadd.f32 %v3364, %v3556
        %v3558 = vpop.f32.mrb[0].mxu0
        %3559 = vdwg.mxu0
        %v3560 = vld [vmem:[%s2590 + $0x1] sm:$0xff]
        %v3561 = vld [vmem:[%s2590 + $0x9] sm:$0xff]
        %v3562 = vld [vmem:[%s2590 + $0x19] sm:$0xff]
        %v3563 = vld [vmem:[%s2590 + $0x21] sm:$0xff]
        %v3564 = vld [vmem:[%s2590 + $0x31] sm:$0xff]
        %v3565 = vld [vmem:[%s2590 + $0x39] sm:$0xff]
        %v3566 = vld [vmem:[%s2590 + $0x49] sm:$0xff]
        %v3567 = vld [vmem:[%s2590 + $0x51] sm:$0xff]
        %v3568 = vld [vmem:[%s2590 + $0x61] sm:$0xff]
        %v3569 = vld [vmem:[%s2590 + $0x69] sm:$0xff]
        %v3570 = vld [vmem:[%s2590 + $0x79] sm:$0xff]
        %v3571 = vld [vmem:[%s2590 + $0x81] sm:$0xff]
        %v3572 = vld [vmem:[%s2590 + $0x91] sm:$0xff]
        %v3573 = vld [vmem:[%s2590 + $0x99] sm:$0xff]
        %v3574 = vld [vmem:[%s2590 + $0xa9] sm:$0xff]
        %v3575 = vld [vmem:[%s2590 + $0xb1] sm:$0xff]
        %s3576 = scalar_lea.vmem %s2, 112
        %v3577 = vld [vmem:[%s3576] sm:$0xff]
        %v3579 = vsel %vm261, %v3560, 0
        %v3582 = vsel %vm261, %v3561, 0
        %v3585 = vsel %vm261, %v3562, 0
        %v3588 = vsel %vm261, %v3563, 0
        %v3591 = vsel %vm261, %v3564, 0
        %v3594 = vsel %vm261, %v3565, 0
        %v3597 = vsel %vm261, %v3566, 0
        %v3600 = vsel %vm261, %v3567, 0
        %v3603 = vsel %vm261, %v3568, 0
        %v3606 = vsel %vm261, %v3569, 0
        %v3609 = vsel %vm261, %v3570, 0
        %v3612 = vsel %vm261, %v3571, 0
        %v3615 = vsel %vm261, %v3572, 0
        %v3618 = vsel %vm261, %v3573, 0
        %v3621 = vsel %vm261, %v3574, 0
        %v3624 = vsel %vm261, %v3575, 0
        %3626 = vmatprep.subr.mxu0 0.0
        %3627 = vmatpush1.msra.mxu0 %v3577
        %3628 = vmatprep.subr.mxu0 0.0
        %3629 = vmatpush1.msra.mxu0 0.0
        %3630 = vmatprep.subr.mxu0 0.0
        %3631 = vmatpush1.msra.mxu0 0.0
        %3632 = vmatprep.subr.mxu0 0.0
        %3633 = vmatpush1.msra.mxu0 0.0
        %3634 = vmatprep.subr.mxu0 0.0
        %3635 = vmatpush1.msra.mxu0 0.0
        %3636 = vmatprep.subr.mxu0 0.0
        %3637 = vmatpush1.msra.mxu0 0.0
        %3638 = vmatprep.subr.mxu0 0.0
        %3639 = vmatpush1.msra.mxu0 0.0
        %3640 = vmatprep.subr.mxu0 0.0
        %3641 = vmatpush1.msra.mxu0 0.0
        %3642 = vmatprep.subr.mxu0 0.0
        %3643 = vmatpush1.msra.mxu0 0.0
        %3644 = vmatprep.subr.mxu0 0.0
        %3645 = vmatpush1.msra.mxu0 0.0
        %3646 = vmatprep.subr.mxu0 0.0
        %3647 = vmatpush1.msra.mxu0 0.0
        %3648 = vmatprep.subr.mxu0 0.0
        %3649 = vmatpush1.msra.mxu0 0.0
        %3650 = vmatprep.subr.mxu0 0.0
        %3651 = vmatpush1.msra.mxu0 0.0
        %3652 = vmatprep.subr.mxu0 0.0
        %3653 = vmatpush1.msra.mxu0 0.0
        %3654 = vmatprep.subr.mxu0 0.0
        %3655 = vmatpush1.msra.mxu0 0.0
        %3656 = vmatprep.subr.mxu0 0.0
        %3657 = vmatpush1.msra.mxu0 0.0
        %3658 = vmatprep.subr.mxu0 0.0
        %3659 = vmatpush1.msra.mxu0 0.0
        %3660 = vmatprep.subr.mxu0 0.0
        %3661 = vmatpush1.msra.mxu0 0.0
        %3662 = vmatprep.subr.mxu0 0.0
        %3663 = vmatpush1.msra.mxu0 0.0
        %3664 = vmatprep.subr.mxu0 0.0
        %3665 = vmatpush1.msra.mxu0 0.0
        %3666 = vmatprep.subr.mxu0 0.0
        %3667 = vmatpush1.msra.mxu0 0.0
        %3668 = vmatprep.subr.mxu0 0.0
        %3669 = vmatpush1.msra.mxu0 0.0
        %3670 = vmatprep.subr.mxu0 0.0
        %3671 = vmatpush1.msra.mxu0 0.0
        %3672 = vmatprep.subr.mxu0 0.0
        %3673 = vmatpush1.msra.mxu0 0.0
        %3674 = vmatprep.subr.mxu0 0.0
        %3675 = vmatpush1.msra.mxu0 0.0
        %3676 = vmatprep.subr.mxu0 0.0
        %3677 = vmatpush1.msra.mxu0 0.0
        %3678 = vmatprep.subr.mxu0 0.0
        %3679 = vmatpush1.msra.mxu0 0.0
        %3680 = vmatprep.subr.mxu0 0.0
        %3681 = vmatpush1.msra.mxu0 0.0
        %3682 = vmatprep.subr.mxu0 0.0
        %3683 = vmatpush1.msra.mxu0 0.0
        %3684 = vmatprep.subr.mxu0 0.0
        %3685 = vmatpush1.msra.mxu0 0.0
        %3686 = vmatprep.subr.mxu0 0.0
        %3687 = vmatpush1.msra.mxu0 0.0
        %3688 = vmatprep.subr.mxu0 0.0
        %3689 = vmatpush1.msra.mxu0 0.0
        %3690 = vmatprep.mubr.f32.mxu0 0.0
        %3691 = vmatmul.mubr.f32.gmra.mrb[0].mxu0 %v3579
        %v3692 = vpop.f32.mrb[0].mxu0
        %v3693 = vadd.f32 0.0, %v3692
        %v3694 = vpop.f32.mrb[0].mxu0
        %3695 = vmatprep.mubr.f32.mxu0 0.0
        %3696 = vmatmul.mubr.f32.gmra.mrb[0].mxu0 %v3582
        %v3697 = vpop.f32.mrb[0].mxu0
        %v3698 = vadd.f32 0.0, %v3697
        %v3699 = vpop.f32.mrb[0].mxu0
        %3700 = vmatprep.mubr.f32.mxu0 0.0
        %3701 = vmatmul.mubr.f32.gmra.mrb[0].mxu0 %v3585
        %v3702 = vpop.f32.mrb[0].mxu0
        %v3703 = vadd.f32 0.0, %v3702
        %v3704 = vpop.f32.mrb[0].mxu0
        %3705 = vmatprep.mubr.f32.mxu0 0.0
        %3706 = vmatmul.mubr.f32.gmra.mrb[0].mxu0 %v3588
        %v3707 = vpop.f32.mrb[0].mxu0
        %v3708 = vadd.f32 0.0, %v3707
        %v3709 = vpop.f32.mrb[0].mxu0
        %3710 = vmatprep.mubr.f32.mxu0 0.0
        %3711 = vmatmul.mubr.f32.gmra.mrb[0].mxu0 %v3591
        %v3712 = vpop.f32.mrb[0].mxu0
        %v3713 = vadd.f32 0.0, %v3712
        %v3714 = vpop.f32.mrb[0].mxu0
        %3715 = vmatprep.mubr.f32.mxu0 0.0
        %3716 = vmatmul.mubr.f32.gmra.mrb[0].mxu0 %v3594
        %v3717 = vpop.f32.mrb[0].mxu0
        %v3718 = vadd.f32 0.0, %v3717
        %v3719 = vpop.f32.mrb[0].mxu0
        %3720 = vmatprep.mubr.f32.mxu0 0.0
        %3721 = vmatmul.mubr.f32.gmra.mrb[0].mxu0 %v3597
        %v3722 = vpop.f32.mrb[0].mxu0
        %v3723 = vadd.f32 0.0, %v3722
        %v3724 = vpop.f32.mrb[0].mxu0
        %3725 = vmatprep.mubr.f32.mxu0 0.0
        %3726 = vmatmul.mubr.f32.gmra.mrb[0].mxu0 %v3600
        %v3727 = vpop.f32.mrb[0].mxu0
        %v3728 = vadd.f32 0.0, %v3727
        %v3729 = vpop.f32.mrb[0].mxu0
        %3730 = vmatprep.mubr.f32.mxu0 0.0
        %3731 = vmatmul.mubr.f32.gmra.mrb[0].mxu0 %v3603
        %v3732 = vpop.f32.mrb[0].mxu0
        %v3733 = vadd.f32 0.0, %v3732
        %v3734 = vpop.f32.mrb[0].mxu0
        %3735 = vmatprep.mubr.f32.mxu0 0.0
        %3736 = vmatmul.mubr.f32.gmra.mrb[0].mxu0 %v3606
        %v3737 = vpop.f32.mrb[0].mxu0
        %v3738 = vadd.f32 0.0, %v3737
        %v3739 = vpop.f32.mrb[0].mxu0
        %3740 = vmatprep.mubr.f32.mxu0 0.0
        %3741 = vmatmul.mubr.f32.gmra.mrb[0].mxu0 %v3609
        %v3742 = vpop.f32.mrb[0].mxu0
        %v3743 = vadd.f32 0.0, %v3742
        %v3744 = vpop.f32.mrb[0].mxu0
        %3745 = vmatprep.mubr.f32.mxu0 0.0
        %3746 = vmatmul.mubr.f32.gmra.mrb[0].mxu0 %v3612
        %v3747 = vpop.f32.mrb[0].mxu0
        %v3748 = vadd.f32 0.0, %v3747
        %v3749 = vpop.f32.mrb[0].mxu0
        %3750 = vmatprep.mubr.f32.mxu0 0.0
        %3751 = vmatmul.mubr.f32.gmra.mrb[0].mxu0 %v3615
        %v3752 = vpop.f32.mrb[0].mxu0
        %v3753 = vadd.f32 0.0, %v3752
        %v3754 = vpop.f32.mrb[0].mxu0
        %3755 = vmatprep.mubr.f32.mxu0 0.0
        %3756 = vmatmul.mubr.f32.gmra.mrb[0].mxu0 %v3618
        %v3757 = vpop.f32.mrb[0].mxu0
        %v3758 = vadd.f32 0.0, %v3757
        %v3759 = vpop.f32.mrb[0].mxu0
        %3760 = vmatprep.mubr.f32.mxu0 0.0
        %3761 = vmatmul.mubr.f32.gmra.mrb[0].mxu0 %v3621
        %v3762 = vpop.f32.mrb[0].mxu0
        %v3763 = vadd.f32 0.0, %v3762
        %v3764 = vpop.f32.mrb[0].mxu0
        %3765 = vmatprep.mubr.f32.mxu0 0.0
        %3766 = vmatmul.mubr.f32.gmra.mrb[0].mxu0 %v3624
        %v3767 = vpop.f32.mrb[0].mxu0
        %v3768 = vadd.f32 0.0, %v3767
        %v3769 = vpop.f32.mrb[0].mxu0
        %3770 = vdwg.mxu0
        %v3771 = vadd.f32 %v3482, %v3693
        %v3772 = vadd.f32 %v3487, %v3698
        %v3773 = vadd.f32 %v3492, %v3703
        %v3774 = vadd.f32 %v3497, %v3708
        %v3775 = vadd.f32 %v3502, %v3713
        %v3776 = vadd.f32 %v3507, %v3718
        %v3777 = vadd.f32 %v3512, %v3723
        %v3778 = vadd.f32 %v3517, %v3728
        %v3779 = vadd.f32 %v3522, %v3733
        %v3780 = vadd.f32 %v3527, %v3738
        %v3781 = vadd.f32 %v3532, %v3743
        %v3782 = vadd.f32 %v3537, %v3748
        %v3783 = vadd.f32 %v3542, %v3753
        %v3784 = vadd.f32 %v3547, %v3758
        %v3785 = vadd.f32 %v3552, %v3763
        %v3786 = vadd.f32 %v3557, %v3768
        %v3787 = vld [vmem:[%s2590 + $0x2] sm:$0xff]
        %v3788 = vld [vmem:[%s2590 + $0xa] sm:$0xff]
        %v3789 = vld [vmem:[%s2590 + $0x1a] sm:$0xff]
        %v3790 = vld [vmem:[%s2590 + $0x22] sm:$0xff]
        %v3791 = vld [vmem:[%s2590 + $0x32] sm:$0xff]
        %v3792 = vld [vmem:[%s2590 + $0x3a] sm:$0xff]
        %v3793 = vld [vmem:[%s2590 + $0x4a] sm:$0xff]
        %v3794 = vld [vmem:[%s2590 + $0x52] sm:$0xff]
        %v3795 = vld [vmem:[%s2590 + $0x62] sm:$0xff]
        %v3796 = vld [vmem:[%s2590 + $0x6a] sm:$0xff]
        %v3797 = vld [vmem:[%s2590 + $0x7a] sm:$0xff]
        %v3798 = vld [vmem:[%s2590 + $0x82] sm:$0xff]
        %v3799 = vld [vmem:[%s2590 + $0x92] sm:$0xff]
        %v3800 = vld [vmem:[%s2590 + $0x9a] sm:$0xff]
        %v3801 = vld [vmem:[%s2590 + $0xaa] sm:$0xff]
        %v3802 = vld [vmem:[%s2590 + $0xb2] sm:$0xff]
        %s3803 = scalar_lea.vmem %s2, 120
        %v3804 = vld [vmem:[%s3803] sm:$0xff]
        %v3806 = vsel %vm261, %v3787, 0
        %v3809 = vsel %vm261, %v3788, 0
        %v3812 = vsel %vm261, %v3789, 0
        %v3815 = vsel %vm261, %v3790, 0
        %v3818 = vsel %vm261, %v3791, 0
        %v3821 = vsel %vm261, %v3792, 0
        %v3824 = vsel %vm261, %v3793, 0
        %v3827 = vsel %vm261, %v3794, 0
        %v3830 = vsel %vm261, %v3795, 0
        %v3833 = vsel %vm261, %v3796, 0
        %v3836 = vsel %vm261, %v3797, 0
        %v3839 = vsel %vm261, %v3798, 0
        %v3842 = vsel %vm261, %v3799, 0
        %v3845 = vsel %vm261, %v3800, 0
        %v3848 = vsel %vm261, %v3801, 0
        %v3851 = vsel %vm261, %v3802, 0
        %3853 = vmatprep.subr.mxu0 0.0
        %3854 = vmatpush1.msra.mxu0 %v3804
        %3855 = vmatprep.subr.mxu0 0.0
        %3856 = vmatpush1.msra.mxu0 0.0
        %3857 = vmatprep.subr.mxu0 0.0
        %3858 = vmatpush1.msra.mxu0 0.0
        %3859 = vmatprep.subr.mxu0 0.0
        %3860 = vmatpush1.msra.mxu0 0.0
        %3861 = vmatprep.subr.mxu0 0.0
        %3862 = vmatpush1.msra.mxu0 0.0
        %3863 = vmatprep.subr.mxu0 0.0
        %3864 = vmatpush1.msra.mxu0 0.0
        %3865 = vmatprep.subr.mxu0 0.0
        %3866 = vmatpush1.msra.mxu0 0.0
        %3867 = vmatprep.subr.mxu0 0.0
        %3868 = vmatpush1.msra.mxu0 0.0
        %3869 = vmatprep.subr.mxu0 0.0
        %3870 = vmatpush1.msra.mxu0 0.0
        %3871 = vmatprep.subr.mxu0 0.0
        %3872 = vmatpush1.msra.mxu0 0.0
        %3873 = vmatprep.subr.mxu0 0.0
        %3874 = vmatpush1.msra.mxu0 0.0
        %3875 = vmatprep.subr.mxu0 0.0
        %3876 = vmatpush1.msra.mxu0 0.0
        %3877 = vmatprep.subr.mxu0 0.0
        %3878 = vmatpush1.msra.mxu0 0.0
        %3879 = vmatprep.subr.mxu0 0.0
        %3880 = vmatpush1.msra.mxu0 0.0
        %3881 = vmatprep.subr.mxu0 0.0
        %3882 = vmatpush1.msra.mxu0 0.0
        %3883 = vmatprep.subr.mxu0 0.0
        %3884 = vmatpush1.msra.mxu0 0.0
        %3885 = vmatprep.subr.mxu0 0.0
        %3886 = vmatpush1.msra.mxu0 0.0
        %3887 = vmatprep.subr.mxu0 0.0
        %3888 = vmatpush1.msra.mxu0 0.0
        %3889 = vmatprep.subr.mxu0 0.0
        %3890 = vmatpush1.msra.mxu0 0.0
        %3891 = vmatprep.subr.mxu0 0.0
        %3892 = vmatpush1.msra.mxu0 0.0
        %3893 = vmatprep.subr.mxu0 0.0
        %3894 = vmatpush1.msra.mxu0 0.0
        %3895 = vmatprep.subr.mxu0 0.0
        %3896 = vmatpush1.msra.mxu0 0.0
        %3897 = vmatprep.subr.mxu0 0.0
        %3898 = vmatpush1.msra.mxu0 0.0
        %3899 = vmatprep.subr.mxu0 0.0
        %3900 = vmatpush1.msra.mxu0 0.0
        %3901 = vmatprep.subr.mxu0 0.0
        %3902 = vmatpush1.msra.mxu0 0.0
        %3903 = vmatprep.subr.mxu0 0.0
        %3904 = vmatpush1.msra.mxu0 0.0
        %3905 = vmatprep.subr.mxu0 0.0
        %3906 = vmatpush1.msra.mxu0 0.0
        %3907 = vmatprep.subr.mxu0 0.0
        %3908 = vmatpush1.msra.mxu0 0.0
        %3909 = vmatprep.subr.mxu0 0.0
        %3910 = vmatpush1.msra.mxu0 0.0
        %3911 = vmatprep.subr.mxu0 0.0
        %3912 = vmatpush1.msra.mxu0 0.0
        %3913 = vmatprep.subr.mxu0 0.0
        %3914 = vmatpush1.msra.mxu0 0.0
        %3915 = vmatprep.subr.mxu0 0.0
        %3916 = vmatpush1.msra.mxu0 0.0
        %3917 = vmatprep.mubr.f32.mxu0 0.0
        %3918 = vmatmul.mubr.f32.gmra.mrb[0].mxu0 %v3806
        %v3919 = vpop.f32.mrb[0].mxu0
        %v3920 = vadd.f32 0.0, %v3919
        %v3921 = vpop.f32.mrb[0].mxu0
        %3922 = vmatprep.mubr.f32.mxu0 0.0
        %3923 = vmatmul.mubr.f32.gmra.mrb[0].mxu0 %v3809
        %v3924 = vpop.f32.mrb[0].mxu0
        %v3925 = vadd.f32 0.0, %v3924
        %v3926 = vpop.f32.mrb[0].mxu0
        %3927 = vmatprep.mubr.f32.mxu0 0.0
        %3928 = vmatmul.mubr.f32.gmra.mrb[0].mxu0 %v3812
        %v3929 = vpop.f32.mrb[0].mxu0
        %v3930 = vadd.f32 0.0, %v3929
        %v3931 = vpop.f32.mrb[0].mxu0
        %3932 = vmatprep.mubr.f32.mxu0 0.0
        %3933 = vmatmul.mubr.f32.gmra.mrb[0].mxu0 %v3815
        %v3934 = vpop.f32.mrb[0].mxu0
        %v3935 = vadd.f32 0.0, %v3934
        %v3936 = vpop.f32.mrb[0].mxu0
        %3937 = vmatprep.mubr.f32.mxu0 0.0
        %3938 = vmatmul.mubr.f32.gmra.mrb[0].mxu0 %v3818
        %v3939 = vpop.f32.mrb[0].mxu0
        %v3940 = vadd.f32 0.0, %v3939
        %v3941 = vpop.f32.mrb[0].mxu0
        %3942 = vmatprep.mubr.f32.mxu0 0.0
        %3943 = vmatmul.mubr.f32.gmra.mrb[0].mxu0 %v3821
        %v3944 = vpop.f32.mrb[0].mxu0
        %v3945 = vadd.f32 0.0, %v3944
        %v3946 = vpop.f32.mrb[0].mxu0
        %3947 = vmatprep.mubr.f32.mxu0 0.0
        %3948 = vmatmul.mubr.f32.gmra.mrb[0].mxu0 %v3824
        %v3949 = vpop.f32.mrb[0].mxu0
        %v3950 = vadd.f32 0.0, %v3949
        %v3951 = vpop.f32.mrb[0].mxu0
        %3952 = vmatprep.mubr.f32.mxu0 0.0
        %3953 = vmatmul.mubr.f32.gmra.mrb[0].mxu0 %v3827
        %v3954 = vpop.f32.mrb[0].mxu0
        %v3955 = vadd.f32 0.0, %v3954
        %v3956 = vpop.f32.mrb[0].mxu0
        %3957 = vmatprep.mubr.f32.mxu0 0.0
        %3958 = vmatmul.mubr.f32.gmra.mrb[0].mxu0 %v3830
        %v3959 = vpop.f32.mrb[0].mxu0
        %v3960 = vadd.f32 0.0, %v3959
        %v3961 = vpop.f32.mrb[0].mxu0
        %3962 = vmatprep.mubr.f32.mxu0 0.0
        %3963 = vmatmul.mubr.f32.gmra.mrb[0].mxu0 %v3833
        %v3964 = vpop.f32.mrb[0].mxu0
        %v3965 = vadd.f32 0.0, %v3964
        %v3966 = vpop.f32.mrb[0].mxu0
        %3967 = vmatprep.mubr.f32.mxu0 0.0
        %3968 = vmatmul.mubr.f32.gmra.mrb[0].mxu0 %v3836
        %v3969 = vpop.f32.mrb[0].mxu0
        %v3970 = vadd.f32 0.0, %v3969
        %v3971 = vpop.f32.mrb[0].mxu0
        %3972 = vmatprep.mubr.f32.mxu0 0.0
        %3973 = vmatmul.mubr.f32.gmra.mrb[0].mxu0 %v3839
        %v3974 = vpop.f32.mrb[0].mxu0
        %v3975 = vadd.f32 0.0, %v3974
        %v3976 = vpop.f32.mrb[0].mxu0
        %3977 = vmatprep.mubr.f32.mxu0 0.0
        %3978 = vmatmul.mubr.f32.gmra.mrb[0].mxu0 %v3842
        %v3979 = vpop.f32.mrb[0].mxu0
        %v3980 = vadd.f32 0.0, %v3979
        %v3981 = vpop.f32.mrb[0].mxu0
        %3982 = vmatprep.mubr.f32.mxu0 0.0
        %3983 = vmatmul.mubr.f32.gmra.mrb[0].mxu0 %v3845
        %v3984 = vpop.f32.mrb[0].mxu0
        %v3985 = vadd.f32 0.0, %v3984
        %v3986 = vpop.f32.mrb[0].mxu0
        %3987 = vmatprep.mubr.f32.mxu0 0.0
        %3988 = vmatmul.mubr.f32.gmra.mrb[0].mxu0 %v3848
        %v3989 = vpop.f32.mrb[0].mxu0
        %v3990 = vadd.f32 0.0, %v3989
        %v3991 = vpop.f32.mrb[0].mxu0
        %3992 = vmatprep.mubr.f32.mxu0 0.0
        %3993 = vmatmul.mubr.f32.gmra.mrb[0].mxu0 %v3851
        %v3994 = vpop.f32.mrb[0].mxu0
        %v3995 = vadd.f32 0.0, %v3994
        %v3996 = vpop.f32.mrb[0].mxu0
        %3997 = vdwg.mxu0
        %v3998 = vadd.f32 %v3771, %v3920
        %v3999 = vadd.f32 %v3772, %v3925
        %v4000 = vadd.f32 %v3773, %v3930
        %v4001 = vadd.f32 %v3774, %v3935
        %v4002 = vadd.f32 %v3775, %v3940
        %v4003 = vadd.f32 %v3776, %v3945
        %v4004 = vadd.f32 %v3777, %v3950
        %v4005 = vadd.f32 %v3778, %v3955
        %v4006 = vadd.f32 %v3779, %v3960
        %v4007 = vadd.f32 %v3780, %v3965
        %v4008 = vadd.f32 %v3781, %v3970
        %v4009 = vadd.f32 %v3782, %v3975
        %v4010 = vadd.f32 %v3783, %v3980
        %v4011 = vadd.f32 %v3784, %v3985
        %v4012 = vadd.f32 %v3785, %v3990
        %v4013 = vadd.f32 %v3786, %v3995
        %v4014 = vadd.f32 %v3998, %v1106
        %v4015 = vadd.f32 %v3999, %v1106
        %v4016 = vadd.f32 %v4000, %v1106
        %v4017 = vadd.f32 %v4001, %v1106
        %v4018 = vadd.f32 %v4002, %v1106
        %v4019 = vadd.f32 %v4003, %v1106
        %v4020 = vadd.f32 %v4004, %v1106
        %v4021 = vadd.f32 %v4005, %v1106
        %v4022 = vadd.f32 %v4006, %v1106
        %v4023 = vadd.f32 %v4007, %v1106
        %v4024 = vadd.f32 %v4008, %v1106
        %v4025 = vadd.f32 %v4009, %v1106
        %v4026 = vadd.f32 %v4010, %v1106
        %v4027 = vadd.f32 %v4011, %v1106
        %v4028 = vadd.f32 %v4012, %v1106
        %v4029 = vadd.f32 %v4013, %v1106
        %s4030 = scalar_lea.vmem %s206, 384 [#allocation2]
        %4031 = vst [vmem:[%s4030] sm:$0xff] %v4014
        %4032 = vst [vmem:[%s4030 + $0x8] sm:$0xff] %v4015
        %4033 = vst [vmem:[%s4030 + $0x10] sm:$0xff] %v4016
        %4034 = vst [vmem:[%s4030 + $0x18] sm:$0xff] %v4017
        %4035 = vst [vmem:[%s4030 + $0x20] sm:$0xff] %v4018
        %4036 = vst [vmem:[%s4030 + $0x28] sm:$0xff] %v4019
        %4037 = vst [vmem:[%s4030 + $0x30] sm:$0xff] %v4020
        %4038 = vst [vmem:[%s4030 + $0x38] sm:$0xff] %v4021
        %4039 = vst [vmem:[%s4030 + $0x40] sm:$0xff] %v4022
        %4040 = vst [vmem:[%s4030 + $0x48] sm:$0xff] %v4023
        %4041 = vst [vmem:[%s4030 + $0x50] sm:$0xff] %v4024
        %4042 = vst [vmem:[%s4030 + $0x58] sm:$0xff] %v4025
        %4043 = vst [vmem:[%s4030 + $0x60] sm:$0xff] %v4026
        %4044 = vst [vmem:[%s4030 + $0x68] sm:$0xff] %v4027
        %4045 = vst [vmem:[%s4030 + $0x70] sm:$0xff] %v4028
        %4046 = vst [vmem:[%s4030 + $0x78] sm:$0xff] %v4029
        %v4047 = vadd.f32 %v4014, %v4015
        %v4048 = vadd.f32 %v4047, %v4016
        %v4049 = vadd.f32 %v4048, %v4017
        %v4050 = vadd.f32 %v4049, %v4018
        %v4051 = vadd.f32 %v4050, %v4019
        %v4052 = vadd.f32 %v4051, %v4020
        %v4053 = vadd.f32 %v4052, %v4021
        %v4054 = vadd.f32 %v4053, %v4022
        %v4055 = vadd.f32 %v4054, %v4023
        %v4056 = vadd.f32 %v4055, %v4024
        %v4057 = vadd.f32 %v4056, %v4025
        %v4058 = vadd.f32 %v4057, %v4026
        %v4059 = vadd.f32 %v4058, %v4027
        %v4060 = vadd.f32 %v4059, %v4028
        %v4061 = vadd.f32 %v4060, %v4029
        %v4062 = vrot.slane %v4061, 4
        %v4063 = vadd.f32 %v4061, %v4062
        %v4064 = vrot.slane %v4063, 2
        %v4065 = vadd.f32 %v4063, %v4064
        %v4066 = vrot.slane %v4065, 1
        %v4067 = vadd.f32 %v4065, %v4066
        %v4068 = vadd.f32 %v3099, %v4067
        %v4069 = vmul.f32 %v4014, %v4014
        %v4070 = vmul.f32 %v4015, %v4015
        %v4071 = vmul.f32 %v4016, %v4016
        %v4072 = vmul.f32 %v4017, %v4017
        %v4073 = vmul.f32 %v4018, %v4018
        %v4074 = vmul.f32 %v4019, %v4019
        %v4075 = vmul.f32 %v4020, %v4020
        %v4076 = vmul.f32 %v4021, %v4021
        %v4077 = vmul.f32 %v4022, %v4022
        %v4078 = vmul.f32 %v4023, %v4023
        %v4079 = vmul.f32 %v4024, %v4024
        %v4080 = vmul.f32 %v4025, %v4025
        %v4081 = vmul.f32 %v4026, %v4026
        %v4082 = vmul.f32 %v4027, %v4027
        %v4083 = vmul.f32 %v4028, %v4028
        %v4084 = vmul.f32 %v4029, %v4029
        %v4085 = vadd.f32 %v4069, %v4070
        %v4086 = vadd.f32 %v4085, %v4071
        %v4087 = vadd.f32 %v4086, %v4072
        %v4088 = vadd.f32 %v4087, %v4073
        %v4089 = vadd.f32 %v4088, %v4074
        %v4090 = vadd.f32 %v4089, %v4075
        %v4091 = vadd.f32 %v4090, %v4076
        %v4092 = vadd.f32 %v4091, %v4077
        %v4093 = vadd.f32 %v4092, %v4078
        %v4094 = vadd.f32 %v4093, %v4079
        %v4095 = vadd.f32 %v4094, %v4080
        %v4096 = vadd.f32 %v4095, %v4081
        %v4097 = vadd.f32 %v4096, %v4082
        %v4098 = vadd.f32 %v4097, %v4083
        %v4099 = vadd.f32 %v4098, %v4084
        %v4100 = vrot.slane %v4099, 4
        %v4101 = vadd.f32 %v4099, %v4100
        %v4102 = vrot.slane %v4101, 2
        %v4103 = vadd.f32 %v4101, %v4102
        %v4104 = vrot.slane %v4103, 1
        %v4105 = vadd.f32 %v4103, %v4104
        %v4106 = vadd.f32 %v3137, %v4105
        %v4107 = vld [vmem:[%s4] sm:$0x1]
        %v4108 = vadd.f32 %v4107, %v4068
        %4109 = vst [vmem:[%s4] sm:$0x1] %v4108
        %v4110 = vld [vmem:[%s4 + $0x1] sm:$0x1]
        %v4111 = vadd.f32 %v4110, %v4106
        %4112 = vst [vmem:[%s4 + $0x1] sm:$0x1] %v4111
        %s4113 = sand.u32 %s108, 1
        %s4114 = sand.u32 %s108, 1
        %s4115 = smul.addr %s4114, 512
        %s4116 = scalar_lea.vmem [#allocation2], %s4115
        // Predicated region
        $region37: #{unet_up_forward.2} parent=31 // pred_check
          %p4117 = pneg %p118
        $region38: #{unet_up_forward.2} parent=31 // pred_check_branch
          %4119 = sbr.rel (%p4117) target = $region40
        $region39: #{unet_up_forward.2} parent=31 // pred_region
          %s4120 = smul.addr %s21, 16
          %s4121 = smul.addr %s20, 32
          %s4122 = sadd.s32 %s4120, %s4121
          %s4123 = smul.addr %s4122, 8
          %s4124 = scalar_lea.vmem %s3, %s4123
          // Predicated region
          $region41: #{unet_up_forward.2} parent=39 // pred_check
            _
          $region42: #{unet_up_forward.2} parent=39 // pred_check_branch
            %4126 = sbr.rel (0) target = $region44
          $region43: #{unet_up_forward.2} parent=39 // pred_region
            // Predicated region
            $region45: #{unet_up_forward.2} parent=43 // pred_check
              _
            $region46: #{unet_up_forward.2} parent=43 // pred_check_branch
              %4128 = sbr.rel (0) target = $region48
            $region47: #{unet_up_forward.2} parent=43 // pred_region
              // Predicated region
              $region60: #{unet_up_forward.2} parent=47 // pred_check
                _
              $region61: #{unet_up_forward.2} parent=47 // pred_check_branch
                %4269 = sbr.rel (0) target = $region63
              $region62: #{unet_up_forward.2} parent=47 // pred_region
                loop: start=0, step=1, limit=1
                $region64: #{unet_up_forward.2} parent=62 // loop_pre_header
                  _
                $region65: #{unet_up_forward.2} parent=62 // loop_header
                  %s4271 = sphi 0, %s4275
                  %p4272 = scmp.ge.s32.totalorder %s4271, 1
                  %s4276 = sphi %s4116, %s4116
                  %s4277 = sphi %s4124, %s4124
                $region66: #{unet_up_forward.2} parent=62 // loop_header_branch
                  %4274 = sbr.rel (%p4272) target = $region70
                $region67: #{unet_up_forward.2} parent=62 // loop_body
                  %v4278 = vld [vmem:[%s4276] sm:$0xff]
                  %4279 = vst [vmem:[%s4277] sm:$0xff] %v4278
                  %v4280 = vld [vmem:[%s4276 + $0x8] sm:$0xff]
                  %4281 = vst [vmem:[%s4277 + $0x8] sm:$0xff] %v4280
                  %v4282 = vld [vmem:[%s4276 + $0x10] sm:$0xff]
                  %4283 = vst [vmem:[%s4277 + $0x10] sm:$0xff] %v4282
                  %v4284 = vld [vmem:[%s4276 + $0x18] sm:$0xff]
                  %4285 = vst [vmem:[%s4277 + $0x18] sm:$0xff] %v4284
                  %v4286 = vld [vmem:[%s4276 + $0x20] sm:$0xff]
                  %4287 = vst [vmem:[%s4277 + $0x20] sm:$0xff] %v4286
                  %v4288 = vld [vmem:[%s4276 + $0x28] sm:$0xff]
                  %4289 = vst [vmem:[%s4277 + $0x28] sm:$0xff] %v4288
                  %v4290 = vld [vmem:[%s4276 + $0x30] sm:$0xff]
                  %4291 = vst [vmem:[%s4277 + $0x30] sm:$0xff] %v4290
                  %v4292 = vld [vmem:[%s4276 + $0x38] sm:$0xff]
                  %4293 = vst [vmem:[%s4277 + $0x38] sm:$0xff] %v4292
                  %v4294 = vld [vmem:[%s4276 + $0x40] sm:$0xff]
                  %4295 = vst [vmem:[%s4277 + $0x40] sm:$0xff] %v4294
                  %v4296 = vld [vmem:[%s4276 + $0x48] sm:$0xff]
                  %4297 = vst [vmem:[%s4277 + $0x48] sm:$0xff] %v4296
                  %v4298 = vld [vmem:[%s4276 + $0x50] sm:$0xff]
                  %4299 = vst [vmem:[%s4277 + $0x50] sm:$0xff] %v4298
                  %v4300 = vld [vmem:[%s4276 + $0x58] sm:$0xff]
                  %4301 = vst [vmem:[%s4277 + $0x58] sm:$0xff] %v4300
                  %v4302 = vld [vmem:[%s4276 + $0x60] sm:$0xff]
                  %4303 = vst [vmem:[%s4277 + $0x60] sm:$0xff] %v4302
                  %v4304 = vld [vmem:[%s4276 + $0x68] sm:$0xff]
                  %4305 = vst [vmem:[%s4277 + $0x68] sm:$0xff] %v4304
                  %v4306 = vld [vmem:[%s4276 + $0x70] sm:$0xff]
                  %4307 = vst [vmem:[%s4277 + $0x70] sm:$0xff] %v4306
                  %v4308 = vld [vmem:[%s4276 + $0x78] sm:$0xff]
                  %4309 = vst [vmem:[%s4277 + $0x78] sm:$0xff] %v4308
                  %v4310 = vld [vmem:[%s4276 + $0x80] sm:$0xff]
                  %4311 = vst [vmem:[%s4277 + $0x200] sm:$0xff] %v4310
                  %v4312 = vld [vmem:[%s4276 + $0x88] sm:$0xff]
                  %4313 = vst [vmem:[%s4277 + $0x208] sm:$0xff] %v4312
                  %v4314 = vld [vmem:[%s4276 + $0x90] sm:$0xff]
                  %4315 = vst [vmem:[%s4277 + $0x210] sm:$0xff] %v4314
                  %v4316 = vld [vmem:[%s4276 + $0x98] sm:$0xff]
                  %4317 = vst [vmem:[%s4277 + $0x218] sm:$0xff] %v4316
                  %v4318 = vld [vmem:[%s4276 + $0xa0] sm:$0xff]
                  %4319 = vst [vmem:[%s4277 + $0x220] sm:$0xff] %v4318
                  %v4320 = vld [vmem:[%s4276 + $0xa8] sm:$0xff]
                  %4321 = vst [vmem:[%s4277 + $0x228] sm:$0xff] %v4320
                  %v4322 = vld [vmem:[%s4276 + $0xb0] sm:$0xff]
                  %4323 = vst [vmem:[%s4277 + $0x230] sm:$0xff] %v4322
                  %v4324 = vld [vmem:[%s4276 + $0xb8] sm:$0xff]
                  %4325 = vst [vmem:[%s4277 + $0x238] sm:$0xff] %v4324
                  %v4326 = vld [vmem:[%s4276 + $0xc0] sm:$0xff]
                  %4327 = vst [vmem:[%s4277 + $0x240] sm:$0xff] %v4326
                  %v4328 = vld [vmem:[%s4276 + $0xc8] sm:$0xff]
                  %4329 = vst [vmem:[%s4277 + $0x248] sm:$0xff] %v4328
                  %v4330 = vld [vmem:[%s4276 + $0xd0] sm:$0xff]
                  %4331 = vst [vmem:[%s4277 + $0x250] sm:$0xff] %v4330
                  %v4332 = vld [vmem:[%s4276 + $0xd8] sm:$0xff]
                  %4333 = vst [vmem:[%s4277 + $0x258] sm:$0xff] %v4332
                  %v4334 = vld [vmem:[%s4276 + $0xe0] sm:$0xff]
                  %4335 = vst [vmem:[%s4277 + $0x260] sm:$0xff] %v4334
                  %v4336 = vld [vmem:[%s4276 + $0xe8] sm:$0xff]
                  %4337 = vst [vmem:[%s4277 + $0x268] sm:$0xff] %v4336
                  %v4338 = vld [vmem:[%s4276 + $0xf0] sm:$0xff]
                  %4339 = vst [vmem:[%s4277 + $0x270] sm:$0xff] %v4338
                  %v4340 = vld [vmem:[%s4276 + $0xf8] sm:$0xff]
                  %4341 = vst [vmem:[%s4277 + $0x278] sm:$0xff] %v4340
                  %v4342 = vld [vmem:[%s4276 + $0x100] sm:$0xff]
                  %4343 = vst [vmem:[%s4277 + $0x400] sm:$0xff] %v4342
                  %v4344 = vld [vmem:[%s4276 + $0x108] sm:$0xff]
                  %4345 = vst [vmem:[%s4277 + $0x408] sm:$0xff] %v4344
                  %v4346 = vld [vmem:[%s4276 + $0x110] sm:$0xff]
                  %4347 = vst [vmem:[%s4277 + $0x410] sm:$0xff] %v4346
                  %v4348 = vld [vmem:[%s4276 + $0x118] sm:$0xff]
                  %4349 = vst [vmem:[%s4277 + $0x418] sm:$0xff] %v4348
                  %v4350 = vld [vmem:[%s4276 + $0x120] sm:$0xff]
                  %4351 = vst [vmem:[%s4277 + $0x420] sm:$0xff] %v4350
                  %v4352 = vld [vmem:[%s4276 + $0x128] sm:$0xff]
                  %4353 = vst [vmem:[%s4277 + $0x428] sm:$0xff] %v4352
                  %v4354 = vld [vmem:[%s4276 + $0x130] sm:$0xff]
                  %4355 = vst [vmem:[%s4277 + $0x430] sm:$0xff] %v4354
                  %v4356 = vld [vmem:[%s4276 + $0x138] sm:$0xff]
                  %4357 = vst [vmem:[%s4277 + $0x438] sm:$0xff] %v4356
                  %v4358 = vld [vmem:[%s4276 + $0x140] sm:$0xff]
                  %4359 = vst [vmem:[%s4277 + $0x440] sm:$0xff] %v4358
                  %v4360 = vld [vmem:[%s4276 + $0x148] sm:$0xff]
                  %4361 = vst [vmem:[%s4277 + $0x448] sm:$0xff] %v4360
                  %v4362 = vld [vmem:[%s4276 + $0x150] sm:$0xff]
                  %4363 = vst [vmem:[%s4277 + $0x450] sm:$0xff] %v4362
                  %v4364 = vld [vmem:[%s4276 + $0x158] sm:$0xff]
                  %4365 = vst [vmem:[%s4277 + $0x458] sm:$0xff] %v4364
                  %v4366 = vld [vmem:[%s4276 + $0x160] sm:$0xff]
                  %4367 = vst [vmem:[%s4277 + $0x460] sm:$0xff] %v4366
                  %v4368 = vld [vmem:[%s4276 + $0x168] sm:$0xff]
                  %4369 = vst [vmem:[%s4277 + $0x468] sm:$0xff] %v4368
                  %v4370 = vld [vmem:[%s4276 + $0x170] sm:$0xff]
                  %4371 = vst [vmem:[%s4277 + $0x470] sm:$0xff] %v4370
                  %v4372 = vld [vmem:[%s4276 + $0x178] sm:$0xff]
                  %4373 = vst [vmem:[%s4277 + $0x478] sm:$0xff] %v4372
                  %v4374 = vld [vmem:[%s4276 + $0x180] sm:$0xff]
                  %4375 = vst [vmem:[%s4277 + $0x600] sm:$0xff] %v4374
                  %v4376 = vld [vmem:[%s4276 + $0x188] sm:$0xff]
                  %4377 = vst [vmem:[%s4277 + $0x608] sm:$0xff] %v4376
                  %v4378 = vld [vmem:[%s4276 + $0x190] sm:$0xff]
                  %4379 = vst [vmem:[%s4277 + $0x610] sm:$0xff] %v4378
                  %v4380 = vld [vmem:[%s4276 + $0x198] sm:$0xff]
                  %4381 = vst [vmem:[%s4277 + $0x618] sm:$0xff] %v4380
                  %v4382 = vld [vmem:[%s4276 + $0x1a0] sm:$0xff]
                  %4383 = vst [vmem:[%s4277 + $0x620] sm:$0xff] %v4382
                  %v4384 = vld [vmem:[%s4276 + $0x1a8] sm:$0xff]
                  %4385 = vst [vmem:[%s4277 + $0x628] sm:$0xff] %v4384
                  %v4386 = vld [vmem:[%s4276 + $0x1b0] sm:$0xff]
                  %4387 = vst [vmem:[%s4277 + $0x630] sm:$0xff] %v4386
                  %v4388 = vld [vmem:[%s4276 + $0x1b8] sm:$0xff]
                  %4389 = vst [vmem:[%s4277 + $0x638] sm:$0xff] %v4388
                  %v4390 = vld [vmem:[%s4276 + $0x1c0] sm:$0xff]
                  %4391 = vst [vmem:[%s4277 + $0x640] sm:$0xff] %v4390
                  %v4392 = vld [vmem:[%s4276 + $0x1c8] sm:$0xff]
                  %4393 = vst [vmem:[%s4277 + $0x648] sm:$0xff] %v4392
                  %v4394 = vld [vmem:[%s4276 + $0x1d0] sm:$0xff]
                  %4395 = vst [vmem:[%s4277 + $0x650] sm:$0xff] %v4394
                  %v4396 = vld [vmem:[%s4276 + $0x1d8] sm:$0xff]
                  %4397 = vst [vmem:[%s4277 + $0x658] sm:$0xff] %v4396
                  %v4398 = vld [vmem:[%s4276 + $0x1e0] sm:$0xff]
                  %4399 = vst [vmem:[%s4277 + $0x660] sm:$0xff] %v4398
                  %v4400 = vld [vmem:[%s4276 + $0x1e8] sm:$0xff]
                  %4401 = vst [vmem:[%s4277 + $0x668] sm:$0xff] %v4400
                  %v4402 = vld [vmem:[%s4276 + $0x1f0] sm:$0xff]
                  %4403 = vst [vmem:[%s4277 + $0x670] sm:$0xff] %v4402
                  %v4404 = vld [vmem:[%s4276 + $0x1f8] sm:$0xff]
                  %4405 = vst [vmem:[%s4277 + $0x678] sm:$0xff] %v4404
                $region68: #{unet_up_forward.2} parent=62 // loop_footer
                  %s4275 = sadd.s32 1, %s4271
                $region69: #{unet_up_forward.2} parent=62 // loop_footer_branch
                  %4270 = sbr.rel target = $region65
                $region70: #{unet_up_forward.2} parent=62 // loop_exit
                  _
              $region63: #{unet_up_forward.2} parent=47 // pred_fallthru
                _
              // Predicated region
              $region71: #{unet_up_forward.2} parent=47 // pred_check
                _
              $region72: #{unet_up_forward.2} parent=47 // pred_check_branch
                %4407 = sbr.rel target = $region74
              $region73: #{unet_up_forward.2} parent=47 // pred_region
                _
              $region74: #{unet_up_forward.2} parent=47 // pred_fallthru
                _
            $region48: #{unet_up_forward.2} parent=43 // pred_fallthru
              _
            // Predicated region
            $region49: #{unet_up_forward.2} parent=43 // pred_check
              _
            $region50: #{unet_up_forward.2} parent=43 // pred_check_branch
              %4130 = sbr.rel target = $region52
            $region51: #{unet_up_forward.2} parent=43 // pred_region
              loop: start=0, step=1, limit=1
              $region53: #{unet_up_forward.2} parent=51 // loop_pre_header
                _
              $region54: #{unet_up_forward.2} parent=51 // loop_header
                %s4133 = sphi 0, %s4137
                %p4134 = scmp.ge.s32.totalorder %s4133, 1
                %s4138 = sphi %s4116, %s4116
                %s4139 = sphi %s4124, %s4124
              $region55: #{unet_up_forward.2} parent=51 // loop_header_branch
                %4136 = sbr.rel (%p4134) target = $region59
              $region56: #{unet_up_forward.2} parent=51 // loop_body
                %v4140 = vld [vmem:[%s4138] sm:$0xff]
                %4141 = vst [vmem:[%s4139] sm:$0xff] %v4140
                %v4142 = vld [vmem:[%s4138 + $0x8] sm:$0xff]
                %4143 = vst [vmem:[%s4139 + $0x8] sm:$0xff] %v4142
                %v4144 = vld [vmem:[%s4138 + $0x10] sm:$0xff]
                %4145 = vst [vmem:[%s4139 + $0x10] sm:$0xff] %v4144
                %v4146 = vld [vmem:[%s4138 + $0x18] sm:$0xff]
                %4147 = vst [vmem:[%s4139 + $0x18] sm:$0xff] %v4146
                %v4148 = vld [vmem:[%s4138 + $0x20] sm:$0xff]
                %4149 = vst [vmem:[%s4139 + $0x20] sm:$0xff] %v4148
                %v4150 = vld [vmem:[%s4138 + $0x28] sm:$0xff]
                %4151 = vst [vmem:[%s4139 + $0x28] sm:$0xff] %v4150
                %v4152 = vld [vmem:[%s4138 + $0x30] sm:$0xff]
                %4153 = vst [vmem:[%s4139 + $0x30] sm:$0xff] %v4152
                %v4154 = vld [vmem:[%s4138 + $0x38] sm:$0xff]
                %4155 = vst [vmem:[%s4139 + $0x38] sm:$0xff] %v4154
                %v4156 = vld [vmem:[%s4138 + $0x40] sm:$0xff]
                %4157 = vst [vmem:[%s4139 + $0x40] sm:$0xff] %v4156
                %v4158 = vld [vmem:[%s4138 + $0x48] sm:$0xff]
                %4159 = vst [vmem:[%s4139 + $0x48] sm:$0xff] %v4158
                %v4160 = vld [vmem:[%s4138 + $0x50] sm:$0xff]
                %4161 = vst [vmem:[%s4139 + $0x50] sm:$0xff] %v4160
                %v4162 = vld [vmem:[%s4138 + $0x58] sm:$0xff]
                %4163 = vst [vmem:[%s4139 + $0x58] sm:$0xff] %v4162
                %v4164 = vld [vmem:[%s4138 + $0x60] sm:$0xff]
                %4165 = vst [vmem:[%s4139 + $0x60] sm:$0xff] %v4164
                %v4166 = vld [vmem:[%s4138 + $0x68] sm:$0xff]
                %4167 = vst [vmem:[%s4139 + $0x68] sm:$0xff] %v4166
                %v4168 = vld [vmem:[%s4138 + $0x70] sm:$0xff]
                %4169 = vst [vmem:[%s4139 + $0x70] sm:$0xff] %v4168
                %v4170 = vld [vmem:[%s4138 + $0x78] sm:$0xff]
                %4171 = vst [vmem:[%s4139 + $0x78] sm:$0xff] %v4170
                %v4172 = vld [vmem:[%s4138 + $0x80] sm:$0xff]
                %4173 = vst [vmem:[%s4139 + $0x200] sm:$0xff] %v4172
                %v4174 = vld [vmem:[%s4138 + $0x88] sm:$0xff]
                %4175 = vst [vmem:[%s4139 + $0x208] sm:$0xff] %v4174
                %v4176 = vld [vmem:[%s4138 + $0x90] sm:$0xff]
                %4177 = vst [vmem:[%s4139 + $0x210] sm:$0xff] %v4176
                %v4178 = vld [vmem:[%s4138 + $0x98] sm:$0xff]
                %4179 = vst [vmem:[%s4139 + $0x218] sm:$0xff] %v4178
                %v4180 = vld [vmem:[%s4138 + $0xa0] sm:$0xff]
                %4181 = vst [vmem:[%s4139 + $0x220] sm:$0xff] %v4180
                %v4182 = vld [vmem:[%s4138 + $0xa8] sm:$0xff]
                %4183 = vst [vmem:[%s4139 + $0x228] sm:$0xff] %v4182
                %v4184 = vld [vmem:[%s4138 + $0xb0] sm:$0xff]
                %4185 = vst [vmem:[%s4139 + $0x230] sm:$0xff] %v4184
                %v4186 = vld [vmem:[%s4138 + $0xb8] sm:$0xff]
                %4187 = vst [vmem:[%s4139 + $0x238] sm:$0xff] %v4186
                %v4188 = vld [vmem:[%s4138 + $0xc0] sm:$0xff]
                %4189 = vst [vmem:[%s4139 + $0x240] sm:$0xff] %v4188
                %v4190 = vld [vmem:[%s4138 + $0xc8] sm:$0xff]
                %4191 = vst [vmem:[%s4139 + $0x248] sm:$0xff] %v4190
                %v4192 = vld [vmem:[%s4138 + $0xd0] sm:$0xff]
                %4193 = vst [vmem:[%s4139 + $0x250] sm:$0xff] %v4192
                %v4194 = vld [vmem:[%s4138 + $0xd8] sm:$0xff]
                %4195 = vst [vmem:[%s4139 + $0x258] sm:$0xff] %v4194
                %v4196 = vld [vmem:[%s4138 + $0xe0] sm:$0xff]
                %4197 = vst [vmem:[%s4139 + $0x260] sm:$0xff] %v4196
                %v4198 = vld [vmem:[%s4138 + $0xe8] sm:$0xff]
                %4199 = vst [vmem:[%s4139 + $0x268] sm:$0xff] %v4198
                %v4200 = vld [vmem:[%s4138 + $0xf0] sm:$0xff]
                %4201 = vst [vmem:[%s4139 + $0x270] sm:$0xff] %v4200
                %v4202 = vld [vmem:[%s4138 + $0xf8] sm:$0xff]
                %4203 = vst [vmem:[%s4139 + $0x278] sm:$0xff] %v4202
                %v4204 = vld [vmem:[%s4138 + $0x100] sm:$0xff]
                %4205 = vst [vmem:[%s4139 + $0x400] sm:$0xff] %v4204
                %v4206 = vld [vmem:[%s4138 + $0x108] sm:$0xff]
                %4207 = vst [vmem:[%s4139 + $0x408] sm:$0xff] %v4206
                %v4208 = vld [vmem:[%s4138 + $0x110] sm:$0xff]
                %4209 = vst [vmem:[%s4139 + $0x410] sm:$0xff] %v4208
                %v4210 = vld [vmem:[%s4138 + $0x118] sm:$0xff]
                %4211 = vst [vmem:[%s4139 + $0x418] sm:$0xff] %v4210
                %v4212 = vld [vmem:[%s4138 + $0x120] sm:$0xff]
                %4213 = vst [vmem:[%s4139 + $0x420] sm:$0xff] %v4212
                %v4214 = vld [vmem:[%s4138 + $0x128] sm:$0xff]
                %4215 = vst [vmem:[%s4139 + $0x428] sm:$0xff] %v4214
                %v4216 = vld [vmem:[%s4138 + $0x130] sm:$0xff]
                %4217 = vst [vmem:[%s4139 + $0x430] sm:$0xff] %v4216
                %v4218 = vld [vmem:[%s4138 + $0x138] sm:$0xff]
                %4219 = vst [vmem:[%s4139 + $0x438] sm:$0xff] %v4218
                %v4220 = vld [vmem:[%s4138 + $0x140] sm:$0xff]
                %4221 = vst [vmem:[%s4139 + $0x440] sm:$0xff] %v4220
                %v4222 = vld [vmem:[%s4138 + $0x148] sm:$0xff]
                %4223 = vst [vmem:[%s4139 + $0x448] sm:$0xff] %v4222
                %v4224 = vld [vmem:[%s4138 + $0x150] sm:$0xff]
                %4225 = vst [vmem:[%s4139 + $0x450] sm:$0xff] %v4224
                %v4226 = vld [vmem:[%s4138 + $0x158] sm:$0xff]
                %4227 = vst [vmem:[%s4139 + $0x458] sm:$0xff] %v4226
                %v4228 = vld [vmem:[%s4138 + $0x160] sm:$0xff]
                %4229 = vst [vmem:[%s4139 + $0x460] sm:$0xff] %v4228
                %v4230 = vld [vmem:[%s4138 + $0x168] sm:$0xff]
                %4231 = vst [vmem:[%s4139 + $0x468] sm:$0xff] %v4230
                %v4232 = vld [vmem:[%s4138 + $0x170] sm:$0xff]
                %4233 = vst [vmem:[%s4139 + $0x470] sm:$0xff] %v4232
                %v4234 = vld [vmem:[%s4138 + $0x178] sm:$0xff]
                %4235 = vst [vmem:[%s4139 + $0x478] sm:$0xff] %v4234
                %v4236 = vld [vmem:[%s4138 + $0x180] sm:$0xff]
                %4237 = vst [vmem:[%s4139 + $0x600] sm:$0xff] %v4236
                %v4238 = vld [vmem:[%s4138 + $0x188] sm:$0xff]
                %4239 = vst [vmem:[%s4139 + $0x608] sm:$0xff] %v4238
                %v4240 = vld [vmem:[%s4138 + $0x190] sm:$0xff]
                %4241 = vst [vmem:[%s4139 + $0x610] sm:$0xff] %v4240
                %v4242 = vld [vmem:[%s4138 + $0x198] sm:$0xff]
                %4243 = vst [vmem:[%s4139 + $0x618] sm:$0xff] %v4242
                %v4244 = vld [vmem:[%s4138 + $0x1a0] sm:$0xff]
                %4245 = vst [vmem:[%s4139 + $0x620] sm:$0xff] %v4244
                %v4246 = vld [vmem:[%s4138 + $0x1a8] sm:$0xff]
                %4247 = vst [vmem:[%s4139 + $0x628] sm:$0xff] %v4246
                %v4248 = vld [vmem:[%s4138 + $0x1b0] sm:$0xff]
                %4249 = vst [vmem:[%s4139 + $0x630] sm:$0xff] %v4248
                %v4250 = vld [vmem:[%s4138 + $0x1b8] sm:$0xff]
                %4251 = vst [vmem:[%s4139 + $0x638] sm:$0xff] %v4250
                %v4252 = vld [vmem:[%s4138 + $0x1c0] sm:$0xff]
                %4253 = vst [vmem:[%s4139 + $0x640] sm:$0xff] %v4252
                %v4254 = vld [vmem:[%s4138 + $0x1c8] sm:$0xff]
                %4255 = vst [vmem:[%s4139 + $0x648] sm:$0xff] %v4254
                %v4256 = vld [vmem:[%s4138 + $0x1d0] sm:$0xff]
                %4257 = vst [vmem:[%s4139 + $0x650] sm:$0xff] %v4256
                %v4258 = vld [vmem:[%s4138 + $0x1d8] sm:$0xff]
                %4259 = vst [vmem:[%s4139 + $0x658] sm:$0xff] %v4258
                %v4260 = vld [vmem:[%s4138 + $0x1e0] sm:$0xff]
                %4261 = vst [vmem:[%s4139 + $0x660] sm:$0xff] %v4260
                %v4262 = vld [vmem:[%s4138 + $0x1e8] sm:$0xff]
                %4263 = vst [vmem:[%s4139 + $0x668] sm:$0xff] %v4262
                %v4264 = vld [vmem:[%s4138 + $0x1f0] sm:$0xff]
                %4265 = vst [vmem:[%s4139 + $0x670] sm:$0xff] %v4264
                %v4266 = vld [vmem:[%s4138 + $0x1f8] sm:$0xff]
                %4267 = vst [vmem:[%s4139 + $0x678] sm:$0xff] %v4266
              $region57: #{unet_up_forward.2} parent=51 // loop_footer
                %s4137 = sadd.s32 1, %s4133
              $region58: #{unet_up_forward.2} parent=51 // loop_footer_branch
                %4132 = sbr.rel target = $region54
              $region59: #{unet_up_forward.2} parent=51 // loop_exit
                _
            $region52: #{unet_up_forward.2} parent=43 // pred_fallthru
              _
          $region44: #{unet_up_forward.2} parent=39 // pred_fallthru
            _
          %4408 = vnop
        $region40: #{unet_up_forward.2} parent=31 // pred_fallthru
          _
        // Predicated region
        $region75: #{unet_up_forward.2} parent=31 // pred_check
          %p4409 = pneg %p139
        $region76: #{unet_up_forward.2} parent=31 // pred_check_branch
          %4411 = sbr.rel (%p4409) target = $region78
        $region77: #{unet_up_forward.2} parent=31 // pred_region
          _
        $region78: #{unet_up_forward.2} parent=31 // pred_fallthru
          _
        // Predicated region
        $region79: #{unet_up_forward.2} parent=31 // pred_check
          %p4412 = pneg %p139
        $region80: #{unet_up_forward.2} parent=31 // pred_check_branch
          %4414 = sbr.rel (%p4412) target = $region82
        $region81: #{unet_up_forward.2} parent=31 // pred_region
          _
        $region82: #{unet_up_forward.2} parent=31 // pred_fallthru
          _
      $region32: #{unet_up_forward.2} parent=5 // pred_fallthru
        _
      %p4415 = scmp.le.s32.totalorder 2, %s11
      // Predicated region
      $region83: #{unet_up_forward.2} parent=5 // pred_check
        %p4416 = pneg %p4415
      $region84: #{unet_up_forward.2} parent=5 // pred_check_branch
        %4418 = sbr.rel (%p4416) target = $region86
      $region85: #{unet_up_forward.2} parent=5 // pred_region
        %s4419 = ssub.s32 %s11, 2
        // Predicated region
        $region87: #{unet_up_forward.2} parent=85 // pred_check
          %p4420 = pneg %p124
        $region88: #{unet_up_forward.2} parent=85 // pred_check_branch
          %4422 = sbr.rel (%p4420) target = $region90
        $region89: #{unet_up_forward.2} parent=85 // pred_region
          %s4423 = sand.u32 %s109, 1
          %s4424 = sand.u32 %s109, 1
          %s4425 = smul.addr %s4424, 512
          %s4426 = scalar_lea.vmem [#allocation2], %s4425
        $region90: #{unet_up_forward.2} parent=85 // pred_fallthru
          _
      $region86: #{unet_up_forward.2} parent=5 // pred_fallthru
        _
    $region6: #{unet_up_forward.2} parent=1 // loop_footer
      %s15 = sadd.s32 1, %s11
    $region7: #{unet_up_forward.2} parent=1 // loop_footer_branch
      %10 = sbr.rel target = $region3
    $region8: #{unet_up_forward.2} parent=1 // loop_exit
      _

</llo_original>
